<compile_context>
chip_gen: v7x
topology: tpu7x:2x2x1
jax: 0.10.0
libtpu: 0.0.40
codegen_flags: <defaults>
</compile_context>

<pallas_src>
import math
import jax
import jax.numpy as jnp
from jax import lax
from jax.experimental import pallas as pl
from jax.experimental.pallas import tpu as pltpu


N_LAYERS = 4


# ----------------------------------------------------------------------------
# Fully fused model kernel
# ----------------------------------------------------------------------------
def make_model1_kernel(S, B, E, H, n_layers=N_LAYERS):
    G = 3 * H
    H2 = 2 * H
    unroll = True if S <= 32 else 8          # cap unroll for long sequences

    def kernel(*refs):
        # ---- parse the flat ref list --------------------------------------
        idx = 0
        x_ref = refs[idx]; idx += 1                        # (S*B, E) bf16
        gru_refs = []
        for _ in range(n_layers):                          # per layer:
            gru_refs.append(refs[idx:idx + 6]); idx += 6   # wih,bx,whf,whb,bnf,bnb
        (conv_ref, sel_ref,
         w1_ref, b1_ref, g1_ref, be1_ref,
         w2_ref, b2_ref, g2_ref, be2_ref,
         w3_ref, b3_ref) = refs[idx:idx + 12]; idx += 12
        out_ref = refs[idx]; idx += 1                      # (B, 1) f32
        act_a, act_b, xp_ref = refs[idx:idx + 3]           # VMEM scratches

        # ---- one bidirectional GRU layer (PyTorch gate order r, z, n) ------
        def run_gru_layer(x_in, wih_ref, bx_ref, whf_ref, whb_ref,
                          bnf_ref, bnb_ref, dst_ref, is_last):
            # Hoisted input projection: ONE large-M bf16 MXU matmul for all
            # timesteps and both directions, off the serial critical path.
            # cols of wih: [Wir_f|Wiz_f|Win_f|Wir_b|Wiz_b|Win_b],
            # bx folds bir+bhr, biz+bhz, bin per direction.
            xp_ref[...] = (jnp.dot(x_in, wih_ref[...],
                                   preferred_element_type=jnp.float32)
                           + bx_ref[...])
            whf = whf_ref[...]                              # (H, 3H) bf16
            whb = whb_ref[...]                              # (H, 3H) bf16
            # Hoist the (1,H)->(B,H) broadcasts out of the unrolled loop.
            bnf = jnp.broadcast_to(bnf_ref[...], (B, H))    # r-gated hidden bias
            bnb = jnp.broadcast_to(bnb_ref[...], (B, H))

            def step(t, carry):
                hf, hb, sf, sb = carry
                s = S - 1 - t
                # Two per-direction hidden matmuls (no zero-padded block-diag,
                # no per-step lane concat of the carry).
                hpf = jnp.dot(hf.astype(whf.dtype), whf,
                              preferred_element_type=jnp.float32)  # (B, 3H)
                hpb = jnp.dot(hb.astype(whb.dtype), whb,
                              preferred_element_type=jnp.float32)  # (B, 3H)
                xf = xp_ref[pl.ds(t * B, B), 0:G]                  # fwd @ time t
                xb = xp_ref[pl.ds(s * B, B), G:2 * G]              # bwd @ time s

                r_f = jax.nn.sigmoid(xf[:, 0:H] + hpf[:, 0:H])
                z_f = jax.nn.sigmoid(xf[:, H:2 * H] + hpf[:, H:2 * H])
                n_f = jnp.tanh(xf[:, 2 * H:G] + r_f * (hpf[:, 2 * H:G] + bnf))
                r_b = jax.nn.sigmoid(xb[:, 0:H] + hpb[:, 0:H])
                z_b = jax.nn.sigmoid(xb[:, H:2 * H] + hpb[:, H:2 * H])
                n_b = jnp.tanh(xb[:, 2 * H:G] + r_b * (hpb[:, 2 * H:G] + bnb))

                hf_new = (1.0 - z_f) * n_f + z_f * hf
                hb_new = (1.0 - z_b) * n_b + z_b * hb

                if is_last:
                    # Fold the sequence mean-pool into the recurrence: the
                    # last layer's (S,B,2H) output is never materialized.
                    sf = sf + hf_new
                    sb = sb + hb_new
                else:
                    dst_ref[pl.ds(t * B, B), 0:H] = hf_new.astype(dst_ref.dtype)
                    dst_ref[pl.ds(s * B, B), H:H2] = hb_new.astype(dst_ref.dtype)
                return (hf_new, hb_new, sf, sb)

            zero = jnp.zeros((B, H), jnp.float32)
            carry = lax.fori_loop(0, S, step, (zero, zero, zero, zero),
                                  unroll=unroll)
            return carry[2], carry[3]        # running fwd / bwd sums

        # ---- 4 stacked layers, ping-ponging two bf16 VMEM buffers ----------
        bufs = (act_a, act_b)
        sf = sb = None
        for l in range(n_layers):
            wih, bx, whf, whb, bnf, bnb = gru_refs[l]
            is_last = (l == n_layers - 1)
            if l == 0:
                x_in = x_ref[...].astype(jnp.bfloat16)
            else:
                x_in = bufs[(l - 1) % 2][...].astype(jnp.bfloat16)
            dst = None if is_last else bufs[l % 2]
            sf, sb = run_gru_layer(x_in, wih, bx, whf, whb, bnf, bnb,
                                   dst, is_last)

        # ---- head: mean -> Conv1d(k=3,'same') -> MaxPool1d(3,2,1)
        # ----        -> Linear+LN+ReLU x2 -> Linear+Sigmoid ----------------
        inv_s = jnp.float32(1.0 / S)
        mean = jnp.concatenate([sf * inv_s, sb * inv_s], axis=1)   # (B, 2H)
        Lw = H2
        col = lax.broadcasted_iota(jnp.int32, (B, Lw), 1)

        # Conv1d(1,1,k=3,'same', zero pad): c[i] = w0*x[i-1]+w1*x[i]+w2*x[i+1]+b
        w0, w1c, w2c, cb = conv_ref[0], conv_ref[1], conv_ref[2], conv_ref[3]
        x_prev = jnp.where(col == 0, 0.0, pltpu.roll(mean, 1, 1))
        x_next = jnp.where(col == Lw - 1, 0.0, pltpu.roll(mean, Lw - 1, 1))
        c = w0 * x_prev + w1c * mean + w2c * x_next + cb

        # MaxPool1d(3, stride=2, padding=1) with -inf padding
        neg = jnp.float32(-jnp.inf)
        c_prev = jnp.where(col == 0, neg, pltpu.roll(c, 1, 1))
        c_next = jnp.where(col == Lw - 1, neg, pltpu.roll(c, Lw - 1, 1))
        m = jnp.maximum(jnp.maximum(c_prev, c), c_next)
        # even-index (stride-2) selection via a 0/1 matmul (MXU-friendly)
        pooled = jnp.dot(m, sel_ref[...],
                         preferred_element_type=jnp.float32)       # (B, H)

        def layer_norm(x, gamma, beta):
            mu = jnp.mean(x, axis=-1, keepdims=True)
            var = jnp.mean((x - mu) ** 2, axis=-1, keepdims=True)
            return (x - mu) * lax.rsqrt(var + 1e-5) * gamma + beta

        h1 = jnp.dot(pooled, w1_ref[...],
                     preferred_element_type=jnp.float32) + b1_ref[...]
        h1 = jnp.maximum(layer_norm(h1, g1_ref[...], be1_ref[...]), 0.0)
        h2 = jnp.dot(h1, w2_ref[...],
                     preferred_element_type=jnp.float32) + b2_ref[...]
        h2 = jnp.maximum(layer_norm(h2, g2_ref[...], be2_ref[...]), 0.0)
        logit = jnp.dot(h2, w3_ref[...],
                        preferred_element_type=jnp.float32) + b3_ref[...]
        out_ref[...] = jax.nn.sigmoid(logit)

    return kernel


# ----------------------------------------------------------------------------
# Full forward (embedding gather in XLA, everything else in ONE Pallas kernel)
# ----------------------------------------------------------------------------
def model1_forward(tokens, params):
    B, S = tokens.shape
    emb = params["embedding"]
    E = emb.shape[1]
    H = params["w2"].shape[1]

    # Gather embeddings directly in time-major layout (no activation transposes
    # anywhere); bf16 halves the only activation HBM input of the fused kernel.
    # TODO(synk): Dropout(0.2 / 0.3) layers are identity (inference semantics).
    x_tm = jnp.take(emb, tokens.T, axis=0).astype(jnp.bfloat16)    # (S, B, E)
    x2d = x_tm.reshape(S * B, E)                                   # free reshape

    vmem = pl.BlockSpec(memory_space=pltpu.MemorySpace.VMEM)
    smem = pl.BlockSpec(memory_space=pltpu.MemorySpace.SMEM)

    gru_args = []
    for layer_weights in params["gru"]:
        gru_args.extend(layer_weights)
    head_args = [params["conv_wb"], params["sel"],
                 params["w1"], params["b1"], params["g1"], params["be1"],
                 params["w2"], params["b2"], params["g2"], params["be2"],
                 params["w3"], params["b3"]]

    out = pl.pallas_call(
        make_model1_kernel(S, B, E, H, n_layers=len(params["gru"])),
        out_shape=jax.ShapeDtypeStruct((B, 1), jnp.float32),
        in_specs=[vmem] * (1 + len(gru_args)) + [smem] + [vmem] * 11,
        out_specs=vmem,
        scratch_shapes=[
            pltpu.VMEM((S * B, 2 * H), jnp.bfloat16),   # activation ping
            pltpu.VMEM((S * B, 2 * H), jnp.bfloat16),   # activation pong
            pltpu.VMEM((S * B, 6 * H), jnp.float32),    # hoisted input proj
        ],
        compiler_params=pltpu.CompilerParams(
            vmem_limit_bytes=32 * 1024 * 1024),
    )(x2d, *gru_args, *head_args)
    return out.reshape(B, 1, 1)                                    # (B, 1, 1)


# ----------------------------------------------------------------------------
# Parameter construction (PyTorch-compatible GRU init, repacked for the kernel)
# ----------------------------------------------------------------------------
def init_params(key, vocab, E, H):
    def uni(k, shape, bound):
        return jax.random.uniform(k, shape, jnp.float32, -bound, bound)

    keys = iter(jax.random.split(key, 128))
    params = {}
    params["embedding"] = jax.random.normal(next(keys), (vocab, E), jnp.float32)

    kH = 1.0 / math.sqrt(H)
    gru = []
    for layer in range(N_LAYERS):
        e_in = E if layer == 0 else 2 * H
        wih_cols, bx_cols, whh_dirs, bhn_dirs = [], [], [], []
        for _ in range(2):                          # forward, backward
            wir = uni(next(keys), (e_in, H), kH)
            wiz = uni(next(keys), (e_in, H), kH)
            win = uni(next(keys), (e_in, H), kH)
            whr = uni(next(keys), (H, H), kH)
            whz = uni(next(keys), (H, H), kH)
            whn = uni(next(keys), (H, H), kH)
            bir = uni(next(keys), (H,), kH)
            biz = uni(next(keys), (H,), kH)
            bin_ = uni(next(keys), (H,), kH)
            bhr = uni(next(keys), (H,), kH)
            bhz = uni(next(keys), (H,), kH)
            bhn = uni(next(keys), (H,), kH)
            wih_cols.append(jnp.concatenate([wir, wiz, win], axis=1))      # (e_in,3H)
            bx_cols.append(jnp.concatenate([bir + bhr, biz + bhz, bin_]))  # (3H,)
            whh_dirs.append(
                jnp.concatenate([whr, whz, whn], axis=1).astype(jnp.bfloat16))
            bhn_dirs.append(bhn.reshape(1, H))
        wih = jnp.concatenate(wih_cols, axis=1).astype(jnp.bfloat16)       # (e_in,6H)
        bx = jnp.concatenate(bx_cols).reshape(1, 6 * H)                    # (1,6H)
        gru.append((wih, bx, whh_dirs[0], whh_dirs[1],
                    bhn_dirs[0], bhn_dirs[1]))
    params["gru"] = gru

    # Conv1d(1, 1, k=3): 3 weights + bias packed into one SMEM vector
    kc = 1.0 / math.sqrt(3.0)
    params["conv_wb"] = jnp.concatenate(
        [uni(next(keys), (3,), kc), uni(next(keys), (1,), kc)]).astype(jnp.float32)

    L = 2 * H
    pool_out = (L - 1) // 2 + 1          # MaxPool1d(3, stride=2, padding=1)
    assert pool_out == H, (pool_out, H)
    sel = jnp.zeros((L, pool_out), jnp.float32)
    sel = sel.at[2 * jnp.arange(pool_out), jnp.arange(pool_out)].set(1.0)
    params["sel"] = sel

    k1 = 1.0 / math.sqrt(H)
    params["w1"] = uni(next(keys), (H, 2 * H), k1)
    params["b1"] = uni(next(keys), (1, 2 * H), k1)
    params["g1"] = jnp.ones((1, 2 * H), jnp.float32)
    params["be1"] = jnp.zeros((1, 2 * H), jnp.float32)

    k2 = 1.0 / math.sqrt(2 * H)
    params["w2"] = uni(next(keys), (2 * H, H), k2)
    params["b2"] = uni(next(keys), (1, H), k2)
    params["g2"] = jnp.ones((1, H), jnp.float32)
    params["be2"] = jnp.zeros((1, H), jnp.float32)

    k3 = 1.0 / math.sqrt(H)
    params["w3"] = uni(next(keys), (H, 1), k3)
    params["b3"] = uni(next(keys), (1, 1), k3)
    return params


if __name__ == "__main__":
    B, S, E, H, VOCAB = 2, 8, 32, 32, 50

    key = jax.random.PRNGKey(0)
    k_param, k_tok = jax.random.split(key)
    params = init_params(k_param, VOCAB, E, H)
    tokens = jax.random.randint(k_tok, (B, S), 0, VOCAB, dtype=jnp.int32)

    out = jax.jit(model1_forward)(tokens, params)
    out = jax.block_until_ready(out)

    assert out.shape == (B, 1, 1), out.shape
    assert bool(jnp.all(jnp.isfinite(out)))
    assert bool(jnp.all((out > 0.0) & (out < 1.0)))
    print("KERNEL_OK")
</pallas_src>

<mosaic_0001>
module attributes {stable_mosaic.version = 11 : i64} {
  func.func @kernel(%arg0: memref<16x32xbf16, #tpu.memory_space<vmem>>, %arg1: memref<32x192xbf16, #tpu.memory_space<vmem>>, %arg2: memref<1x192xf32, #tpu.memory_space<vmem>>, %arg3: memref<32x96xbf16, #tpu.memory_space<vmem>>, %arg4: memref<32x96xbf16, #tpu.memory_space<vmem>>, %arg5: memref<1x32xf32, #tpu.memory_space<vmem>>, %arg6: memref<1x32xf32, #tpu.memory_space<vmem>>, %arg7: memref<64x192xbf16, #tpu.memory_space<vmem>>, %arg8: memref<1x192xf32, #tpu.memory_space<vmem>>, %arg9: memref<32x96xbf16, #tpu.memory_space<vmem>>, %arg10: memref<32x96xbf16, #tpu.memory_space<vmem>>, %arg11: memref<1x32xf32, #tpu.memory_space<vmem>>, %arg12: memref<1x32xf32, #tpu.memory_space<vmem>>, %arg13: memref<64x192xbf16, #tpu.memory_space<vmem>>, %arg14: memref<1x192xf32, #tpu.memory_space<vmem>>, %arg15: memref<32x96xbf16, #tpu.memory_space<vmem>>, %arg16: memref<32x96xbf16, #tpu.memory_space<vmem>>, %arg17: memref<1x32xf32, #tpu.memory_space<vmem>>, %arg18: memref<1x32xf32, #tpu.memory_space<vmem>>, %arg19: memref<64x192xbf16, #tpu.memory_space<vmem>>, %arg20: memref<1x192xf32, #tpu.memory_space<vmem>>, %arg21: memref<32x96xbf16, #tpu.memory_space<vmem>>, %arg22: memref<32x96xbf16, #tpu.memory_space<vmem>>, %arg23: memref<1x32xf32, #tpu.memory_space<vmem>>, %arg24: memref<1x32xf32, #tpu.memory_space<vmem>>, %arg25: memref<4xf32, #tpu.memory_space<smem>>, %arg26: memref<64x32xf32, #tpu.memory_space<vmem>>, %arg27: memref<32x64xf32, #tpu.memory_space<vmem>>, %arg28: memref<1x64xf32, #tpu.memory_space<vmem>>, %arg29: memref<1x64xf32, #tpu.memory_space<vmem>>, %arg30: memref<1x64xf32, #tpu.memory_space<vmem>>, %arg31: memref<64x32xf32, #tpu.memory_space<vmem>>, %arg32: memref<1x32xf32, #tpu.memory_space<vmem>>, %arg33: memref<1x32xf32, #tpu.memory_space<vmem>>, %arg34: memref<1x32xf32, #tpu.memory_space<vmem>>, %arg35: memref<32x1xf32, #tpu.memory_space<vmem>>, %arg36: memref<1x1xf32, #tpu.memory_space<vmem>>, %arg37: memref<2x1xf32, #tpu.memory_space<vmem>>, %arg38: memref<16x64xbf16, #tpu.memory_space<vmem>>, %arg39: memref<16x64xbf16, #tpu.memory_space<vmem>>, %arg40: memref<16x192xf32, #tpu.memory_space<vmem>>) attributes {dimension_semantics = [], scalar_prefetch = 0 : i64, scratch_operands = 3 : i64, tpu.core_type = #tpu.core_type<tc>} {
    %c0 = arith.constant 0 : index
    %c0_0 = arith.constant 0 : index
    %0 = vector.load %arg0[%c0, %c0_0] : memref<16x32xbf16, #tpu.memory_space<vmem>>, vector<16x32xbf16>
    %c0_1 = arith.constant 0 : index
    %c0_2 = arith.constant 0 : index
    %1 = vector.load %arg1[%c0_1, %c0_2] : memref<32x192xbf16, #tpu.memory_space<vmem>>, vector<32x192xbf16>
    %cst = arith.constant dense<0.000000e+00> : vector<16x192xf32>
    %2 = tpu.matmul %0, %1, %cst {dimension_numbers = #tpu.dot_dimension_numbers<[1], [0], [0], [1], [0, 0, 1, 1], [], []>} : vector<16x32xbf16>, vector<32x192xbf16>, vector<16x192xf32> -> vector<16x192xf32>
    %c0_3 = arith.constant 0 : index
    %c0_4 = arith.constant 0 : index
    %3 = vector.load %arg2[%c0_3, %c0_4] : memref<1x192xf32, #tpu.memory_space<vmem>>, vector<1x192xf32>
    %4 = vector.broadcast %3 : vector<1x192xf32> to vector<16x192xf32>
    %5 = arith.addf %2, %4 : vector<16x192xf32>
    %c0_5 = arith.constant 0 : index
    %c0_6 = arith.constant 0 : index
    %6 = vector.load %arg40[%c0_5, %c0_6] : memref<16x192xf32, #tpu.memory_space<vmem>>, vector<16x192xf32>
    tpu.vector_store %arg40[%c0_5, %c0_6], %5 {strides = array<i32>} : memref<16x192xf32, #tpu.memory_space<vmem>>, vector<16x192xf32>,
    %c0_7 = arith.constant 0 : index
    %c0_8 = arith.constant 0 : index
    %7 = vector.load %arg3[%c0_7, %c0_8] : memref<32x96xbf16, #tpu.memory_space<vmem>>, vector<32x96xbf16>
    %c0_9 = arith.constant 0 : index
    %c0_10 = arith.constant 0 : index
    %8 = vector.load %arg4[%c0_9, %c0_10] : memref<32x96xbf16, #tpu.memory_space<vmem>>, vector<32x96xbf16>
    %c0_11 = arith.constant 0 : index
    %c0_12 = arith.constant 0 : index
    %9 = vector.load %arg5[%c0_11, %c0_12] : memref<1x32xf32, #tpu.memory_space<vmem>>, vector<1x32xf32>
    %10 = vector.shape_cast %9 : vector<1x32xf32> to vector<1x32xf32>
    %11 = vector.broadcast %10 : vector<1x32xf32> to vector<2x32xf32>
    %c0_13 = arith.constant 0 : index
    %c0_14 = arith.constant 0 : index
    %12 = vector.load %arg6[%c0_13, %c0_14] : memref<1x32xf32, #tpu.memory_space<vmem>>, vector<1x32xf32>
    %13 = vector.shape_cast %12 : vector<1x32xf32> to vector<1x32xf32>
    %14 = vector.broadcast %13 : vector<1x32xf32> to vector<2x32xf32>
    %cst_15 = arith.constant 0.000000e+00 : f32
    %15 = vector.broadcast %cst_15 : f32 to vector<2x32xf32>
    %c0_i32 = arith.constant 0 : i32
    %c7_i32 = arith.constant 7 : i32
    %16 = arith.subi %c7_i32, %c0_i32 : i32
    %17 = arith.truncf %15 : vector<2x32xf32> to vector<2x32xbf16>
    %cst_16 = arith.constant dense<0.000000e+00> : vector<2x96xf32>
    %18 = tpu.matmul %17, %7, %cst_16 {dimension_numbers = #tpu.dot_dimension_numbers<[1], [0], [0], [1], [0, 0, 1, 1], [], []>} : vector<2x32xbf16>, vector<32x96xbf16>, vector<2x96xf32> -> vector<2x96xf32>
    %19 = arith.truncf %15 : vector<2x32xf32> to vector<2x32xbf16>
    %cst_17 = arith.constant dense<0.000000e+00> : vector<2x96xf32>
    %20 = tpu.matmul %19, %8, %cst_17 {dimension_numbers = #tpu.dot_dimension_numbers<[1], [0], [0], [1], [0, 0, 1, 1], [], []>} : vector<2x32xbf16>, vector<32x96xbf16>, vector<2x96xf32> -> vector<2x96xf32>
    %c2_i32 = arith.constant 2 : i32
    %21 = arith.muli %c0_i32, %c2_i32 : i32
    %22 = arith.index_cast %21 : i32 to index
    %c0_18 = arith.constant 0 : index
    %23 = vector.load %arg40[%22, %c0_18] : memref<16x192xf32, #tpu.memory_space<vmem>>, vector<2x96xf32>
    %c2_i32_19 = arith.constant 2 : i32
    %24 = arith.muli %16, %c2_i32_19 : i32
    %25 = arith.index_cast %24 : i32 to index
    %c96 = arith.constant 96 : index
    %26 = vector.load %arg40[%25, %c96] : memref<16x192xf32, #tpu.memory_space<vmem>>, vector<2x96xf32>
    %27 = vector.extract_strided_slice %23 {offsets = [0, 0], sizes = [2, 32], strides = [1, 1]} : vector<2x96xf32> to vector<2x32xf32>
    %28 = vector.extract_strided_slice %18 {offsets = [0, 0], sizes = [2, 32], strides = [1, 1]} : vector<2x96xf32> to vector<2x32xf32>
    %29 = arith.addf %27, %28 : vector<2x32xf32>
    %30 = arith.negf %29 : vector<2x32xf32>
    %31 = math.exp %30 : vector<2x32xf32>
    %cst_20 = arith.constant 1.000000e+00 : f32
    %32 = vector.broadcast %cst_20 : f32 to vector<2x32xf32>
    %33 = arith.addf %32, %31 : vector<2x32xf32>
    %34 = arith.divf %32, %33 : vector<2x32xf32>
    %35 = vector.extract_strided_slice %23 {offsets = [0, 32], sizes = [2, 32], strides = [1, 1]} : vector<2x96xf32> to vector<2x32xf32>
    %36 = vector.extract_strided_slice %18 {offsets = [0, 32], sizes = [2, 32], strides = [1, 1]} : vector<2x96xf32> to vector<2x32xf32>
    %37 = arith.addf %35, %36 : vector<2x32xf32>
    %38 = arith.negf %37 : vector<2x32xf32>
    %39 = math.exp %38 : vector<2x32xf32>
    %cst_21 = arith.constant 1.000000e+00 : f32
    %40 = vector.broadcast %cst_21 : f32 to vector<2x32xf32>
    %41 = arith.addf %40, %39 : vector<2x32xf32>
    %42 = arith.divf %40, %41 : vector<2x32xf32>
    %43 = vector.extract_strided_slice %23 {offsets = [0, 64], sizes = [2, 32], strides = [1, 1]} : vector<2x96xf32> to vector<2x32xf32>
    %44 = vector.extract_strided_slice %18 {offsets = [0, 64], sizes = [2, 32], strides = [1, 1]} : vector<2x96xf32> to vector<2x32xf32>
    %45 = arith.addf %44, %11 : vector<2x32xf32>
    %46 = arith.mulf %34, %45 : vector<2x32xf32>
    %47 = arith.addf %43, %46 : vector<2x32xf32>
    %48 = math.tanh %47 : vector<2x32xf32>
    %49 = vector.extract_strided_slice %26 {offsets = [0, 0], sizes = [2, 32], strides = [1, 1]} : vector<2x96xf32> to vector<2x32xf32>
    %50 = vector.extract_strided_slice %20 {offsets = [0, 0], sizes = [2, 32], strides = [1, 1]} : vector<2x96xf32> to vector<2x32xf32>
    %51 = arith.addf %49, %50 : vector<2x32xf32>
    %52 = arith.negf %51 : vector<2x32xf32>
    %53 = math.exp %52 : vector<2x32xf32>
    %cst_22 = arith.constant 1.000000e+00 : f32
    %54 = vector.broadcast %cst_22 : f32 to vector<2x32xf32>
    %55 = arith.addf %54, %53 : vector<2x32xf32>
    %56 = arith.divf %54, %55 : vector<2x32xf32>
    %57 = vector.extract_strided_slice %26 {offsets = [0, 32], sizes = [2, 32], strides = [1, 1]} : vector<2x96xf32> to vector<2x32xf32>
    %58 = vector.extract_strided_slice %20 {offsets = [0, 32], sizes = [2, 32], strides = [1, 1]} : vector<2x96xf32> to vector<2x32xf32>
    %59 = arith.addf %57, %58 : vector<2x32xf32>
    %60 = arith.negf %59 : vector<2x32xf32>
    %61 = math.exp %60 : vector<2x32xf32>
    %cst_23 = arith.constant 1.000000e+00 : f32
    %62 = vector.broadcast %cst_23 : f32 to vector<2x32xf32>
    %63 = arith.addf %62, %61 : vector<2x32xf32>
    %64 = arith.divf %62, %63 : vector<2x32xf32>
    %65 = vector.extract_strided_slice %26 {offsets = [0, 64], sizes = [2, 32], strides = [1, 1]} : vector<2x96xf32> to vector<2x32xf32>
    %66 = vector.extract_strided_slice %20 {offsets = [0, 64], sizes = [2, 32], strides = [1, 1]} : vector<2x96xf32> to vector<2x32xf32>
    %67 = arith.addf %66, %14 : vector<2x32xf32>
    %68 = arith.mulf %56, %67 : vector<2x32xf32>
    %69 = arith.addf %65, %68 : vector<2x32xf32>
    %70 = math.tanh %69 : vector<2x32xf32>
    %cst_24 = arith.constant 1.000000e+00 : f32
    %71 = vector.broadcast %cst_24 : f32 to vector<2x32xf32>
    %72 = arith.subf %71, %42 : vector<2x32xf32>
    %73 = arith.mulf %72, %48 : vector<2x32xf32>
    %74 = arith.mulf %42, %15 : vector<2x32xf32>
    %75 = arith.addf %73, %74 : vector<2x32xf32>
    %cst_25 = arith.constant 1.000000e+00 : f32
    %76 = vector.broadcast %cst_25 : f32 to vector<2x32xf32>
    %77 = arith.subf %76, %64 : vector<2x32xf32>
    %78 = arith.mulf %77, %70 : vector<2x32xf32>
    %79 = arith.mulf %64, %15 : vector<2x32xf32>
    %80 = arith.addf %78, %79 : vector<2x32xf32>
    %81 = arith.truncf %75 : vector<2x32xf32> to vector<2x32xbf16>
    %c2_i32_26 = arith.constant 2 : i32
    %82 = arith.muli %c0_i32, %c2_i32_26 : i32
    %83 = arith.index_cast %82 : i32 to index
    %c0_27 = arith.constant 0 : index
    %84 = vector.load %arg38[%83, %c0_27] : memref<16x64xbf16, #tpu.memory_space<vmem>>, vector<2x32xbf16>
    tpu.vector_store %arg38[%83, %c0_27], %81 {strides = array<i32>} : memref<16x64xbf16, #tpu.memory_space<vmem>>, vector<2x32xbf16>,
    %85 = arith.truncf %80 : vector<2x32xf32> to vector<2x32xbf16>
    %c2_i32_28 = arith.constant 2 : i32
    %86 = arith.muli %16, %c2_i32_28 : i32
    %87 = arith.index_cast %86 : i32 to index
    %c32 = arith.constant 32 : index
    %88 = vector.load %arg38[%87, %c32] : memref<16x64xbf16, #tpu.memory_space<vmem>>, vector<2x32xbf16>
    tpu.vector_store %arg38[%87, %c32], %85 {strides = array<i32>} : memref<16x64xbf16, #tpu.memory_space<vmem>>, vector<2x32xbf16>,
    %c1_i32 = arith.constant 1 : i32
    %c7_i32_29 = arith.constant 7 : i32
    %89 = arith.subi %c7_i32_29, %c1_i32 : i32
    %90 = arith.truncf %75 : vector<2x32xf32> to vector<2x32xbf16>
    %cst_30 = arith.constant dense<0.000000e+00> : vector<2x96xf32>
    %91 = tpu.matmul %90, %7, %cst_30 {dimension_numbers = #tpu.dot_dimension_numbers<[1], [0], [0], [1], [0, 0, 1, 1], [], []>} : vector<2x32xbf16>, vector<32x96xbf16>, vector<2x96xf32> -> vector<2x96xf32>
    %92 = arith.truncf %80 : vector<2x32xf32> to vector<2x32xbf16>
    %cst_31 = arith.constant dense<0.000000e+00> : vector<2x96xf32>
    %93 = tpu.matmul %92, %8, %cst_31 {dimension_numbers = #tpu.dot_dimension_numbers<[1], [0], [0], [1], [0, 0, 1, 1], [], []>} : vector<2x32xbf16>, vector<32x96xbf16>, vector<2x96xf32> -> vector<2x96xf32>
    %c2_i32_32 = arith.constant 2 : i32
    %94 = arith.muli %c1_i32, %c2_i32_32 : i32
    %95 = arith.index_cast %94 : i32 to index
    %c0_33 = arith.constant 0 : index
    %96 = vector.load %arg40[%95, %c0_33] : memref<16x192xf32, #tpu.memory_space<vmem>>, vector<2x96xf32>
    %c2_i32_34 = arith.constant 2 : i32
    %97 = arith.muli %89, %c2_i32_34 : i32
    %98 = arith.index_cast %97 : i32 to index
    %c96_35 = arith.constant 96 : index
    %99 = vector.load %arg40[%98, %c96_35] : memref<16x192xf32, #tpu.memory_space<vmem>>, vector<2x96xf32>
    %100 = vector.extract_strided_slice %96 {offsets = [0, 0], sizes = [2, 32], strides = [1, 1]} : vector<2x96xf32> to vector<2x32xf32>
    %101 = vector.extract_strided_slice %91 {offsets = [0, 0], sizes = [2, 32], strides = [1, 1]} : vector<2x96xf32> to vector<2x32xf32>
    %102 = arith.addf %100, %101 : vector<2x32xf32>
    %103 = arith.negf %102 : vector<2x32xf32>
    %104 = math.exp %103 : vector<2x32xf32>
    %cst_36 = arith.constant 1.000000e+00 : f32
    %105 = vector.broadcast %cst_36 : f32 to vector<2x32xf32>
    %106 = arith.addf %105, %104 : vector<2x32xf32>
    %107 = arith.divf %105, %106 : vector<2x32xf32>
    %108 = vector.extract_strided_slice %96 {offsets = [0, 32], sizes = [2, 32], strides = [1, 1]} : vector<2x96xf32> to vector<2x32xf32>
    %109 = vector.extract_strided_slice %91 {offsets = [0, 32], sizes = [2, 32], strides = [1, 1]} : vector<2x96xf32> to vector<2x32xf32>
    %110 = arith.addf %108, %109 : vector<2x32xf32>
    %111 = arith.negf %110 : vector<2x32xf32>
    %112 = math.exp %111 : vector<2x32xf32>
    %cst_37 = arith.constant 1.000000e+00 : f32
    %113 = vector.broadcast %cst_37 : f32 to vector<2x32xf32>
    %114 = arith.addf %113, %112 : vector<2x32xf32>
    %115 = arith.divf %113, %114 : vector<2x32xf32>
    %116 = vector.extract_strided_slice %96 {offsets = [0, 64], sizes = [2, 32], strides = [1, 1]} : vector<2x96xf32> to vector<2x32xf32>
    %117 = vector.extract_strided_slice %91 {offsets = [0, 64], sizes = [2, 32], strides = [1, 1]} : vector<2x96xf32> to vector<2x32xf32>
    %118 = arith.addf %117, %11 : vector<2x32xf32>
    %119 = arith.mulf %107, %118 : vector<2x32xf32>
    %120 = arith.addf %116, %119 : vector<2x32xf32>
    %121 = math.tanh %120 : vector<2x32xf32>
    %122 = vector.extract_strided_slice %99 {offsets = [0, 0], sizes = [2, 32], strides = [1, 1]} : vector<2x96xf32> to vector<2x32xf32>
    %123 = vector.extract_strided_slice %93 {offsets = [0, 0], sizes = [2, 32], strides = [1, 1]} : vector<2x96xf32> to vector<2x32xf32>
    %124 = arith.addf %122, %123 : vector<2x32xf32>
    %125 = arith.negf %124 : vector<2x32xf32>
    %126 = math.exp %125 : vector<2x32xf32>
    %cst_38 = arith.constant 1.000000e+00 : f32
    %127 = vector.broadcast %cst_38 : f32 to vector<2x32xf32>
    %128 = arith.addf %127, %126 : vector<2x32xf32>
    %129 = arith.divf %127, %128 : vector<2x32xf32>
    %130 = vector.extract_strided_slice %99 {offsets = [0, 32], sizes = [2, 32], strides = [1, 1]} : vector<2x96xf32> to vector<2x32xf32>
    %131 = vector.extract_strided_slice %93 {offsets = [0, 32], sizes = [2, 32], strides = [1, 1]} : vector<2x96xf32> to vector<2x32xf32>
    %132 = arith.addf %130, %131 : vector<2x32xf32>
    %133 = arith.negf %132 : vector<2x32xf32>
    %134 = math.exp %133 : vector<2x32xf32>
    %cst_39 = arith.constant 1.000000e+00 : f32
    %135 = vector.broadcast %cst_39 : f32 to vector<2x32xf32>
    %136 = arith.addf %135, %134 : vector<2x32xf32>
    %137 = arith.divf %135, %136 : vector<2x32xf32>
    %138 = vector.extract_strided_slice %99 {offsets = [0, 64], sizes = [2, 32], strides = [1, 1]} : vector<2x96xf32> to vector<2x32xf32>
    %139 = vector.extract_strided_slice %93 {offsets = [0, 64], sizes = [2, 32], strides = [1, 1]} : vector<2x96xf32> to vector<2x32xf32>
    %140 = arith.addf %139, %14 : vector<2x32xf32>
    %141 = arith.mulf %129, %140 : vector<2x32xf32>
    %142 = arith.addf %138, %141 : vector<2x32xf32>
    %143 = math.tanh %142 : vector<2x32xf32>
    %cst_40 = arith.constant 1.000000e+00 : f32
    %144 = vector.broadcast %cst_40 : f32 to vector<2x32xf32>
    %145 = arith.subf %144, %115 : vector<2x32xf32>
    %146 = arith.mulf %145, %121 : vector<2x32xf32>
    %147 = arith.mulf %115, %75 : vector<2x32xf32>
    %148 = arith.addf %146, %147 : vector<2x32xf32>
    %cst_41 = arith.constant 1.000000e+00 : f32
    %149 = vector.broadcast %cst_41 : f32 to vector<2x32xf32>
    %150 = arith.subf %149, %137 : vector<2x32xf32>
    %151 = arith.mulf %150, %143 : vector<2x32xf32>
    %152 = arith.mulf %137, %80 : vector<2x32xf32>
    %153 = arith.addf %151, %152 : vector<2x32xf32>
    %154 = arith.truncf %148 : vector<2x32xf32> to vector<2x32xbf16>
    %c2_i32_42 = arith.constant 2 : i32
    %155 = arith.muli %c1_i32, %c2_i32_42 : i32
    %156 = arith.index_cast %155 : i32 to index
    %c0_43 = arith.constant 0 : index
    %157 = vector.load %arg38[%156, %c0_43] : memref<16x64xbf16, #tpu.memory_space<vmem>>, vector<2x32xbf16>
    tpu.vector_store %arg38[%156, %c0_43], %154 {strides = array<i32>} : memref<16x64xbf16, #tpu.memory_space<vmem>>, vector<2x32xbf16>,
    %158 = arith.truncf %153 : vector<2x32xf32> to vector<2x32xbf16>
    %c2_i32_44 = arith.constant 2 : i32
    %159 = arith.muli %89, %c2_i32_44 : i32
    %160 = arith.index_cast %159 : i32 to index
    %c32_45 = arith.constant 32 : index
    %161 = vector.load %arg38[%160, %c32_45] : memref<16x64xbf16, #tpu.memory_space<vmem>>, vector<2x32xbf16>
    tpu.vector_store %arg38[%160, %c32_45], %158 {strides = array<i32>} : memref<16x64xbf16, #tpu.memory_space<vmem>>, vector<2x32xbf16>,
    %c2_i32_46 = arith.constant 2 : i32
    %c7_i32_47 = arith.constant 7 : i32
    %162 = arith.subi %c7_i32_47, %c2_i32_46 : i32
    %163 = arith.truncf %148 : vector<2x32xf32> to vector<2x32xbf16>
    %cst_48 = arith.constant dense<0.000000e+00> : vector<2x96xf32>
    %164 = tpu.matmul %163, %7, %cst_48 {dimension_numbers = #tpu.dot_dimension_numbers<[1], [0], [0], [1], [0, 0, 1, 1], [], []>} : vector<2x32xbf16>, vector<32x96xbf16>, vector<2x96xf32> -> vector<2x96xf32>
    %165 = arith.truncf %153 : vector<2x32xf32> to vector<2x32xbf16>
    %cst_49 = arith.constant dense<0.000000e+00> : vector<2x96xf32>
    %166 = tpu.matmul %165, %8, %cst_49 {dimension_numbers = #tpu.dot_dimension_numbers<[1], [0], [0], [1], [0, 0, 1, 1], [], []>} : vector<2x32xbf16>, vector<32x96xbf16>, vector<2x96xf32> -> vector<2x96xf32>
    %c2_i32_50 = arith.constant 2 : i32
    %167 = arith.muli %c2_i32_46, %c2_i32_50 : i32
    %168 = arith.index_cast %167 : i32 to index
    %c0_51 = arith.constant 0 : index
    %169 = vector.load %arg40[%168, %c0_51] : memref<16x192xf32, #tpu.memory_space<vmem>>, vector<2x96xf32>
    %c2_i32_52 = arith.constant 2 : i32
    %170 = arith.muli %162, %c2_i32_52 : i32
    %171 = arith.index_cast %170 : i32 to index
    %c96_53 = arith.constant 96 : index
    %172 = vector.load %arg40[%171, %c96_53] : memref<16x192xf32, #tpu.memory_space<vmem>>, vector<2x96xf32>
    %173 = vector.extract_strided_slice %169 {offsets = [0, 0], sizes = [2, 32], strides = [1, 1]} : vector<2x96xf32> to vector<2x32xf32>
    %174 = vector.extract_strided_slice %164 {offsets = [0, 0], sizes = [2, 32], strides = [1, 1]} : vector<2x96xf32> to vector<2x32xf32>
    %175 = arith.addf %173, %174 : vector<2x32xf32>
    %176 = arith.negf %175 : vector<2x32xf32>
    %177 = math.exp %176 : vector<2x32xf32>
    %cst_54 = arith.constant 1.000000e+00 : f32
    %178 = vector.broadcast %cst_54 : f32 to vector<2x32xf32>
    %179 = arith.addf %178, %177 : vector<2x32xf32>
    %180 = arith.divf %178, %179 : vector<2x32xf32>
    %181 = vector.extract_strided_slice %169 {offsets = [0, 32], sizes = [2, 32], strides = [1, 1]} : vector<2x96xf32> to vector<2x32xf32>
    %182 = vector.extract_strided_slice %164 {offsets = [0, 32], sizes = [2, 32], strides = [1, 1]} : vector<2x96xf32> to vector<2x32xf32>
    %183 = arith.addf %181, %182 : vector<2x32xf32>
    %184 = arith.negf %183 : vector<2x32xf32>
    %185 = math.exp %184 : vector<2x32xf32>
    %cst_55 = arith.constant 1.000000e+00 : f32
    %186 = vector.broadcast %cst_55 : f32 to vector<2x32xf32>
    %187 = arith.addf %186, %185 : vector<2x32xf32>
    %188 = arith.divf %186, %187 : vector<2x32xf32>
    %189 = vector.extract_strided_slice %169 {offsets = [0, 64], sizes = [2, 32], strides = [1, 1]} : vector<2x96xf32> to vector<2x32xf32>
    %190 = vector.extract_strided_slice %164 {offsets = [0, 64], sizes = [2, 32], strides = [1, 1]} : vector<2x96xf32> to vector<2x32xf32>
    %191 = arith.addf %190, %11 : vector<2x32xf32>
    %192 = arith.mulf %180, %191 : vector<2x32xf32>
    %193 = arith.addf %189, %192 : vector<2x32xf32>
    %194 = math.tanh %193 : vector<2x32xf32>
    %195 = vector.extract_strided_slice %172 {offsets = [0, 0], sizes = [2, 32], strides = [1, 1]} : vector<2x96xf32> to vector<2x32xf32>
    %196 = vector.extract_strided_slice %166 {offsets = [0, 0], sizes = [2, 32], strides = [1, 1]} : vector<2x96xf32> to vector<2x32xf32>
    %197 = arith.addf %195, %196 : vector<2x32xf32>
    %198 = arith.negf %197 : vector<2x32xf32>
    %199 = math.exp %198 : vector<2x32xf32>
    %cst_56 = arith.constant 1.000000e+00 : f32
    %200 = vector.broadcast %cst_56 : f32 to vector<2x32xf32>
    %201 = arith.addf %200, %199 : vector<2x32xf32>
    %202 = arith.divf %200, %201 : vector<2x32xf32>
    %203 = vector.extract_strided_slice %172 {offsets = [0, 32], sizes = [2, 32], strides = [1, 1]} : vector<2x96xf32> to vector<2x32xf32>
    %204 = vector.extract_strided_slice %166 {offsets = [0, 32], sizes = [2, 32], strides = [1, 1]} : vector<2x96xf32> to vector<2x32xf32>
    %205 = arith.addf %203, %204 : vector<2x32xf32>
    %206 = arith.negf %205 : vector<2x32xf32>
    %207 = math.exp %206 : vector<2x32xf32>
    %cst_57 = arith.constant 1.000000e+00 : f32
    %208 = vector.broadcast %cst_57 : f32 to vector<2x32xf32>
    %209 = arith.addf %208, %207 : vector<2x32xf32>
    %210 = arith.divf %208, %209 : vector<2x32xf32>
    %211 = vector.extract_strided_slice %172 {offsets = [0, 64], sizes = [2, 32], strides = [1, 1]} : vector<2x96xf32> to vector<2x32xf32>
    %212 = vector.extract_strided_slice %166 {offsets = [0, 64], sizes = [2, 32], strides = [1, 1]} : vector<2x96xf32> to vector<2x32xf32>
    %213 = arith.addf %212, %14 : vector<2x32xf32>
    %214 = arith.mulf %202, %213 : vector<2x32xf32>
    %215 = arith.addf %211, %214 : vector<2x32xf32>
    %216 = math.tanh %215 : vector<2x32xf32>
    %cst_58 = arith.constant 1.000000e+00 : f32
    %217 = vector.broadcast %cst_58 : f32 to vector<2x32xf32>
    %218 = arith.subf %217, %188 : vector<2x32xf32>
    %219 = arith.mulf %218, %194 : vector<2x32xf32>
    %220 = arith.mulf %188, %148 : vector<2x32xf32>
    %221 = arith.addf %219, %220 : vector<2x32xf32>
    %cst_59 = arith.constant 1.000000e+00 : f32
    %222 = vector.broadcast %cst_59 : f32 to vector<2x32xf32>
    %223 = arith.subf %222, %210 : vector<2x32xf32>
    %224 = arith.mulf %223, %216 : vector<2x32xf32>
    %225 = arith.mulf %210, %153 : vector<2x32xf32>
    %226 = arith.addf %224, %225 : vector<2x32xf32>
    %227 = arith.truncf %221 : vector<2x32xf32> to vector<2x32xbf16>
    %c2_i32_60 = arith.constant 2 : i32
    %228 = arith.muli %c2_i32_46, %c2_i32_60 : i32
    %229 = arith.index_cast %228 : i32 to index
    %c0_61 = arith.constant 0 : index
    %230 = vector.load %arg38[%229, %c0_61] : memref<16x64xbf16, #tpu.memory_space<vmem>>, vector<2x32xbf16>
    tpu.vector_store %arg38[%229, %c0_61], %227 {strides = array<i32>} : memref<16x64xbf16, #tpu.memory_space<vmem>>, vector<2x32xbf16>,
    %231 = arith.truncf %226 : vector<2x32xf32> to vector<2x32xbf16>
    %c2_i32_62 = arith.constant 2 : i32
    %232 = arith.muli %162, %c2_i32_62 : i32
    %233 = arith.index_cast %232 : i32 to index
    %c32_63 = arith.constant 32 : index
    %234 = vector.load %arg38[%233, %c32_63] : memref<16x64xbf16, #tpu.memory_space<vmem>>, vector<2x32xbf16>
    tpu.vector_store %arg38[%233, %c32_63], %231 {strides = array<i32>} : memref<16x64xbf16, #tpu.memory_space<vmem>>, vector<2x32xbf16>,
    %c3_i32 = arith.constant 3 : i32
    %c7_i32_64 = arith.constant 7 : i32
    %235 = arith.subi %c7_i32_64, %c3_i32 : i32
    %236 = arith.truncf %221 : vector<2x32xf32> to vector<2x32xbf16>
    %cst_65 = arith.constant dense<0.000000e+00> : vector<2x96xf32>
    %237 = tpu.matmul %236, %7, %cst_65 {dimension_numbers = #tpu.dot_dimension_numbers<[1], [0], [0], [1], [0, 0, 1, 1], [], []>} : vector<2x32xbf16>, vector<32x96xbf16>, vector<2x96xf32> -> vector<2x96xf32>
    %238 = arith.truncf %226 : vector<2x32xf32> to vector<2x32xbf16>
    %cst_66 = arith.constant dense<0.000000e+00> : vector<2x96xf32>
    %239 = tpu.matmul %238, %8, %cst_66 {dimension_numbers = #tpu.dot_dimension_numbers<[1], [0], [0], [1], [0, 0, 1, 1], [], []>} : vector<2x32xbf16>, vector<32x96xbf16>, vector<2x96xf32> -> vector<2x96xf32>
    %c2_i32_67 = arith.constant 2 : i32
    %240 = arith.muli %c3_i32, %c2_i32_67 : i32
    %241 = arith.index_cast %240 : i32 to index
    %c0_68 = arith.constant 0 : index
    %242 = vector.load %arg40[%241, %c0_68] : memref<16x192xf32, #tpu.memory_space<vmem>>, vector<2x96xf32>
    %c2_i32_69 = arith.constant 2 : i32
    %243 = arith.muli %235, %c2_i32_69 : i32
    %244 = arith.index_cast %243 : i32 to index
    %c96_70 = arith.constant 96 : index
    %245 = vector.load %arg40[%244, %c96_70] : memref<16x192xf32, #tpu.memory_space<vmem>>, vector<2x96xf32>
    %246 = vector.extract_strided_slice %242 {offsets = [0, 0], sizes = [2, 32], strides = [1, 1]} : vector<2x96xf32> to vector<2x32xf32>
    %247 = vector.extract_strided_slice %237 {offsets = [0, 0], sizes = [2, 32], strides = [1, 1]} : vector<2x96xf32> to vector<2x32xf32>
    %248 = arith.addf %246, %247 : vector<2x32xf32>
    %249 = arith.negf %248 : vector<2x32xf32>
    %250 = math.exp %249 : vector<2x32xf32>
    %cst_71 = arith.constant 1.000000e+00 : f32
    %251 = vector.broadcast %cst_71 : f32 to vector<2x32xf32>
    %252 = arith.addf %251, %250 : vector<2x32xf32>
    %253 = arith.divf %251, %252 : vector<2x32xf32>
    %254 = vector.extract_strided_slice %242 {offsets = [0, 32], sizes = [2, 32], strides = [1, 1]} : vector<2x96xf32> to vector<2x32xf32>
    %255 = vector.extract_strided_slice %237 {offsets = [0, 32], sizes = [2, 32], strides = [1, 1]} : vector<2x96xf32> to vector<2x32xf32>
    %256 = arith.addf %254, %255 : vector<2x32xf32>
    %257 = arith.negf %256 : vector<2x32xf32>
    %258 = math.exp %257 : vector<2x32xf32>
    %cst_72 = arith.constant 1.000000e+00 : f32
    %259 = vector.broadcast %cst_72 : f32 to vector<2x32xf32>
    %260 = arith.addf %259, %258 : vector<2x32xf32>
    %261 = arith.divf %259, %260 : vector<2x32xf32>
    %262 = vector.extract_strided_slice %242 {offsets = [0, 64], sizes = [2, 32], strides = [1, 1]} : vector<2x96xf32> to vector<2x32xf32>
    %263 = vector.extract_strided_slice %237 {offsets = [0, 64], sizes = [2, 32], strides = [1, 1]} : vector<2x96xf32> to vector<2x32xf32>
    %264 = arith.addf %263, %11 : vector<2x32xf32>
    %265 = arith.mulf %253, %264 : vector<2x32xf32>
    %266 = arith.addf %262, %265 : vector<2x32xf32>
    %267 = math.tanh %266 : vector<2x32xf32>
    %268 = vector.extract_strided_slice %245 {offsets = [0, 0], sizes = [2, 32], strides = [1, 1]} : vector<2x96xf32> to vector<2x32xf32>
    %269 = vector.extract_strided_slice %239 {offsets = [0, 0], sizes = [2, 32], strides = [1, 1]} : vector<2x96xf32> to vector<2x32xf32>
    %270 = arith.addf %268, %269 : vector<2x32xf32>
    %271 = arith.negf %270 : vector<2x32xf32>
    %272 = math.exp %271 : vector<2x32xf32>
    %cst_73 = arith.constant 1.000000e+00 : f32
    %273 = vector.broadcast %cst_73 : f32 to vector<2x32xf32>
    %274 = arith.addf %273, %272 : vector<2x32xf32>
    %275 = arith.divf %273, %274 : vector<2x32xf32>
    %276 = vector.extract_strided_slice %245 {offsets = [0, 32], sizes = [2, 32], strides = [1, 1]} : vector<2x96xf32> to vector<2x32xf32>
    %277 = vector.extract_strided_slice %239 {offsets = [0, 32], sizes = [2, 32], strides = [1, 1]} : vector<2x96xf32> to vector<2x32xf32>
    %278 = arith.addf %276, %277 : vector<2x32xf32>
    %279 = arith.negf %278 : vector<2x32xf32>
    %280 = math.exp %279 : vector<2x32xf32>
    %cst_74 = arith.constant 1.000000e+00 : f32
    %281 = vector.broadcast %cst_74 : f32 to vector<2x32xf32>
    %282 = arith.addf %281, %280 : vector<2x32xf32>
    %283 = arith.divf %281, %282 : vector<2x32xf32>
    %284 = vector.extract_strided_slice %245 {offsets = [0, 64], sizes = [2, 32], strides = [1, 1]} : vector<2x96xf32> to vector<2x32xf32>
    %285 = vector.extract_strided_slice %239 {offsets = [0, 64], sizes = [2, 32], strides = [1, 1]} : vector<2x96xf32> to vector<2x32xf32>
    %286 = arith.addf %285, %14 : vector<2x32xf32>
    %287 = arith.mulf %275, %286 : vector<2x32xf32>
    %288 = arith.addf %284, %287 : vector<2x32xf32>
    %289 = math.tanh %288 : vector<2x32xf32>
    %cst_75 = arith.constant 1.000000e+00 : f32
    %290 = vector.broadcast %cst_75 : f32 to vector<2x32xf32>
    %291 = arith.subf %290, %261 : vector<2x32xf32>
    %292 = arith.mulf %291, %267 : vector<2x32xf32>
    %293 = arith.mulf %261, %221 : vector<2x32xf32>
    %294 = arith.addf %292, %293 : vector<2x32xf32>
    %cst_76 = arith.constant 1.000000e+00 : f32
    %295 = vector.broadcast %cst_76 : f32 to vector<2x32xf32>
    %296 = arith.subf %295, %283 : vector<2x32xf32>
    %297 = arith.mulf %296, %289 : vector<2x32xf32>
    %298 = arith.mulf %283, %226 : vector<2x32xf32>
    %299 = arith.addf %297, %298 : vector<2x32xf32>
    %300 = arith.truncf %294 : vector<2x32xf32> to vector<2x32xbf16>
    %c2_i32_77 = arith.constant 2 : i32
    %301 = arith.muli %c3_i32, %c2_i32_77 : i32
    %302 = arith.index_cast %301 : i32 to index
    %c0_78 = arith.constant 0 : index
    %303 = vector.load %arg38[%302, %c0_78] : memref<16x64xbf16, #tpu.memory_space<vmem>>, vector<2x32xbf16>
    tpu.vector_store %arg38[%302, %c0_78], %300 {strides = array<i32>} : memref<16x64xbf16, #tpu.memory_space<vmem>>, vector<2x32xbf16>,
    %304 = arith.truncf %299 : vector<2x32xf32> to vector<2x32xbf16>
    %c2_i32_79 = arith.constant 2 : i32
    %305 = arith.muli %235, %c2_i32_79 : i32
    %306 = arith.index_cast %305 : i32 to index
    %c32_80 = arith.constant 32 : index
    %307 = vector.load %arg38[%306, %c32_80] : memref<16x64xbf16, #tpu.memory_space<vmem>>, vector<2x32xbf16>
    tpu.vector_store %arg38[%306, %c32_80], %304 {strides = array<i32>} : memref<16x64xbf16, #tpu.memory_space<vmem>>, vector<2x32xbf16>,
    %c4_i32 = arith.constant 4 : i32
    %c7_i32_81 = arith.constant 7 : i32
    %308 = arith.subi %c7_i32_81, %c4_i32 : i32
    %309 = arith.truncf %294 : vector<2x32xf32> to vector<2x32xbf16>
    %cst_82 = arith.constant dense<0.000000e+00> : vector<2x96xf32>
    %310 = tpu.matmul %309, %7, %cst_82 {dimension_numbers = #tpu.dot_dimension_numbers<[1], [0], [0], [1], [0, 0, 1, 1], [], []>} : vector<2x32xbf16>, vector<32x96xbf16>, vector<2x96xf32> -> vector<2x96xf32>
    %311 = arith.truncf %299 : vector<2x32xf32> to vector<2x32xbf16>
    %cst_83 = arith.constant dense<0.000000e+00> : vector<2x96xf32>
    %312 = tpu.matmul %311, %8, %cst_83 {dimension_numbers = #tpu.dot_dimension_numbers<[1], [0], [0], [1], [0, 0, 1, 1], [], []>} : vector<2x32xbf16>, vector<32x96xbf16>, vector<2x96xf32> -> vector<2x96xf32>
    %c2_i32_84 = arith.constant 2 : i32
    %313 = arith.muli %c4_i32, %c2_i32_84 : i32
    %314 = arith.index_cast %313 : i32 to index
    %c0_85 = arith.constant 0 : index
    %315 = vector.load %arg40[%314, %c0_85] : memref<16x192xf32, #tpu.memory_space<vmem>>, vector<2x96xf32>
    %c2_i32_86 = arith.constant 2 : i32
    %316 = arith.muli %308, %c2_i32_86 : i32
    %317 = arith.index_cast %316 : i32 to index
    %c96_87 = arith.constant 96 : index
    %318 = vector.load %arg40[%317, %c96_87] : memref<16x192xf32, #tpu.memory_space<vmem>>, vector<2x96xf32>
    %319 = vector.extract_strided_slice %315 {offsets = [0, 0], sizes = [2, 32], strides = [1, 1]} : vector<2x96xf32> to vector<2x32xf32>
    %320 = vector.extract_strided_slice %310 {offsets = [0, 0], sizes = [2, 32], strides = [1, 1]} : vector<2x96xf32> to vector<2x32xf32>
    %321 = arith.addf %319, %320 : vector<2x32xf32>
    %322 = arith.negf %321 : vector<2x32xf32>
    %323 = math.exp %322 : vector<2x32xf32>
    %cst_88 = arith.constant 1.000000e+00 : f32
    %324 = vector.broadcast %cst_88 : f32 to vector<2x32xf32>
    %325 = arith.addf %324, %323 : vector<2x32xf32>
    %326 = arith.divf %324, %325 : vector<2x32xf32>
    %327 = vector.extract_strided_slice %315 {offsets = [0, 32], sizes = [2, 32], strides = [1, 1]} : vector<2x96xf32> to vector<2x32xf32>
    %328 = vector.extract_strided_slice %310 {offsets = [0, 32], sizes = [2, 32], strides = [1, 1]} : vector<2x96xf32> to vector<2x32xf32>
    %329 = arith.addf %327, %328 : vector<2x32xf32>
    %330 = arith.negf %329 : vector<2x32xf32>
    %331 = math.exp %330 : vector<2x32xf32>
    %cst_89 = arith.constant 1.000000e+00 : f32
    %332 = vector.broadcast %cst_89 : f32 to vector<2x32xf32>
    %333 = arith.addf %332, %331 : vector<2x32xf32>
    %334 = arith.divf %332, %333 : vector<2x32xf32>
    %335 = vector.extract_strided_slice %315 {offsets = [0, 64], sizes = [2, 32], strides = [1, 1]} : vector<2x96xf32> to vector<2x32xf32>
    %336 = vector.extract_strided_slice %310 {offsets = [0, 64], sizes = [2, 32], strides = [1, 1]} : vector<2x96xf32> to vector<2x32xf32>
    %337 = arith.addf %336, %11 : vector<2x32xf32>
    %338 = arith.mulf %326, %337 : vector<2x32xf32>
    %339 = arith.addf %335, %338 : vector<2x32xf32>
    %340 = math.tanh %339 : vector<2x32xf32>
    %341 = vector.extract_strided_slice %318 {offsets = [0, 0], sizes = [2, 32], strides = [1, 1]} : vector<2x96xf32> to vector<2x32xf32>
    %342 = vector.extract_strided_slice %312 {offsets = [0, 0], sizes = [2, 32], strides = [1, 1]} : vector<2x96xf32> to vector<2x32xf32>
    %343 = arith.addf %341, %342 : vector<2x32xf32>
    %344 = arith.negf %343 : vector<2x32xf32>
    %345 = math.exp %344 : vector<2x32xf32>
    %cst_90 = arith.constant 1.000000e+00 : f32
    %346 = vector.broadcast %cst_90 : f32 to vector<2x32xf32>
    %347 = arith.addf %346, %345 : vector<2x32xf32>
    %348 = arith.divf %346, %347 : vector<2x32xf32>
    %349 = vector.extract_strided_slice %318 {offsets = [0, 32], sizes = [2, 32], strides = [1, 1]} : vector<2x96xf32> to vector<2x32xf32>
    %350 = vector.extract_strided_slice %312 {offsets = [0, 32], sizes = [2, 32], strides = [1, 1]} : vector<2x96xf32> to vector<2x32xf32>
    %351 = arith.addf %349, %350 : vector<2x32xf32>
    %352 = arith.negf %351 : vector<2x32xf32>
    %353 = math.exp %352 : vector<2x32xf32>
    %cst_91 = arith.constant 1.000000e+00 : f32
    %354 = vector.broadcast %cst_91 : f32 to vector<2x32xf32>
    %355 = arith.addf %354, %353 : vector<2x32xf32>
    %356 = arith.divf %354, %355 : vector<2x32xf32>
    %357 = vector.extract_strided_slice %318 {offsets = [0, 64], sizes = [2, 32], strides = [1, 1]} : vector<2x96xf32> to vector<2x32xf32>
    %358 = vector.extract_strided_slice %312 {offsets = [0, 64], sizes = [2, 32], strides = [1, 1]} : vector<2x96xf32> to vector<2x32xf32>
    %359 = arith.addf %358, %14 : vector<2x32xf32>
    %360 = arith.mulf %348, %359 : vector<2x32xf32>
    %361 = arith.addf %357, %360 : vector<2x32xf32>
    %362 = math.tanh %361 : vector<2x32xf32>
    %cst_92 = arith.constant 1.000000e+00 : f32
    %363 = vector.broadcast %cst_92 : f32 to vector<2x32xf32>
    %364 = arith.subf %363, %334 : vector<2x32xf32>
    %365 = arith.mulf %364, %340 : vector<2x32xf32>
    %366 = arith.mulf %334, %294 : vector<2x32xf32>
    %367 = arith.addf %365, %366 : vector<2x32xf32>
    %cst_93 = arith.constant 1.000000e+00 : f32
    %368 = vector.broadcast %cst_93 : f32 to vector<2x32xf32>
    %369 = arith.subf %368, %356 : vector<2x32xf32>
    %370 = arith.mulf %369, %362 : vector<2x32xf32>
    %371 = arith.mulf %356, %299 : vector<2x32xf32>
    %372 = arith.addf %370, %371 : vector<2x32xf32>
    %373 = arith.truncf %367 : vector<2x32xf32> to vector<2x32xbf16>
    %c2_i32_94 = arith.constant 2 : i32
    %374 = arith.muli %c4_i32, %c2_i32_94 : i32
    %375 = arith.index_cast %374 : i32 to index
    %c0_95 = arith.constant 0 : index
    %376 = vector.load %arg38[%375, %c0_95] : memref<16x64xbf16, #tpu.memory_space<vmem>>, vector<2x32xbf16>
    tpu.vector_store %arg38[%375, %c0_95], %373 {strides = array<i32>} : memref<16x64xbf16, #tpu.memory_space<vmem>>, vector<2x32xbf16>,
    %377 = arith.truncf %372 : vector<2x32xf32> to vector<2x32xbf16>
    %c2_i32_96 = arith.constant 2 : i32
    %378 = arith.muli %308, %c2_i32_96 : i32
    %379 = arith.index_cast %378 : i32 to index
    %c32_97 = arith.constant 32 : index
    %380 = vector.load %arg38[%379, %c32_97] : memref<16x64xbf16, #tpu.memory_space<vmem>>, vector<2x32xbf16>
    tpu.vector_store %arg38[%379, %c32_97], %377 {strides = array<i32>} : memref<16x64xbf16, #tpu.memory_space<vmem>>, vector<2x32xbf16>,
    %c5_i32 = arith.constant 5 : i32
    %c7_i32_98 = arith.constant 7 : i32
    %381 = arith.subi %c7_i32_98, %c5_i32 : i32
    %382 = arith.truncf %367 : vector<2x32xf32> to vector<2x32xbf16>
    %cst_99 = arith.constant dense<0.000000e+00> : vector<2x96xf32>
    %383 = tpu.matmul %382, %7, %cst_99 {dimension_numbers = #tpu.dot_dimension_numbers<[1], [0], [0], [1], [0, 0, 1, 1], [], []>} : vector<2x32xbf16>, vector<32x96xbf16>, vector<2x96xf32> -> vector<2x96xf32>
    %384 = arith.truncf %372 : vector<2x32xf32> to vector<2x32xbf16>
    %cst_100 = arith.constant dense<0.000000e+00> : vector<2x96xf32>
    %385 = tpu.matmul %384, %8, %cst_100 {dimension_numbers = #tpu.dot_dimension_numbers<[1], [0], [0], [1], [0, 0, 1, 1], [], []>} : vector<2x32xbf16>, vector<32x96xbf16>, vector<2x96xf32> -> vector<2x96xf32>
    %c2_i32_101 = arith.constant 2 : i32
    %386 = arith.muli %c5_i32, %c2_i32_101 : i32
    %387 = arith.index_cast %386 : i32 to index
    %c0_102 = arith.constant 0 : index
    %388 = vector.load %arg40[%387, %c0_102] : memref<16x192xf32, #tpu.memory_space<vmem>>, vector<2x96xf32>
    %c2_i32_103 = arith.constant 2 : i32
    %389 = arith.muli %381, %c2_i32_103 : i32
    %390 = arith.index_cast %389 : i32 to index
    %c96_104 = arith.constant 96 : index
    %391 = vector.load %arg40[%390, %c96_104] : memref<16x192xf32, #tpu.memory_space<vmem>>, vector<2x96xf32>
    %392 = vector.extract_strided_slice %388 {offsets = [0, 0], sizes = [2, 32], strides = [1, 1]} : vector<2x96xf32> to vector<2x32xf32>
    %393 = vector.extract_strided_slice %383 {offsets = [0, 0], sizes = [2, 32], strides = [1, 1]} : vector<2x96xf32> to vector<2x32xf32>
    %394 = arith.addf %392, %393 : vector<2x32xf32>
    %395 = arith.negf %394 : vector<2x32xf32>
    %396 = math.exp %395 : vector<2x32xf32>
    %cst_105 = arith.constant 1.000000e+00 : f32
    %397 = vector.broadcast %cst_105 : f32 to vector<2x32xf32>
    %398 = arith.addf %397, %396 : vector<2x32xf32>
    %399 = arith.divf %397, %398 : vector<2x32xf32>
    %400 = vector.extract_strided_slice %388 {offsets = [0, 32], sizes = [2, 32], strides = [1, 1]} : vector<2x96xf32> to vector<2x32xf32>
    %401 = vector.extract_strided_slice %383 {offsets = [0, 32], sizes = [2, 32], strides = [1, 1]} : vector<2x96xf32> to vector<2x32xf32>
    %402 = arith.addf %400, %401 : vector<2x32xf32>
    %403 = arith.negf %402 : vector<2x32xf32>
    %404 = math.exp %403 : vector<2x32xf32>
    %cst_106 = arith.constant 1.000000e+00 : f32
    %405 = vector.broadcast %cst_106 : f32 to vector<2x32xf32>
    %406 = arith.addf %405, %404 : vector<2x32xf32>
    %407 = arith.divf %405, %406 : vector<2x32xf32>
    %408 = vector.extract_strided_slice %388 {offsets = [0, 64], sizes = [2, 32], strides = [1, 1]} : vector<2x96xf32> to vector<2x32xf32>
    %409 = vector.extract_strided_slice %383 {offsets = [0, 64], sizes = [2, 32], strides = [1, 1]} : vector<2x96xf32> to vector<2x32xf32>
    %410 = arith.addf %409, %11 : vector<2x32xf32>
    %411 = arith.mulf %399, %410 : vector<2x32xf32>
    %412 = arith.addf %408, %411 : vector<2x32xf32>
    %413 = math.tanh %412 : vector<2x32xf32>
    %414 = vector.extract_strided_slice %391 {offsets = [0, 0], sizes = [2, 32], strides = [1, 1]} : vector<2x96xf32> to vector<2x32xf32>
    %415 = vector.extract_strided_slice %385 {offsets = [0, 0], sizes = [2, 32], strides = [1, 1]} : vector<2x96xf32> to vector<2x32xf32>
    %416 = arith.addf %414, %415 : vector<2x32xf32>
    %417 = arith.negf %416 : vector<2x32xf32>
    %418 = math.exp %417 : vector<2x32xf32>
    %cst_107 = arith.constant 1.000000e+00 : f32
    %419 = vector.broadcast %cst_107 : f32 to vector<2x32xf32>
    %420 = arith.addf %419, %418 : vector<2x32xf32>
    %421 = arith.divf %419, %420 : vector<2x32xf32>
    %422 = vector.extract_strided_slice %391 {offsets = [0, 32], sizes = [2, 32], strides = [1, 1]} : vector<2x96xf32> to vector<2x32xf32>
    %423 = vector.extract_strided_slice %385 {offsets = [0, 32], sizes = [2, 32], strides = [1, 1]} : vector<2x96xf32> to vector<2x32xf32>
    %424 = arith.addf %422, %423 : vector<2x32xf32>
    %425 = arith.negf %424 : vector<2x32xf32>
    %426 = math.exp %425 : vector<2x32xf32>
    %cst_108 = arith.constant 1.000000e+00 : f32
    %427 = vector.broadcast %cst_108 : f32 to vector<2x32xf32>
    %428 = arith.addf %427, %426 : vector<2x32xf32>
    %429 = arith.divf %427, %428 : vector<2x32xf32>
    %430 = vector.extract_strided_slice %391 {offsets = [0, 64], sizes = [2, 32], strides = [1, 1]} : vector<2x96xf32> to vector<2x32xf32>
    %431 = vector.extract_strided_slice %385 {offsets = [0, 64], sizes = [2, 32], strides = [1, 1]} : vector<2x96xf32> to vector<2x32xf32>
    %432 = arith.addf %431, %14 : vector<2x32xf32>
    %433 = arith.mulf %421, %432 : vector<2x32xf32>
    %434 = arith.addf %430, %433 : vector<2x32xf32>
    %435 = math.tanh %434 : vector<2x32xf32>
    %cst_109 = arith.constant 1.000000e+00 : f32
    %436 = vector.broadcast %cst_109 : f32 to vector<2x32xf32>
    %437 = arith.subf %436, %407 : vector<2x32xf32>
    %438 = arith.mulf %437, %413 : vector<2x32xf32>
    %439 = arith.mulf %407, %367 : vector<2x32xf32>
    %440 = arith.addf %438, %439 : vector<2x32xf32>
    %cst_110 = arith.constant 1.000000e+00 : f32
    %441 = vector.broadcast %cst_110 : f32 to vector<2x32xf32>
    %442 = arith.subf %441, %429 : vector<2x32xf32>
    %443 = arith.mulf %442, %435 : vector<2x32xf32>
    %444 = arith.mulf %429, %372 : vector<2x32xf32>
    %445 = arith.addf %443, %444 : vector<2x32xf32>
    %446 = arith.truncf %440 : vector<2x32xf32> to vector<2x32xbf16>
    %c2_i32_111 = arith.constant 2 : i32
    %447 = arith.muli %c5_i32, %c2_i32_111 : i32
    %448 = arith.index_cast %447 : i32 to index
    %c0_112 = arith.constant 0 : index
    %449 = vector.load %arg38[%448, %c0_112] : memref<16x64xbf16, #tpu.memory_space<vmem>>, vector<2x32xbf16>
    tpu.vector_store %arg38[%448, %c0_112], %446 {strides = array<i32>} : memref<16x64xbf16, #tpu.memory_space<vmem>>, vector<2x32xbf16>,
    %450 = arith.truncf %445 : vector<2x32xf32> to vector<2x32xbf16>
    %c2_i32_113 = arith.constant 2 : i32
    %451 = arith.muli %381, %c2_i32_113 : i32
    %452 = arith.index_cast %451 : i32 to index
    %c32_114 = arith.constant 32 : index
    %453 = vector.load %arg38[%452, %c32_114] : memref<16x64xbf16, #tpu.memory_space<vmem>>, vector<2x32xbf16>
    tpu.vector_store %arg38[%452, %c32_114], %450 {strides = array<i32>} : memref<16x64xbf16, #tpu.memory_space<vmem>>, vector<2x32xbf16>,
    %c6_i32 = arith.constant 6 : i32
    %c7_i32_115 = arith.constant 7 : i32
    %454 = arith.subi %c7_i32_115, %c6_i32 : i32
    %455 = arith.truncf %440 : vector<2x32xf32> to vector<2x32xbf16>
    %cst_116 = arith.constant dense<0.000000e+00> : vector<2x96xf32>
    %456 = tpu.matmul %455, %7, %cst_116 {dimension_numbers = #tpu.dot_dimension_numbers<[1], [0], [0], [1], [0, 0, 1, 1], [], []>} : vector<2x32xbf16>, vector<32x96xbf16>, vector<2x96xf32> -> vector<2x96xf32>
    %457 = arith.truncf %445 : vector<2x32xf32> to vector<2x32xbf16>
    %cst_117 = arith.constant dense<0.000000e+00> : vector<2x96xf32>
    %458 = tpu.matmul %457, %8, %cst_117 {dimension_numbers = #tpu.dot_dimension_numbers<[1], [0], [0], [1], [0, 0, 1, 1], [], []>} : vector<2x32xbf16>, vector<32x96xbf16>, vector<2x96xf32> -> vector<2x96xf32>
    %c2_i32_118 = arith.constant 2 : i32
    %459 = arith.muli %c6_i32, %c2_i32_118 : i32
    %460 = arith.index_cast %459 : i32 to index
    %c0_119 = arith.constant 0 : index
    %461 = vector.load %arg40[%460, %c0_119] : memref<16x192xf32, #tpu.memory_space<vmem>>, vector<2x96xf32>
    %c2_i32_120 = arith.constant 2 : i32
    %462 = arith.muli %454, %c2_i32_120 : i32
    %463 = arith.index_cast %462 : i32 to index
    %c96_121 = arith.constant 96 : index
    %464 = vector.load %arg40[%463, %c96_121] : memref<16x192xf32, #tpu.memory_space<vmem>>, vector<2x96xf32>
    %465 = vector.extract_strided_slice %461 {offsets = [0, 0], sizes = [2, 32], strides = [1, 1]} : vector<2x96xf32> to vector<2x32xf32>
    %466 = vector.extract_strided_slice %456 {offsets = [0, 0], sizes = [2, 32], strides = [1, 1]} : vector<2x96xf32> to vector<2x32xf32>
    %467 = arith.addf %465, %466 : vector<2x32xf32>
    %468 = arith.negf %467 : vector<2x32xf32>
    %469 = math.exp %468 : vector<2x32xf32>
    %cst_122 = arith.constant 1.000000e+00 : f32
    %470 = vector.broadcast %cst_122 : f32 to vector<2x32xf32>
    %471 = arith.addf %470, %469 : vector<2x32xf32>
    %472 = arith.divf %470, %471 : vector<2x32xf32>
    %473 = vector.extract_strided_slice %461 {offsets = [0, 32], sizes = [2, 32], strides = [1, 1]} : vector<2x96xf32> to vector<2x32xf32>
    %474 = vector.extract_strided_slice %456 {offsets = [0, 32], sizes = [2, 32], strides = [1, 1]} : vector<2x96xf32> to vector<2x32xf32>
    %475 = arith.addf %473, %474 : vector<2x32xf32>
    %476 = arith.negf %475 : vector<2x32xf32>
    %477 = math.exp %476 : vector<2x32xf32>
    %cst_123 = arith.constant 1.000000e+00 : f32
    %478 = vector.broadcast %cst_123 : f32 to vector<2x32xf32>
    %479 = arith.addf %478, %477 : vector<2x32xf32>
    %480 = arith.divf %478, %479 : vector<2x32xf32>
    %481 = vector.extract_strided_slice %461 {offsets = [0, 64], sizes = [2, 32], strides = [1, 1]} : vector<2x96xf32> to vector<2x32xf32>
    %482 = vector.extract_strided_slice %456 {offsets = [0, 64], sizes = [2, 32], strides = [1, 1]} : vector<2x96xf32> to vector<2x32xf32>
    %483 = arith.addf %482, %11 : vector<2x32xf32>
    %484 = arith.mulf %472, %483 : vector<2x32xf32>
    %485 = arith.addf %481, %484 : vector<2x32xf32>
    %486 = math.tanh %485 : vector<2x32xf32>
    %487 = vector.extract_strided_slice %464 {offsets = [0, 0], sizes = [2, 32], strides = [1, 1]} : vector<2x96xf32> to vector<2x32xf32>
    %488 = vector.extract_strided_slice %458 {offsets = [0, 0], sizes = [2, 32], strides = [1, 1]} : vector<2x96xf32> to vector<2x32xf32>
    %489 = arith.addf %487, %488 : vector<2x32xf32>
    %490 = arith.negf %489 : vector<2x32xf32>
    %491 = math.exp %490 : vector<2x32xf32>
    %cst_124 = arith.constant 1.000000e+00 : f32
    %492 = vector.broadcast %cst_124 : f32 to vector<2x32xf32>
    %493 = arith.addf %492, %491 : vector<2x32xf32>
    %494 = arith.divf %492, %493 : vector<2x32xf32>
    %495 = vector.extract_strided_slice %464 {offsets = [0, 32], sizes = [2, 32], strides = [1, 1]} : vector<2x96xf32> to vector<2x32xf32>
    %496 = vector.extract_strided_slice %458 {offsets = [0, 32], sizes = [2, 32], strides = [1, 1]} : vector<2x96xf32> to vector<2x32xf32>
    %497 = arith.addf %495, %496 : vector<2x32xf32>
    %498 = arith.negf %497 : vector<2x32xf32>
    %499 = math.exp %498 : vector<2x32xf32>
    %cst_125 = arith.constant 1.000000e+00 : f32
    %500 = vector.broadcast %cst_125 : f32 to vector<2x32xf32>
    %501 = arith.addf %500, %499 : vector<2x32xf32>
    %502 = arith.divf %500, %501 : vector<2x32xf32>
    %503 = vector.extract_strided_slice %464 {offsets = [0, 64], sizes = [2, 32], strides = [1, 1]} : vector<2x96xf32> to vector<2x32xf32>
    %504 = vector.extract_strided_slice %458 {offsets = [0, 64], sizes = [2, 32], strides = [1, 1]} : vector<2x96xf32> to vector<2x32xf32>
    %505 = arith.addf %504, %14 : vector<2x32xf32>
    %506 = arith.mulf %494, %505 : vector<2x32xf32>
    %507 = arith.addf %503, %506 : vector<2x32xf32>
    %508 = math.tanh %507 : vector<2x32xf32>
    %cst_126 = arith.constant 1.000000e+00 : f32
    %509 = vector.broadcast %cst_126 : f32 to vector<2x32xf32>
    %510 = arith.subf %509, %480 : vector<2x32xf32>
    %511 = arith.mulf %510, %486 : vector<2x32xf32>
    %512 = arith.mulf %480, %440 : vector<2x32xf32>
    %513 = arith.addf %511, %512 : vector<2x32xf32>
    %cst_127 = arith.constant 1.000000e+00 : f32
    %514 = vector.broadcast %cst_127 : f32 to vector<2x32xf32>
    %515 = arith.subf %514, %502 : vector<2x32xf32>
    %516 = arith.mulf %515, %508 : vector<2x32xf32>
    %517 = arith.mulf %502, %445 : vector<2x32xf32>
    %518 = arith.addf %516, %517 : vector<2x32xf32>
    %519 = arith.truncf %513 : vector<2x32xf32> to vector<2x32xbf16>
    %c2_i32_128 = arith.constant 2 : i32
    %520 = arith.muli %c6_i32, %c2_i32_128 : i32
    %521 = arith.index_cast %520 : i32 to index
    %c0_129 = arith.constant 0 : index
    %522 = vector.load %arg38[%521, %c0_129] : memref<16x64xbf16, #tpu.memory_space<vmem>>, vector<2x32xbf16>
    tpu.vector_store %arg38[%521, %c0_129], %519 {strides = array<i32>} : memref<16x64xbf16, #tpu.memory_space<vmem>>, vector<2x32xbf16>,
    %523 = arith.truncf %518 : vector<2x32xf32> to vector<2x32xbf16>
    %c2_i32_130 = arith.constant 2 : i32
    %524 = arith.muli %454, %c2_i32_130 : i32
    %525 = arith.index_cast %524 : i32 to index
    %c32_131 = arith.constant 32 : index
    %526 = vector.load %arg38[%525, %c32_131] : memref<16x64xbf16, #tpu.memory_space<vmem>>, vector<2x32xbf16>
    tpu.vector_store %arg38[%525, %c32_131], %523 {strides = array<i32>} : memref<16x64xbf16, #tpu.memory_space<vmem>>, vector<2x32xbf16>,
    %c7_i32_132 = arith.constant 7 : i32
    %c7_i32_133 = arith.constant 7 : i32
    %527 = arith.subi %c7_i32_133, %c7_i32_132 : i32
    %528 = arith.truncf %513 : vector<2x32xf32> to vector<2x32xbf16>
    %cst_134 = arith.constant dense<0.000000e+00> : vector<2x96xf32>
    %529 = tpu.matmul %528, %7, %cst_134 {dimension_numbers = #tpu.dot_dimension_numbers<[1], [0], [0], [1], [0, 0, 1, 1], [], []>} : vector<2x32xbf16>, vector<32x96xbf16>, vector<2x96xf32> -> vector<2x96xf32>
    %530 = arith.truncf %518 : vector<2x32xf32> to vector<2x32xbf16>
    %cst_135 = arith.constant dense<0.000000e+00> : vector<2x96xf32>
    %531 = tpu.matmul %530, %8, %cst_135 {dimension_numbers = #tpu.dot_dimension_numbers<[1], [0], [0], [1], [0, 0, 1, 1], [], []>} : vector<2x32xbf16>, vector<32x96xbf16>, vector<2x96xf32> -> vector<2x96xf32>
    %c2_i32_136 = arith.constant 2 : i32
    %532 = arith.muli %c7_i32_132, %c2_i32_136 : i32
    %533 = arith.index_cast %532 : i32 to index
    %c0_137 = arith.constant 0 : index
    %534 = vector.load %arg40[%533, %c0_137] : memref<16x192xf32, #tpu.memory_space<vmem>>, vector<2x96xf32>
    %c2_i32_138 = arith.constant 2 : i32
    %535 = arith.muli %527, %c2_i32_138 : i32
    %536 = arith.index_cast %535 : i32 to index
    %c96_139 = arith.constant 96 : index
    %537 = vector.load %arg40[%536, %c96_139] : memref<16x192xf32, #tpu.memory_space<vmem>>, vector<2x96xf32>
    %538 = vector.extract_strided_slice %534 {offsets = [0, 0], sizes = [2, 32], strides = [1, 1]} : vector<2x96xf32> to vector<2x32xf32>
    %539 = vector.extract_strided_slice %529 {offsets = [0, 0], sizes = [2, 32], strides = [1, 1]} : vector<2x96xf32> to vector<2x32xf32>
    %540 = arith.addf %538, %539 : vector<2x32xf32>
    %541 = arith.negf %540 : vector<2x32xf32>
    %542 = math.exp %541 : vector<2x32xf32>
    %cst_140 = arith.constant 1.000000e+00 : f32
    %543 = vector.broadcast %cst_140 : f32 to vector<2x32xf32>
    %544 = arith.addf %543, %542 : vector<2x32xf32>
    %545 = arith.divf %543, %544 : vector<2x32xf32>
    %546 = vector.extract_strided_slice %534 {offsets = [0, 32], sizes = [2, 32], strides = [1, 1]} : vector<2x96xf32> to vector<2x32xf32>
    %547 = vector.extract_strided_slice %529 {offsets = [0, 32], sizes = [2, 32], strides = [1, 1]} : vector<2x96xf32> to vector<2x32xf32>
    %548 = arith.addf %546, %547 : vector<2x32xf32>
    %549 = arith.negf %548 : vector<2x32xf32>
    %550 = math.exp %549 : vector<2x32xf32>
    %cst_141 = arith.constant 1.000000e+00 : f32
    %551 = vector.broadcast %cst_141 : f32 to vector<2x32xf32>
    %552 = arith.addf %551, %550 : vector<2x32xf32>
    %553 = arith.divf %551, %552 : vector<2x32xf32>
    %554 = vector.extract_strided_slice %534 {offsets = [0, 64], sizes = [2, 32], strides = [1, 1]} : vector<2x96xf32> to vector<2x32xf32>
    %555 = vector.extract_strided_slice %529 {offsets = [0, 64], sizes = [2, 32], strides = [1, 1]} : vector<2x96xf32> to vector<2x32xf32>
    %556 = arith.addf %555, %11 : vector<2x32xf32>
    %557 = arith.mulf %545, %556 : vector<2x32xf32>
    %558 = arith.addf %554, %557 : vector<2x32xf32>
    %559 = math.tanh %558 : vector<2x32xf32>
    %560 = vector.extract_strided_slice %537 {offsets = [0, 0], sizes = [2, 32], strides = [1, 1]} : vector<2x96xf32> to vector<2x32xf32>
    %561 = vector.extract_strided_slice %531 {offsets = [0, 0], sizes = [2, 32], strides = [1, 1]} : vector<2x96xf32> to vector<2x32xf32>
    %562 = arith.addf %560, %561 : vector<2x32xf32>
    %563 = arith.negf %562 : vector<2x32xf32>
    %564 = math.exp %563 : vector<2x32xf32>
    %cst_142 = arith.constant 1.000000e+00 : f32
    %565 = vector.broadcast %cst_142 : f32 to vector<2x32xf32>
    %566 = arith.addf %565, %564 : vector<2x32xf32>
    %567 = arith.divf %565, %566 : vector<2x32xf32>
    %568 = vector.extract_strided_slice %537 {offsets = [0, 32], sizes = [2, 32], strides = [1, 1]} : vector<2x96xf32> to vector<2x32xf32>
    %569 = vector.extract_strided_slice %531 {offsets = [0, 32], sizes = [2, 32], strides = [1, 1]} : vector<2x96xf32> to vector<2x32xf32>
    %570 = arith.addf %568, %569 : vector<2x32xf32>
    %571 = arith.negf %570 : vector<2x32xf32>
    %572 = math.exp %571 : vector<2x32xf32>
    %cst_143 = arith.constant 1.000000e+00 : f32
    %573 = vector.broadcast %cst_143 : f32 to vector<2x32xf32>
    %574 = arith.addf %573, %572 : vector<2x32xf32>
    %575 = arith.divf %573, %574 : vector<2x32xf32>
    %576 = vector.extract_strided_slice %537 {offsets = [0, 64], sizes = [2, 32], strides = [1, 1]} : vector<2x96xf32> to vector<2x32xf32>
    %577 = vector.extract_strided_slice %531 {offsets = [0, 64], sizes = [2, 32], strides = [1, 1]} : vector<2x96xf32> to vector<2x32xf32>
    %578 = arith.addf %577, %14 : vector<2x32xf32>
    %579 = arith.mulf %567, %578 : vector<2x32xf32>
    %580 = arith.addf %576, %579 : vector<2x32xf32>
    %581 = math.tanh %580 : vector<2x32xf32>
    %cst_144 = arith.constant 1.000000e+00 : f32
    %582 = vector.broadcast %cst_144 : f32 to vector<2x32xf32>
    %583 = arith.subf %582, %553 : vector<2x32xf32>
    %584 = arith.mulf %583, %559 : vector<2x32xf32>
    %585 = arith.mulf %553, %513 : vector<2x32xf32>
    %586 = arith.addf %584, %585 : vector<2x32xf32>
    %cst_145 = arith.constant 1.000000e+00 : f32
    %587 = vector.broadcast %cst_145 : f32 to vector<2x32xf32>
    %588 = arith.subf %587, %575 : vector<2x32xf32>
    %589 = arith.mulf %588, %581 : vector<2x32xf32>
    %590 = arith.mulf %575, %518 : vector<2x32xf32>
    %591 = arith.addf %589, %590 : vector<2x32xf32>
    %592 = arith.truncf %586 : vector<2x32xf32> to vector<2x32xbf16>
    %c2_i32_146 = arith.constant 2 : i32
    %593 = arith.muli %c7_i32_132, %c2_i32_146 : i32
    %594 = arith.index_cast %593 : i32 to index
    %c0_147 = arith.constant 0 : index
    %595 = vector.load %arg38[%594, %c0_147] : memref<16x64xbf16, #tpu.memory_space<vmem>>, vector<2x32xbf16>
    tpu.vector_store %arg38[%594, %c0_147], %592 {strides = array<i32>} : memref<16x64xbf16, #tpu.memory_space<vmem>>, vector<2x32xbf16>,
    %596 = arith.truncf %591 : vector<2x32xf32> to vector<2x32xbf16>
    %c2_i32_148 = arith.constant 2 : i32
    %597 = arith.muli %527, %c2_i32_148 : i32
    %598 = arith.index_cast %597 : i32 to index
    %c32_149 = arith.constant 32 : index
    %599 = vector.load %arg38[%598, %c32_149] : memref<16x64xbf16, #tpu.memory_space<vmem>>, vector<2x32xbf16>
    tpu.vector_store %arg38[%598, %c32_149], %596 {strides = array<i32>} : memref<16x64xbf16, #tpu.memory_space<vmem>>, vector<2x32xbf16>,
    %c8_i32 = arith.constant 8 : i32
    %c0_150 = arith.constant 0 : index
    %c0_151 = arith.constant 0 : index
    %600 = vector.load %arg38[%c0_150, %c0_151] : memref<16x64xbf16, #tpu.memory_space<vmem>>, vector<16x64xbf16>
    %c0_152 = arith.constant 0 : index
    %c0_153 = arith.constant 0 : index
    %601 = vector.load %arg7[%c0_152, %c0_153] : memref<64x192xbf16, #tpu.memory_space<vmem>>, vector<64x192xbf16>
    %cst_154 = arith.constant dense<0.000000e+00> : vector<16x192xf32>
    %602 = tpu.matmul %600, %601, %cst_154 {dimension_numbers = #tpu.dot_dimension_numbers<[1], [0], [0], [1], [0, 0, 1, 1], [], []>} : vector<16x64xbf16>, vector<64x192xbf16>, vector<16x192xf32> -> vector<16x192xf32>
    %c0_155 = arith.constant 0 : index
    %c0_156 = arith.constant 0 : index
    %603 = vector.load %arg8[%c0_155, %c0_156] : memref<1x192xf32, #tpu.memory_space<vmem>>, vector<1x192xf32>
    %604 = vector.broadcast %603 : vector<1x192xf32> to vector<16x192xf32>
    %605 = arith.addf %602, %604 : vector<16x192xf32>
    %c0_157 = arith.constant 0 : index
    %c0_158 = arith.constant 0 : index
    %606 = vector.load %arg40[%c0_157, %c0_158] : memref<16x192xf32, #tpu.memory_space<vmem>>, vector<16x192xf32>
    tpu.vector_store %arg40[%c0_157, %c0_158], %605 {strides = array<i32>} : memref<16x192xf32, #tpu.memory_space<vmem>>, vector<16x192xf32>,
    %c0_159 = arith.constant 0 : index
    %c0_160 = arith.constant 0 : index
    %607 = vector.load %arg9[%c0_159, %c0_160] : memref<32x96xbf16, #tpu.memory_space<vmem>>, vector<32x96xbf16>
    %c0_161 = arith.constant 0 : index
    %c0_162 = arith.constant 0 : index
    %608 = vector.load %arg10[%c0_161, %c0_162] : memref<32x96xbf16, #tpu.memory_space<vmem>>, vector<32x96xbf16>
    %c0_163 = arith.constant 0 : index
    %c0_164 = arith.constant 0 : index
    %609 = vector.load %arg11[%c0_163, %c0_164] : memref<1x32xf32, #tpu.memory_space<vmem>>, vector<1x32xf32>
    %610 = vector.shape_cast %609 : vector<1x32xf32> to vector<1x32xf32>
    %611 = vector.broadcast %610 : vector<1x32xf32> to vector<2x32xf32>
    %c0_165 = arith.constant 0 : index
    %c0_166 = arith.constant 0 : index
    %612 = vector.load %arg12[%c0_165, %c0_166] : memref<1x32xf32, #tpu.memory_space<vmem>>, vector<1x32xf32>
    %613 = vector.shape_cast %612 : vector<1x32xf32> to vector<1x32xf32>
    %614 = vector.broadcast %613 : vector<1x32xf32> to vector<2x32xf32>
    %cst_167 = arith.constant 0.000000e+00 : f32
    %615 = vector.broadcast %cst_167 : f32 to vector<2x32xf32>
    %c0_i32_168 = arith.constant 0 : i32
    %c7_i32_169 = arith.constant 7 : i32
    %616 = arith.subi %c7_i32_169, %c0_i32_168 : i32
    %617 = arith.truncf %615 : vector<2x32xf32> to vector<2x32xbf16>
    %cst_170 = arith.constant dense<0.000000e+00> : vector<2x96xf32>
    %618 = tpu.matmul %617, %607, %cst_170 {dimension_numbers = #tpu.dot_dimension_numbers<[1], [0], [0], [1], [0, 0, 1, 1], [], []>} : vector<2x32xbf16>, vector<32x96xbf16>, vector<2x96xf32> -> vector<2x96xf32>
    %619 = arith.truncf %615 : vector<2x32xf32> to vector<2x32xbf16>
    %cst_171 = arith.constant dense<0.000000e+00> : vector<2x96xf32>
    %620 = tpu.matmul %619, %608, %cst_171 {dimension_numbers = #tpu.dot_dimension_numbers<[1], [0], [0], [1], [0, 0, 1, 1], [], []>} : vector<2x32xbf16>, vector<32x96xbf16>, vector<2x96xf32> -> vector<2x96xf32>
    %c2_i32_172 = arith.constant 2 : i32
    %621 = arith.muli %c0_i32_168, %c2_i32_172 : i32
    %622 = arith.index_cast %621 : i32 to index
    %c0_173 = arith.constant 0 : index
    %623 = vector.load %arg40[%622, %c0_173] : memref<16x192xf32, #tpu.memory_space<vmem>>, vector<2x96xf32>
    %c2_i32_174 = arith.constant 2 : i32
    %624 = arith.muli %616, %c2_i32_174 : i32
    %625 = arith.index_cast %624 : i32 to index
    %c96_175 = arith.constant 96 : index
    %626 = vector.load %arg40[%625, %c96_175] : memref<16x192xf32, #tpu.memory_space<vmem>>, vector<2x96xf32>
    %627 = vector.extract_strided_slice %623 {offsets = [0, 0], sizes = [2, 32], strides = [1, 1]} : vector<2x96xf32> to vector<2x32xf32>
    %628 = vector.extract_strided_slice %618 {offsets = [0, 0], sizes = [2, 32], strides = [1, 1]} : vector<2x96xf32> to vector<2x32xf32>
    %629 = arith.addf %627, %628 : vector<2x32xf32>
    %630 = arith.negf %629 : vector<2x32xf32>
    %631 = math.exp %630 : vector<2x32xf32>
    %cst_176 = arith.constant 1.000000e+00 : f32
    %632 = vector.broadcast %cst_176 : f32 to vector<2x32xf32>
    %633 = arith.addf %632, %631 : vector<2x32xf32>
    %634 = arith.divf %632, %633 : vector<2x32xf32>
    %635 = vector.extract_strided_slice %623 {offsets = [0, 32], sizes = [2, 32], strides = [1, 1]} : vector<2x96xf32> to vector<2x32xf32>
    %636 = vector.extract_strided_slice %618 {offsets = [0, 32], sizes = [2, 32], strides = [1, 1]} : vector<2x96xf32> to vector<2x32xf32>
    %637 = arith.addf %635, %636 : vector<2x32xf32>
    %638 = arith.negf %637 : vector<2x32xf32>
    %639 = math.exp %638 : vector<2x32xf32>
    %cst_177 = arith.constant 1.000000e+00 : f32
    %640 = vector.broadcast %cst_177 : f32 to vector<2x32xf32>
    %641 = arith.addf %640, %639 : vector<2x32xf32>
    %642 = arith.divf %640, %641 : vector<2x32xf32>
    %643 = vector.extract_strided_slice %623 {offsets = [0, 64], sizes = [2, 32], strides = [1, 1]} : vector<2x96xf32> to vector<2x32xf32>
    %644 = vector.extract_strided_slice %618 {offsets = [0, 64], sizes = [2, 32], strides = [1, 1]} : vector<2x96xf32> to vector<2x32xf32>
    %645 = arith.addf %644, %611 : vector<2x32xf32>
    %646 = arith.mulf %634, %645 : vector<2x32xf32>
    %647 = arith.addf %643, %646 : vector<2x32xf32>
    %648 = math.tanh %647 : vector<2x32xf32>
    %649 = vector.extract_strided_slice %626 {offsets = [0, 0], sizes = [2, 32], strides = [1, 1]} : vector<2x96xf32> to vector<2x32xf32>
    %650 = vector.extract_strided_slice %620 {offsets = [0, 0], sizes = [2, 32], strides = [1, 1]} : vector<2x96xf32> to vector<2x32xf32>
    %651 = arith.addf %649, %650 : vector<2x32xf32>
    %652 = arith.negf %651 : vector<2x32xf32>
    %653 = math.exp %652 : vector<2x32xf32>
    %cst_178 = arith.constant 1.000000e+00 : f32
    %654 = vector.broadcast %cst_178 : f32 to vector<2x32xf32>
    %655 = arith.addf %654, %653 : vector<2x32xf32>
    %656 = arith.divf %654, %655 : vector<2x32xf32>
    %657 = vector.extract_strided_slice %626 {offsets = [0, 32], sizes = [2, 32], strides = [1, 1]} : vector<2x96xf32> to vector<2x32xf32>
    %658 = vector.extract_strided_slice %620 {offsets = [0, 32], sizes = [2, 32], strides = [1, 1]} : vector<2x96xf32> to vector<2x32xf32>
    %659 = arith.addf %657, %658 : vector<2x32xf32>
    %660 = arith.negf %659 : vector<2x32xf32>
    %661 = math.exp %660 : vector<2x32xf32>
    %cst_179 = arith.constant 1.000000e+00 : f32
    %662 = vector.broadcast %cst_179 : f32 to vector<2x32xf32>
    %663 = arith.addf %662, %661 : vector<2x32xf32>
    %664 = arith.divf %662, %663 : vector<2x32xf32>
    %665 = vector.extract_strided_slice %626 {offsets = [0, 64], sizes = [2, 32], strides = [1, 1]} : vector<2x96xf32> to vector<2x32xf32>
    %666 = vector.extract_strided_slice %620 {offsets = [0, 64], sizes = [2, 32], strides = [1, 1]} : vector<2x96xf32> to vector<2x32xf32>
    %667 = arith.addf %666, %614 : vector<2x32xf32>
    %668 = arith.mulf %656, %667 : vector<2x32xf32>
    %669 = arith.addf %665, %668 : vector<2x32xf32>
    %670 = math.tanh %669 : vector<2x32xf32>
    %cst_180 = arith.constant 1.000000e+00 : f32
    %671 = vector.broadcast %cst_180 : f32 to vector<2x32xf32>
    %672 = arith.subf %671, %642 : vector<2x32xf32>
    %673 = arith.mulf %672, %648 : vector<2x32xf32>
    %674 = arith.mulf %642, %615 : vector<2x32xf32>
    %675 = arith.addf %673, %674 : vector<2x32xf32>
    %cst_181 = arith.constant 1.000000e+00 : f32
    %676 = vector.broadcast %cst_181 : f32 to vector<2x32xf32>
    %677 = arith.subf %676, %664 : vector<2x32xf32>
    %678 = arith.mulf %677, %670 : vector<2x32xf32>
    %679 = arith.mulf %664, %615 : vector<2x32xf32>
    %680 = arith.addf %678, %679 : vector<2x32xf32>
    %681 = arith.truncf %675 : vector<2x32xf32> to vector<2x32xbf16>
    %c2_i32_182 = arith.constant 2 : i32
    %682 = arith.muli %c0_i32_168, %c2_i32_182 : i32
    %683 = arith.index_cast %682 : i32 to index
    %c0_183 = arith.constant 0 : index
    %684 = vector.load %arg39[%683, %c0_183] : memref<16x64xbf16, #tpu.memory_space<vmem>>, vector<2x32xbf16>
    tpu.vector_store %arg39[%683, %c0_183], %681 {strides = array<i32>} : memref<16x64xbf16, #tpu.memory_space<vmem>>, vector<2x32xbf16>,
    %685 = arith.truncf %680 : vector<2x32xf32> to vector<2x32xbf16>
    %c2_i32_184 = arith.constant 2 : i32
    %686 = arith.muli %616, %c2_i32_184 : i32
    %687 = arith.index_cast %686 : i32 to index
    %c32_185 = arith.constant 32 : index
    %688 = vector.load %arg39[%687, %c32_185] : memref<16x64xbf16, #tpu.memory_space<vmem>>, vector<2x32xbf16>
    tpu.vector_store %arg39[%687, %c32_185], %685 {strides = array<i32>} : memref<16x64xbf16, #tpu.memory_space<vmem>>, vector<2x32xbf16>,
    %c1_i32_186 = arith.constant 1 : i32
    %c7_i32_187 = arith.constant 7 : i32
    %689 = arith.subi %c7_i32_187, %c1_i32_186 : i32
    %690 = arith.truncf %675 : vector<2x32xf32> to vector<2x32xbf16>
    %cst_188 = arith.constant dense<0.000000e+00> : vector<2x96xf32>
    %691 = tpu.matmul %690, %607, %cst_188 {dimension_numbers = #tpu.dot_dimension_numbers<[1], [0], [0], [1], [0, 0, 1, 1], [], []>} : vector<2x32xbf16>, vector<32x96xbf16>, vector<2x96xf32> -> vector<2x96xf32>
    %692 = arith.truncf %680 : vector<2x32xf32> to vector<2x32xbf16>
    %cst_189 = arith.constant dense<0.000000e+00> : vector<2x96xf32>
    %693 = tpu.matmul %692, %608, %cst_189 {dimension_numbers = #tpu.dot_dimension_numbers<[1], [0], [0], [1], [0, 0, 1, 1], [], []>} : vector<2x32xbf16>, vector<32x96xbf16>, vector<2x96xf32> -> vector<2x96xf32>
    %c2_i32_190 = arith.constant 2 : i32
    %694 = arith.muli %c1_i32_186, %c2_i32_190 : i32
    %695 = arith.index_cast %694 : i32 to index
    %c0_191 = arith.constant 0 : index
    %696 = vector.load %arg40[%695, %c0_191] : memref<16x192xf32, #tpu.memory_space<vmem>>, vector<2x96xf32>
    %c2_i32_192 = arith.constant 2 : i32
    %697 = arith.muli %689, %c2_i32_192 : i32
    %698 = arith.index_cast %697 : i32 to index
    %c96_193 = arith.constant 96 : index
    %699 = vector.load %arg40[%698, %c96_193] : memref<16x192xf32, #tpu.memory_space<vmem>>, vector<2x96xf32>
    %700 = vector.extract_strided_slice %696 {offsets = [0, 0], sizes = [2, 32], strides = [1, 1]} : vector<2x96xf32> to vector<2x32xf32>
    %701 = vector.extract_strided_slice %691 {offsets = [0, 0], sizes = [2, 32], strides = [1, 1]} : vector<2x96xf32> to vector<2x32xf32>
    %702 = arith.addf %700, %701 : vector<2x32xf32>
    %703 = arith.negf %702 : vector<2x32xf32>
    %704 = math.exp %703 : vector<2x32xf32>
    %cst_194 = arith.constant 1.000000e+00 : f32
    %705 = vector.broadcast %cst_194 : f32 to vector<2x32xf32>
    %706 = arith.addf %705, %704 : vector<2x32xf32>
    %707 = arith.divf %705, %706 : vector<2x32xf32>
    %708 = vector.extract_strided_slice %696 {offsets = [0, 32], sizes = [2, 32], strides = [1, 1]} : vector<2x96xf32> to vector<2x32xf32>
    %709 = vector.extract_strided_slice %691 {offsets = [0, 32], sizes = [2, 32], strides = [1, 1]} : vector<2x96xf32> to vector<2x32xf32>
    %710 = arith.addf %708, %709 : vector<2x32xf32>
    %711 = arith.negf %710 : vector<2x32xf32>
    %712 = math.exp %711 : vector<2x32xf32>
    %cst_195 = arith.constant 1.000000e+00 : f32
    %713 = vector.broadcast %cst_195 : f32 to vector<2x32xf32>
    %714 = arith.addf %713, %712 : vector<2x32xf32>
    %715 = arith.divf %713, %714 : vector<2x32xf32>
    %716 = vector.extract_strided_slice %696 {offsets = [0, 64], sizes = [2, 32], strides = [1, 1]} : vector<2x96xf32> to vector<2x32xf32>
    %717 = vector.extract_strided_slice %691 {offsets = [0, 64], sizes = [2, 32], strides = [1, 1]} : vector<2x96xf32> to vector<2x32xf32>
    %718 = arith.addf %717, %611 : vector<2x32xf32>
    %719 = arith.mulf %707, %718 : vector<2x32xf32>
    %720 = arith.addf %716, %719 : vector<2x32xf32>
    %721 = math.tanh %720 : vector<2x32xf32>
    %722 = vector.extract_strided_slice %699 {offsets = [0, 0], sizes = [2, 32], strides = [1, 1]} : vector<2x96xf32> to vector<2x32xf32>
    %723 = vector.extract_strided_slice %693 {offsets = [0, 0], sizes = [2, 32], strides = [1, 1]} : vector<2x96xf32> to vector<2x32xf32>
    %724 = arith.addf %722, %723 : vector<2x32xf32>
    %725 = arith.negf %724 : vector<2x32xf32>
    %726 = math.exp %725 : vector<2x32xf32>
    %cst_196 = arith.constant 1.000000e+00 : f32
    %727 = vector.broadcast %cst_196 : f32 to vector<2x32xf32>
    %728 = arith.addf %727, %726 : vector<2x32xf32>
    %729 = arith.divf %727, %728 : vector<2x32xf32>
    %730 = vector.extract_strided_slice %699 {offsets = [0, 32], sizes = [2, 32], strides = [1, 1]} : vector<2x96xf32> to vector<2x32xf32>
    %731 = vector.extract_strided_slice %693 {offsets = [0, 32], sizes = [2, 32], strides = [1, 1]} : vector<2x96xf32> to vector<2x32xf32>
    %732 = arith.addf %730, %731 : vector<2x32xf32>
    %733 = arith.negf %732 : vector<2x32xf32>
    %734 = math.exp %733 : vector<2x32xf32>
    %cst_197 = arith.constant 1.000000e+00 : f32
    %735 = vector.broadcast %cst_197 : f32 to vector<2x32xf32>
    %736 = arith.addf %735, %734 : vector<2x32xf32>
    %737 = arith.divf %735, %736 : vector<2x32xf32>
    %738 = vector.extract_strided_slice %699 {offsets = [0, 64], sizes = [2, 32], strides = [1, 1]} : vector<2x96xf32> to vector<2x32xf32>
    %739 = vector.extract_strided_slice %693 {offsets = [0, 64], sizes = [2, 32], strides = [1, 1]} : vector<2x96xf32> to vector<2x32xf32>
    %740 = arith.addf %739, %614 : vector<2x32xf32>
    %741 = arith.mulf %729, %740 : vector<2x32xf32>
    %742 = arith.addf %738, %741 : vector<2x32xf32>
    %743 = math.tanh %742 : vector<2x32xf32>
    %cst_198 = arith.constant 1.000000e+00 : f32
    %744 = vector.broadcast %cst_198 : f32 to vector<2x32xf32>
    %745 = arith.subf %744, %715 : vector<2x32xf32>
    %746 = arith.mulf %745, %721 : vector<2x32xf32>
    %747 = arith.mulf %715, %675 : vector<2x32xf32>
    %748 = arith.addf %746, %747 : vector<2x32xf32>
    %cst_199 = arith.constant 1.000000e+00 : f32
    %749 = vector.broadcast %cst_199 : f32 to vector<2x32xf32>
    %750 = arith.subf %749, %737 : vector<2x32xf32>
    %751 = arith.mulf %750, %743 : vector<2x32xf32>
    %752 = arith.mulf %737, %680 : vector<2x32xf32>
    %753 = arith.addf %751, %752 : vector<2x32xf32>
    %754 = arith.truncf %748 : vector<2x32xf32> to vector<2x32xbf16>
    %c2_i32_200 = arith.constant 2 : i32
    %755 = arith.muli %c1_i32_186, %c2_i32_200 : i32
    %756 = arith.index_cast %755 : i32 to index
    %c0_201 = arith.constant 0 : index
    %757 = vector.load %arg39[%756, %c0_201] : memref<16x64xbf16, #tpu.memory_space<vmem>>, vector<2x32xbf16>
    tpu.vector_store %arg39[%756, %c0_201], %754 {strides = array<i32>} : memref<16x64xbf16, #tpu.memory_space<vmem>>, vector<2x32xbf16>,
    %758 = arith.truncf %753 : vector<2x32xf32> to vector<2x32xbf16>
    %c2_i32_202 = arith.constant 2 : i32
    %759 = arith.muli %689, %c2_i32_202 : i32
    %760 = arith.index_cast %759 : i32 to index
    %c32_203 = arith.constant 32 : index
    %761 = vector.load %arg39[%760, %c32_203] : memref<16x64xbf16, #tpu.memory_space<vmem>>, vector<2x32xbf16>
    tpu.vector_store %arg39[%760, %c32_203], %758 {strides = array<i32>} : memref<16x64xbf16, #tpu.memory_space<vmem>>, vector<2x32xbf16>,
    %c2_i32_204 = arith.constant 2 : i32
    %c7_i32_205 = arith.constant 7 : i32
    %762 = arith.subi %c7_i32_205, %c2_i32_204 : i32
    %763 = arith.truncf %748 : vector<2x32xf32> to vector<2x32xbf16>
    %cst_206 = arith.constant dense<0.000000e+00> : vector<2x96xf32>
    %764 = tpu.matmul %763, %607, %cst_206 {dimension_numbers = #tpu.dot_dimension_numbers<[1], [0], [0], [1], [0, 0, 1, 1], [], []>} : vector<2x32xbf16>, vector<32x96xbf16>, vector<2x96xf32> -> vector<2x96xf32>
    %765 = arith.truncf %753 : vector<2x32xf32> to vector<2x32xbf16>
    %cst_207 = arith.constant dense<0.000000e+00> : vector<2x96xf32>
    %766 = tpu.matmul %765, %608, %cst_207 {dimension_numbers = #tpu.dot_dimension_numbers<[1], [0], [0], [1], [0, 0, 1, 1], [], []>} : vector<2x32xbf16>, vector<32x96xbf16>, vector<2x96xf32> -> vector<2x96xf32>
    %c2_i32_208 = arith.constant 2 : i32
    %767 = arith.muli %c2_i32_204, %c2_i32_208 : i32
    %768 = arith.index_cast %767 : i32 to index
    %c0_209 = arith.constant 0 : index
    %769 = vector.load %arg40[%768, %c0_209] : memref<16x192xf32, #tpu.memory_space<vmem>>, vector<2x96xf32>
    %c2_i32_210 = arith.constant 2 : i32
    %770 = arith.muli %762, %c2_i32_210 : i32
    %771 = arith.index_cast %770 : i32 to index
    %c96_211 = arith.constant 96 : index
    %772 = vector.load %arg40[%771, %c96_211] : memref<16x192xf32, #tpu.memory_space<vmem>>, vector<2x96xf32>
    %773 = vector.extract_strided_slice %769 {offsets = [0, 0], sizes = [2, 32], strides = [1, 1]} : vector<2x96xf32> to vector<2x32xf32>
    %774 = vector.extract_strided_slice %764 {offsets = [0, 0], sizes = [2, 32], strides = [1, 1]} : vector<2x96xf32> to vector<2x32xf32>
    %775 = arith.addf %773, %774 : vector<2x32xf32>
    %776 = arith.negf %775 : vector<2x32xf32>
    %777 = math.exp %776 : vector<2x32xf32>
    %cst_212 = arith.constant 1.000000e+00 : f32
    %778 = vector.broadcast %cst_212 : f32 to vector<2x32xf32>
    %779 = arith.addf %778, %777 : vector<2x32xf32>
    %780 = arith.divf %778, %779 : vector<2x32xf32>
    %781 = vector.extract_strided_slice %769 {offsets = [0, 32], sizes = [2, 32], strides = [1, 1]} : vector<2x96xf32> to vector<2x32xf32>
    %782 = vector.extract_strided_slice %764 {offsets = [0, 32], sizes = [2, 32], strides = [1, 1]} : vector<2x96xf32> to vector<2x32xf32>
    %783 = arith.addf %781, %782 : vector<2x32xf32>
    %784 = arith.negf %783 : vector<2x32xf32>
    %785 = math.exp %784 : vector<2x32xf32>
    %cst_213 = arith.constant 1.000000e+00 : f32
    %786 = vector.broadcast %cst_213 : f32 to vector<2x32xf32>
    %787 = arith.addf %786, %785 : vector<2x32xf32>
    %788 = arith.divf %786, %787 : vector<2x32xf32>
    %789 = vector.extract_strided_slice %769 {offsets = [0, 64], sizes = [2, 32], strides = [1, 1]} : vector<2x96xf32> to vector<2x32xf32>
    %790 = vector.extract_strided_slice %764 {offsets = [0, 64], sizes = [2, 32], strides = [1, 1]} : vector<2x96xf32> to vector<2x32xf32>
    %791 = arith.addf %790, %611 : vector<2x32xf32>
    %792 = arith.mulf %780, %791 : vector<2x32xf32>
    %793 = arith.addf %789, %792 : vector<2x32xf32>
    %794 = math.tanh %793 : vector<2x32xf32>
    %795 = vector.extract_strided_slice %772 {offsets = [0, 0], sizes = [2, 32], strides = [1, 1]} : vector<2x96xf32> to vector<2x32xf32>
    %796 = vector.extract_strided_slice %766 {offsets = [0, 0], sizes = [2, 32], strides = [1, 1]} : vector<2x96xf32> to vector<2x32xf32>
    %797 = arith.addf %795, %796 : vector<2x32xf32>
    %798 = arith.negf %797 : vector<2x32xf32>
    %799 = math.exp %798 : vector<2x32xf32>
    %cst_214 = arith.constant 1.000000e+00 : f32
    %800 = vector.broadcast %cst_214 : f32 to vector<2x32xf32>
    %801 = arith.addf %800, %799 : vector<2x32xf32>
    %802 = arith.divf %800, %801 : vector<2x32xf32>
    %803 = vector.extract_strided_slice %772 {offsets = [0, 32], sizes = [2, 32], strides = [1, 1]} : vector<2x96xf32> to vector<2x32xf32>
    %804 = vector.extract_strided_slice %766 {offsets = [0, 32], sizes = [2, 32], strides = [1, 1]} : vector<2x96xf32> to vector<2x32xf32>
    %805 = arith.addf %803, %804 : vector<2x32xf32>
    %806 = arith.negf %805 : vector<2x32xf32>
    %807 = math.exp %806 : vector<2x32xf32>
    %cst_215 = arith.constant 1.000000e+00 : f32
    %808 = vector.broadcast %cst_215 : f32 to vector<2x32xf32>
    %809 = arith.addf %808, %807 : vector<2x32xf32>
    %810 = arith.divf %808, %809 : vector<2x32xf32>
    %811 = vector.extract_strided_slice %772 {offsets = [0, 64], sizes = [2, 32], strides = [1, 1]} : vector<2x96xf32> to vector<2x32xf32>
    %812 = vector.extract_strided_slice %766 {offsets = [0, 64], sizes = [2, 32], strides = [1, 1]} : vector<2x96xf32> to vector<2x32xf32>
    %813 = arith.addf %812, %614 : vector<2x32xf32>
    %814 = arith.mulf %802, %813 : vector<2x32xf32>
    %815 = arith.addf %811, %814 : vector<2x32xf32>
    %816 = math.tanh %815 : vector<2x32xf32>
    %cst_216 = arith.constant 1.000000e+00 : f32
    %817 = vector.broadcast %cst_216 : f32 to vector<2x32xf32>
    %818 = arith.subf %817, %788 : vector<2x32xf32>
    %819 = arith.mulf %818, %794 : vector<2x32xf32>
    %820 = arith.mulf %788, %748 : vector<2x32xf32>
    %821 = arith.addf %819, %820 : vector<2x32xf32>
    %cst_217 = arith.constant 1.000000e+00 : f32
    %822 = vector.broadcast %cst_217 : f32 to vector<2x32xf32>
    %823 = arith.subf %822, %810 : vector<2x32xf32>
    %824 = arith.mulf %823, %816 : vector<2x32xf32>
    %825 = arith.mulf %810, %753 : vector<2x32xf32>
    %826 = arith.addf %824, %825 : vector<2x32xf32>
    %827 = arith.truncf %821 : vector<2x32xf32> to vector<2x32xbf16>
    %c2_i32_218 = arith.constant 2 : i32
    %828 = arith.muli %c2_i32_204, %c2_i32_218 : i32
    %829 = arith.index_cast %828 : i32 to index
    %c0_219 = arith.constant 0 : index
    %830 = vector.load %arg39[%829, %c0_219] : memref<16x64xbf16, #tpu.memory_space<vmem>>, vector<2x32xbf16>
    tpu.vector_store %arg39[%829, %c0_219], %827 {strides = array<i32>} : memref<16x64xbf16, #tpu.memory_space<vmem>>, vector<2x32xbf16>,
    %831 = arith.truncf %826 : vector<2x32xf32> to vector<2x32xbf16>
    %c2_i32_220 = arith.constant 2 : i32
    %832 = arith.muli %762, %c2_i32_220 : i32
    %833 = arith.index_cast %832 : i32 to index
    %c32_221 = arith.constant 32 : index
    %834 = vector.load %arg39[%833, %c32_221] : memref<16x64xbf16, #tpu.memory_space<vmem>>, vector<2x32xbf16>
    tpu.vector_store %arg39[%833, %c32_221], %831 {strides = array<i32>} : memref<16x64xbf16, #tpu.memory_space<vmem>>, vector<2x32xbf16>,
    %c3_i32_222 = arith.constant 3 : i32
    %c7_i32_223 = arith.constant 7 : i32
    %835 = arith.subi %c7_i32_223, %c3_i32_222 : i32
    %836 = arith.truncf %821 : vector<2x32xf32> to vector<2x32xbf16>
    %cst_224 = arith.constant dense<0.000000e+00> : vector<2x96xf32>
    %837 = tpu.matmul %836, %607, %cst_224 {dimension_numbers = #tpu.dot_dimension_numbers<[1], [0], [0], [1], [0, 0, 1, 1], [], []>} : vector<2x32xbf16>, vector<32x96xbf16>, vector<2x96xf32> -> vector<2x96xf32>
    %838 = arith.truncf %826 : vector<2x32xf32> to vector<2x32xbf16>
    %cst_225 = arith.constant dense<0.000000e+00> : vector<2x96xf32>
    %839 = tpu.matmul %838, %608, %cst_225 {dimension_numbers = #tpu.dot_dimension_numbers<[1], [0], [0], [1], [0, 0, 1, 1], [], []>} : vector<2x32xbf16>, vector<32x96xbf16>, vector<2x96xf32> -> vector<2x96xf32>
    %c2_i32_226 = arith.constant 2 : i32
    %840 = arith.muli %c3_i32_222, %c2_i32_226 : i32
    %841 = arith.index_cast %840 : i32 to index
    %c0_227 = arith.constant 0 : index
    %842 = vector.load %arg40[%841, %c0_227] : memref<16x192xf32, #tpu.memory_space<vmem>>, vector<2x96xf32>
    %c2_i32_228 = arith.constant 2 : i32
    %843 = arith.muli %835, %c2_i32_228 : i32
    %844 = arith.index_cast %843 : i32 to index
    %c96_229 = arith.constant 96 : index
    %845 = vector.load %arg40[%844, %c96_229] : memref<16x192xf32, #tpu.memory_space<vmem>>, vector<2x96xf32>
    %846 = vector.extract_strided_slice %842 {offsets = [0, 0], sizes = [2, 32], strides = [1, 1]} : vector<2x96xf32> to vector<2x32xf32>
    %847 = vector.extract_strided_slice %837 {offsets = [0, 0], sizes = [2, 32], strides = [1, 1]} : vector<2x96xf32> to vector<2x32xf32>
    %848 = arith.addf %846, %847 : vector<2x32xf32>
    %849 = arith.negf %848 : vector<2x32xf32>
    %850 = math.exp %849 : vector<2x32xf32>
    %cst_230 = arith.constant 1.000000e+00 : f32
    %851 = vector.broadcast %cst_230 : f32 to vector<2x32xf32>
    %852 = arith.addf %851, %850 : vector<2x32xf32>
    %853 = arith.divf %851, %852 : vector<2x32xf32>
    %854 = vector.extract_strided_slice %842 {offsets = [0, 32], sizes = [2, 32], strides = [1, 1]} : vector<2x96xf32> to vector<2x32xf32>
    %855 = vector.extract_strided_slice %837 {offsets = [0, 32], sizes = [2, 32], strides = [1, 1]} : vector<2x96xf32> to vector<2x32xf32>
    %856 = arith.addf %854, %855 : vector<2x32xf32>
    %857 = arith.negf %856 : vector<2x32xf32>
    %858 = math.exp %857 : vector<2x32xf32>
    %cst_231 = arith.constant 1.000000e+00 : f32
    %859 = vector.broadcast %cst_231 : f32 to vector<2x32xf32>
    %860 = arith.addf %859, %858 : vector<2x32xf32>
    %861 = arith.divf %859, %860 : vector<2x32xf32>
    %862 = vector.extract_strided_slice %842 {offsets = [0, 64], sizes = [2, 32], strides = [1, 1]} : vector<2x96xf32> to vector<2x32xf32>
    %863 = vector.extract_strided_slice %837 {offsets = [0, 64], sizes = [2, 32], strides = [1, 1]} : vector<2x96xf32> to vector<2x32xf32>
    %864 = arith.addf %863, %611 : vector<2x32xf32>
    %865 = arith.mulf %853, %864 : vector<2x32xf32>
    %866 = arith.addf %862, %865 : vector<2x32xf32>
    %867 = math.tanh %866 : vector<2x32xf32>
    %868 = vector.extract_strided_slice %845 {offsets = [0, 0], sizes = [2, 32], strides = [1, 1]} : vector<2x96xf32> to vector<2x32xf32>
    %869 = vector.extract_strided_slice %839 {offsets = [0, 0], sizes = [2, 32], strides = [1, 1]} : vector<2x96xf32> to vector<2x32xf32>
    %870 = arith.addf %868, %869 : vector<2x32xf32>
    %871 = arith.negf %870 : vector<2x32xf32>
    %872 = math.exp %871 : vector<2x32xf32>
    %cst_232 = arith.constant 1.000000e+00 : f32
    %873 = vector.broadcast %cst_232 : f32 to vector<2x32xf32>
    %874 = arith.addf %873, %872 : vector<2x32xf32>
    %875 = arith.divf %873, %874 : vector<2x32xf32>
    %876 = vector.extract_strided_slice %845 {offsets = [0, 32], sizes = [2, 32], strides = [1, 1]} : vector<2x96xf32> to vector<2x32xf32>
    %877 = vector.extract_strided_slice %839 {offsets = [0, 32], sizes = [2, 32], strides = [1, 1]} : vector<2x96xf32> to vector<2x32xf32>
    %878 = arith.addf %876, %877 : vector<2x32xf32>
    %879 = arith.negf %878 : vector<2x32xf32>
    %880 = math.exp %879 : vector<2x32xf32>
    %cst_233 = arith.constant 1.000000e+00 : f32
    %881 = vector.broadcast %cst_233 : f32 to vector<2x32xf32>
    %882 = arith.addf %881, %880 : vector<2x32xf32>
    %883 = arith.divf %881, %882 : vector<2x32xf32>
    %884 = vector.extract_strided_slice %845 {offsets = [0, 64], sizes = [2, 32], strides = [1, 1]} : vector<2x96xf32> to vector<2x32xf32>
    %885 = vector.extract_strided_slice %839 {offsets = [0, 64], sizes = [2, 32], strides = [1, 1]} : vector<2x96xf32> to vector<2x32xf32>
    %886 = arith.addf %885, %614 : vector<2x32xf32>
    %887 = arith.mulf %875, %886 : vector<2x32xf32>
    %888 = arith.addf %884, %887 : vector<2x32xf32>
    %889 = math.tanh %888 : vector<2x32xf32>
    %cst_234 = arith.constant 1.000000e+00 : f32
    %890 = vector.broadcast %cst_234 : f32 to vector<2x32xf32>
    %891 = arith.subf %890, %861 : vector<2x32xf32>
    %892 = arith.mulf %891, %867 : vector<2x32xf32>
    %893 = arith.mulf %861, %821 : vector<2x32xf32>
    %894 = arith.addf %892, %893 : vector<2x32xf32>
    %cst_235 = arith.constant 1.000000e+00 : f32
    %895 = vector.broadcast %cst_235 : f32 to vector<2x32xf32>
    %896 = arith.subf %895, %883 : vector<2x32xf32>
    %897 = arith.mulf %896, %889 : vector<2x32xf32>
    %898 = arith.mulf %883, %826 : vector<2x32xf32>
    %899 = arith.addf %897, %898 : vector<2x32xf32>
    %900 = arith.truncf %894 : vector<2x32xf32> to vector<2x32xbf16>
    %c2_i32_236 = arith.constant 2 : i32
    %901 = arith.muli %c3_i32_222, %c2_i32_236 : i32
    %902 = arith.index_cast %901 : i32 to index
    %c0_237 = arith.constant 0 : index
    %903 = vector.load %arg39[%902, %c0_237] : memref<16x64xbf16, #tpu.memory_space<vmem>>, vector<2x32xbf16>
    tpu.vector_store %arg39[%902, %c0_237], %900 {strides = array<i32>} : memref<16x64xbf16, #tpu.memory_space<vmem>>, vector<2x32xbf16>,
    %904 = arith.truncf %899 : vector<2x32xf32> to vector<2x32xbf16>
    %c2_i32_238 = arith.constant 2 : i32
    %905 = arith.muli %835, %c2_i32_238 : i32
    %906 = arith.index_cast %905 : i32 to index
    %c32_239 = arith.constant 32 : index
    %907 = vector.load %arg39[%906, %c32_239] : memref<16x64xbf16, #tpu.memory_space<vmem>>, vector<2x32xbf16>
    tpu.vector_store %arg39[%906, %c32_239], %904 {strides = array<i32>} : memref<16x64xbf16, #tpu.memory_space<vmem>>, vector<2x32xbf16>,
    %c4_i32_240 = arith.constant 4 : i32
    %c7_i32_241 = arith.constant 7 : i32
    %908 = arith.subi %c7_i32_241, %c4_i32_240 : i32
    %909 = arith.truncf %894 : vector<2x32xf32> to vector<2x32xbf16>
    %cst_242 = arith.constant dense<0.000000e+00> : vector<2x96xf32>
    %910 = tpu.matmul %909, %607, %cst_242 {dimension_numbers = #tpu.dot_dimension_numbers<[1], [0], [0], [1], [0, 0, 1, 1], [], []>} : vector<2x32xbf16>, vector<32x96xbf16>, vector<2x96xf32> -> vector<2x96xf32>
    %911 = arith.truncf %899 : vector<2x32xf32> to vector<2x32xbf16>
    %cst_243 = arith.constant dense<0.000000e+00> : vector<2x96xf32>
    %912 = tpu.matmul %911, %608, %cst_243 {dimension_numbers = #tpu.dot_dimension_numbers<[1], [0], [0], [1], [0, 0, 1, 1], [], []>} : vector<2x32xbf16>, vector<32x96xbf16>, vector<2x96xf32> -> vector<2x96xf32>
    %c2_i32_244 = arith.constant 2 : i32
    %913 = arith.muli %c4_i32_240, %c2_i32_244 : i32
    %914 = arith.index_cast %913 : i32 to index
    %c0_245 = arith.constant 0 : index
    %915 = vector.load %arg40[%914, %c0_245] : memref<16x192xf32, #tpu.memory_space<vmem>>, vector<2x96xf32>
    %c2_i32_246 = arith.constant 2 : i32
    %916 = arith.muli %908, %c2_i32_246 : i32
    %917 = arith.index_cast %916 : i32 to index
    %c96_247 = arith.constant 96 : index
    %918 = vector.load %arg40[%917, %c96_247] : memref<16x192xf32, #tpu.memory_space<vmem>>, vector<2x96xf32>
    %919 = vector.extract_strided_slice %915 {offsets = [0, 0], sizes = [2, 32], strides = [1, 1]} : vector<2x96xf32> to vector<2x32xf32>
    %920 = vector.extract_strided_slice %910 {offsets = [0, 0], sizes = [2, 32], strides = [1, 1]} : vector<2x96xf32> to vector<2x32xf32>
    %921 = arith.addf %919, %920 : vector<2x32xf32>
    %922 = arith.negf %921 : vector<2x32xf32>
    %923 = math.exp %922 : vector<2x32xf32>
    %cst_248 = arith.constant 1.000000e+00 : f32
    %924 = vector.broadcast %cst_248 : f32 to vector<2x32xf32>
    %925 = arith.addf %924, %923 : vector<2x32xf32>
    %926 = arith.divf %924, %925 : vector<2x32xf32>
    %927 = vector.extract_strided_slice %915 {offsets = [0, 32], sizes = [2, 32], strides = [1, 1]} : vector<2x96xf32> to vector<2x32xf32>
    %928 = vector.extract_strided_slice %910 {offsets = [0, 32], sizes = [2, 32], strides = [1, 1]} : vector<2x96xf32> to vector<2x32xf32>
    %929 = arith.addf %927, %928 : vector<2x32xf32>
    %930 = arith.negf %929 : vector<2x32xf32>
    %931 = math.exp %930 : vector<2x32xf32>
    %cst_249 = arith.constant 1.000000e+00 : f32
    %932 = vector.broadcast %cst_249 : f32 to vector<2x32xf32>
    %933 = arith.addf %932, %931 : vector<2x32xf32>
    %934 = arith.divf %932, %933 : vector<2x32xf32>
    %935 = vector.extract_strided_slice %915 {offsets = [0, 64], sizes = [2, 32], strides = [1, 1]} : vector<2x96xf32> to vector<2x32xf32>
    %936 = vector.extract_strided_slice %910 {offsets = [0, 64], sizes = [2, 32], strides = [1, 1]} : vector<2x96xf32> to vector<2x32xf32>
    %937 = arith.addf %936, %611 : vector<2x32xf32>
    %938 = arith.mulf %926, %937 : vector<2x32xf32>
    %939 = arith.addf %935, %938 : vector<2x32xf32>
    %940 = math.tanh %939 : vector<2x32xf32>
    %941 = vector.extract_strided_slice %918 {offsets = [0, 0], sizes = [2, 32], strides = [1, 1]} : vector<2x96xf32> to vector<2x32xf32>
    %942 = vector.extract_strided_slice %912 {offsets = [0, 0], sizes = [2, 32], strides = [1, 1]} : vector<2x96xf32> to vector<2x32xf32>
    %943 = arith.addf %941, %942 : vector<2x32xf32>
    %944 = arith.negf %943 : vector<2x32xf32>
    %945 = math.exp %944 : vector<2x32xf32>
    %cst_250 = arith.constant 1.000000e+00 : f32
    %946 = vector.broadcast %cst_250 : f32 to vector<2x32xf32>
    %947 = arith.addf %946, %945 : vector<2x32xf32>
    %948 = arith.divf %946, %947 : vector<2x32xf32>
    %949 = vector.extract_strided_slice %918 {offsets = [0, 32], sizes = [2, 32], strides = [1, 1]} : vector<2x96xf32> to vector<2x32xf32>
    %950 = vector.extract_strided_slice %912 {offsets = [0, 32], sizes = [2, 32], strides = [1, 1]} : vector<2x96xf32> to vector<2x32xf32>
    %951 = arith.addf %949, %950 : vector<2x32xf32>
    %952 = arith.negf %951 : vector<2x32xf32>
    %953 = math.exp %952 : vector<2x32xf32>
    %cst_251 = arith.constant 1.000000e+00 : f32
    %954 = vector.broadcast %cst_251 : f32 to vector<2x32xf32>
    %955 = arith.addf %954, %953 : vector<2x32xf32>
    %956 = arith.divf %954, %955 : vector<2x32xf32>
    %957 = vector.extract_strided_slice %918 {offsets = [0, 64], sizes = [2, 32], strides = [1, 1]} : vector<2x96xf32> to vector<2x32xf32>
    %958 = vector.extract_strided_slice %912 {offsets = [0, 64], sizes = [2, 32], strides = [1, 1]} : vector<2x96xf32> to vector<2x32xf32>
    %959 = arith.addf %958, %614 : vector<2x32xf32>
    %960 = arith.mulf %948, %959 : vector<2x32xf32>
    %961 = arith.addf %957, %960 : vector<2x32xf32>
    %962 = math.tanh %961 : vector<2x32xf32>
    %cst_252 = arith.constant 1.000000e+00 : f32
    %963 = vector.broadcast %cst_252 : f32 to vector<2x32xf32>
    %964 = arith.subf %963, %934 : vector<2x32xf32>
    %965 = arith.mulf %964, %940 : vector<2x32xf32>
    %966 = arith.mulf %934, %894 : vector<2x32xf32>
    %967 = arith.addf %965, %966 : vector<2x32xf32>
    %cst_253 = arith.constant 1.000000e+00 : f32
    %968 = vector.broadcast %cst_253 : f32 to vector<2x32xf32>
    %969 = arith.subf %968, %956 : vector<2x32xf32>
    %970 = arith.mulf %969, %962 : vector<2x32xf32>
    %971 = arith.mulf %956, %899 : vector<2x32xf32>
    %972 = arith.addf %970, %971 : vector<2x32xf32>
    %973 = arith.truncf %967 : vector<2x32xf32> to vector<2x32xbf16>
    %c2_i32_254 = arith.constant 2 : i32
    %974 = arith.muli %c4_i32_240, %c2_i32_254 : i32
    %975 = arith.index_cast %974 : i32 to index
    %c0_255 = arith.constant 0 : index
    %976 = vector.load %arg39[%975, %c0_255] : memref<16x64xbf16, #tpu.memory_space<vmem>>, vector<2x32xbf16>
    tpu.vector_store %arg39[%975, %c0_255], %973 {strides = array<i32>} : memref<16x64xbf16, #tpu.memory_space<vmem>>, vector<2x32xbf16>,
    %977 = arith.truncf %972 : vector<2x32xf32> to vector<2x32xbf16>
    %c2_i32_256 = arith.constant 2 : i32
    %978 = arith.muli %908, %c2_i32_256 : i32
    %979 = arith.index_cast %978 : i32 to index
    %c32_257 = arith.constant 32 : index
    %980 = vector.load %arg39[%979, %c32_257] : memref<16x64xbf16, #tpu.memory_space<vmem>>, vector<2x32xbf16>
    tpu.vector_store %arg39[%979, %c32_257], %977 {strides = array<i32>} : memref<16x64xbf16, #tpu.memory_space<vmem>>, vector<2x32xbf16>,
    %c5_i32_258 = arith.constant 5 : i32
    %c7_i32_259 = arith.constant 7 : i32
    %981 = arith.subi %c7_i32_259, %c5_i32_258 : i32
    %982 = arith.truncf %967 : vector<2x32xf32> to vector<2x32xbf16>
    %cst_260 = arith.constant dense<0.000000e+00> : vector<2x96xf32>
    %983 = tpu.matmul %982, %607, %cst_260 {dimension_numbers = #tpu.dot_dimension_numbers<[1], [0], [0], [1], [0, 0, 1, 1], [], []>} : vector<2x32xbf16>, vector<32x96xbf16>, vector<2x96xf32> -> vector<2x96xf32>
    %984 = arith.truncf %972 : vector<2x32xf32> to vector<2x32xbf16>
    %cst_261 = arith.constant dense<0.000000e+00> : vector<2x96xf32>
    %985 = tpu.matmul %984, %608, %cst_261 {dimension_numbers = #tpu.dot_dimension_numbers<[1], [0], [0], [1], [0, 0, 1, 1], [], []>} : vector<2x32xbf16>, vector<32x96xbf16>, vector<2x96xf32> -> vector<2x96xf32>
    %c2_i32_262 = arith.constant 2 : i32
    %986 = arith.muli %c5_i32_258, %c2_i32_262 : i32
    %987 = arith.index_cast %986 : i32 to index
    %c0_263 = arith.constant 0 : index
    %988 = vector.load %arg40[%987, %c0_263] : memref<16x192xf32, #tpu.memory_space<vmem>>, vector<2x96xf32>
    %c2_i32_264 = arith.constant 2 : i32
    %989 = arith.muli %981, %c2_i32_264 : i32
    %990 = arith.index_cast %989 : i32 to index
    %c96_265 = arith.constant 96 : index
    %991 = vector.load %arg40[%990, %c96_265] : memref<16x192xf32, #tpu.memory_space<vmem>>, vector<2x96xf32>
    %992 = vector.extract_strided_slice %988 {offsets = [0, 0], sizes = [2, 32], strides = [1, 1]} : vector<2x96xf32> to vector<2x32xf32>
    %993 = vector.extract_strided_slice %983 {offsets = [0, 0], sizes = [2, 32], strides = [1, 1]} : vector<2x96xf32> to vector<2x32xf32>
    %994 = arith.addf %992, %993 : vector<2x32xf32>
    %995 = arith.negf %994 : vector<2x32xf32>
    %996 = math.exp %995 : vector<2x32xf32>
    %cst_266 = arith.constant 1.000000e+00 : f32
    %997 = vector.broadcast %cst_266 : f32 to vector<2x32xf32>
    %998 = arith.addf %997, %996 : vector<2x32xf32>
    %999 = arith.divf %997, %998 : vector<2x32xf32>
    %1000 = vector.extract_strided_slice %988 {offsets = [0, 32], sizes = [2, 32], strides = [1, 1]} : vector<2x96xf32> to vector<2x32xf32>
    %1001 = vector.extract_strided_slice %983 {offsets = [0, 32], sizes = [2, 32], strides = [1, 1]} : vector<2x96xf32> to vector<2x32xf32>
    %1002 = arith.addf %1000, %1001 : vector<2x32xf32>
    %1003 = arith.negf %1002 : vector<2x32xf32>
    %1004 = math.exp %1003 : vector<2x32xf32>
    %cst_267 = arith.constant 1.000000e+00 : f32
    %1005 = vector.broadcast %cst_267 : f32 to vector<2x32xf32>
    %1006 = arith.addf %1005, %1004 : vector<2x32xf32>
    %1007 = arith.divf %1005, %1006 : vector<2x32xf32>
    %1008 = vector.extract_strided_slice %988 {offsets = [0, 64], sizes = [2, 32], strides = [1, 1]} : vector<2x96xf32> to vector<2x32xf32>
    %1009 = vector.extract_strided_slice %983 {offsets = [0, 64], sizes = [2, 32], strides = [1, 1]} : vector<2x96xf32> to vector<2x32xf32>
    %1010 = arith.addf %1009, %611 : vector<2x32xf32>
    %1011 = arith.mulf %999, %1010 : vector<2x32xf32>
    %1012 = arith.addf %1008, %1011 : vector<2x32xf32>
    %1013 = math.tanh %1012 : vector<2x32xf32>
    %1014 = vector.extract_strided_slice %991 {offsets = [0, 0], sizes = [2, 32], strides = [1, 1]} : vector<2x96xf32> to vector<2x32xf32>
    %1015 = vector.extract_strided_slice %985 {offsets = [0, 0], sizes = [2, 32], strides = [1, 1]} : vector<2x96xf32> to vector<2x32xf32>
    %1016 = arith.addf %1014, %1015 : vector<2x32xf32>
    %1017 = arith.negf %1016 : vector<2x32xf32>
    %1018 = math.exp %1017 : vector<2x32xf32>
    %cst_268 = arith.constant 1.000000e+00 : f32
    %1019 = vector.broadcast %cst_268 : f32 to vector<2x32xf32>
    %1020 = arith.addf %1019, %1018 : vector<2x32xf32>
    %1021 = arith.divf %1019, %1020 : vector<2x32xf32>
    %1022 = vector.extract_strided_slice %991 {offsets = [0, 32], sizes = [2, 32], strides = [1, 1]} : vector<2x96xf32> to vector<2x32xf32>
    %1023 = vector.extract_strided_slice %985 {offsets = [0, 32], sizes = [2, 32], strides = [1, 1]} : vector<2x96xf32> to vector<2x32xf32>
    %1024 = arith.addf %1022, %1023 : vector<2x32xf32>
    %1025 = arith.negf %1024 : vector<2x32xf32>
    %1026 = math.exp %1025 : vector<2x32xf32>
    %cst_269 = arith.constant 1.000000e+00 : f32
    %1027 = vector.broadcast %cst_269 : f32 to vector<2x32xf32>
    %1028 = arith.addf %1027, %1026 : vector<2x32xf32>
    %1029 = arith.divf %1027, %1028 : vector<2x32xf32>
    %1030 = vector.extract_strided_slice %991 {offsets = [0, 64], sizes = [2, 32], strides = [1, 1]} : vector<2x96xf32> to vector<2x32xf32>
    %1031 = vector.extract_strided_slice %985 {offsets = [0, 64], sizes = [2, 32], strides = [1, 1]} : vector<2x96xf32> to vector<2x32xf32>
    %1032 = arith.addf %1031, %614 : vector<2x32xf32>
    %1033 = arith.mulf %1021, %1032 : vector<2x32xf32>
    %1034 = arith.addf %1030, %1033 : vector<2x32xf32>
    %1035 = math.tanh %1034 : vector<2x32xf32>
    %cst_270 = arith.constant 1.000000e+00 : f32
    %1036 = vector.broadcast %cst_270 : f32 to vector<2x32xf32>
    %1037 = arith.subf %1036, %1007 : vector<2x32xf32>
    %1038 = arith.mulf %1037, %1013 : vector<2x32xf32>
    %1039 = arith.mulf %1007, %967 : vector<2x32xf32>
    %1040 = arith.addf %1038, %1039 : vector<2x32xf32>
    %cst_271 = arith.constant 1.000000e+00 : f32
    %1041 = vector.broadcast %cst_271 : f32 to vector<2x32xf32>
    %1042 = arith.subf %1041, %1029 : vector<2x32xf32>
    %1043 = arith.mulf %1042, %1035 : vector<2x32xf32>
    %1044 = arith.mulf %1029, %972 : vector<2x32xf32>
    %1045 = arith.addf %1043, %1044 : vector<2x32xf32>
    %1046 = arith.truncf %1040 : vector<2x32xf32> to vector<2x32xbf16>
    %c2_i32_272 = arith.constant 2 : i32
    %1047 = arith.muli %c5_i32_258, %c2_i32_272 : i32
    %1048 = arith.index_cast %1047 : i32 to index
    %c0_273 = arith.constant 0 : index
    %1049 = vector.load %arg39[%1048, %c0_273] : memref<16x64xbf16, #tpu.memory_space<vmem>>, vector<2x32xbf16>
    tpu.vector_store %arg39[%1048, %c0_273], %1046 {strides = array<i32>} : memref<16x64xbf16, #tpu.memory_space<vmem>>, vector<2x32xbf16>,
    %1050 = arith.truncf %1045 : vector<2x32xf32> to vector<2x32xbf16>
    %c2_i32_274 = arith.constant 2 : i32
    %1051 = arith.muli %981, %c2_i32_274 : i32
    %1052 = arith.index_cast %1051 : i32 to index
    %c32_275 = arith.constant 32 : index
    %1053 = vector.load %arg39[%1052, %c32_275] : memref<16x64xbf16, #tpu.memory_space<vmem>>, vector<2x32xbf16>
    tpu.vector_store %arg39[%1052, %c32_275], %1050 {strides = array<i32>} : memref<16x64xbf16, #tpu.memory_space<vmem>>, vector<2x32xbf16>,
    %c6_i32_276 = arith.constant 6 : i32
    %c7_i32_277 = arith.constant 7 : i32
    %1054 = arith.subi %c7_i32_277, %c6_i32_276 : i32
    %1055 = arith.truncf %1040 : vector<2x32xf32> to vector<2x32xbf16>
    %cst_278 = arith.constant dense<0.000000e+00> : vector<2x96xf32>
    %1056 = tpu.matmul %1055, %607, %cst_278 {dimension_numbers = #tpu.dot_dimension_numbers<[1], [0], [0], [1], [0, 0, 1, 1], [], []>} : vector<2x32xbf16>, vector<32x96xbf16>, vector<2x96xf32> -> vector<2x96xf32>
    %1057 = arith.truncf %1045 : vector<2x32xf32> to vector<2x32xbf16>
    %cst_279 = arith.constant dense<0.000000e+00> : vector<2x96xf32>
    %1058 = tpu.matmul %1057, %608, %cst_279 {dimension_numbers = #tpu.dot_dimension_numbers<[1], [0], [0], [1], [0, 0, 1, 1], [], []>} : vector<2x32xbf16>, vector<32x96xbf16>, vector<2x96xf32> -> vector<2x96xf32>
    %c2_i32_280 = arith.constant 2 : i32
    %1059 = arith.muli %c6_i32_276, %c2_i32_280 : i32
    %1060 = arith.index_cast %1059 : i32 to index
    %c0_281 = arith.constant 0 : index
    %1061 = vector.load %arg40[%1060, %c0_281] : memref<16x192xf32, #tpu.memory_space<vmem>>, vector<2x96xf32>
    %c2_i32_282 = arith.constant 2 : i32
    %1062 = arith.muli %1054, %c2_i32_282 : i32
    %1063 = arith.index_cast %1062 : i32 to index
    %c96_283 = arith.constant 96 : index
    %1064 = vector.load %arg40[%1063, %c96_283] : memref<16x192xf32, #tpu.memory_space<vmem>>, vector<2x96xf32>
    %1065 = vector.extract_strided_slice %1061 {offsets = [0, 0], sizes = [2, 32], strides = [1, 1]} : vector<2x96xf32> to vector<2x32xf32>
    %1066 = vector.extract_strided_slice %1056 {offsets = [0, 0], sizes = [2, 32], strides = [1, 1]} : vector<2x96xf32> to vector<2x32xf32>
    %1067 = arith.addf %1065, %1066 : vector<2x32xf32>
    %1068 = arith.negf %1067 : vector<2x32xf32>
    %1069 = math.exp %1068 : vector<2x32xf32>
    %cst_284 = arith.constant 1.000000e+00 : f32
    %1070 = vector.broadcast %cst_284 : f32 to vector<2x32xf32>
    %1071 = arith.addf %1070, %1069 : vector<2x32xf32>
    %1072 = arith.divf %1070, %1071 : vector<2x32xf32>
    %1073 = vector.extract_strided_slice %1061 {offsets = [0, 32], sizes = [2, 32], strides = [1, 1]} : vector<2x96xf32> to vector<2x32xf32>
    %1074 = vector.extract_strided_slice %1056 {offsets = [0, 32], sizes = [2, 32], strides = [1, 1]} : vector<2x96xf32> to vector<2x32xf32>
    %1075 = arith.addf %1073, %1074 : vector<2x32xf32>
    %1076 = arith.negf %1075 : vector<2x32xf32>
    %1077 = math.exp %1076 : vector<2x32xf32>
    %cst_285 = arith.constant 1.000000e+00 : f32
    %1078 = vector.broadcast %cst_285 : f32 to vector<2x32xf32>
    %1079 = arith.addf %1078, %1077 : vector<2x32xf32>
    %1080 = arith.divf %1078, %1079 : vector<2x32xf32>
    %1081 = vector.extract_strided_slice %1061 {offsets = [0, 64], sizes = [2, 32], strides = [1, 1]} : vector<2x96xf32> to vector<2x32xf32>
    %1082 = vector.extract_strided_slice %1056 {offsets = [0, 64], sizes = [2, 32], strides = [1, 1]} : vector<2x96xf32> to vector<2x32xf32>
    %1083 = arith.addf %1082, %611 : vector<2x32xf32>
    %1084 = arith.mulf %1072, %1083 : vector<2x32xf32>
    %1085 = arith.addf %1081, %1084 : vector<2x32xf32>
    %1086 = math.tanh %1085 : vector<2x32xf32>
    %1087 = vector.extract_strided_slice %1064 {offsets = [0, 0], sizes = [2, 32], strides = [1, 1]} : vector<2x96xf32> to vector<2x32xf32>
    %1088 = vector.extract_strided_slice %1058 {offsets = [0, 0], sizes = [2, 32], strides = [1, 1]} : vector<2x96xf32> to vector<2x32xf32>
    %1089 = arith.addf %1087, %1088 : vector<2x32xf32>
    %1090 = arith.negf %1089 : vector<2x32xf32>
    %1091 = math.exp %1090 : vector<2x32xf32>
    %cst_286 = arith.constant 1.000000e+00 : f32
    %1092 = vector.broadcast %cst_286 : f32 to vector<2x32xf32>
    %1093 = arith.addf %1092, %1091 : vector<2x32xf32>
    %1094 = arith.divf %1092, %1093 : vector<2x32xf32>
    %1095 = vector.extract_strided_slice %1064 {offsets = [0, 32], sizes = [2, 32], strides = [1, 1]} : vector<2x96xf32> to vector<2x32xf32>
    %1096 = vector.extract_strided_slice %1058 {offsets = [0, 32], sizes = [2, 32], strides = [1, 1]} : vector<2x96xf32> to vector<2x32xf32>
    %1097 = arith.addf %1095, %1096 : vector<2x32xf32>
    %1098 = arith.negf %1097 : vector<2x32xf32>
    %1099 = math.exp %1098 : vector<2x32xf32>
    %cst_287 = arith.constant 1.000000e+00 : f32
    %1100 = vector.broadcast %cst_287 : f32 to vector<2x32xf32>
    %1101 = arith.addf %1100, %1099 : vector<2x32xf32>
    %1102 = arith.divf %1100, %1101 : vector<2x32xf32>
    %1103 = vector.extract_strided_slice %1064 {offsets = [0, 64], sizes = [2, 32], strides = [1, 1]} : vector<2x96xf32> to vector<2x32xf32>
    %1104 = vector.extract_strided_slice %1058 {offsets = [0, 64], sizes = [2, 32], strides = [1, 1]} : vector<2x96xf32> to vector<2x32xf32>
    %1105 = arith.addf %1104, %614 : vector<2x32xf32>
    %1106 = arith.mulf %1094, %1105 : vector<2x32xf32>
    %1107 = arith.addf %1103, %1106 : vector<2x32xf32>
    %1108 = math.tanh %1107 : vector<2x32xf32>
    %cst_288 = arith.constant 1.000000e+00 : f32
    %1109 = vector.broadcast %cst_288 : f32 to vector<2x32xf32>
    %1110 = arith.subf %1109, %1080 : vector<2x32xf32>
    %1111 = arith.mulf %1110, %1086 : vector<2x32xf32>
    %1112 = arith.mulf %1080, %1040 : vector<2x32xf32>
    %1113 = arith.addf %1111, %1112 : vector<2x32xf32>
    %cst_289 = arith.constant 1.000000e+00 : f32
    %1114 = vector.broadcast %cst_289 : f32 to vector<2x32xf32>
    %1115 = arith.subf %1114, %1102 : vector<2x32xf32>
    %1116 = arith.mulf %1115, %1108 : vector<2x32xf32>
    %1117 = arith.mulf %1102, %1045 : vector<2x32xf32>
    %1118 = arith.addf %1116, %1117 : vector<2x32xf32>
    %1119 = arith.truncf %1113 : vector<2x32xf32> to vector<2x32xbf16>
    %c2_i32_290 = arith.constant 2 : i32
    %1120 = arith.muli %c6_i32_276, %c2_i32_290 : i32
    %1121 = arith.index_cast %1120 : i32 to index
    %c0_291 = arith.constant 0 : index
    %1122 = vector.load %arg39[%1121, %c0_291] : memref<16x64xbf16, #tpu.memory_space<vmem>>, vector<2x32xbf16>
    tpu.vector_store %arg39[%1121, %c0_291], %1119 {strides = array<i32>} : memref<16x64xbf16, #tpu.memory_space<vmem>>, vector<2x32xbf16>,
    %1123 = arith.truncf %1118 : vector<2x32xf32> to vector<2x32xbf16>
    %c2_i32_292 = arith.constant 2 : i32
    %1124 = arith.muli %1054, %c2_i32_292 : i32
    %1125 = arith.index_cast %1124 : i32 to index
    %c32_293 = arith.constant 32 : index
    %1126 = vector.load %arg39[%1125, %c32_293] : memref<16x64xbf16, #tpu.memory_space<vmem>>, vector<2x32xbf16>
    tpu.vector_store %arg39[%1125, %c32_293], %1123 {strides = array<i32>} : memref<16x64xbf16, #tpu.memory_space<vmem>>, vector<2x32xbf16>,
    %c7_i32_294 = arith.constant 7 : i32
    %c7_i32_295 = arith.constant 7 : i32
    %1127 = arith.subi %c7_i32_295, %c7_i32_294 : i32
    %1128 = arith.truncf %1113 : vector<2x32xf32> to vector<2x32xbf16>
    %cst_296 = arith.constant dense<0.000000e+00> : vector<2x96xf32>
    %1129 = tpu.matmul %1128, %607, %cst_296 {dimension_numbers = #tpu.dot_dimension_numbers<[1], [0], [0], [1], [0, 0, 1, 1], [], []>} : vector<2x32xbf16>, vector<32x96xbf16>, vector<2x96xf32> -> vector<2x96xf32>
    %1130 = arith.truncf %1118 : vector<2x32xf32> to vector<2x32xbf16>
    %cst_297 = arith.constant dense<0.000000e+00> : vector<2x96xf32>
    %1131 = tpu.matmul %1130, %608, %cst_297 {dimension_numbers = #tpu.dot_dimension_numbers<[1], [0], [0], [1], [0, 0, 1, 1], [], []>} : vector<2x32xbf16>, vector<32x96xbf16>, vector<2x96xf32> -> vector<2x96xf32>
    %c2_i32_298 = arith.constant 2 : i32
    %1132 = arith.muli %c7_i32_294, %c2_i32_298 : i32
    %1133 = arith.index_cast %1132 : i32 to index
    %c0_299 = arith.constant 0 : index
    %1134 = vector.load %arg40[%1133, %c0_299] : memref<16x192xf32, #tpu.memory_space<vmem>>, vector<2x96xf32>
    %c2_i32_300 = arith.constant 2 : i32
    %1135 = arith.muli %1127, %c2_i32_300 : i32
    %1136 = arith.index_cast %1135 : i32 to index
    %c96_301 = arith.constant 96 : index
    %1137 = vector.load %arg40[%1136, %c96_301] : memref<16x192xf32, #tpu.memory_space<vmem>>, vector<2x96xf32>
    %1138 = vector.extract_strided_slice %1134 {offsets = [0, 0], sizes = [2, 32], strides = [1, 1]} : vector<2x96xf32> to vector<2x32xf32>
    %1139 = vector.extract_strided_slice %1129 {offsets = [0, 0], sizes = [2, 32], strides = [1, 1]} : vector<2x96xf32> to vector<2x32xf32>
    %1140 = arith.addf %1138, %1139 : vector<2x32xf32>
    %1141 = arith.negf %1140 : vector<2x32xf32>
    %1142 = math.exp %1141 : vector<2x32xf32>
    %cst_302 = arith.constant 1.000000e+00 : f32
    %1143 = vector.broadcast %cst_302 : f32 to vector<2x32xf32>
    %1144 = arith.addf %1143, %1142 : vector<2x32xf32>
    %1145 = arith.divf %1143, %1144 : vector<2x32xf32>
    %1146 = vector.extract_strided_slice %1134 {offsets = [0, 32], sizes = [2, 32], strides = [1, 1]} : vector<2x96xf32> to vector<2x32xf32>
    %1147 = vector.extract_strided_slice %1129 {offsets = [0, 32], sizes = [2, 32], strides = [1, 1]} : vector<2x96xf32> to vector<2x32xf32>
    %1148 = arith.addf %1146, %1147 : vector<2x32xf32>
    %1149 = arith.negf %1148 : vector<2x32xf32>
    %1150 = math.exp %1149 : vector<2x32xf32>
    %cst_303 = arith.constant 1.000000e+00 : f32
    %1151 = vector.broadcast %cst_303 : f32 to vector<2x32xf32>
    %1152 = arith.addf %1151, %1150 : vector<2x32xf32>
    %1153 = arith.divf %1151, %1152 : vector<2x32xf32>
    %1154 = vector.extract_strided_slice %1134 {offsets = [0, 64], sizes = [2, 32], strides = [1, 1]} : vector<2x96xf32> to vector<2x32xf32>
    %1155 = vector.extract_strided_slice %1129 {offsets = [0, 64], sizes = [2, 32], strides = [1, 1]} : vector<2x96xf32> to vector<2x32xf32>
    %1156 = arith.addf %1155, %611 : vector<2x32xf32>
    %1157 = arith.mulf %1145, %1156 : vector<2x32xf32>
    %1158 = arith.addf %1154, %1157 : vector<2x32xf32>
    %1159 = math.tanh %1158 : vector<2x32xf32>
    %1160 = vector.extract_strided_slice %1137 {offsets = [0, 0], sizes = [2, 32], strides = [1, 1]} : vector<2x96xf32> to vector<2x32xf32>
    %1161 = vector.extract_strided_slice %1131 {offsets = [0, 0], sizes = [2, 32], strides = [1, 1]} : vector<2x96xf32> to vector<2x32xf32>
    %1162 = arith.addf %1160, %1161 : vector<2x32xf32>
    %1163 = arith.negf %1162 : vector<2x32xf32>
    %1164 = math.exp %1163 : vector<2x32xf32>
    %cst_304 = arith.constant 1.000000e+00 : f32
    %1165 = vector.broadcast %cst_304 : f32 to vector<2x32xf32>
    %1166 = arith.addf %1165, %1164 : vector<2x32xf32>
    %1167 = arith.divf %1165, %1166 : vector<2x32xf32>
    %1168 = vector.extract_strided_slice %1137 {offsets = [0, 32], sizes = [2, 32], strides = [1, 1]} : vector<2x96xf32> to vector<2x32xf32>
    %1169 = vector.extract_strided_slice %1131 {offsets = [0, 32], sizes = [2, 32], strides = [1, 1]} : vector<2x96xf32> to vector<2x32xf32>
    %1170 = arith.addf %1168, %1169 : vector<2x32xf32>
    %1171 = arith.negf %1170 : vector<2x32xf32>
    %1172 = math.exp %1171 : vector<2x32xf32>
    %cst_305 = arith.constant 1.000000e+00 : f32
    %1173 = vector.broadcast %cst_305 : f32 to vector<2x32xf32>
    %1174 = arith.addf %1173, %1172 : vector<2x32xf32>
    %1175 = arith.divf %1173, %1174 : vector<2x32xf32>
    %1176 = vector.extract_strided_slice %1137 {offsets = [0, 64], sizes = [2, 32], strides = [1, 1]} : vector<2x96xf32> to vector<2x32xf32>
    %1177 = vector.extract_strided_slice %1131 {offsets = [0, 64], sizes = [2, 32], strides = [1, 1]} : vector<2x96xf32> to vector<2x32xf32>
    %1178 = arith.addf %1177, %614 : vector<2x32xf32>
    %1179 = arith.mulf %1167, %1178 : vector<2x32xf32>
    %1180 = arith.addf %1176, %1179 : vector<2x32xf32>
    %1181 = math.tanh %1180 : vector<2x32xf32>
    %cst_306 = arith.constant 1.000000e+00 : f32
    %1182 = vector.broadcast %cst_306 : f32 to vector<2x32xf32>
    %1183 = arith.subf %1182, %1153 : vector<2x32xf32>
    %1184 = arith.mulf %1183, %1159 : vector<2x32xf32>
    %1185 = arith.mulf %1153, %1113 : vector<2x32xf32>
    %1186 = arith.addf %1184, %1185 : vector<2x32xf32>
    %cst_307 = arith.constant 1.000000e+00 : f32
    %1187 = vector.broadcast %cst_307 : f32 to vector<2x32xf32>
    %1188 = arith.subf %1187, %1175 : vector<2x32xf32>
    %1189 = arith.mulf %1188, %1181 : vector<2x32xf32>
    %1190 = arith.mulf %1175, %1118 : vector<2x32xf32>
    %1191 = arith.addf %1189, %1190 : vector<2x32xf32>
    %1192 = arith.truncf %1186 : vector<2x32xf32> to vector<2x32xbf16>
    %c2_i32_308 = arith.constant 2 : i32
    %1193 = arith.muli %c7_i32_294, %c2_i32_308 : i32
    %1194 = arith.index_cast %1193 : i32 to index
    %c0_309 = arith.constant 0 : index
    %1195 = vector.load %arg39[%1194, %c0_309] : memref<16x64xbf16, #tpu.memory_space<vmem>>, vector<2x32xbf16>
    tpu.vector_store %arg39[%1194, %c0_309], %1192 {strides = array<i32>} : memref<16x64xbf16, #tpu.memory_space<vmem>>, vector<2x32xbf16>,
    %1196 = arith.truncf %1191 : vector<2x32xf32> to vector<2x32xbf16>
    %c2_i32_310 = arith.constant 2 : i32
    %1197 = arith.muli %1127, %c2_i32_310 : i32
    %1198 = arith.index_cast %1197 : i32 to index
    %c32_311 = arith.constant 32 : index
    %1199 = vector.load %arg39[%1198, %c32_311] : memref<16x64xbf16, #tpu.memory_space<vmem>>, vector<2x32xbf16>
    tpu.vector_store %arg39[%1198, %c32_311], %1196 {strides = array<i32>} : memref<16x64xbf16, #tpu.memory_space<vmem>>, vector<2x32xbf16>,
    %c8_i32_312 = arith.constant 8 : i32
    %c0_313 = arith.constant 0 : index
    %c0_314 = arith.constant 0 : index
    %1200 = vector.load %arg39[%c0_313, %c0_314] : memref<16x64xbf16, #tpu.memory_space<vmem>>, vector<16x64xbf16>
    %c0_315 = arith.constant 0 : index
    %c0_316 = arith.constant 0 : index
    %1201 = vector.load %arg13[%c0_315, %c0_316] : memref<64x192xbf16, #tpu.memory_space<vmem>>, vector<64x192xbf16>
    %cst_317 = arith.constant dense<0.000000e+00> : vector<16x192xf32>
    %1202 = tpu.matmul %1200, %1201, %cst_317 {dimension_numbers = #tpu.dot_dimension_numbers<[1], [0], [0], [1], [0, 0, 1, 1], [], []>} : vector<16x64xbf16>, vector<64x192xbf16>, vector<16x192xf32> -> vector<16x192xf32>
    %c0_318 = arith.constant 0 : index
    %c0_319 = arith.constant 0 : index
    %1203 = vector.load %arg14[%c0_318, %c0_319] : memref<1x192xf32, #tpu.memory_space<vmem>>, vector<1x192xf32>
    %1204 = vector.broadcast %1203 : vector<1x192xf32> to vector<16x192xf32>
    %1205 = arith.addf %1202, %1204 : vector<16x192xf32>
    %c0_320 = arith.constant 0 : index
    %c0_321 = arith.constant 0 : index
    %1206 = vector.load %arg40[%c0_320, %c0_321] : memref<16x192xf32, #tpu.memory_space<vmem>>, vector<16x192xf32>
    tpu.vector_store %arg40[%c0_320, %c0_321], %1205 {strides = array<i32>} : memref<16x192xf32, #tpu.memory_space<vmem>>, vector<16x192xf32>,
    %c0_322 = arith.constant 0 : index
    %c0_323 = arith.constant 0 : index
    %1207 = vector.load %arg15[%c0_322, %c0_323] : memref<32x96xbf16, #tpu.memory_space<vmem>>, vector<32x96xbf16>
    %c0_324 = arith.constant 0 : index
    %c0_325 = arith.constant 0 : index
    %1208 = vector.load %arg16[%c0_324, %c0_325] : memref<32x96xbf16, #tpu.memory_space<vmem>>, vector<32x96xbf16>
    %c0_326 = arith.constant 0 : index
    %c0_327 = arith.constant 0 : index
    %1209 = vector.load %arg17[%c0_326, %c0_327] : memref<1x32xf32, #tpu.memory_space<vmem>>, vector<1x32xf32>
    %1210 = vector.shape_cast %1209 : vector<1x32xf32> to vector<1x32xf32>
    %1211 = vector.broadcast %1210 : vector<1x32xf32> to vector<2x32xf32>
    %c0_328 = arith.constant 0 : index
    %c0_329 = arith.constant 0 : index
    %1212 = vector.load %arg18[%c0_328, %c0_329] : memref<1x32xf32, #tpu.memory_space<vmem>>, vector<1x32xf32>
    %1213 = vector.shape_cast %1212 : vector<1x32xf32> to vector<1x32xf32>
    %1214 = vector.broadcast %1213 : vector<1x32xf32> to vector<2x32xf32>
    %cst_330 = arith.constant 0.000000e+00 : f32
    %1215 = vector.broadcast %cst_330 : f32 to vector<2x32xf32>
    %c0_i32_331 = arith.constant 0 : i32
    %c7_i32_332 = arith.constant 7 : i32
    %1216 = arith.subi %c7_i32_332, %c0_i32_331 : i32
    %1217 = arith.truncf %1215 : vector<2x32xf32> to vector<2x32xbf16>
    %cst_333 = arith.constant dense<0.000000e+00> : vector<2x96xf32>
    %1218 = tpu.matmul %1217, %1207, %cst_333 {dimension_numbers = #tpu.dot_dimension_numbers<[1], [0], [0], [1], [0, 0, 1, 1], [], []>} : vector<2x32xbf16>, vector<32x96xbf16>, vector<2x96xf32> -> vector<2x96xf32>
    %1219 = arith.truncf %1215 : vector<2x32xf32> to vector<2x32xbf16>
    %cst_334 = arith.constant dense<0.000000e+00> : vector<2x96xf32>
    %1220 = tpu.matmul %1219, %1208, %cst_334 {dimension_numbers = #tpu.dot_dimension_numbers<[1], [0], [0], [1], [0, 0, 1, 1], [], []>} : vector<2x32xbf16>, vector<32x96xbf16>, vector<2x96xf32> -> vector<2x96xf32>
    %c2_i32_335 = arith.constant 2 : i32
    %1221 = arith.muli %c0_i32_331, %c2_i32_335 : i32
    %1222 = arith.index_cast %1221 : i32 to index
    %c0_336 = arith.constant 0 : index
    %1223 = vector.load %arg40[%1222, %c0_336] : memref<16x192xf32, #tpu.memory_space<vmem>>, vector<2x96xf32>
    %c2_i32_337 = arith.constant 2 : i32
    %1224 = arith.muli %1216, %c2_i32_337 : i32
    %1225 = arith.index_cast %1224 : i32 to index
    %c96_338 = arith.constant 96 : index
    %1226 = vector.load %arg40[%1225, %c96_338] : memref<16x192xf32, #tpu.memory_space<vmem>>, vector<2x96xf32>
    %1227 = vector.extract_strided_slice %1223 {offsets = [0, 0], sizes = [2, 32], strides = [1, 1]} : vector<2x96xf32> to vector<2x32xf32>
    %1228 = vector.extract_strided_slice %1218 {offsets = [0, 0], sizes = [2, 32], strides = [1, 1]} : vector<2x96xf32> to vector<2x32xf32>
    %1229 = arith.addf %1227, %1228 : vector<2x32xf32>
    %1230 = arith.negf %1229 : vector<2x32xf32>
    %1231 = math.exp %1230 : vector<2x32xf32>
    %cst_339 = arith.constant 1.000000e+00 : f32
    %1232 = vector.broadcast %cst_339 : f32 to vector<2x32xf32>
    %1233 = arith.addf %1232, %1231 : vector<2x32xf32>
    %1234 = arith.divf %1232, %1233 : vector<2x32xf32>
    %1235 = vector.extract_strided_slice %1223 {offsets = [0, 32], sizes = [2, 32], strides = [1, 1]} : vector<2x96xf32> to vector<2x32xf32>
    %1236 = vector.extract_strided_slice %1218 {offsets = [0, 32], sizes = [2, 32], strides = [1, 1]} : vector<2x96xf32> to vector<2x32xf32>
    %1237 = arith.addf %1235, %1236 : vector<2x32xf32>
    %1238 = arith.negf %1237 : vector<2x32xf32>
    %1239 = math.exp %1238 : vector<2x32xf32>
    %cst_340 = arith.constant 1.000000e+00 : f32
    %1240 = vector.broadcast %cst_340 : f32 to vector<2x32xf32>
    %1241 = arith.addf %1240, %1239 : vector<2x32xf32>
    %1242 = arith.divf %1240, %1241 : vector<2x32xf32>
    %1243 = vector.extract_strided_slice %1223 {offsets = [0, 64], sizes = [2, 32], strides = [1, 1]} : vector<2x96xf32> to vector<2x32xf32>
    %1244 = vector.extract_strided_slice %1218 {offsets = [0, 64], sizes = [2, 32], strides = [1, 1]} : vector<2x96xf32> to vector<2x32xf32>
    %1245 = arith.addf %1244, %1211 : vector<2x32xf32>
    %1246 = arith.mulf %1234, %1245 : vector<2x32xf32>
    %1247 = arith.addf %1243, %1246 : vector<2x32xf32>
    %1248 = math.tanh %1247 : vector<2x32xf32>
    %1249 = vector.extract_strided_slice %1226 {offsets = [0, 0], sizes = [2, 32], strides = [1, 1]} : vector<2x96xf32> to vector<2x32xf32>
    %1250 = vector.extract_strided_slice %1220 {offsets = [0, 0], sizes = [2, 32], strides = [1, 1]} : vector<2x96xf32> to vector<2x32xf32>
    %1251 = arith.addf %1249, %1250 : vector<2x32xf32>
    %1252 = arith.negf %1251 : vector<2x32xf32>
    %1253 = math.exp %1252 : vector<2x32xf32>
    %cst_341 = arith.constant 1.000000e+00 : f32
    %1254 = vector.broadcast %cst_341 : f32 to vector<2x32xf32>
    %1255 = arith.addf %1254, %1253 : vector<2x32xf32>
    %1256 = arith.divf %1254, %1255 : vector<2x32xf32>
    %1257 = vector.extract_strided_slice %1226 {offsets = [0, 32], sizes = [2, 32], strides = [1, 1]} : vector<2x96xf32> to vector<2x32xf32>
    %1258 = vector.extract_strided_slice %1220 {offsets = [0, 32], sizes = [2, 32], strides = [1, 1]} : vector<2x96xf32> to vector<2x32xf32>
    %1259 = arith.addf %1257, %1258 : vector<2x32xf32>
    %1260 = arith.negf %1259 : vector<2x32xf32>
    %1261 = math.exp %1260 : vector<2x32xf32>
    %cst_342 = arith.constant 1.000000e+00 : f32
    %1262 = vector.broadcast %cst_342 : f32 to vector<2x32xf32>
    %1263 = arith.addf %1262, %1261 : vector<2x32xf32>
    %1264 = arith.divf %1262, %1263 : vector<2x32xf32>
    %1265 = vector.extract_strided_slice %1226 {offsets = [0, 64], sizes = [2, 32], strides = [1, 1]} : vector<2x96xf32> to vector<2x32xf32>
    %1266 = vector.extract_strided_slice %1220 {offsets = [0, 64], sizes = [2, 32], strides = [1, 1]} : vector<2x96xf32> to vector<2x32xf32>
    %1267 = arith.addf %1266, %1214 : vector<2x32xf32>
    %1268 = arith.mulf %1256, %1267 : vector<2x32xf32>
    %1269 = arith.addf %1265, %1268 : vector<2x32xf32>
    %1270 = math.tanh %1269 : vector<2x32xf32>
    %cst_343 = arith.constant 1.000000e+00 : f32
    %1271 = vector.broadcast %cst_343 : f32 to vector<2x32xf32>
    %1272 = arith.subf %1271, %1242 : vector<2x32xf32>
    %1273 = arith.mulf %1272, %1248 : vector<2x32xf32>
    %1274 = arith.mulf %1242, %1215 : vector<2x32xf32>
    %1275 = arith.addf %1273, %1274 : vector<2x32xf32>
    %cst_344 = arith.constant 1.000000e+00 : f32
    %1276 = vector.broadcast %cst_344 : f32 to vector<2x32xf32>
    %1277 = arith.subf %1276, %1264 : vector<2x32xf32>
    %1278 = arith.mulf %1277, %1270 : vector<2x32xf32>
    %1279 = arith.mulf %1264, %1215 : vector<2x32xf32>
    %1280 = arith.addf %1278, %1279 : vector<2x32xf32>
    %1281 = arith.truncf %1275 : vector<2x32xf32> to vector<2x32xbf16>
    %c2_i32_345 = arith.constant 2 : i32
    %1282 = arith.muli %c0_i32_331, %c2_i32_345 : i32
    %1283 = arith.index_cast %1282 : i32 to index
    %c0_346 = arith.constant 0 : index
    %1284 = vector.load %arg38[%1283, %c0_346] : memref<16x64xbf16, #tpu.memory_space<vmem>>, vector<2x32xbf16>
    tpu.vector_store %arg38[%1283, %c0_346], %1281 {strides = array<i32>} : memref<16x64xbf16, #tpu.memory_space<vmem>>, vector<2x32xbf16>,
    %1285 = arith.truncf %1280 : vector<2x32xf32> to vector<2x32xbf16>
    %c2_i32_347 = arith.constant 2 : i32
    %1286 = arith.muli %1216, %c2_i32_347 : i32
    %1287 = arith.index_cast %1286 : i32 to index
    %c32_348 = arith.constant 32 : index
    %1288 = vector.load %arg38[%1287, %c32_348] : memref<16x64xbf16, #tpu.memory_space<vmem>>, vector<2x32xbf16>
    tpu.vector_store %arg38[%1287, %c32_348], %1285 {strides = array<i32>} : memref<16x64xbf16, #tpu.memory_space<vmem>>, vector<2x32xbf16>,
    %c1_i32_349 = arith.constant 1 : i32
    %c7_i32_350 = arith.constant 7 : i32
    %1289 = arith.subi %c7_i32_350, %c1_i32_349 : i32
    %1290 = arith.truncf %1275 : vector<2x32xf32> to vector<2x32xbf16>
    %cst_351 = arith.constant dense<0.000000e+00> : vector<2x96xf32>
    %1291 = tpu.matmul %1290, %1207, %cst_351 {dimension_numbers = #tpu.dot_dimension_numbers<[1], [0], [0], [1], [0, 0, 1, 1], [], []>} : vector<2x32xbf16>, vector<32x96xbf16>, vector<2x96xf32> -> vector<2x96xf32>
    %1292 = arith.truncf %1280 : vector<2x32xf32> to vector<2x32xbf16>
    %cst_352 = arith.constant dense<0.000000e+00> : vector<2x96xf32>
    %1293 = tpu.matmul %1292, %1208, %cst_352 {dimension_numbers = #tpu.dot_dimension_numbers<[1], [0], [0], [1], [0, 0, 1, 1], [], []>} : vector<2x32xbf16>, vector<32x96xbf16>, vector<2x96xf32> -> vector<2x96xf32>
    %c2_i32_353 = arith.constant 2 : i32
    %1294 = arith.muli %c1_i32_349, %c2_i32_353 : i32
    %1295 = arith.index_cast %1294 : i32 to index
    %c0_354 = arith.constant 0 : index
    %1296 = vector.load %arg40[%1295, %c0_354] : memref<16x192xf32, #tpu.memory_space<vmem>>, vector<2x96xf32>
    %c2_i32_355 = arith.constant 2 : i32
    %1297 = arith.muli %1289, %c2_i32_355 : i32
    %1298 = arith.index_cast %1297 : i32 to index
    %c96_356 = arith.constant 96 : index
    %1299 = vector.load %arg40[%1298, %c96_356] : memref<16x192xf32, #tpu.memory_space<vmem>>, vector<2x96xf32>
    %1300 = vector.extract_strided_slice %1296 {offsets = [0, 0], sizes = [2, 32], strides = [1, 1]} : vector<2x96xf32> to vector<2x32xf32>
    %1301 = vector.extract_strided_slice %1291 {offsets = [0, 0], sizes = [2, 32], strides = [1, 1]} : vector<2x96xf32> to vector<2x32xf32>
    %1302 = arith.addf %1300, %1301 : vector<2x32xf32>
    %1303 = arith.negf %1302 : vector<2x32xf32>
    %1304 = math.exp %1303 : vector<2x32xf32>
    %cst_357 = arith.constant 1.000000e+00 : f32
    %1305 = vector.broadcast %cst_357 : f32 to vector<2x32xf32>
    %1306 = arith.addf %1305, %1304 : vector<2x32xf32>
    %1307 = arith.divf %1305, %1306 : vector<2x32xf32>
    %1308 = vector.extract_strided_slice %1296 {offsets = [0, 32], sizes = [2, 32], strides = [1, 1]} : vector<2x96xf32> to vector<2x32xf32>
    %1309 = vector.extract_strided_slice %1291 {offsets = [0, 32], sizes = [2, 32], strides = [1, 1]} : vector<2x96xf32> to vector<2x32xf32>
    %1310 = arith.addf %1308, %1309 : vector<2x32xf32>
    %1311 = arith.negf %1310 : vector<2x32xf32>
    %1312 = math.exp %1311 : vector<2x32xf32>
    %cst_358 = arith.constant 1.000000e+00 : f32
    %1313 = vector.broadcast %cst_358 : f32 to vector<2x32xf32>
    %1314 = arith.addf %1313, %1312 : vector<2x32xf32>
    %1315 = arith.divf %1313, %1314 : vector<2x32xf32>
    %1316 = vector.extract_strided_slice %1296 {offsets = [0, 64], sizes = [2, 32], strides = [1, 1]} : vector<2x96xf32> to vector<2x32xf32>
    %1317 = vector.extract_strided_slice %1291 {offsets = [0, 64], sizes = [2, 32], strides = [1, 1]} : vector<2x96xf32> to vector<2x32xf32>
    %1318 = arith.addf %1317, %1211 : vector<2x32xf32>
    %1319 = arith.mulf %1307, %1318 : vector<2x32xf32>
    %1320 = arith.addf %1316, %1319 : vector<2x32xf32>
    %1321 = math.tanh %1320 : vector<2x32xf32>
    %1322 = vector.extract_strided_slice %1299 {offsets = [0, 0], sizes = [2, 32], strides = [1, 1]} : vector<2x96xf32> to vector<2x32xf32>
    %1323 = vector.extract_strided_slice %1293 {offsets = [0, 0], sizes = [2, 32], strides = [1, 1]} : vector<2x96xf32> to vector<2x32xf32>
    %1324 = arith.addf %1322, %1323 : vector<2x32xf32>
    %1325 = arith.negf %1324 : vector<2x32xf32>
    %1326 = math.exp %1325 : vector<2x32xf32>
    %cst_359 = arith.constant 1.000000e+00 : f32
    %1327 = vector.broadcast %cst_359 : f32 to vector<2x32xf32>
    %1328 = arith.addf %1327, %1326 : vector<2x32xf32>
    %1329 = arith.divf %1327, %1328 : vector<2x32xf32>
    %1330 = vector.extract_strided_slice %1299 {offsets = [0, 32], sizes = [2, 32], strides = [1, 1]} : vector<2x96xf32> to vector<2x32xf32>
    %1331 = vector.extract_strided_slice %1293 {offsets = [0, 32], sizes = [2, 32], strides = [1, 1]} : vector<2x96xf32> to vector<2x32xf32>
    %1332 = arith.addf %1330, %1331 : vector<2x32xf32>
    %1333 = arith.negf %1332 : vector<2x32xf32>
    %1334 = math.exp %1333 : vector<2x32xf32>
    %cst_360 = arith.constant 1.000000e+00 : f32
    %1335 = vector.broadcast %cst_360 : f32 to vector<2x32xf32>
    %1336 = arith.addf %1335, %1334 : vector<2x32xf32>
    %1337 = arith.divf %1335, %1336 : vector<2x32xf32>
    %1338 = vector.extract_strided_slice %1299 {offsets = [0, 64], sizes = [2, 32], strides = [1, 1]} : vector<2x96xf32> to vector<2x32xf32>
    %1339 = vector.extract_strided_slice %1293 {offsets = [0, 64], sizes = [2, 32], strides = [1, 1]} : vector<2x96xf32> to vector<2x32xf32>
    %1340 = arith.addf %1339, %1214 : vector<2x32xf32>
    %1341 = arith.mulf %1329, %1340 : vector<2x32xf32>
    %1342 = arith.addf %1338, %1341 : vector<2x32xf32>
    %1343 = math.tanh %1342 : vector<2x32xf32>
    %cst_361 = arith.constant 1.000000e+00 : f32
    %1344 = vector.broadcast %cst_361 : f32 to vector<2x32xf32>
    %1345 = arith.subf %1344, %1315 : vector<2x32xf32>
    %1346 = arith.mulf %1345, %1321 : vector<2x32xf32>
    %1347 = arith.mulf %1315, %1275 : vector<2x32xf32>
    %1348 = arith.addf %1346, %1347 : vector<2x32xf32>
    %cst_362 = arith.constant 1.000000e+00 : f32
    %1349 = vector.broadcast %cst_362 : f32 to vector<2x32xf32>
    %1350 = arith.subf %1349, %1337 : vector<2x32xf32>
    %1351 = arith.mulf %1350, %1343 : vector<2x32xf32>
    %1352 = arith.mulf %1337, %1280 : vector<2x32xf32>
    %1353 = arith.addf %1351, %1352 : vector<2x32xf32>
    %1354 = arith.truncf %1348 : vector<2x32xf32> to vector<2x32xbf16>
    %c2_i32_363 = arith.constant 2 : i32
    %1355 = arith.muli %c1_i32_349, %c2_i32_363 : i32
    %1356 = arith.index_cast %1355 : i32 to index
    %c0_364 = arith.constant 0 : index
    %1357 = vector.load %arg38[%1356, %c0_364] : memref<16x64xbf16, #tpu.memory_space<vmem>>, vector<2x32xbf16>
    tpu.vector_store %arg38[%1356, %c0_364], %1354 {strides = array<i32>} : memref<16x64xbf16, #tpu.memory_space<vmem>>, vector<2x32xbf16>,
    %1358 = arith.truncf %1353 : vector<2x32xf32> to vector<2x32xbf16>
    %c2_i32_365 = arith.constant 2 : i32
    %1359 = arith.muli %1289, %c2_i32_365 : i32
    %1360 = arith.index_cast %1359 : i32 to index
    %c32_366 = arith.constant 32 : index
    %1361 = vector.load %arg38[%1360, %c32_366] : memref<16x64xbf16, #tpu.memory_space<vmem>>, vector<2x32xbf16>
    tpu.vector_store %arg38[%1360, %c32_366], %1358 {strides = array<i32>} : memref<16x64xbf16, #tpu.memory_space<vmem>>, vector<2x32xbf16>,
    %c2_i32_367 = arith.constant 2 : i32
    %c7_i32_368 = arith.constant 7 : i32
    %1362 = arith.subi %c7_i32_368, %c2_i32_367 : i32
    %1363 = arith.truncf %1348 : vector<2x32xf32> to vector<2x32xbf16>
    %cst_369 = arith.constant dense<0.000000e+00> : vector<2x96xf32>
    %1364 = tpu.matmul %1363, %1207, %cst_369 {dimension_numbers = #tpu.dot_dimension_numbers<[1], [0], [0], [1], [0, 0, 1, 1], [], []>} : vector<2x32xbf16>, vector<32x96xbf16>, vector<2x96xf32> -> vector<2x96xf32>
    %1365 = arith.truncf %1353 : vector<2x32xf32> to vector<2x32xbf16>
    %cst_370 = arith.constant dense<0.000000e+00> : vector<2x96xf32>
    %1366 = tpu.matmul %1365, %1208, %cst_370 {dimension_numbers = #tpu.dot_dimension_numbers<[1], [0], [0], [1], [0, 0, 1, 1], [], []>} : vector<2x32xbf16>, vector<32x96xbf16>, vector<2x96xf32> -> vector<2x96xf32>
    %c2_i32_371 = arith.constant 2 : i32
    %1367 = arith.muli %c2_i32_367, %c2_i32_371 : i32
    %1368 = arith.index_cast %1367 : i32 to index
    %c0_372 = arith.constant 0 : index
    %1369 = vector.load %arg40[%1368, %c0_372] : memref<16x192xf32, #tpu.memory_space<vmem>>, vector<2x96xf32>
    %c2_i32_373 = arith.constant 2 : i32
    %1370 = arith.muli %1362, %c2_i32_373 : i32
    %1371 = arith.index_cast %1370 : i32 to index
    %c96_374 = arith.constant 96 : index
    %1372 = vector.load %arg40[%1371, %c96_374] : memref<16x192xf32, #tpu.memory_space<vmem>>, vector<2x96xf32>
    %1373 = vector.extract_strided_slice %1369 {offsets = [0, 0], sizes = [2, 32], strides = [1, 1]} : vector<2x96xf32> to vector<2x32xf32>
    %1374 = vector.extract_strided_slice %1364 {offsets = [0, 0], sizes = [2, 32], strides = [1, 1]} : vector<2x96xf32> to vector<2x32xf32>
    %1375 = arith.addf %1373, %1374 : vector<2x32xf32>
    %1376 = arith.negf %1375 : vector<2x32xf32>
    %1377 = math.exp %1376 : vector<2x32xf32>
    %cst_375 = arith.constant 1.000000e+00 : f32
    %1378 = vector.broadcast %cst_375 : f32 to vector<2x32xf32>
    %1379 = arith.addf %1378, %1377 : vector<2x32xf32>
    %1380 = arith.divf %1378, %1379 : vector<2x32xf32>
    %1381 = vector.extract_strided_slice %1369 {offsets = [0, 32], sizes = [2, 32], strides = [1, 1]} : vector<2x96xf32> to vector<2x32xf32>
    %1382 = vector.extract_strided_slice %1364 {offsets = [0, 32], sizes = [2, 32], strides = [1, 1]} : vector<2x96xf32> to vector<2x32xf32>
    %1383 = arith.addf %1381, %1382 : vector<2x32xf32>
    %1384 = arith.negf %1383 : vector<2x32xf32>
    %1385 = math.exp %1384 : vector<2x32xf32>
    %cst_376 = arith.constant 1.000000e+00 : f32
    %1386 = vector.broadcast %cst_376 : f32 to vector<2x32xf32>
    %1387 = arith.addf %1386, %1385 : vector<2x32xf32>
    %1388 = arith.divf %1386, %1387 : vector<2x32xf32>
    %1389 = vector.extract_strided_slice %1369 {offsets = [0, 64], sizes = [2, 32], strides = [1, 1]} : vector<2x96xf32> to vector<2x32xf32>
    %1390 = vector.extract_strided_slice %1364 {offsets = [0, 64], sizes = [2, 32], strides = [1, 1]} : vector<2x96xf32> to vector<2x32xf32>
    %1391 = arith.addf %1390, %1211 : vector<2x32xf32>
    %1392 = arith.mulf %1380, %1391 : vector<2x32xf32>
    %1393 = arith.addf %1389, %1392 : vector<2x32xf32>
    %1394 = math.tanh %1393 : vector<2x32xf32>
    %1395 = vector.extract_strided_slice %1372 {offsets = [0, 0], sizes = [2, 32], strides = [1, 1]} : vector<2x96xf32> to vector<2x32xf32>
    %1396 = vector.extract_strided_slice %1366 {offsets = [0, 0], sizes = [2, 32], strides = [1, 1]} : vector<2x96xf32> to vector<2x32xf32>
    %1397 = arith.addf %1395, %1396 : vector<2x32xf32>
    %1398 = arith.negf %1397 : vector<2x32xf32>
    %1399 = math.exp %1398 : vector<2x32xf32>
    %cst_377 = arith.constant 1.000000e+00 : f32
    %1400 = vector.broadcast %cst_377 : f32 to vector<2x32xf32>
    %1401 = arith.addf %1400, %1399 : vector<2x32xf32>
    %1402 = arith.divf %1400, %1401 : vector<2x32xf32>
    %1403 = vector.extract_strided_slice %1372 {offsets = [0, 32], sizes = [2, 32], strides = [1, 1]} : vector<2x96xf32> to vector<2x32xf32>
    %1404 = vector.extract_strided_slice %1366 {offsets = [0, 32], sizes = [2, 32], strides = [1, 1]} : vector<2x96xf32> to vector<2x32xf32>
    %1405 = arith.addf %1403, %1404 : vector<2x32xf32>
    %1406 = arith.negf %1405 : vector<2x32xf32>
    %1407 = math.exp %1406 : vector<2x32xf32>
    %cst_378 = arith.constant 1.000000e+00 : f32
    %1408 = vector.broadcast %cst_378 : f32 to vector<2x32xf32>
    %1409 = arith.addf %1408, %1407 : vector<2x32xf32>
    %1410 = arith.divf %1408, %1409 : vector<2x32xf32>
    %1411 = vector.extract_strided_slice %1372 {offsets = [0, 64], sizes = [2, 32], strides = [1, 1]} : vector<2x96xf32> to vector<2x32xf32>
    %1412 = vector.extract_strided_slice %1366 {offsets = [0, 64], sizes = [2, 32], strides = [1, 1]} : vector<2x96xf32> to vector<2x32xf32>
    %1413 = arith.addf %1412, %1214 : vector<2x32xf32>
    %1414 = arith.mulf %1402, %1413 : vector<2x32xf32>
    %1415 = arith.addf %1411, %1414 : vector<2x32xf32>
    %1416 = math.tanh %1415 : vector<2x32xf32>
    %cst_379 = arith.constant 1.000000e+00 : f32
    %1417 = vector.broadcast %cst_379 : f32 to vector<2x32xf32>
    %1418 = arith.subf %1417, %1388 : vector<2x32xf32>
    %1419 = arith.mulf %1418, %1394 : vector<2x32xf32>
    %1420 = arith.mulf %1388, %1348 : vector<2x32xf32>
    %1421 = arith.addf %1419, %1420 : vector<2x32xf32>
    %cst_380 = arith.constant 1.000000e+00 : f32
    %1422 = vector.broadcast %cst_380 : f32 to vector<2x32xf32>
    %1423 = arith.subf %1422, %1410 : vector<2x32xf32>
    %1424 = arith.mulf %1423, %1416 : vector<2x32xf32>
    %1425 = arith.mulf %1410, %1353 : vector<2x32xf32>
    %1426 = arith.addf %1424, %1425 : vector<2x32xf32>
    %1427 = arith.truncf %1421 : vector<2x32xf32> to vector<2x32xbf16>
    %c2_i32_381 = arith.constant 2 : i32
    %1428 = arith.muli %c2_i32_367, %c2_i32_381 : i32
    %1429 = arith.index_cast %1428 : i32 to index
    %c0_382 = arith.constant 0 : index
    %1430 = vector.load %arg38[%1429, %c0_382] : memref<16x64xbf16, #tpu.memory_space<vmem>>, vector<2x32xbf16>
    tpu.vector_store %arg38[%1429, %c0_382], %1427 {strides = array<i32>} : memref<16x64xbf16, #tpu.memory_space<vmem>>, vector<2x32xbf16>,
    %1431 = arith.truncf %1426 : vector<2x32xf32> to vector<2x32xbf16>
    %c2_i32_383 = arith.constant 2 : i32
    %1432 = arith.muli %1362, %c2_i32_383 : i32
    %1433 = arith.index_cast %1432 : i32 to index
    %c32_384 = arith.constant 32 : index
    %1434 = vector.load %arg38[%1433, %c32_384] : memref<16x64xbf16, #tpu.memory_space<vmem>>, vector<2x32xbf16>
    tpu.vector_store %arg38[%1433, %c32_384], %1431 {strides = array<i32>} : memref<16x64xbf16, #tpu.memory_space<vmem>>, vector<2x32xbf16>,
    %c3_i32_385 = arith.constant 3 : i32
    %c7_i32_386 = arith.constant 7 : i32
    %1435 = arith.subi %c7_i32_386, %c3_i32_385 : i32
    %1436 = arith.truncf %1421 : vector<2x32xf32> to vector<2x32xbf16>
    %cst_387 = arith.constant dense<0.000000e+00> : vector<2x96xf32>
    %1437 = tpu.matmul %1436, %1207, %cst_387 {dimension_numbers = #tpu.dot_dimension_numbers<[1], [0], [0], [1], [0, 0, 1, 1], [], []>} : vector<2x32xbf16>, vector<32x96xbf16>, vector<2x96xf32> -> vector<2x96xf32>
    %1438 = arith.truncf %1426 : vector<2x32xf32> to vector<2x32xbf16>
    %cst_388 = arith.constant dense<0.000000e+00> : vector<2x96xf32>
    %1439 = tpu.matmul %1438, %1208, %cst_388 {dimension_numbers = #tpu.dot_dimension_numbers<[1], [0], [0], [1], [0, 0, 1, 1], [], []>} : vector<2x32xbf16>, vector<32x96xbf16>, vector<2x96xf32> -> vector<2x96xf32>
    %c2_i32_389 = arith.constant 2 : i32
    %1440 = arith.muli %c3_i32_385, %c2_i32_389 : i32
    %1441 = arith.index_cast %1440 : i32 to index
    %c0_390 = arith.constant 0 : index
    %1442 = vector.load %arg40[%1441, %c0_390] : memref<16x192xf32, #tpu.memory_space<vmem>>, vector<2x96xf32>
    %c2_i32_391 = arith.constant 2 : i32
    %1443 = arith.muli %1435, %c2_i32_391 : i32
    %1444 = arith.index_cast %1443 : i32 to index
    %c96_392 = arith.constant 96 : index
    %1445 = vector.load %arg40[%1444, %c96_392] : memref<16x192xf32, #tpu.memory_space<vmem>>, vector<2x96xf32>
    %1446 = vector.extract_strided_slice %1442 {offsets = [0, 0], sizes = [2, 32], strides = [1, 1]} : vector<2x96xf32> to vector<2x32xf32>
    %1447 = vector.extract_strided_slice %1437 {offsets = [0, 0], sizes = [2, 32], strides = [1, 1]} : vector<2x96xf32> to vector<2x32xf32>
    %1448 = arith.addf %1446, %1447 : vector<2x32xf32>
    %1449 = arith.negf %1448 : vector<2x32xf32>
    %1450 = math.exp %1449 : vector<2x32xf32>
    %cst_393 = arith.constant 1.000000e+00 : f32
    %1451 = vector.broadcast %cst_393 : f32 to vector<2x32xf32>
    %1452 = arith.addf %1451, %1450 : vector<2x32xf32>
    %1453 = arith.divf %1451, %1452 : vector<2x32xf32>
    %1454 = vector.extract_strided_slice %1442 {offsets = [0, 32], sizes = [2, 32], strides = [1, 1]} : vector<2x96xf32> to vector<2x32xf32>
    %1455 = vector.extract_strided_slice %1437 {offsets = [0, 32], sizes = [2, 32], strides = [1, 1]} : vector<2x96xf32> to vector<2x32xf32>
    %1456 = arith.addf %1454, %1455 : vector<2x32xf32>
    %1457 = arith.negf %1456 : vector<2x32xf32>
    %1458 = math.exp %1457 : vector<2x32xf32>
    %cst_394 = arith.constant 1.000000e+00 : f32
    %1459 = vector.broadcast %cst_394 : f32 to vector<2x32xf32>
    %1460 = arith.addf %1459, %1458 : vector<2x32xf32>
    %1461 = arith.divf %1459, %1460 : vector<2x32xf32>
    %1462 = vector.extract_strided_slice %1442 {offsets = [0, 64], sizes = [2, 32], strides = [1, 1]} : vector<2x96xf32> to vector<2x32xf32>
    %1463 = vector.extract_strided_slice %1437 {offsets = [0, 64], sizes = [2, 32], strides = [1, 1]} : vector<2x96xf32> to vector<2x32xf32>
    %1464 = arith.addf %1463, %1211 : vector<2x32xf32>
    %1465 = arith.mulf %1453, %1464 : vector<2x32xf32>
    %1466 = arith.addf %1462, %1465 : vector<2x32xf32>
    %1467 = math.tanh %1466 : vector<2x32xf32>
    %1468 = vector.extract_strided_slice %1445 {offsets = [0, 0], sizes = [2, 32], strides = [1, 1]} : vector<2x96xf32> to vector<2x32xf32>
    %1469 = vector.extract_strided_slice %1439 {offsets = [0, 0], sizes = [2, 32], strides = [1, 1]} : vector<2x96xf32> to vector<2x32xf32>
    %1470 = arith.addf %1468, %1469 : vector<2x32xf32>
    %1471 = arith.negf %1470 : vector<2x32xf32>
    %1472 = math.exp %1471 : vector<2x32xf32>
    %cst_395 = arith.constant 1.000000e+00 : f32
    %1473 = vector.broadcast %cst_395 : f32 to vector<2x32xf32>
    %1474 = arith.addf %1473, %1472 : vector<2x32xf32>
    %1475 = arith.divf %1473, %1474 : vector<2x32xf32>
    %1476 = vector.extract_strided_slice %1445 {offsets = [0, 32], sizes = [2, 32], strides = [1, 1]} : vector<2x96xf32> to vector<2x32xf32>
    %1477 = vector.extract_strided_slice %1439 {offsets = [0, 32], sizes = [2, 32], strides = [1, 1]} : vector<2x96xf32> to vector<2x32xf32>
    %1478 = arith.addf %1476, %1477 : vector<2x32xf32>
    %1479 = arith.negf %1478 : vector<2x32xf32>
    %1480 = math.exp %1479 : vector<2x32xf32>
    %cst_396 = arith.constant 1.000000e+00 : f32
    %1481 = vector.broadcast %cst_396 : f32 to vector<2x32xf32>
    %1482 = arith.addf %1481, %1480 : vector<2x32xf32>
    %1483 = arith.divf %1481, %1482 : vector<2x32xf32>
    %1484 = vector.extract_strided_slice %1445 {offsets = [0, 64], sizes = [2, 32], strides = [1, 1]} : vector<2x96xf32> to vector<2x32xf32>
    %1485 = vector.extract_strided_slice %1439 {offsets = [0, 64], sizes = [2, 32], strides = [1, 1]} : vector<2x96xf32> to vector<2x32xf32>
    %1486 = arith.addf %1485, %1214 : vector<2x32xf32>
    %1487 = arith.mulf %1475, %1486 : vector<2x32xf32>
    %1488 = arith.addf %1484, %1487 : vector<2x32xf32>
    %1489 = math.tanh %1488 : vector<2x32xf32>
    %cst_397 = arith.constant 1.000000e+00 : f32
    %1490 = vector.broadcast %cst_397 : f32 to vector<2x32xf32>
    %1491 = arith.subf %1490, %1461 : vector<2x32xf32>
    %1492 = arith.mulf %1491, %1467 : vector<2x32xf32>
    %1493 = arith.mulf %1461, %1421 : vector<2x32xf32>
    %1494 = arith.addf %1492, %1493 : vector<2x32xf32>
    %cst_398 = arith.constant 1.000000e+00 : f32
    %1495 = vector.broadcast %cst_398 : f32 to vector<2x32xf32>
    %1496 = arith.subf %1495, %1483 : vector<2x32xf32>
    %1497 = arith.mulf %1496, %1489 : vector<2x32xf32>
    %1498 = arith.mulf %1483, %1426 : vector<2x32xf32>
    %1499 = arith.addf %1497, %1498 : vector<2x32xf32>
    %1500 = arith.truncf %1494 : vector<2x32xf32> to vector<2x32xbf16>
    %c2_i32_399 = arith.constant 2 : i32
    %1501 = arith.muli %c3_i32_385, %c2_i32_399 : i32
    %1502 = arith.index_cast %1501 : i32 to index
    %c0_400 = arith.constant 0 : index
    %1503 = vector.load %arg38[%1502, %c0_400] : memref<16x64xbf16, #tpu.memory_space<vmem>>, vector<2x32xbf16>
    tpu.vector_store %arg38[%1502, %c0_400], %1500 {strides = array<i32>} : memref<16x64xbf16, #tpu.memory_space<vmem>>, vector<2x32xbf16>,
    %1504 = arith.truncf %1499 : vector<2x32xf32> to vector<2x32xbf16>
    %c2_i32_401 = arith.constant 2 : i32
    %1505 = arith.muli %1435, %c2_i32_401 : i32
    %1506 = arith.index_cast %1505 : i32 to index
    %c32_402 = arith.constant 32 : index
    %1507 = vector.load %arg38[%1506, %c32_402] : memref<16x64xbf16, #tpu.memory_space<vmem>>, vector<2x32xbf16>
    tpu.vector_store %arg38[%1506, %c32_402], %1504 {strides = array<i32>} : memref<16x64xbf16, #tpu.memory_space<vmem>>, vector<2x32xbf16>,
    %c4_i32_403 = arith.constant 4 : i32
    %c7_i32_404 = arith.constant 7 : i32
    %1508 = arith.subi %c7_i32_404, %c4_i32_403 : i32
    %1509 = arith.truncf %1494 : vector<2x32xf32> to vector<2x32xbf16>
    %cst_405 = arith.constant dense<0.000000e+00> : vector<2x96xf32>
    %1510 = tpu.matmul %1509, %1207, %cst_405 {dimension_numbers = #tpu.dot_dimension_numbers<[1], [0], [0], [1], [0, 0, 1, 1], [], []>} : vector<2x32xbf16>, vector<32x96xbf16>, vector<2x96xf32> -> vector<2x96xf32>
    %1511 = arith.truncf %1499 : vector<2x32xf32> to vector<2x32xbf16>
    %cst_406 = arith.constant dense<0.000000e+00> : vector<2x96xf32>
    %1512 = tpu.matmul %1511, %1208, %cst_406 {dimension_numbers = #tpu.dot_dimension_numbers<[1], [0], [0], [1], [0, 0, 1, 1], [], []>} : vector<2x32xbf16>, vector<32x96xbf16>, vector<2x96xf32> -> vector<2x96xf32>
    %c2_i32_407 = arith.constant 2 : i32
    %1513 = arith.muli %c4_i32_403, %c2_i32_407 : i32
    %1514 = arith.index_cast %1513 : i32 to index
    %c0_408 = arith.constant 0 : index
    %1515 = vector.load %arg40[%1514, %c0_408] : memref<16x192xf32, #tpu.memory_space<vmem>>, vector<2x96xf32>
    %c2_i32_409 = arith.constant 2 : i32
    %1516 = arith.muli %1508, %c2_i32_409 : i32
    %1517 = arith.index_cast %1516 : i32 to index
    %c96_410 = arith.constant 96 : index
    %1518 = vector.load %arg40[%1517, %c96_410] : memref<16x192xf32, #tpu.memory_space<vmem>>, vector<2x96xf32>
    %1519 = vector.extract_strided_slice %1515 {offsets = [0, 0], sizes = [2, 32], strides = [1, 1]} : vector<2x96xf32> to vector<2x32xf32>
    %1520 = vector.extract_strided_slice %1510 {offsets = [0, 0], sizes = [2, 32], strides = [1, 1]} : vector<2x96xf32> to vector<2x32xf32>
    %1521 = arith.addf %1519, %1520 : vector<2x32xf32>
    %1522 = arith.negf %1521 : vector<2x32xf32>
    %1523 = math.exp %1522 : vector<2x32xf32>
    %cst_411 = arith.constant 1.000000e+00 : f32
    %1524 = vector.broadcast %cst_411 : f32 to vector<2x32xf32>
    %1525 = arith.addf %1524, %1523 : vector<2x32xf32>
    %1526 = arith.divf %1524, %1525 : vector<2x32xf32>
    %1527 = vector.extract_strided_slice %1515 {offsets = [0, 32], sizes = [2, 32], strides = [1, 1]} : vector<2x96xf32> to vector<2x32xf32>
    %1528 = vector.extract_strided_slice %1510 {offsets = [0, 32], sizes = [2, 32], strides = [1, 1]} : vector<2x96xf32> to vector<2x32xf32>
    %1529 = arith.addf %1527, %1528 : vector<2x32xf32>
    %1530 = arith.negf %1529 : vector<2x32xf32>
    %1531 = math.exp %1530 : vector<2x32xf32>
    %cst_412 = arith.constant 1.000000e+00 : f32
    %1532 = vector.broadcast %cst_412 : f32 to vector<2x32xf32>
    %1533 = arith.addf %1532, %1531 : vector<2x32xf32>
    %1534 = arith.divf %1532, %1533 : vector<2x32xf32>
    %1535 = vector.extract_strided_slice %1515 {offsets = [0, 64], sizes = [2, 32], strides = [1, 1]} : vector<2x96xf32> to vector<2x32xf32>
    %1536 = vector.extract_strided_slice %1510 {offsets = [0, 64], sizes = [2, 32], strides = [1, 1]} : vector<2x96xf32> to vector<2x32xf32>
    %1537 = arith.addf %1536, %1211 : vector<2x32xf32>
    %1538 = arith.mulf %1526, %1537 : vector<2x32xf32>
    %1539 = arith.addf %1535, %1538 : vector<2x32xf32>
    %1540 = math.tanh %1539 : vector<2x32xf32>
    %1541 = vector.extract_strided_slice %1518 {offsets = [0, 0], sizes = [2, 32], strides = [1, 1]} : vector<2x96xf32> to vector<2x32xf32>
    %1542 = vector.extract_strided_slice %1512 {offsets = [0, 0], sizes = [2, 32], strides = [1, 1]} : vector<2x96xf32> to vector<2x32xf32>
    %1543 = arith.addf %1541, %1542 : vector<2x32xf32>
    %1544 = arith.negf %1543 : vector<2x32xf32>
    %1545 = math.exp %1544 : vector<2x32xf32>
    %cst_413 = arith.constant 1.000000e+00 : f32
    %1546 = vector.broadcast %cst_413 : f32 to vector<2x32xf32>
    %1547 = arith.addf %1546, %1545 : vector<2x32xf32>
    %1548 = arith.divf %1546, %1547 : vector<2x32xf32>
    %1549 = vector.extract_strided_slice %1518 {offsets = [0, 32], sizes = [2, 32], strides = [1, 1]} : vector<2x96xf32> to vector<2x32xf32>
    %1550 = vector.extract_strided_slice %1512 {offsets = [0, 32], sizes = [2, 32], strides = [1, 1]} : vector<2x96xf32> to vector<2x32xf32>
    %1551 = arith.addf %1549, %1550 : vector<2x32xf32>
    %1552 = arith.negf %1551 : vector<2x32xf32>
    %1553 = math.exp %1552 : vector<2x32xf32>
    %cst_414 = arith.constant 1.000000e+00 : f32
    %1554 = vector.broadcast %cst_414 : f32 to vector<2x32xf32>
    %1555 = arith.addf %1554, %1553 : vector<2x32xf32>
    %1556 = arith.divf %1554, %1555 : vector<2x32xf32>
    %1557 = vector.extract_strided_slice %1518 {offsets = [0, 64], sizes = [2, 32], strides = [1, 1]} : vector<2x96xf32> to vector<2x32xf32>
    %1558 = vector.extract_strided_slice %1512 {offsets = [0, 64], sizes = [2, 32], strides = [1, 1]} : vector<2x96xf32> to vector<2x32xf32>
    %1559 = arith.addf %1558, %1214 : vector<2x32xf32>
    %1560 = arith.mulf %1548, %1559 : vector<2x32xf32>
    %1561 = arith.addf %1557, %1560 : vector<2x32xf32>
    %1562 = math.tanh %1561 : vector<2x32xf32>
    %cst_415 = arith.constant 1.000000e+00 : f32
    %1563 = vector.broadcast %cst_415 : f32 to vector<2x32xf32>
    %1564 = arith.subf %1563, %1534 : vector<2x32xf32>
    %1565 = arith.mulf %1564, %1540 : vector<2x32xf32>
    %1566 = arith.mulf %1534, %1494 : vector<2x32xf32>
    %1567 = arith.addf %1565, %1566 : vector<2x32xf32>
    %cst_416 = arith.constant 1.000000e+00 : f32
    %1568 = vector.broadcast %cst_416 : f32 to vector<2x32xf32>
    %1569 = arith.subf %1568, %1556 : vector<2x32xf32>
    %1570 = arith.mulf %1569, %1562 : vector<2x32xf32>
    %1571 = arith.mulf %1556, %1499 : vector<2x32xf32>
    %1572 = arith.addf %1570, %1571 : vector<2x32xf32>
    %1573 = arith.truncf %1567 : vector<2x32xf32> to vector<2x32xbf16>
    %c2_i32_417 = arith.constant 2 : i32
    %1574 = arith.muli %c4_i32_403, %c2_i32_417 : i32
    %1575 = arith.index_cast %1574 : i32 to index
    %c0_418 = arith.constant 0 : index
    %1576 = vector.load %arg38[%1575, %c0_418] : memref<16x64xbf16, #tpu.memory_space<vmem>>, vector<2x32xbf16>
    tpu.vector_store %arg38[%1575, %c0_418], %1573 {strides = array<i32>} : memref<16x64xbf16, #tpu.memory_space<vmem>>, vector<2x32xbf16>,
    %1577 = arith.truncf %1572 : vector<2x32xf32> to vector<2x32xbf16>
    %c2_i32_419 = arith.constant 2 : i32
    %1578 = arith.muli %1508, %c2_i32_419 : i32
    %1579 = arith.index_cast %1578 : i32 to index
    %c32_420 = arith.constant 32 : index
    %1580 = vector.load %arg38[%1579, %c32_420] : memref<16x64xbf16, #tpu.memory_space<vmem>>, vector<2x32xbf16>
    tpu.vector_store %arg38[%1579, %c32_420], %1577 {strides = array<i32>} : memref<16x64xbf16, #tpu.memory_space<vmem>>, vector<2x32xbf16>,
    %c5_i32_421 = arith.constant 5 : i32
    %c7_i32_422 = arith.constant 7 : i32
    %1581 = arith.subi %c7_i32_422, %c5_i32_421 : i32
    %1582 = arith.truncf %1567 : vector<2x32xf32> to vector<2x32xbf16>
    %cst_423 = arith.constant dense<0.000000e+00> : vector<2x96xf32>
    %1583 = tpu.matmul %1582, %1207, %cst_423 {dimension_numbers = #tpu.dot_dimension_numbers<[1], [0], [0], [1], [0, 0, 1, 1], [], []>} : vector<2x32xbf16>, vector<32x96xbf16>, vector<2x96xf32> -> vector<2x96xf32>
    %1584 = arith.truncf %1572 : vector<2x32xf32> to vector<2x32xbf16>
    %cst_424 = arith.constant dense<0.000000e+00> : vector<2x96xf32>
    %1585 = tpu.matmul %1584, %1208, %cst_424 {dimension_numbers = #tpu.dot_dimension_numbers<[1], [0], [0], [1], [0, 0, 1, 1], [], []>} : vector<2x32xbf16>, vector<32x96xbf16>, vector<2x96xf32> -> vector<2x96xf32>
    %c2_i32_425 = arith.constant 2 : i32
    %1586 = arith.muli %c5_i32_421, %c2_i32_425 : i32
    %1587 = arith.index_cast %1586 : i32 to index
    %c0_426 = arith.constant 0 : index
    %1588 = vector.load %arg40[%1587, %c0_426] : memref<16x192xf32, #tpu.memory_space<vmem>>, vector<2x96xf32>
    %c2_i32_427 = arith.constant 2 : i32
    %1589 = arith.muli %1581, %c2_i32_427 : i32
    %1590 = arith.index_cast %1589 : i32 to index
    %c96_428 = arith.constant 96 : index
    %1591 = vector.load %arg40[%1590, %c96_428] : memref<16x192xf32, #tpu.memory_space<vmem>>, vector<2x96xf32>
    %1592 = vector.extract_strided_slice %1588 {offsets = [0, 0], sizes = [2, 32], strides = [1, 1]} : vector<2x96xf32> to vector<2x32xf32>
    %1593 = vector.extract_strided_slice %1583 {offsets = [0, 0], sizes = [2, 32], strides = [1, 1]} : vector<2x96xf32> to vector<2x32xf32>
    %1594 = arith.addf %1592, %1593 : vector<2x32xf32>
    %1595 = arith.negf %1594 : vector<2x32xf32>
    %1596 = math.exp %1595 : vector<2x32xf32>
    %cst_429 = arith.constant 1.000000e+00 : f32
    %1597 = vector.broadcast %cst_429 : f32 to vector<2x32xf32>
    %1598 = arith.addf %1597, %1596 : vector<2x32xf32>
    %1599 = arith.divf %1597, %1598 : vector<2x32xf32>
    %1600 = vector.extract_strided_slice %1588 {offsets = [0, 32], sizes = [2, 32], strides = [1, 1]} : vector<2x96xf32> to vector<2x32xf32>
    %1601 = vector.extract_strided_slice %1583 {offsets = [0, 32], sizes = [2, 32], strides = [1, 1]} : vector<2x96xf32> to vector<2x32xf32>
    %1602 = arith.addf %1600, %1601 : vector<2x32xf32>
    %1603 = arith.negf %1602 : vector<2x32xf32>
    %1604 = math.exp %1603 : vector<2x32xf32>
    %cst_430 = arith.constant 1.000000e+00 : f32
    %1605 = vector.broadcast %cst_430 : f32 to vector<2x32xf32>
    %1606 = arith.addf %1605, %1604 : vector<2x32xf32>
    %1607 = arith.divf %1605, %1606 : vector<2x32xf32>
    %1608 = vector.extract_strided_slice %1588 {offsets = [0, 64], sizes = [2, 32], strides = [1, 1]} : vector<2x96xf32> to vector<2x32xf32>
    %1609 = vector.extract_strided_slice %1583 {offsets = [0, 64], sizes = [2, 32], strides = [1, 1]} : vector<2x96xf32> to vector<2x32xf32>
    %1610 = arith.addf %1609, %1211 : vector<2x32xf32>
    %1611 = arith.mulf %1599, %1610 : vector<2x32xf32>
    %1612 = arith.addf %1608, %1611 : vector<2x32xf32>
    %1613 = math.tanh %1612 : vector<2x32xf32>
    %1614 = vector.extract_strided_slice %1591 {offsets = [0, 0], sizes = [2, 32], strides = [1, 1]} : vector<2x96xf32> to vector<2x32xf32>
    %1615 = vector.extract_strided_slice %1585 {offsets = [0, 0], sizes = [2, 32], strides = [1, 1]} : vector<2x96xf32> to vector<2x32xf32>
    %1616 = arith.addf %1614, %1615 : vector<2x32xf32>
    %1617 = arith.negf %1616 : vector<2x32xf32>
    %1618 = math.exp %1617 : vector<2x32xf32>
    %cst_431 = arith.constant 1.000000e+00 : f32
    %1619 = vector.broadcast %cst_431 : f32 to vector<2x32xf32>
    %1620 = arith.addf %1619, %1618 : vector<2x32xf32>
    %1621 = arith.divf %1619, %1620 : vector<2x32xf32>
    %1622 = vector.extract_strided_slice %1591 {offsets = [0, 32], sizes = [2, 32], strides = [1, 1]} : vector<2x96xf32> to vector<2x32xf32>
    %1623 = vector.extract_strided_slice %1585 {offsets = [0, 32], sizes = [2, 32], strides = [1, 1]} : vector<2x96xf32> to vector<2x32xf32>
    %1624 = arith.addf %1622, %1623 : vector<2x32xf32>
    %1625 = arith.negf %1624 : vector<2x32xf32>
    %1626 = math.exp %1625 : vector<2x32xf32>
    %cst_432 = arith.constant 1.000000e+00 : f32
    %1627 = vector.broadcast %cst_432 : f32 to vector<2x32xf32>
    %1628 = arith.addf %1627, %1626 : vector<2x32xf32>
    %1629 = arith.divf %1627, %1628 : vector<2x32xf32>
    %1630 = vector.extract_strided_slice %1591 {offsets = [0, 64], sizes = [2, 32], strides = [1, 1]} : vector<2x96xf32> to vector<2x32xf32>
    %1631 = vector.extract_strided_slice %1585 {offsets = [0, 64], sizes = [2, 32], strides = [1, 1]} : vector<2x96xf32> to vector<2x32xf32>
    %1632 = arith.addf %1631, %1214 : vector<2x32xf32>
    %1633 = arith.mulf %1621, %1632 : vector<2x32xf32>
    %1634 = arith.addf %1630, %1633 : vector<2x32xf32>
    %1635 = math.tanh %1634 : vector<2x32xf32>
    %cst_433 = arith.constant 1.000000e+00 : f32
    %1636 = vector.broadcast %cst_433 : f32 to vector<2x32xf32>
    %1637 = arith.subf %1636, %1607 : vector<2x32xf32>
    %1638 = arith.mulf %1637, %1613 : vector<2x32xf32>
    %1639 = arith.mulf %1607, %1567 : vector<2x32xf32>
    %1640 = arith.addf %1638, %1639 : vector<2x32xf32>
    %cst_434 = arith.constant 1.000000e+00 : f32
    %1641 = vector.broadcast %cst_434 : f32 to vector<2x32xf32>
    %1642 = arith.subf %1641, %1629 : vector<2x32xf32>
    %1643 = arith.mulf %1642, %1635 : vector<2x32xf32>
    %1644 = arith.mulf %1629, %1572 : vector<2x32xf32>
    %1645 = arith.addf %1643, %1644 : vector<2x32xf32>
    %1646 = arith.truncf %1640 : vector<2x32xf32> to vector<2x32xbf16>
    %c2_i32_435 = arith.constant 2 : i32
    %1647 = arith.muli %c5_i32_421, %c2_i32_435 : i32
    %1648 = arith.index_cast %1647 : i32 to index
    %c0_436 = arith.constant 0 : index
    %1649 = vector.load %arg38[%1648, %c0_436] : memref<16x64xbf16, #tpu.memory_space<vmem>>, vector<2x32xbf16>
    tpu.vector_store %arg38[%1648, %c0_436], %1646 {strides = array<i32>} : memref<16x64xbf16, #tpu.memory_space<vmem>>, vector<2x32xbf16>,
    %1650 = arith.truncf %1645 : vector<2x32xf32> to vector<2x32xbf16>
    %c2_i32_437 = arith.constant 2 : i32
    %1651 = arith.muli %1581, %c2_i32_437 : i32
    %1652 = arith.index_cast %1651 : i32 to index
    %c32_438 = arith.constant 32 : index
    %1653 = vector.load %arg38[%1652, %c32_438] : memref<16x64xbf16, #tpu.memory_space<vmem>>, vector<2x32xbf16>
    tpu.vector_store %arg38[%1652, %c32_438], %1650 {strides = array<i32>} : memref<16x64xbf16, #tpu.memory_space<vmem>>, vector<2x32xbf16>,
    %c6_i32_439 = arith.constant 6 : i32
    %c7_i32_440 = arith.constant 7 : i32
    %1654 = arith.subi %c7_i32_440, %c6_i32_439 : i32
    %1655 = arith.truncf %1640 : vector<2x32xf32> to vector<2x32xbf16>
    %cst_441 = arith.constant dense<0.000000e+00> : vector<2x96xf32>
    %1656 = tpu.matmul %1655, %1207, %cst_441 {dimension_numbers = #tpu.dot_dimension_numbers<[1], [0], [0], [1], [0, 0, 1, 1], [], []>} : vector<2x32xbf16>, vector<32x96xbf16>, vector<2x96xf32> -> vector<2x96xf32>
    %1657 = arith.truncf %1645 : vector<2x32xf32> to vector<2x32xbf16>
    %cst_442 = arith.constant dense<0.000000e+00> : vector<2x96xf32>
    %1658 = tpu.matmul %1657, %1208, %cst_442 {dimension_numbers = #tpu.dot_dimension_numbers<[1], [0], [0], [1], [0, 0, 1, 1], [], []>} : vector<2x32xbf16>, vector<32x96xbf16>, vector<2x96xf32> -> vector<2x96xf32>
    %c2_i32_443 = arith.constant 2 : i32
    %1659 = arith.muli %c6_i32_439, %c2_i32_443 : i32
    %1660 = arith.index_cast %1659 : i32 to index
    %c0_444 = arith.constant 0 : index
    %1661 = vector.load %arg40[%1660, %c0_444] : memref<16x192xf32, #tpu.memory_space<vmem>>, vector<2x96xf32>
    %c2_i32_445 = arith.constant 2 : i32
    %1662 = arith.muli %1654, %c2_i32_445 : i32
    %1663 = arith.index_cast %1662 : i32 to index
    %c96_446 = arith.constant 96 : index
    %1664 = vector.load %arg40[%1663, %c96_446] : memref<16x192xf32, #tpu.memory_space<vmem>>, vector<2x96xf32>
    %1665 = vector.extract_strided_slice %1661 {offsets = [0, 0], sizes = [2, 32], strides = [1, 1]} : vector<2x96xf32> to vector<2x32xf32>
    %1666 = vector.extract_strided_slice %1656 {offsets = [0, 0], sizes = [2, 32], strides = [1, 1]} : vector<2x96xf32> to vector<2x32xf32>
    %1667 = arith.addf %1665, %1666 : vector<2x32xf32>
    %1668 = arith.negf %1667 : vector<2x32xf32>
    %1669 = math.exp %1668 : vector<2x32xf32>
    %cst_447 = arith.constant 1.000000e+00 : f32
    %1670 = vector.broadcast %cst_447 : f32 to vector<2x32xf32>
    %1671 = arith.addf %1670, %1669 : vector<2x32xf32>
    %1672 = arith.divf %1670, %1671 : vector<2x32xf32>
    %1673 = vector.extract_strided_slice %1661 {offsets = [0, 32], sizes = [2, 32], strides = [1, 1]} : vector<2x96xf32> to vector<2x32xf32>
    %1674 = vector.extract_strided_slice %1656 {offsets = [0, 32], sizes = [2, 32], strides = [1, 1]} : vector<2x96xf32> to vector<2x32xf32>
    %1675 = arith.addf %1673, %1674 : vector<2x32xf32>
    %1676 = arith.negf %1675 : vector<2x32xf32>
    %1677 = math.exp %1676 : vector<2x32xf32>
    %cst_448 = arith.constant 1.000000e+00 : f32
    %1678 = vector.broadcast %cst_448 : f32 to vector<2x32xf32>
    %1679 = arith.addf %1678, %1677 : vector<2x32xf32>
    %1680 = arith.divf %1678, %1679 : vector<2x32xf32>
    %1681 = vector.extract_strided_slice %1661 {offsets = [0, 64], sizes = [2, 32], strides = [1, 1]} : vector<2x96xf32> to vector<2x32xf32>
    %1682 = vector.extract_strided_slice %1656 {offsets = [0, 64], sizes = [2, 32], strides = [1, 1]} : vector<2x96xf32> to vector<2x32xf32>
    %1683 = arith.addf %1682, %1211 : vector<2x32xf32>
    %1684 = arith.mulf %1672, %1683 : vector<2x32xf32>
    %1685 = arith.addf %1681, %1684 : vector<2x32xf32>
    %1686 = math.tanh %1685 : vector<2x32xf32>
    %1687 = vector.extract_strided_slice %1664 {offsets = [0, 0], sizes = [2, 32], strides = [1, 1]} : vector<2x96xf32> to vector<2x32xf32>
    %1688 = vector.extract_strided_slice %1658 {offsets = [0, 0], sizes = [2, 32], strides = [1, 1]} : vector<2x96xf32> to vector<2x32xf32>
    %1689 = arith.addf %1687, %1688 : vector<2x32xf32>
    %1690 = arith.negf %1689 : vector<2x32xf32>
    %1691 = math.exp %1690 : vector<2x32xf32>
    %cst_449 = arith.constant 1.000000e+00 : f32
    %1692 = vector.broadcast %cst_449 : f32 to vector<2x32xf32>
    %1693 = arith.addf %1692, %1691 : vector<2x32xf32>
    %1694 = arith.divf %1692, %1693 : vector<2x32xf32>
    %1695 = vector.extract_strided_slice %1664 {offsets = [0, 32], sizes = [2, 32], strides = [1, 1]} : vector<2x96xf32> to vector<2x32xf32>
    %1696 = vector.extract_strided_slice %1658 {offsets = [0, 32], sizes = [2, 32], strides = [1, 1]} : vector<2x96xf32> to vector<2x32xf32>
    %1697 = arith.addf %1695, %1696 : vector<2x32xf32>
    %1698 = arith.negf %1697 : vector<2x32xf32>
    %1699 = math.exp %1698 : vector<2x32xf32>
    %cst_450 = arith.constant 1.000000e+00 : f32
    %1700 = vector.broadcast %cst_450 : f32 to vector<2x32xf32>
    %1701 = arith.addf %1700, %1699 : vector<2x32xf32>
    %1702 = arith.divf %1700, %1701 : vector<2x32xf32>
    %1703 = vector.extract_strided_slice %1664 {offsets = [0, 64], sizes = [2, 32], strides = [1, 1]} : vector<2x96xf32> to vector<2x32xf32>
    %1704 = vector.extract_strided_slice %1658 {offsets = [0, 64], sizes = [2, 32], strides = [1, 1]} : vector<2x96xf32> to vector<2x32xf32>
    %1705 = arith.addf %1704, %1214 : vector<2x32xf32>
    %1706 = arith.mulf %1694, %1705 : vector<2x32xf32>
    %1707 = arith.addf %1703, %1706 : vector<2x32xf32>
    %1708 = math.tanh %1707 : vector<2x32xf32>
    %cst_451 = arith.constant 1.000000e+00 : f32
    %1709 = vector.broadcast %cst_451 : f32 to vector<2x32xf32>
    %1710 = arith.subf %1709, %1680 : vector<2x32xf32>
    %1711 = arith.mulf %1710, %1686 : vector<2x32xf32>
    %1712 = arith.mulf %1680, %1640 : vector<2x32xf32>
    %1713 = arith.addf %1711, %1712 : vector<2x32xf32>
    %cst_452 = arith.constant 1.000000e+00 : f32
    %1714 = vector.broadcast %cst_452 : f32 to vector<2x32xf32>
    %1715 = arith.subf %1714, %1702 : vector<2x32xf32>
    %1716 = arith.mulf %1715, %1708 : vector<2x32xf32>
    %1717 = arith.mulf %1702, %1645 : vector<2x32xf32>
    %1718 = arith.addf %1716, %1717 : vector<2x32xf32>
    %1719 = arith.truncf %1713 : vector<2x32xf32> to vector<2x32xbf16>
    %c2_i32_453 = arith.constant 2 : i32
    %1720 = arith.muli %c6_i32_439, %c2_i32_453 : i32
    %1721 = arith.index_cast %1720 : i32 to index
    %c0_454 = arith.constant 0 : index
    %1722 = vector.load %arg38[%1721, %c0_454] : memref<16x64xbf16, #tpu.memory_space<vmem>>, vector<2x32xbf16>
    tpu.vector_store %arg38[%1721, %c0_454], %1719 {strides = array<i32>} : memref<16x64xbf16, #tpu.memory_space<vmem>>, vector<2x32xbf16>,
    %1723 = arith.truncf %1718 : vector<2x32xf32> to vector<2x32xbf16>
    %c2_i32_455 = arith.constant 2 : i32
    %1724 = arith.muli %1654, %c2_i32_455 : i32
    %1725 = arith.index_cast %1724 : i32 to index
    %c32_456 = arith.constant 32 : index
    %1726 = vector.load %arg38[%1725, %c32_456] : memref<16x64xbf16, #tpu.memory_space<vmem>>, vector<2x32xbf16>
    tpu.vector_store %arg38[%1725, %c32_456], %1723 {strides = array<i32>} : memref<16x64xbf16, #tpu.memory_space<vmem>>, vector<2x32xbf16>,
    %c7_i32_457 = arith.constant 7 : i32
    %c7_i32_458 = arith.constant 7 : i32
    %1727 = arith.subi %c7_i32_458, %c7_i32_457 : i32
    %1728 = arith.truncf %1713 : vector<2x32xf32> to vector<2x32xbf16>
    %cst_459 = arith.constant dense<0.000000e+00> : vector<2x96xf32>
    %1729 = tpu.matmul %1728, %1207, %cst_459 {dimension_numbers = #tpu.dot_dimension_numbers<[1], [0], [0], [1], [0, 0, 1, 1], [], []>} : vector<2x32xbf16>, vector<32x96xbf16>, vector<2x96xf32> -> vector<2x96xf32>
    %1730 = arith.truncf %1718 : vector<2x32xf32> to vector<2x32xbf16>
    %cst_460 = arith.constant dense<0.000000e+00> : vector<2x96xf32>
    %1731 = tpu.matmul %1730, %1208, %cst_460 {dimension_numbers = #tpu.dot_dimension_numbers<[1], [0], [0], [1], [0, 0, 1, 1], [], []>} : vector<2x32xbf16>, vector<32x96xbf16>, vector<2x96xf32> -> vector<2x96xf32>
    %c2_i32_461 = arith.constant 2 : i32
    %1732 = arith.muli %c7_i32_457, %c2_i32_461 : i32
    %1733 = arith.index_cast %1732 : i32 to index
    %c0_462 = arith.constant 0 : index
    %1734 = vector.load %arg40[%1733, %c0_462] : memref<16x192xf32, #tpu.memory_space<vmem>>, vector<2x96xf32>
    %c2_i32_463 = arith.constant 2 : i32
    %1735 = arith.muli %1727, %c2_i32_463 : i32
    %1736 = arith.index_cast %1735 : i32 to index
    %c96_464 = arith.constant 96 : index
    %1737 = vector.load %arg40[%1736, %c96_464] : memref<16x192xf32, #tpu.memory_space<vmem>>, vector<2x96xf32>
    %1738 = vector.extract_strided_slice %1734 {offsets = [0, 0], sizes = [2, 32], strides = [1, 1]} : vector<2x96xf32> to vector<2x32xf32>
    %1739 = vector.extract_strided_slice %1729 {offsets = [0, 0], sizes = [2, 32], strides = [1, 1]} : vector<2x96xf32> to vector<2x32xf32>
    %1740 = arith.addf %1738, %1739 : vector<2x32xf32>
    %1741 = arith.negf %1740 : vector<2x32xf32>
    %1742 = math.exp %1741 : vector<2x32xf32>
    %cst_465 = arith.constant 1.000000e+00 : f32
    %1743 = vector.broadcast %cst_465 : f32 to vector<2x32xf32>
    %1744 = arith.addf %1743, %1742 : vector<2x32xf32>
    %1745 = arith.divf %1743, %1744 : vector<2x32xf32>
    %1746 = vector.extract_strided_slice %1734 {offsets = [0, 32], sizes = [2, 32], strides = [1, 1]} : vector<2x96xf32> to vector<2x32xf32>
    %1747 = vector.extract_strided_slice %1729 {offsets = [0, 32], sizes = [2, 32], strides = [1, 1]} : vector<2x96xf32> to vector<2x32xf32>
    %1748 = arith.addf %1746, %1747 : vector<2x32xf32>
    %1749 = arith.negf %1748 : vector<2x32xf32>
    %1750 = math.exp %1749 : vector<2x32xf32>
    %cst_466 = arith.constant 1.000000e+00 : f32
    %1751 = vector.broadcast %cst_466 : f32 to vector<2x32xf32>
    %1752 = arith.addf %1751, %1750 : vector<2x32xf32>
    %1753 = arith.divf %1751, %1752 : vector<2x32xf32>
    %1754 = vector.extract_strided_slice %1734 {offsets = [0, 64], sizes = [2, 32], strides = [1, 1]} : vector<2x96xf32> to vector<2x32xf32>
    %1755 = vector.extract_strided_slice %1729 {offsets = [0, 64], sizes = [2, 32], strides = [1, 1]} : vector<2x96xf32> to vector<2x32xf32>
    %1756 = arith.addf %1755, %1211 : vector<2x32xf32>
    %1757 = arith.mulf %1745, %1756 : vector<2x32xf32>
    %1758 = arith.addf %1754, %1757 : vector<2x32xf32>
    %1759 = math.tanh %1758 : vector<2x32xf32>
    %1760 = vector.extract_strided_slice %1737 {offsets = [0, 0], sizes = [2, 32], strides = [1, 1]} : vector<2x96xf32> to vector<2x32xf32>
    %1761 = vector.extract_strided_slice %1731 {offsets = [0, 0], sizes = [2, 32], strides = [1, 1]} : vector<2x96xf32> to vector<2x32xf32>
    %1762 = arith.addf %1760, %1761 : vector<2x32xf32>
    %1763 = arith.negf %1762 : vector<2x32xf32>
    %1764 = math.exp %1763 : vector<2x32xf32>
    %cst_467 = arith.constant 1.000000e+00 : f32
    %1765 = vector.broadcast %cst_467 : f32 to vector<2x32xf32>
    %1766 = arith.addf %1765, %1764 : vector<2x32xf32>
    %1767 = arith.divf %1765, %1766 : vector<2x32xf32>
    %1768 = vector.extract_strided_slice %1737 {offsets = [0, 32], sizes = [2, 32], strides = [1, 1]} : vector<2x96xf32> to vector<2x32xf32>
    %1769 = vector.extract_strided_slice %1731 {offsets = [0, 32], sizes = [2, 32], strides = [1, 1]} : vector<2x96xf32> to vector<2x32xf32>
    %1770 = arith.addf %1768, %1769 : vector<2x32xf32>
    %1771 = arith.negf %1770 : vector<2x32xf32>
    %1772 = math.exp %1771 : vector<2x32xf32>
    %cst_468 = arith.constant 1.000000e+00 : f32
    %1773 = vector.broadcast %cst_468 : f32 to vector<2x32xf32>
    %1774 = arith.addf %1773, %1772 : vector<2x32xf32>
    %1775 = arith.divf %1773, %1774 : vector<2x32xf32>
    %1776 = vector.extract_strided_slice %1737 {offsets = [0, 64], sizes = [2, 32], strides = [1, 1]} : vector<2x96xf32> to vector<2x32xf32>
    %1777 = vector.extract_strided_slice %1731 {offsets = [0, 64], sizes = [2, 32], strides = [1, 1]} : vector<2x96xf32> to vector<2x32xf32>
    %1778 = arith.addf %1777, %1214 : vector<2x32xf32>
    %1779 = arith.mulf %1767, %1778 : vector<2x32xf32>
    %1780 = arith.addf %1776, %1779 : vector<2x32xf32>
    %1781 = math.tanh %1780 : vector<2x32xf32>
    %cst_469 = arith.constant 1.000000e+00 : f32
    %1782 = vector.broadcast %cst_469 : f32 to vector<2x32xf32>
    %1783 = arith.subf %1782, %1753 : vector<2x32xf32>
    %1784 = arith.mulf %1783, %1759 : vector<2x32xf32>
    %1785 = arith.mulf %1753, %1713 : vector<2x32xf32>
    %1786 = arith.addf %1784, %1785 : vector<2x32xf32>
    %cst_470 = arith.constant 1.000000e+00 : f32
    %1787 = vector.broadcast %cst_470 : f32 to vector<2x32xf32>
    %1788 = arith.subf %1787, %1775 : vector<2x32xf32>
    %1789 = arith.mulf %1788, %1781 : vector<2x32xf32>
    %1790 = arith.mulf %1775, %1718 : vector<2x32xf32>
    %1791 = arith.addf %1789, %1790 : vector<2x32xf32>
    %1792 = arith.truncf %1786 : vector<2x32xf32> to vector<2x32xbf16>
    %c2_i32_471 = arith.constant 2 : i32
    %1793 = arith.muli %c7_i32_457, %c2_i32_471 : i32
    %1794 = arith.index_cast %1793 : i32 to index
    %c0_472 = arith.constant 0 : index
    %1795 = vector.load %arg38[%1794, %c0_472] : memref<16x64xbf16, #tpu.memory_space<vmem>>, vector<2x32xbf16>
    tpu.vector_store %arg38[%1794, %c0_472], %1792 {strides = array<i32>} : memref<16x64xbf16, #tpu.memory_space<vmem>>, vector<2x32xbf16>,
    %1796 = arith.truncf %1791 : vector<2x32xf32> to vector<2x32xbf16>
    %c2_i32_473 = arith.constant 2 : i32
    %1797 = arith.muli %1727, %c2_i32_473 : i32
    %1798 = arith.index_cast %1797 : i32 to index
    %c32_474 = arith.constant 32 : index
    %1799 = vector.load %arg38[%1798, %c32_474] : memref<16x64xbf16, #tpu.memory_space<vmem>>, vector<2x32xbf16>
    tpu.vector_store %arg38[%1798, %c32_474], %1796 {strides = array<i32>} : memref<16x64xbf16, #tpu.memory_space<vmem>>, vector<2x32xbf16>,
    %c8_i32_475 = arith.constant 8 : i32
    %c0_476 = arith.constant 0 : index
    %c0_477 = arith.constant 0 : index
    %1800 = vector.load %arg38[%c0_476, %c0_477] : memref<16x64xbf16, #tpu.memory_space<vmem>>, vector<16x64xbf16>
    %c0_478 = arith.constant 0 : index
    %c0_479 = arith.constant 0 : index
    %1801 = vector.load %arg19[%c0_478, %c0_479] : memref<64x192xbf16, #tpu.memory_space<vmem>>, vector<64x192xbf16>
    %cst_480 = arith.constant dense<0.000000e+00> : vector<16x192xf32>
    %1802 = tpu.matmul %1800, %1801, %cst_480 {dimension_numbers = #tpu.dot_dimension_numbers<[1], [0], [0], [1], [0, 0, 1, 1], [], []>} : vector<16x64xbf16>, vector<64x192xbf16>, vector<16x192xf32> -> vector<16x192xf32>
    %c0_481 = arith.constant 0 : index
    %c0_482 = arith.constant 0 : index
    %1803 = vector.load %arg20[%c0_481, %c0_482] : memref<1x192xf32, #tpu.memory_space<vmem>>, vector<1x192xf32>
    %1804 = vector.broadcast %1803 : vector<1x192xf32> to vector<16x192xf32>
    %1805 = arith.addf %1802, %1804 : vector<16x192xf32>
    %c0_483 = arith.constant 0 : index
    %c0_484 = arith.constant 0 : index
    %1806 = vector.load %arg40[%c0_483, %c0_484] : memref<16x192xf32, #tpu.memory_space<vmem>>, vector<16x192xf32>
    tpu.vector_store %arg40[%c0_483, %c0_484], %1805 {strides = array<i32>} : memref<16x192xf32, #tpu.memory_space<vmem>>, vector<16x192xf32>,
    %c0_485 = arith.constant 0 : index
    %c0_486 = arith.constant 0 : index
    %1807 = vector.load %arg21[%c0_485, %c0_486] : memref<32x96xbf16, #tpu.memory_space<vmem>>, vector<32x96xbf16>
    %c0_487 = arith.constant 0 : index
    %c0_488 = arith.constant 0 : index
    %1808 = vector.load %arg22[%c0_487, %c0_488] : memref<32x96xbf16, #tpu.memory_space<vmem>>, vector<32x96xbf16>
    %c0_489 = arith.constant 0 : index
    %c0_490 = arith.constant 0 : index
    %1809 = vector.load %arg23[%c0_489, %c0_490] : memref<1x32xf32, #tpu.memory_space<vmem>>, vector<1x32xf32>
    %1810 = vector.shape_cast %1809 : vector<1x32xf32> to vector<1x32xf32>
    %1811 = vector.broadcast %1810 : vector<1x32xf32> to vector<2x32xf32>
    %c0_491 = arith.constant 0 : index
    %c0_492 = arith.constant 0 : index
    %1812 = vector.load %arg24[%c0_491, %c0_492] : memref<1x32xf32, #tpu.memory_space<vmem>>, vector<1x32xf32>
    %1813 = vector.shape_cast %1812 : vector<1x32xf32> to vector<1x32xf32>
    %1814 = vector.broadcast %1813 : vector<1x32xf32> to vector<2x32xf32>
    %cst_493 = arith.constant 0.000000e+00 : f32
    %1815 = vector.broadcast %cst_493 : f32 to vector<2x32xf32>
    %c0_i32_494 = arith.constant 0 : i32
    %c7_i32_495 = arith.constant 7 : i32
    %1816 = arith.subi %c7_i32_495, %c0_i32_494 : i32
    %1817 = arith.truncf %1815 : vector<2x32xf32> to vector<2x32xbf16>
    %cst_496 = arith.constant dense<0.000000e+00> : vector<2x96xf32>
    %1818 = tpu.matmul %1817, %1807, %cst_496 {dimension_numbers = #tpu.dot_dimension_numbers<[1], [0], [0], [1], [0, 0, 1, 1], [], []>} : vector<2x32xbf16>, vector<32x96xbf16>, vector<2x96xf32> -> vector<2x96xf32>
    %1819 = arith.truncf %1815 : vector<2x32xf32> to vector<2x32xbf16>
    %cst_497 = arith.constant dense<0.000000e+00> : vector<2x96xf32>
    %1820 = tpu.matmul %1819, %1808, %cst_497 {dimension_numbers = #tpu.dot_dimension_numbers<[1], [0], [0], [1], [0, 0, 1, 1], [], []>} : vector<2x32xbf16>, vector<32x96xbf16>, vector<2x96xf32> -> vector<2x96xf32>
    %c2_i32_498 = arith.constant 2 : i32
    %1821 = arith.muli %c0_i32_494, %c2_i32_498 : i32
    %1822 = arith.index_cast %1821 : i32 to index
    %c0_499 = arith.constant 0 : index
    %1823 = vector.load %arg40[%1822, %c0_499] : memref<16x192xf32, #tpu.memory_space<vmem>>, vector<2x96xf32>
    %c2_i32_500 = arith.constant 2 : i32
    %1824 = arith.muli %1816, %c2_i32_500 : i32
    %1825 = arith.index_cast %1824 : i32 to index
    %c96_501 = arith.constant 96 : index
    %1826 = vector.load %arg40[%1825, %c96_501] : memref<16x192xf32, #tpu.memory_space<vmem>>, vector<2x96xf32>
    %1827 = vector.extract_strided_slice %1823 {offsets = [0, 0], sizes = [2, 32], strides = [1, 1]} : vector<2x96xf32> to vector<2x32xf32>
    %1828 = vector.extract_strided_slice %1818 {offsets = [0, 0], sizes = [2, 32], strides = [1, 1]} : vector<2x96xf32> to vector<2x32xf32>
    %1829 = arith.addf %1827, %1828 : vector<2x32xf32>
    %1830 = arith.negf %1829 : vector<2x32xf32>
    %1831 = math.exp %1830 : vector<2x32xf32>
    %cst_502 = arith.constant 1.000000e+00 : f32
    %1832 = vector.broadcast %cst_502 : f32 to vector<2x32xf32>
    %1833 = arith.addf %1832, %1831 : vector<2x32xf32>
    %1834 = arith.divf %1832, %1833 : vector<2x32xf32>
    %1835 = vector.extract_strided_slice %1823 {offsets = [0, 32], sizes = [2, 32], strides = [1, 1]} : vector<2x96xf32> to vector<2x32xf32>
    %1836 = vector.extract_strided_slice %1818 {offsets = [0, 32], sizes = [2, 32], strides = [1, 1]} : vector<2x96xf32> to vector<2x32xf32>
    %1837 = arith.addf %1835, %1836 : vector<2x32xf32>
    %1838 = arith.negf %1837 : vector<2x32xf32>
    %1839 = math.exp %1838 : vector<2x32xf32>
    %cst_503 = arith.constant 1.000000e+00 : f32
    %1840 = vector.broadcast %cst_503 : f32 to vector<2x32xf32>
    %1841 = arith.addf %1840, %1839 : vector<2x32xf32>
    %1842 = arith.divf %1840, %1841 : vector<2x32xf32>
    %1843 = vector.extract_strided_slice %1823 {offsets = [0, 64], sizes = [2, 32], strides = [1, 1]} : vector<2x96xf32> to vector<2x32xf32>
    %1844 = vector.extract_strided_slice %1818 {offsets = [0, 64], sizes = [2, 32], strides = [1, 1]} : vector<2x96xf32> to vector<2x32xf32>
    %1845 = arith.addf %1844, %1811 : vector<2x32xf32>
    %1846 = arith.mulf %1834, %1845 : vector<2x32xf32>
    %1847 = arith.addf %1843, %1846 : vector<2x32xf32>
    %1848 = math.tanh %1847 : vector<2x32xf32>
    %1849 = vector.extract_strided_slice %1826 {offsets = [0, 0], sizes = [2, 32], strides = [1, 1]} : vector<2x96xf32> to vector<2x32xf32>
    %1850 = vector.extract_strided_slice %1820 {offsets = [0, 0], sizes = [2, 32], strides = [1, 1]} : vector<2x96xf32> to vector<2x32xf32>
    %1851 = arith.addf %1849, %1850 : vector<2x32xf32>
    %1852 = arith.negf %1851 : vector<2x32xf32>
    %1853 = math.exp %1852 : vector<2x32xf32>
    %cst_504 = arith.constant 1.000000e+00 : f32
    %1854 = vector.broadcast %cst_504 : f32 to vector<2x32xf32>
    %1855 = arith.addf %1854, %1853 : vector<2x32xf32>
    %1856 = arith.divf %1854, %1855 : vector<2x32xf32>
    %1857 = vector.extract_strided_slice %1826 {offsets = [0, 32], sizes = [2, 32], strides = [1, 1]} : vector<2x96xf32> to vector<2x32xf32>
    %1858 = vector.extract_strided_slice %1820 {offsets = [0, 32], sizes = [2, 32], strides = [1, 1]} : vector<2x96xf32> to vector<2x32xf32>
    %1859 = arith.addf %1857, %1858 : vector<2x32xf32>
    %1860 = arith.negf %1859 : vector<2x32xf32>
    %1861 = math.exp %1860 : vector<2x32xf32>
    %cst_505 = arith.constant 1.000000e+00 : f32
    %1862 = vector.broadcast %cst_505 : f32 to vector<2x32xf32>
    %1863 = arith.addf %1862, %1861 : vector<2x32xf32>
    %1864 = arith.divf %1862, %1863 : vector<2x32xf32>
    %1865 = vector.extract_strided_slice %1826 {offsets = [0, 64], sizes = [2, 32], strides = [1, 1]} : vector<2x96xf32> to vector<2x32xf32>
    %1866 = vector.extract_strided_slice %1820 {offsets = [0, 64], sizes = [2, 32], strides = [1, 1]} : vector<2x96xf32> to vector<2x32xf32>
    %1867 = arith.addf %1866, %1814 : vector<2x32xf32>
    %1868 = arith.mulf %1856, %1867 : vector<2x32xf32>
    %1869 = arith.addf %1865, %1868 : vector<2x32xf32>
    %1870 = math.tanh %1869 : vector<2x32xf32>
    %cst_506 = arith.constant 1.000000e+00 : f32
    %1871 = vector.broadcast %cst_506 : f32 to vector<2x32xf32>
    %1872 = arith.subf %1871, %1842 : vector<2x32xf32>
    %1873 = arith.mulf %1872, %1848 : vector<2x32xf32>
    %1874 = arith.mulf %1842, %1815 : vector<2x32xf32>
    %1875 = arith.addf %1873, %1874 : vector<2x32xf32>
    %cst_507 = arith.constant 1.000000e+00 : f32
    %1876 = vector.broadcast %cst_507 : f32 to vector<2x32xf32>
    %1877 = arith.subf %1876, %1864 : vector<2x32xf32>
    %1878 = arith.mulf %1877, %1870 : vector<2x32xf32>
    %1879 = arith.mulf %1864, %1815 : vector<2x32xf32>
    %1880 = arith.addf %1878, %1879 : vector<2x32xf32>
    %1881 = arith.addf %1815, %1875 : vector<2x32xf32>
    %1882 = arith.addf %1815, %1880 : vector<2x32xf32>
    %c1_i32_508 = arith.constant 1 : i32
    %c7_i32_509 = arith.constant 7 : i32
    %1883 = arith.subi %c7_i32_509, %c1_i32_508 : i32
    %1884 = arith.truncf %1875 : vector<2x32xf32> to vector<2x32xbf16>
    %cst_510 = arith.constant dense<0.000000e+00> : vector<2x96xf32>
    %1885 = tpu.matmul %1884, %1807, %cst_510 {dimension_numbers = #tpu.dot_dimension_numbers<[1], [0], [0], [1], [0, 0, 1, 1], [], []>} : vector<2x32xbf16>, vector<32x96xbf16>, vector<2x96xf32> -> vector<2x96xf32>
    %1886 = arith.truncf %1880 : vector<2x32xf32> to vector<2x32xbf16>
    %cst_511 = arith.constant dense<0.000000e+00> : vector<2x96xf32>
    %1887 = tpu.matmul %1886, %1808, %cst_511 {dimension_numbers = #tpu.dot_dimension_numbers<[1], [0], [0], [1], [0, 0, 1, 1], [], []>} : vector<2x32xbf16>, vector<32x96xbf16>, vector<2x96xf32> -> vector<2x96xf32>
    %c2_i32_512 = arith.constant 2 : i32
    %1888 = arith.muli %c1_i32_508, %c2_i32_512 : i32
    %1889 = arith.index_cast %1888 : i32 to index
    %c0_513 = arith.constant 0 : index
    %1890 = vector.load %arg40[%1889, %c0_513] : memref<16x192xf32, #tpu.memory_space<vmem>>, vector<2x96xf32>
    %c2_i32_514 = arith.constant 2 : i32
    %1891 = arith.muli %1883, %c2_i32_514 : i32
    %1892 = arith.index_cast %1891 : i32 to index
    %c96_515 = arith.constant 96 : index
    %1893 = vector.load %arg40[%1892, %c96_515] : memref<16x192xf32, #tpu.memory_space<vmem>>, vector<2x96xf32>
    %1894 = vector.extract_strided_slice %1890 {offsets = [0, 0], sizes = [2, 32], strides = [1, 1]} : vector<2x96xf32> to vector<2x32xf32>
    %1895 = vector.extract_strided_slice %1885 {offsets = [0, 0], sizes = [2, 32], strides = [1, 1]} : vector<2x96xf32> to vector<2x32xf32>
    %1896 = arith.addf %1894, %1895 : vector<2x32xf32>
    %1897 = arith.negf %1896 : vector<2x32xf32>
    %1898 = math.exp %1897 : vector<2x32xf32>
    %cst_516 = arith.constant 1.000000e+00 : f32
    %1899 = vector.broadcast %cst_516 : f32 to vector<2x32xf32>
    %1900 = arith.addf %1899, %1898 : vector<2x32xf32>
    %1901 = arith.divf %1899, %1900 : vector<2x32xf32>
    %1902 = vector.extract_strided_slice %1890 {offsets = [0, 32], sizes = [2, 32], strides = [1, 1]} : vector<2x96xf32> to vector<2x32xf32>
    %1903 = vector.extract_strided_slice %1885 {offsets = [0, 32], sizes = [2, 32], strides = [1, 1]} : vector<2x96xf32> to vector<2x32xf32>
    %1904 = arith.addf %1902, %1903 : vector<2x32xf32>
    %1905 = arith.negf %1904 : vector<2x32xf32>
    %1906 = math.exp %1905 : vector<2x32xf32>
    %cst_517 = arith.constant 1.000000e+00 : f32
    %1907 = vector.broadcast %cst_517 : f32 to vector<2x32xf32>
    %1908 = arith.addf %1907, %1906 : vector<2x32xf32>
    %1909 = arith.divf %1907, %1908 : vector<2x32xf32>
    %1910 = vector.extract_strided_slice %1890 {offsets = [0, 64], sizes = [2, 32], strides = [1, 1]} : vector<2x96xf32> to vector<2x32xf32>
    %1911 = vector.extract_strided_slice %1885 {offsets = [0, 64], sizes = [2, 32], strides = [1, 1]} : vector<2x96xf32> to vector<2x32xf32>
    %1912 = arith.addf %1911, %1811 : vector<2x32xf32>
    %1913 = arith.mulf %1901, %1912 : vector<2x32xf32>
    %1914 = arith.addf %1910, %1913 : vector<2x32xf32>
    %1915 = math.tanh %1914 : vector<2x32xf32>
    %1916 = vector.extract_strided_slice %1893 {offsets = [0, 0], sizes = [2, 32], strides = [1, 1]} : vector<2x96xf32> to vector<2x32xf32>
    %1917 = vector.extract_strided_slice %1887 {offsets = [0, 0], sizes = [2, 32], strides = [1, 1]} : vector<2x96xf32> to vector<2x32xf32>
    %1918 = arith.addf %1916, %1917 : vector<2x32xf32>
    %1919 = arith.negf %1918 : vector<2x32xf32>
    %1920 = math.exp %1919 : vector<2x32xf32>
    %cst_518 = arith.constant 1.000000e+00 : f32
    %1921 = vector.broadcast %cst_518 : f32 to vector<2x32xf32>
    %1922 = arith.addf %1921, %1920 : vector<2x32xf32>
    %1923 = arith.divf %1921, %1922 : vector<2x32xf32>
    %1924 = vector.extract_strided_slice %1893 {offsets = [0, 32], sizes = [2, 32], strides = [1, 1]} : vector<2x96xf32> to vector<2x32xf32>
    %1925 = vector.extract_strided_slice %1887 {offsets = [0, 32], sizes = [2, 32], strides = [1, 1]} : vector<2x96xf32> to vector<2x32xf32>
    %1926 = arith.addf %1924, %1925 : vector<2x32xf32>
    %1927 = arith.negf %1926 : vector<2x32xf32>
    %1928 = math.exp %1927 : vector<2x32xf32>
    %cst_519 = arith.constant 1.000000e+00 : f32
    %1929 = vector.broadcast %cst_519 : f32 to vector<2x32xf32>
    %1930 = arith.addf %1929, %1928 : vector<2x32xf32>
    %1931 = arith.divf %1929, %1930 : vector<2x32xf32>
    %1932 = vector.extract_strided_slice %1893 {offsets = [0, 64], sizes = [2, 32], strides = [1, 1]} : vector<2x96xf32> to vector<2x32xf32>
    %1933 = vector.extract_strided_slice %1887 {offsets = [0, 64], sizes = [2, 32], strides = [1, 1]} : vector<2x96xf32> to vector<2x32xf32>
    %1934 = arith.addf %1933, %1814 : vector<2x32xf32>
    %1935 = arith.mulf %1923, %1934 : vector<2x32xf32>
    %1936 = arith.addf %1932, %1935 : vector<2x32xf32>
    %1937 = math.tanh %1936 : vector<2x32xf32>
    %cst_520 = arith.constant 1.000000e+00 : f32
    %1938 = vector.broadcast %cst_520 : f32 to vector<2x32xf32>
    %1939 = arith.subf %1938, %1909 : vector<2x32xf32>
    %1940 = arith.mulf %1939, %1915 : vector<2x32xf32>
    %1941 = arith.mulf %1909, %1875 : vector<2x32xf32>
    %1942 = arith.addf %1940, %1941 : vector<2x32xf32>
    %cst_521 = arith.constant 1.000000e+00 : f32
    %1943 = vector.broadcast %cst_521 : f32 to vector<2x32xf32>
    %1944 = arith.subf %1943, %1931 : vector<2x32xf32>
    %1945 = arith.mulf %1944, %1937 : vector<2x32xf32>
    %1946 = arith.mulf %1931, %1880 : vector<2x32xf32>
    %1947 = arith.addf %1945, %1946 : vector<2x32xf32>
    %1948 = arith.addf %1881, %1942 : vector<2x32xf32>
    %1949 = arith.addf %1882, %1947 : vector<2x32xf32>
    %c2_i32_522 = arith.constant 2 : i32
    %c7_i32_523 = arith.constant 7 : i32
    %1950 = arith.subi %c7_i32_523, %c2_i32_522 : i32
    %1951 = arith.truncf %1942 : vector<2x32xf32> to vector<2x32xbf16>
    %cst_524 = arith.constant dense<0.000000e+00> : vector<2x96xf32>
    %1952 = tpu.matmul %1951, %1807, %cst_524 {dimension_numbers = #tpu.dot_dimension_numbers<[1], [0], [0], [1], [0, 0, 1, 1], [], []>} : vector<2x32xbf16>, vector<32x96xbf16>, vector<2x96xf32> -> vector<2x96xf32>
    %1953 = arith.truncf %1947 : vector<2x32xf32> to vector<2x32xbf16>
    %cst_525 = arith.constant dense<0.000000e+00> : vector<2x96xf32>
    %1954 = tpu.matmul %1953, %1808, %cst_525 {dimension_numbers = #tpu.dot_dimension_numbers<[1], [0], [0], [1], [0, 0, 1, 1], [], []>} : vector<2x32xbf16>, vector<32x96xbf16>, vector<2x96xf32> -> vector<2x96xf32>
    %c2_i32_526 = arith.constant 2 : i32
    %1955 = arith.muli %c2_i32_522, %c2_i32_526 : i32
    %1956 = arith.index_cast %1955 : i32 to index
    %c0_527 = arith.constant 0 : index
    %1957 = vector.load %arg40[%1956, %c0_527] : memref<16x192xf32, #tpu.memory_space<vmem>>, vector<2x96xf32>
    %c2_i32_528 = arith.constant 2 : i32
    %1958 = arith.muli %1950, %c2_i32_528 : i32
    %1959 = arith.index_cast %1958 : i32 to index
    %c96_529 = arith.constant 96 : index
    %1960 = vector.load %arg40[%1959, %c96_529] : memref<16x192xf32, #tpu.memory_space<vmem>>, vector<2x96xf32>
    %1961 = vector.extract_strided_slice %1957 {offsets = [0, 0], sizes = [2, 32], strides = [1, 1]} : vector<2x96xf32> to vector<2x32xf32>
    %1962 = vector.extract_strided_slice %1952 {offsets = [0, 0], sizes = [2, 32], strides = [1, 1]} : vector<2x96xf32> to vector<2x32xf32>
    %1963 = arith.addf %1961, %1962 : vector<2x32xf32>
    %1964 = arith.negf %1963 : vector<2x32xf32>
    %1965 = math.exp %1964 : vector<2x32xf32>
    %cst_530 = arith.constant 1.000000e+00 : f32
    %1966 = vector.broadcast %cst_530 : f32 to vector<2x32xf32>
    %1967 = arith.addf %1966, %1965 : vector<2x32xf32>
    %1968 = arith.divf %1966, %1967 : vector<2x32xf32>
    %1969 = vector.extract_strided_slice %1957 {offsets = [0, 32], sizes = [2, 32], strides = [1, 1]} : vector<2x96xf32> to vector<2x32xf32>
    %1970 = vector.extract_strided_slice %1952 {offsets = [0, 32], sizes = [2, 32], strides = [1, 1]} : vector<2x96xf32> to vector<2x32xf32>
    %1971 = arith.addf %1969, %1970 : vector<2x32xf32>
    %1972 = arith.negf %1971 : vector<2x32xf32>
    %1973 = math.exp %1972 : vector<2x32xf32>
    %cst_531 = arith.constant 1.000000e+00 : f32
    %1974 = vector.broadcast %cst_531 : f32 to vector<2x32xf32>
    %1975 = arith.addf %1974, %1973 : vector<2x32xf32>
    %1976 = arith.divf %1974, %1975 : vector<2x32xf32>
    %1977 = vector.extract_strided_slice %1957 {offsets = [0, 64], sizes = [2, 32], strides = [1, 1]} : vector<2x96xf32> to vector<2x32xf32>
    %1978 = vector.extract_strided_slice %1952 {offsets = [0, 64], sizes = [2, 32], strides = [1, 1]} : vector<2x96xf32> to vector<2x32xf32>
    %1979 = arith.addf %1978, %1811 : vector<2x32xf32>
    %1980 = arith.mulf %1968, %1979 : vector<2x32xf32>
    %1981 = arith.addf %1977, %1980 : vector<2x32xf32>
    %1982 = math.tanh %1981 : vector<2x32xf32>
    %1983 = vector.extract_strided_slice %1960 {offsets = [0, 0], sizes = [2, 32], strides = [1, 1]} : vector<2x96xf32> to vector<2x32xf32>
    %1984 = vector.extract_strided_slice %1954 {offsets = [0, 0], sizes = [2, 32], strides = [1, 1]} : vector<2x96xf32> to vector<2x32xf32>
    %1985 = arith.addf %1983, %1984 : vector<2x32xf32>
    %1986 = arith.negf %1985 : vector<2x32xf32>
    %1987 = math.exp %1986 : vector<2x32xf32>
    %cst_532 = arith.constant 1.000000e+00 : f32
    %1988 = vector.broadcast %cst_532 : f32 to vector<2x32xf32>
    %1989 = arith.addf %1988, %1987 : vector<2x32xf32>
    %1990 = arith.divf %1988, %1989 : vector<2x32xf32>
    %1991 = vector.extract_strided_slice %1960 {offsets = [0, 32], sizes = [2, 32], strides = [1, 1]} : vector<2x96xf32> to vector<2x32xf32>
    %1992 = vector.extract_strided_slice %1954 {offsets = [0, 32], sizes = [2, 32], strides = [1, 1]} : vector<2x96xf32> to vector<2x32xf32>
    %1993 = arith.addf %1991, %1992 : vector<2x32xf32>
    %1994 = arith.negf %1993 : vector<2x32xf32>
    %1995 = math.exp %1994 : vector<2x32xf32>
    %cst_533 = arith.constant 1.000000e+00 : f32
    %1996 = vector.broadcast %cst_533 : f32 to vector<2x32xf32>
    %1997 = arith.addf %1996, %1995 : vector<2x32xf32>
    %1998 = arith.divf %1996, %1997 : vector<2x32xf32>
    %1999 = vector.extract_strided_slice %1960 {offsets = [0, 64], sizes = [2, 32], strides = [1, 1]} : vector<2x96xf32> to vector<2x32xf32>
    %2000 = vector.extract_strided_slice %1954 {offsets = [0, 64], sizes = [2, 32], strides = [1, 1]} : vector<2x96xf32> to vector<2x32xf32>
    %2001 = arith.addf %2000, %1814 : vector<2x32xf32>
    %2002 = arith.mulf %1990, %2001 : vector<2x32xf32>
    %2003 = arith.addf %1999, %2002 : vector<2x32xf32>
    %2004 = math.tanh %2003 : vector<2x32xf32>
    %cst_534 = arith.constant 1.000000e+00 : f32
    %2005 = vector.broadcast %cst_534 : f32 to vector<2x32xf32>
    %2006 = arith.subf %2005, %1976 : vector<2x32xf32>
    %2007 = arith.mulf %2006, %1982 : vector<2x32xf32>
    %2008 = arith.mulf %1976, %1942 : vector<2x32xf32>
    %2009 = arith.addf %2007, %2008 : vector<2x32xf32>
    %cst_535 = arith.constant 1.000000e+00 : f32
    %2010 = vector.broadcast %cst_535 : f32 to vector<2x32xf32>
    %2011 = arith.subf %2010, %1998 : vector<2x32xf32>
    %2012 = arith.mulf %2011, %2004 : vector<2x32xf32>
    %2013 = arith.mulf %1998, %1947 : vector<2x32xf32>
    %2014 = arith.addf %2012, %2013 : vector<2x32xf32>
    %2015 = arith.addf %1948, %2009 : vector<2x32xf32>
    %2016 = arith.addf %1949, %2014 : vector<2x32xf32>
    %c3_i32_536 = arith.constant 3 : i32
    %c7_i32_537 = arith.constant 7 : i32
    %2017 = arith.subi %c7_i32_537, %c3_i32_536 : i32
    %2018 = arith.truncf %2009 : vector<2x32xf32> to vector<2x32xbf16>
    %cst_538 = arith.constant dense<0.000000e+00> : vector<2x96xf32>
    %2019 = tpu.matmul %2018, %1807, %cst_538 {dimension_numbers = #tpu.dot_dimension_numbers<[1], [0], [0], [1], [0, 0, 1, 1], [], []>} : vector<2x32xbf16>, vector<32x96xbf16>, vector<2x96xf32> -> vector<2x96xf32>
    %2020 = arith.truncf %2014 : vector<2x32xf32> to vector<2x32xbf16>
    %cst_539 = arith.constant dense<0.000000e+00> : vector<2x96xf32>
    %2021 = tpu.matmul %2020, %1808, %cst_539 {dimension_numbers = #tpu.dot_dimension_numbers<[1], [0], [0], [1], [0, 0, 1, 1], [], []>} : vector<2x32xbf16>, vector<32x96xbf16>, vector<2x96xf32> -> vector<2x96xf32>
    %c2_i32_540 = arith.constant 2 : i32
    %2022 = arith.muli %c3_i32_536, %c2_i32_540 : i32
    %2023 = arith.index_cast %2022 : i32 to index
    %c0_541 = arith.constant 0 : index
    %2024 = vector.load %arg40[%2023, %c0_541] : memref<16x192xf32, #tpu.memory_space<vmem>>, vector<2x96xf32>
    %c2_i32_542 = arith.constant 2 : i32
    %2025 = arith.muli %2017, %c2_i32_542 : i32
    %2026 = arith.index_cast %2025 : i32 to index
    %c96_543 = arith.constant 96 : index
    %2027 = vector.load %arg40[%2026, %c96_543] : memref<16x192xf32, #tpu.memory_space<vmem>>, vector<2x96xf32>
    %2028 = vector.extract_strided_slice %2024 {offsets = [0, 0], sizes = [2, 32], strides = [1, 1]} : vector<2x96xf32> to vector<2x32xf32>
    %2029 = vector.extract_strided_slice %2019 {offsets = [0, 0], sizes = [2, 32], strides = [1, 1]} : vector<2x96xf32> to vector<2x32xf32>
    %2030 = arith.addf %2028, %2029 : vector<2x32xf32>
    %2031 = arith.negf %2030 : vector<2x32xf32>
    %2032 = math.exp %2031 : vector<2x32xf32>
    %cst_544 = arith.constant 1.000000e+00 : f32
    %2033 = vector.broadcast %cst_544 : f32 to vector<2x32xf32>
    %2034 = arith.addf %2033, %2032 : vector<2x32xf32>
    %2035 = arith.divf %2033, %2034 : vector<2x32xf32>
    %2036 = vector.extract_strided_slice %2024 {offsets = [0, 32], sizes = [2, 32], strides = [1, 1]} : vector<2x96xf32> to vector<2x32xf32>
    %2037 = vector.extract_strided_slice %2019 {offsets = [0, 32], sizes = [2, 32], strides = [1, 1]} : vector<2x96xf32> to vector<2x32xf32>
    %2038 = arith.addf %2036, %2037 : vector<2x32xf32>
    %2039 = arith.negf %2038 : vector<2x32xf32>
    %2040 = math.exp %2039 : vector<2x32xf32>
    %cst_545 = arith.constant 1.000000e+00 : f32
    %2041 = vector.broadcast %cst_545 : f32 to vector<2x32xf32>
    %2042 = arith.addf %2041, %2040 : vector<2x32xf32>
    %2043 = arith.divf %2041, %2042 : vector<2x32xf32>
    %2044 = vector.extract_strided_slice %2024 {offsets = [0, 64], sizes = [2, 32], strides = [1, 1]} : vector<2x96xf32> to vector<2x32xf32>
    %2045 = vector.extract_strided_slice %2019 {offsets = [0, 64], sizes = [2, 32], strides = [1, 1]} : vector<2x96xf32> to vector<2x32xf32>
    %2046 = arith.addf %2045, %1811 : vector<2x32xf32>
    %2047 = arith.mulf %2035, %2046 : vector<2x32xf32>
    %2048 = arith.addf %2044, %2047 : vector<2x32xf32>
    %2049 = math.tanh %2048 : vector<2x32xf32>
    %2050 = vector.extract_strided_slice %2027 {offsets = [0, 0], sizes = [2, 32], strides = [1, 1]} : vector<2x96xf32> to vector<2x32xf32>
    %2051 = vector.extract_strided_slice %2021 {offsets = [0, 0], sizes = [2, 32], strides = [1, 1]} : vector<2x96xf32> to vector<2x32xf32>
    %2052 = arith.addf %2050, %2051 : vector<2x32xf32>
    %2053 = arith.negf %2052 : vector<2x32xf32>
    %2054 = math.exp %2053 : vector<2x32xf32>
    %cst_546 = arith.constant 1.000000e+00 : f32
    %2055 = vector.broadcast %cst_546 : f32 to vector<2x32xf32>
    %2056 = arith.addf %2055, %2054 : vector<2x32xf32>
    %2057 = arith.divf %2055, %2056 : vector<2x32xf32>
    %2058 = vector.extract_strided_slice %2027 {offsets = [0, 32], sizes = [2, 32], strides = [1, 1]} : vector<2x96xf32> to vector<2x32xf32>
    %2059 = vector.extract_strided_slice %2021 {offsets = [0, 32], sizes = [2, 32], strides = [1, 1]} : vector<2x96xf32> to vector<2x32xf32>
    %2060 = arith.addf %2058, %2059 : vector<2x32xf32>
    %2061 = arith.negf %2060 : vector<2x32xf32>
    %2062 = math.exp %2061 : vector<2x32xf32>
    %cst_547 = arith.constant 1.000000e+00 : f32
    %2063 = vector.broadcast %cst_547 : f32 to vector<2x32xf32>
    %2064 = arith.addf %2063, %2062 : vector<2x32xf32>
    %2065 = arith.divf %2063, %2064 : vector<2x32xf32>
    %2066 = vector.extract_strided_slice %2027 {offsets = [0, 64], sizes = [2, 32], strides = [1, 1]} : vector<2x96xf32> to vector<2x32xf32>
    %2067 = vector.extract_strided_slice %2021 {offsets = [0, 64], sizes = [2, 32], strides = [1, 1]} : vector<2x96xf32> to vector<2x32xf32>
    %2068 = arith.addf %2067, %1814 : vector<2x32xf32>
    %2069 = arith.mulf %2057, %2068 : vector<2x32xf32>
    %2070 = arith.addf %2066, %2069 : vector<2x32xf32>
    %2071 = math.tanh %2070 : vector<2x32xf32>
    %cst_548 = arith.constant 1.000000e+00 : f32
    %2072 = vector.broadcast %cst_548 : f32 to vector<2x32xf32>
    %2073 = arith.subf %2072, %2043 : vector<2x32xf32>
    %2074 = arith.mulf %2073, %2049 : vector<2x32xf32>
    %2075 = arith.mulf %2043, %2009 : vector<2x32xf32>
    %2076 = arith.addf %2074, %2075 : vector<2x32xf32>
    %cst_549 = arith.constant 1.000000e+00 : f32
    %2077 = vector.broadcast %cst_549 : f32 to vector<2x32xf32>
    %2078 = arith.subf %2077, %2065 : vector<2x32xf32>
    %2079 = arith.mulf %2078, %2071 : vector<2x32xf32>
    %2080 = arith.mulf %2065, %2014 : vector<2x32xf32>
    %2081 = arith.addf %2079, %2080 : vector<2x32xf32>
    %2082 = arith.addf %2015, %2076 : vector<2x32xf32>
    %2083 = arith.addf %2016, %2081 : vector<2x32xf32>
    %c4_i32_550 = arith.constant 4 : i32
    %c7_i32_551 = arith.constant 7 : i32
    %2084 = arith.subi %c7_i32_551, %c4_i32_550 : i32
    %2085 = arith.truncf %2076 : vector<2x32xf32> to vector<2x32xbf16>
    %cst_552 = arith.constant dense<0.000000e+00> : vector<2x96xf32>
    %2086 = tpu.matmul %2085, %1807, %cst_552 {dimension_numbers = #tpu.dot_dimension_numbers<[1], [0], [0], [1], [0, 0, 1, 1], [], []>} : vector<2x32xbf16>, vector<32x96xbf16>, vector<2x96xf32> -> vector<2x96xf32>
    %2087 = arith.truncf %2081 : vector<2x32xf32> to vector<2x32xbf16>
    %cst_553 = arith.constant dense<0.000000e+00> : vector<2x96xf32>
    %2088 = tpu.matmul %2087, %1808, %cst_553 {dimension_numbers = #tpu.dot_dimension_numbers<[1], [0], [0], [1], [0, 0, 1, 1], [], []>} : vector<2x32xbf16>, vector<32x96xbf16>, vector<2x96xf32> -> vector<2x96xf32>
    %c2_i32_554 = arith.constant 2 : i32
    %2089 = arith.muli %c4_i32_550, %c2_i32_554 : i32
    %2090 = arith.index_cast %2089 : i32 to index
    %c0_555 = arith.constant 0 : index
    %2091 = vector.load %arg40[%2090, %c0_555] : memref<16x192xf32, #tpu.memory_space<vmem>>, vector<2x96xf32>
    %c2_i32_556 = arith.constant 2 : i32
    %2092 = arith.muli %2084, %c2_i32_556 : i32
    %2093 = arith.index_cast %2092 : i32 to index
    %c96_557 = arith.constant 96 : index
    %2094 = vector.load %arg40[%2093, %c96_557] : memref<16x192xf32, #tpu.memory_space<vmem>>, vector<2x96xf32>
    %2095 = vector.extract_strided_slice %2091 {offsets = [0, 0], sizes = [2, 32], strides = [1, 1]} : vector<2x96xf32> to vector<2x32xf32>
    %2096 = vector.extract_strided_slice %2086 {offsets = [0, 0], sizes = [2, 32], strides = [1, 1]} : vector<2x96xf32> to vector<2x32xf32>
    %2097 = arith.addf %2095, %2096 : vector<2x32xf32>
    %2098 = arith.negf %2097 : vector<2x32xf32>
    %2099 = math.exp %2098 : vector<2x32xf32>
    %cst_558 = arith.constant 1.000000e+00 : f32
    %2100 = vector.broadcast %cst_558 : f32 to vector<2x32xf32>
    %2101 = arith.addf %2100, %2099 : vector<2x32xf32>
    %2102 = arith.divf %2100, %2101 : vector<2x32xf32>
    %2103 = vector.extract_strided_slice %2091 {offsets = [0, 32], sizes = [2, 32], strides = [1, 1]} : vector<2x96xf32> to vector<2x32xf32>
    %2104 = vector.extract_strided_slice %2086 {offsets = [0, 32], sizes = [2, 32], strides = [1, 1]} : vector<2x96xf32> to vector<2x32xf32>
    %2105 = arith.addf %2103, %2104 : vector<2x32xf32>
    %2106 = arith.negf %2105 : vector<2x32xf32>
    %2107 = math.exp %2106 : vector<2x32xf32>
    %cst_559 = arith.constant 1.000000e+00 : f32
    %2108 = vector.broadcast %cst_559 : f32 to vector<2x32xf32>
    %2109 = arith.addf %2108, %2107 : vector<2x32xf32>
    %2110 = arith.divf %2108, %2109 : vector<2x32xf32>
    %2111 = vector.extract_strided_slice %2091 {offsets = [0, 64], sizes = [2, 32], strides = [1, 1]} : vector<2x96xf32> to vector<2x32xf32>
    %2112 = vector.extract_strided_slice %2086 {offsets = [0, 64], sizes = [2, 32], strides = [1, 1]} : vector<2x96xf32> to vector<2x32xf32>
    %2113 = arith.addf %2112, %1811 : vector<2x32xf32>
    %2114 = arith.mulf %2102, %2113 : vector<2x32xf32>
    %2115 = arith.addf %2111, %2114 : vector<2x32xf32>
    %2116 = math.tanh %2115 : vector<2x32xf32>
    %2117 = vector.extract_strided_slice %2094 {offsets = [0, 0], sizes = [2, 32], strides = [1, 1]} : vector<2x96xf32> to vector<2x32xf32>
    %2118 = vector.extract_strided_slice %2088 {offsets = [0, 0], sizes = [2, 32], strides = [1, 1]} : vector<2x96xf32> to vector<2x32xf32>
    %2119 = arith.addf %2117, %2118 : vector<2x32xf32>
    %2120 = arith.negf %2119 : vector<2x32xf32>
    %2121 = math.exp %2120 : vector<2x32xf32>
    %cst_560 = arith.constant 1.000000e+00 : f32
    %2122 = vector.broadcast %cst_560 : f32 to vector<2x32xf32>
    %2123 = arith.addf %2122, %2121 : vector<2x32xf32>
    %2124 = arith.divf %2122, %2123 : vector<2x32xf32>
    %2125 = vector.extract_strided_slice %2094 {offsets = [0, 32], sizes = [2, 32], strides = [1, 1]} : vector<2x96xf32> to vector<2x32xf32>
    %2126 = vector.extract_strided_slice %2088 {offsets = [0, 32], sizes = [2, 32], strides = [1, 1]} : vector<2x96xf32> to vector<2x32xf32>
    %2127 = arith.addf %2125, %2126 : vector<2x32xf32>
    %2128 = arith.negf %2127 : vector<2x32xf32>
    %2129 = math.exp %2128 : vector<2x32xf32>
    %cst_561 = arith.constant 1.000000e+00 : f32
    %2130 = vector.broadcast %cst_561 : f32 to vector<2x32xf32>
    %2131 = arith.addf %2130, %2129 : vector<2x32xf32>
    %2132 = arith.divf %2130, %2131 : vector<2x32xf32>
    %2133 = vector.extract_strided_slice %2094 {offsets = [0, 64], sizes = [2, 32], strides = [1, 1]} : vector<2x96xf32> to vector<2x32xf32>
    %2134 = vector.extract_strided_slice %2088 {offsets = [0, 64], sizes = [2, 32], strides = [1, 1]} : vector<2x96xf32> to vector<2x32xf32>
    %2135 = arith.addf %2134, %1814 : vector<2x32xf32>
    %2136 = arith.mulf %2124, %2135 : vector<2x32xf32>
    %2137 = arith.addf %2133, %2136 : vector<2x32xf32>
    %2138 = math.tanh %2137 : vector<2x32xf32>
    %cst_562 = arith.constant 1.000000e+00 : f32
    %2139 = vector.broadcast %cst_562 : f32 to vector<2x32xf32>
    %2140 = arith.subf %2139, %2110 : vector<2x32xf32>
    %2141 = arith.mulf %2140, %2116 : vector<2x32xf32>
    %2142 = arith.mulf %2110, %2076 : vector<2x32xf32>
    %2143 = arith.addf %2141, %2142 : vector<2x32xf32>
    %cst_563 = arith.constant 1.000000e+00 : f32
    %2144 = vector.broadcast %cst_563 : f32 to vector<2x32xf32>
    %2145 = arith.subf %2144, %2132 : vector<2x32xf32>
    %2146 = arith.mulf %2145, %2138 : vector<2x32xf32>
    %2147 = arith.mulf %2132, %2081 : vector<2x32xf32>
    %2148 = arith.addf %2146, %2147 : vector<2x32xf32>
    %2149 = arith.addf %2082, %2143 : vector<2x32xf32>
    %2150 = arith.addf %2083, %2148 : vector<2x32xf32>
    %c5_i32_564 = arith.constant 5 : i32
    %c7_i32_565 = arith.constant 7 : i32
    %2151 = arith.subi %c7_i32_565, %c5_i32_564 : i32
    %2152 = arith.truncf %2143 : vector<2x32xf32> to vector<2x32xbf16>
    %cst_566 = arith.constant dense<0.000000e+00> : vector<2x96xf32>
    %2153 = tpu.matmul %2152, %1807, %cst_566 {dimension_numbers = #tpu.dot_dimension_numbers<[1], [0], [0], [1], [0, 0, 1, 1], [], []>} : vector<2x32xbf16>, vector<32x96xbf16>, vector<2x96xf32> -> vector<2x96xf32>
    %2154 = arith.truncf %2148 : vector<2x32xf32> to vector<2x32xbf16>
    %cst_567 = arith.constant dense<0.000000e+00> : vector<2x96xf32>
    %2155 = tpu.matmul %2154, %1808, %cst_567 {dimension_numbers = #tpu.dot_dimension_numbers<[1], [0], [0], [1], [0, 0, 1, 1], [], []>} : vector<2x32xbf16>, vector<32x96xbf16>, vector<2x96xf32> -> vector<2x96xf32>
    %c2_i32_568 = arith.constant 2 : i32
    %2156 = arith.muli %c5_i32_564, %c2_i32_568 : i32
    %2157 = arith.index_cast %2156 : i32 to index
    %c0_569 = arith.constant 0 : index
    %2158 = vector.load %arg40[%2157, %c0_569] : memref<16x192xf32, #tpu.memory_space<vmem>>, vector<2x96xf32>
    %c2_i32_570 = arith.constant 2 : i32
    %2159 = arith.muli %2151, %c2_i32_570 : i32
    %2160 = arith.index_cast %2159 : i32 to index
    %c96_571 = arith.constant 96 : index
    %2161 = vector.load %arg40[%2160, %c96_571] : memref<16x192xf32, #tpu.memory_space<vmem>>, vector<2x96xf32>
    %2162 = vector.extract_strided_slice %2158 {offsets = [0, 0], sizes = [2, 32], strides = [1, 1]} : vector<2x96xf32> to vector<2x32xf32>
    %2163 = vector.extract_strided_slice %2153 {offsets = [0, 0], sizes = [2, 32], strides = [1, 1]} : vector<2x96xf32> to vector<2x32xf32>
    %2164 = arith.addf %2162, %2163 : vector<2x32xf32>
    %2165 = arith.negf %2164 : vector<2x32xf32>
    %2166 = math.exp %2165 : vector<2x32xf32>
    %cst_572 = arith.constant 1.000000e+00 : f32
    %2167 = vector.broadcast %cst_572 : f32 to vector<2x32xf32>
    %2168 = arith.addf %2167, %2166 : vector<2x32xf32>
    %2169 = arith.divf %2167, %2168 : vector<2x32xf32>
    %2170 = vector.extract_strided_slice %2158 {offsets = [0, 32], sizes = [2, 32], strides = [1, 1]} : vector<2x96xf32> to vector<2x32xf32>
    %2171 = vector.extract_strided_slice %2153 {offsets = [0, 32], sizes = [2, 32], strides = [1, 1]} : vector<2x96xf32> to vector<2x32xf32>
    %2172 = arith.addf %2170, %2171 : vector<2x32xf32>
    %2173 = arith.negf %2172 : vector<2x32xf32>
    %2174 = math.exp %2173 : vector<2x32xf32>
    %cst_573 = arith.constant 1.000000e+00 : f32
    %2175 = vector.broadcast %cst_573 : f32 to vector<2x32xf32>
    %2176 = arith.addf %2175, %2174 : vector<2x32xf32>
    %2177 = arith.divf %2175, %2176 : vector<2x32xf32>
    %2178 = vector.extract_strided_slice %2158 {offsets = [0, 64], sizes = [2, 32], strides = [1, 1]} : vector<2x96xf32> to vector<2x32xf32>
    %2179 = vector.extract_strided_slice %2153 {offsets = [0, 64], sizes = [2, 32], strides = [1, 1]} : vector<2x96xf32> to vector<2x32xf32>
    %2180 = arith.addf %2179, %1811 : vector<2x32xf32>
    %2181 = arith.mulf %2169, %2180 : vector<2x32xf32>
    %2182 = arith.addf %2178, %2181 : vector<2x32xf32>
    %2183 = math.tanh %2182 : vector<2x32xf32>
    %2184 = vector.extract_strided_slice %2161 {offsets = [0, 0], sizes = [2, 32], strides = [1, 1]} : vector<2x96xf32> to vector<2x32xf32>
    %2185 = vector.extract_strided_slice %2155 {offsets = [0, 0], sizes = [2, 32], strides = [1, 1]} : vector<2x96xf32> to vector<2x32xf32>
    %2186 = arith.addf %2184, %2185 : vector<2x32xf32>
    %2187 = arith.negf %2186 : vector<2x32xf32>
    %2188 = math.exp %2187 : vector<2x32xf32>
    %cst_574 = arith.constant 1.000000e+00 : f32
    %2189 = vector.broadcast %cst_574 : f32 to vector<2x32xf32>
    %2190 = arith.addf %2189, %2188 : vector<2x32xf32>
    %2191 = arith.divf %2189, %2190 : vector<2x32xf32>
    %2192 = vector.extract_strided_slice %2161 {offsets = [0, 32], sizes = [2, 32], strides = [1, 1]} : vector<2x96xf32> to vector<2x32xf32>
    %2193 = vector.extract_strided_slice %2155 {offsets = [0, 32], sizes = [2, 32], strides = [1, 1]} : vector<2x96xf32> to vector<2x32xf32>
    %2194 = arith.addf %2192, %2193 : vector<2x32xf32>
    %2195 = arith.negf %2194 : vector<2x32xf32>
    %2196 = math.exp %2195 : vector<2x32xf32>
    %cst_575 = arith.constant 1.000000e+00 : f32
    %2197 = vector.broadcast %cst_575 : f32 to vector<2x32xf32>
    %2198 = arith.addf %2197, %2196 : vector<2x32xf32>
    %2199 = arith.divf %2197, %2198 : vector<2x32xf32>
    %2200 = vector.extract_strided_slice %2161 {offsets = [0, 64], sizes = [2, 32], strides = [1, 1]} : vector<2x96xf32> to vector<2x32xf32>
    %2201 = vector.extract_strided_slice %2155 {offsets = [0, 64], sizes = [2, 32], strides = [1, 1]} : vector<2x96xf32> to vector<2x32xf32>
    %2202 = arith.addf %2201, %1814 : vector<2x32xf32>
    %2203 = arith.mulf %2191, %2202 : vector<2x32xf32>
    %2204 = arith.addf %2200, %2203 : vector<2x32xf32>
    %2205 = math.tanh %2204 : vector<2x32xf32>
    %cst_576 = arith.constant 1.000000e+00 : f32
    %2206 = vector.broadcast %cst_576 : f32 to vector<2x32xf32>
    %2207 = arith.subf %2206, %2177 : vector<2x32xf32>
    %2208 = arith.mulf %2207, %2183 : vector<2x32xf32>
    %2209 = arith.mulf %2177, %2143 : vector<2x32xf32>
    %2210 = arith.addf %2208, %2209 : vector<2x32xf32>
    %cst_577 = arith.constant 1.000000e+00 : f32
    %2211 = vector.broadcast %cst_577 : f32 to vector<2x32xf32>
    %2212 = arith.subf %2211, %2199 : vector<2x32xf32>
    %2213 = arith.mulf %2212, %2205 : vector<2x32xf32>
    %2214 = arith.mulf %2199, %2148 : vector<2x32xf32>
    %2215 = arith.addf %2213, %2214 : vector<2x32xf32>
    %2216 = arith.addf %2149, %2210 : vector<2x32xf32>
    %2217 = arith.addf %2150, %2215 : vector<2x32xf32>
    %c6_i32_578 = arith.constant 6 : i32
    %c7_i32_579 = arith.constant 7 : i32
    %2218 = arith.subi %c7_i32_579, %c6_i32_578 : i32
    %2219 = arith.truncf %2210 : vector<2x32xf32> to vector<2x32xbf16>
    %cst_580 = arith.constant dense<0.000000e+00> : vector<2x96xf32>
    %2220 = tpu.matmul %2219, %1807, %cst_580 {dimension_numbers = #tpu.dot_dimension_numbers<[1], [0], [0], [1], [0, 0, 1, 1], [], []>} : vector<2x32xbf16>, vector<32x96xbf16>, vector<2x96xf32> -> vector<2x96xf32>
    %2221 = arith.truncf %2215 : vector<2x32xf32> to vector<2x32xbf16>
    %cst_581 = arith.constant dense<0.000000e+00> : vector<2x96xf32>
    %2222 = tpu.matmul %2221, %1808, %cst_581 {dimension_numbers = #tpu.dot_dimension_numbers<[1], [0], [0], [1], [0, 0, 1, 1], [], []>} : vector<2x32xbf16>, vector<32x96xbf16>, vector<2x96xf32> -> vector<2x96xf32>
    %c2_i32_582 = arith.constant 2 : i32
    %2223 = arith.muli %c6_i32_578, %c2_i32_582 : i32
    %2224 = arith.index_cast %2223 : i32 to index
    %c0_583 = arith.constant 0 : index
    %2225 = vector.load %arg40[%2224, %c0_583] : memref<16x192xf32, #tpu.memory_space<vmem>>, vector<2x96xf32>
    %c2_i32_584 = arith.constant 2 : i32
    %2226 = arith.muli %2218, %c2_i32_584 : i32
    %2227 = arith.index_cast %2226 : i32 to index
    %c96_585 = arith.constant 96 : index
    %2228 = vector.load %arg40[%2227, %c96_585] : memref<16x192xf32, #tpu.memory_space<vmem>>, vector<2x96xf32>
    %2229 = vector.extract_strided_slice %2225 {offsets = [0, 0], sizes = [2, 32], strides = [1, 1]} : vector<2x96xf32> to vector<2x32xf32>
    %2230 = vector.extract_strided_slice %2220 {offsets = [0, 0], sizes = [2, 32], strides = [1, 1]} : vector<2x96xf32> to vector<2x32xf32>
    %2231 = arith.addf %2229, %2230 : vector<2x32xf32>
    %2232 = arith.negf %2231 : vector<2x32xf32>
    %2233 = math.exp %2232 : vector<2x32xf32>
    %cst_586 = arith.constant 1.000000e+00 : f32
    %2234 = vector.broadcast %cst_586 : f32 to vector<2x32xf32>
    %2235 = arith.addf %2234, %2233 : vector<2x32xf32>
    %2236 = arith.divf %2234, %2235 : vector<2x32xf32>
    %2237 = vector.extract_strided_slice %2225 {offsets = [0, 32], sizes = [2, 32], strides = [1, 1]} : vector<2x96xf32> to vector<2x32xf32>
    %2238 = vector.extract_strided_slice %2220 {offsets = [0, 32], sizes = [2, 32], strides = [1, 1]} : vector<2x96xf32> to vector<2x32xf32>
    %2239 = arith.addf %2237, %2238 : vector<2x32xf32>
    %2240 = arith.negf %2239 : vector<2x32xf32>
    %2241 = math.exp %2240 : vector<2x32xf32>
    %cst_587 = arith.constant 1.000000e+00 : f32
    %2242 = vector.broadcast %cst_587 : f32 to vector<2x32xf32>
    %2243 = arith.addf %2242, %2241 : vector<2x32xf32>
    %2244 = arith.divf %2242, %2243 : vector<2x32xf32>
    %2245 = vector.extract_strided_slice %2225 {offsets = [0, 64], sizes = [2, 32], strides = [1, 1]} : vector<2x96xf32> to vector<2x32xf32>
    %2246 = vector.extract_strided_slice %2220 {offsets = [0, 64], sizes = [2, 32], strides = [1, 1]} : vector<2x96xf32> to vector<2x32xf32>
    %2247 = arith.addf %2246, %1811 : vector<2x32xf32>
    %2248 = arith.mulf %2236, %2247 : vector<2x32xf32>
    %2249 = arith.addf %2245, %2248 : vector<2x32xf32>
    %2250 = math.tanh %2249 : vector<2x32xf32>
    %2251 = vector.extract_strided_slice %2228 {offsets = [0, 0], sizes = [2, 32], strides = [1, 1]} : vector<2x96xf32> to vector<2x32xf32>
    %2252 = vector.extract_strided_slice %2222 {offsets = [0, 0], sizes = [2, 32], strides = [1, 1]} : vector<2x96xf32> to vector<2x32xf32>
    %2253 = arith.addf %2251, %2252 : vector<2x32xf32>
    %2254 = arith.negf %2253 : vector<2x32xf32>
    %2255 = math.exp %2254 : vector<2x32xf32>
    %cst_588 = arith.constant 1.000000e+00 : f32
    %2256 = vector.broadcast %cst_588 : f32 to vector<2x32xf32>
    %2257 = arith.addf %2256, %2255 : vector<2x32xf32>
    %2258 = arith.divf %2256, %2257 : vector<2x32xf32>
    %2259 = vector.extract_strided_slice %2228 {offsets = [0, 32], sizes = [2, 32], strides = [1, 1]} : vector<2x96xf32> to vector<2x32xf32>
    %2260 = vector.extract_strided_slice %2222 {offsets = [0, 32], sizes = [2, 32], strides = [1, 1]} : vector<2x96xf32> to vector<2x32xf32>
    %2261 = arith.addf %2259, %2260 : vector<2x32xf32>
    %2262 = arith.negf %2261 : vector<2x32xf32>
    %2263 = math.exp %2262 : vector<2x32xf32>
    %cst_589 = arith.constant 1.000000e+00 : f32
    %2264 = vector.broadcast %cst_589 : f32 to vector<2x32xf32>
    %2265 = arith.addf %2264, %2263 : vector<2x32xf32>
    %2266 = arith.divf %2264, %2265 : vector<2x32xf32>
    %2267 = vector.extract_strided_slice %2228 {offsets = [0, 64], sizes = [2, 32], strides = [1, 1]} : vector<2x96xf32> to vector<2x32xf32>
    %2268 = vector.extract_strided_slice %2222 {offsets = [0, 64], sizes = [2, 32], strides = [1, 1]} : vector<2x96xf32> to vector<2x32xf32>
    %2269 = arith.addf %2268, %1814 : vector<2x32xf32>
    %2270 = arith.mulf %2258, %2269 : vector<2x32xf32>
    %2271 = arith.addf %2267, %2270 : vector<2x32xf32>
    %2272 = math.tanh %2271 : vector<2x32xf32>
    %cst_590 = arith.constant 1.000000e+00 : f32
    %2273 = vector.broadcast %cst_590 : f32 to vector<2x32xf32>
    %2274 = arith.subf %2273, %2244 : vector<2x32xf32>
    %2275 = arith.mulf %2274, %2250 : vector<2x32xf32>
    %2276 = arith.mulf %2244, %2210 : vector<2x32xf32>
    %2277 = arith.addf %2275, %2276 : vector<2x32xf32>
    %cst_591 = arith.constant 1.000000e+00 : f32
    %2278 = vector.broadcast %cst_591 : f32 to vector<2x32xf32>
    %2279 = arith.subf %2278, %2266 : vector<2x32xf32>
    %2280 = arith.mulf %2279, %2272 : vector<2x32xf32>
    %2281 = arith.mulf %2266, %2215 : vector<2x32xf32>
    %2282 = arith.addf %2280, %2281 : vector<2x32xf32>
    %2283 = arith.addf %2216, %2277 : vector<2x32xf32>
    %2284 = arith.addf %2217, %2282 : vector<2x32xf32>
    %c7_i32_592 = arith.constant 7 : i32
    %c7_i32_593 = arith.constant 7 : i32
    %2285 = arith.subi %c7_i32_593, %c7_i32_592 : i32
    %2286 = arith.truncf %2277 : vector<2x32xf32> to vector<2x32xbf16>
    %cst_594 = arith.constant dense<0.000000e+00> : vector<2x96xf32>
    %2287 = tpu.matmul %2286, %1807, %cst_594 {dimension_numbers = #tpu.dot_dimension_numbers<[1], [0], [0], [1], [0, 0, 1, 1], [], []>} : vector<2x32xbf16>, vector<32x96xbf16>, vector<2x96xf32> -> vector<2x96xf32>
    %2288 = arith.truncf %2282 : vector<2x32xf32> to vector<2x32xbf16>
    %cst_595 = arith.constant dense<0.000000e+00> : vector<2x96xf32>
    %2289 = tpu.matmul %2288, %1808, %cst_595 {dimension_numbers = #tpu.dot_dimension_numbers<[1], [0], [0], [1], [0, 0, 1, 1], [], []>} : vector<2x32xbf16>, vector<32x96xbf16>, vector<2x96xf32> -> vector<2x96xf32>
    %c2_i32_596 = arith.constant 2 : i32
    %2290 = arith.muli %c7_i32_592, %c2_i32_596 : i32
    %2291 = arith.index_cast %2290 : i32 to index
    %c0_597 = arith.constant 0 : index
    %2292 = vector.load %arg40[%2291, %c0_597] : memref<16x192xf32, #tpu.memory_space<vmem>>, vector<2x96xf32>
    %c2_i32_598 = arith.constant 2 : i32
    %2293 = arith.muli %2285, %c2_i32_598 : i32
    %2294 = arith.index_cast %2293 : i32 to index
    %c96_599 = arith.constant 96 : index
    %2295 = vector.load %arg40[%2294, %c96_599] : memref<16x192xf32, #tpu.memory_space<vmem>>, vector<2x96xf32>
    %2296 = vector.extract_strided_slice %2292 {offsets = [0, 0], sizes = [2, 32], strides = [1, 1]} : vector<2x96xf32> to vector<2x32xf32>
    %2297 = vector.extract_strided_slice %2287 {offsets = [0, 0], sizes = [2, 32], strides = [1, 1]} : vector<2x96xf32> to vector<2x32xf32>
    %2298 = arith.addf %2296, %2297 : vector<2x32xf32>
    %2299 = arith.negf %2298 : vector<2x32xf32>
    %2300 = math.exp %2299 : vector<2x32xf32>
    %cst_600 = arith.constant 1.000000e+00 : f32
    %2301 = vector.broadcast %cst_600 : f32 to vector<2x32xf32>
    %2302 = arith.addf %2301, %2300 : vector<2x32xf32>
    %2303 = arith.divf %2301, %2302 : vector<2x32xf32>
    %2304 = vector.extract_strided_slice %2292 {offsets = [0, 32], sizes = [2, 32], strides = [1, 1]} : vector<2x96xf32> to vector<2x32xf32>
    %2305 = vector.extract_strided_slice %2287 {offsets = [0, 32], sizes = [2, 32], strides = [1, 1]} : vector<2x96xf32> to vector<2x32xf32>
    %2306 = arith.addf %2304, %2305 : vector<2x32xf32>
    %2307 = arith.negf %2306 : vector<2x32xf32>
    %2308 = math.exp %2307 : vector<2x32xf32>
    %cst_601 = arith.constant 1.000000e+00 : f32
    %2309 = vector.broadcast %cst_601 : f32 to vector<2x32xf32>
    %2310 = arith.addf %2309, %2308 : vector<2x32xf32>
    %2311 = arith.divf %2309, %2310 : vector<2x32xf32>
    %2312 = vector.extract_strided_slice %2292 {offsets = [0, 64], sizes = [2, 32], strides = [1, 1]} : vector<2x96xf32> to vector<2x32xf32>
    %2313 = vector.extract_strided_slice %2287 {offsets = [0, 64], sizes = [2, 32], strides = [1, 1]} : vector<2x96xf32> to vector<2x32xf32>
    %2314 = arith.addf %2313, %1811 : vector<2x32xf32>
    %2315 = arith.mulf %2303, %2314 : vector<2x32xf32>
    %2316 = arith.addf %2312, %2315 : vector<2x32xf32>
    %2317 = math.tanh %2316 : vector<2x32xf32>
    %2318 = vector.extract_strided_slice %2295 {offsets = [0, 0], sizes = [2, 32], strides = [1, 1]} : vector<2x96xf32> to vector<2x32xf32>
    %2319 = vector.extract_strided_slice %2289 {offsets = [0, 0], sizes = [2, 32], strides = [1, 1]} : vector<2x96xf32> to vector<2x32xf32>
    %2320 = arith.addf %2318, %2319 : vector<2x32xf32>
    %2321 = arith.negf %2320 : vector<2x32xf32>
    %2322 = math.exp %2321 : vector<2x32xf32>
    %cst_602 = arith.constant 1.000000e+00 : f32
    %2323 = vector.broadcast %cst_602 : f32 to vector<2x32xf32>
    %2324 = arith.addf %2323, %2322 : vector<2x32xf32>
    %2325 = arith.divf %2323, %2324 : vector<2x32xf32>
    %2326 = vector.extract_strided_slice %2295 {offsets = [0, 32], sizes = [2, 32], strides = [1, 1]} : vector<2x96xf32> to vector<2x32xf32>
    %2327 = vector.extract_strided_slice %2289 {offsets = [0, 32], sizes = [2, 32], strides = [1, 1]} : vector<2x96xf32> to vector<2x32xf32>
    %2328 = arith.addf %2326, %2327 : vector<2x32xf32>
    %2329 = arith.negf %2328 : vector<2x32xf32>
    %2330 = math.exp %2329 : vector<2x32xf32>
    %cst_603 = arith.constant 1.000000e+00 : f32
    %2331 = vector.broadcast %cst_603 : f32 to vector<2x32xf32>
    %2332 = arith.addf %2331, %2330 : vector<2x32xf32>
    %2333 = arith.divf %2331, %2332 : vector<2x32xf32>
    %2334 = vector.extract_strided_slice %2295 {offsets = [0, 64], sizes = [2, 32], strides = [1, 1]} : vector<2x96xf32> to vector<2x32xf32>
    %2335 = vector.extract_strided_slice %2289 {offsets = [0, 64], sizes = [2, 32], strides = [1, 1]} : vector<2x96xf32> to vector<2x32xf32>
    %2336 = arith.addf %2335, %1814 : vector<2x32xf32>
    %2337 = arith.mulf %2325, %2336 : vector<2x32xf32>
    %2338 = arith.addf %2334, %2337 : vector<2x32xf32>
    %2339 = math.tanh %2338 : vector<2x32xf32>
    %cst_604 = arith.constant 1.000000e+00 : f32
    %2340 = vector.broadcast %cst_604 : f32 to vector<2x32xf32>
    %2341 = arith.subf %2340, %2311 : vector<2x32xf32>
    %2342 = arith.mulf %2341, %2317 : vector<2x32xf32>
    %2343 = arith.mulf %2311, %2277 : vector<2x32xf32>
    %2344 = arith.addf %2342, %2343 : vector<2x32xf32>
    %cst_605 = arith.constant 1.000000e+00 : f32
    %2345 = vector.broadcast %cst_605 : f32 to vector<2x32xf32>
    %2346 = arith.subf %2345, %2333 : vector<2x32xf32>
    %2347 = arith.mulf %2346, %2339 : vector<2x32xf32>
    %2348 = arith.mulf %2333, %2282 : vector<2x32xf32>
    %2349 = arith.addf %2347, %2348 : vector<2x32xf32>
    %2350 = arith.addf %2283, %2344 : vector<2x32xf32>
    %2351 = arith.addf %2284, %2349 : vector<2x32xf32>
    %c8_i32_606 = arith.constant 8 : i32
    %cst_607 = arith.constant 1.250000e-01 : f32
    %2352 = vector.broadcast %cst_607 : f32 to vector<2x32xf32>
    %2353 = arith.mulf %2350, %2352 : vector<2x32xf32>
    %cst_608 = arith.constant 1.250000e-01 : f32
    %2354 = vector.broadcast %cst_608 : f32 to vector<2x32xf32>
    %2355 = arith.mulf %2351, %2354 : vector<2x32xf32>
    %2356 = tpu.concatenate %2353, %2355 in 1 : vector<2x32xf32>, vector<2x32xf32> -> vector<2x64xf32>
    %2357 = tpu.iota {dimensions = array<i32: 1>} : vector<2x64xi32>
    %c0_609 = arith.constant 0 : index
    %2358 = memref.load %arg25[%c0_609] : memref<4xf32, #tpu.memory_space<smem>>
    %c1 = arith.constant 1 : index
    %2359 = memref.load %arg25[%c1] : memref<4xf32, #tpu.memory_space<smem>>
    %c2 = arith.constant 2 : index
    %2360 = memref.load %arg25[%c2] : memref<4xf32, #tpu.memory_space<smem>>
    %c3 = arith.constant 3 : index
    %2361 = memref.load %arg25[%c3] : memref<4xf32, #tpu.memory_space<smem>>
    %c0_i32_610 = arith.constant 0 : i32
    %2362 = vector.broadcast %c0_i32_610 : i32 to vector<2x64xi32>
    %2363 = arith.cmpi eq, %2357, %2362 : vector<2x64xi32>
    %c1_i32_611 = arith.constant 1 : i32
    %2364 = tpu.dynamic_rotate %2356 by %c1_i32_611 dim 1 : vector<2x64xf32>, i32 -> vector<2x64xf32>
    %cst_612 = arith.constant 0.000000e+00 : f32
    %2365 = vector.broadcast %cst_612 : f32 to vector<2x64xf32>
    %2366 = arith.select %2363, %2365, %2364 : vector<2x64xi1>, vector<2x64xf32>
    %c63_i32 = arith.constant 63 : i32
    %2367 = vector.broadcast %c63_i32 : i32 to vector<2x64xi32>
    %2368 = arith.cmpi eq, %2357, %2367 : vector<2x64xi32>
    %c63_i32_613 = arith.constant 63 : i32
    %2369 = tpu.dynamic_rotate %2356 by %c63_i32_613 dim 1 : vector<2x64xf32>, i32 -> vector<2x64xf32>
    %cst_614 = arith.constant 0.000000e+00 : f32
    %2370 = vector.broadcast %cst_614 : f32 to vector<2x64xf32>
    %2371 = arith.select %2368, %2370, %2369 : vector<2x64xi1>, vector<2x64xf32>
    %2372 = vector.broadcast %2358 : f32 to vector<2x64xf32>
    %2373 = arith.mulf %2372, %2366 : vector<2x64xf32>
    %2374 = vector.broadcast %2359 : f32 to vector<2x64xf32>
    %2375 = arith.mulf %2374, %2356 : vector<2x64xf32>
    %2376 = arith.addf %2373, %2375 : vector<2x64xf32>
    %2377 = vector.broadcast %2360 : f32 to vector<2x64xf32>
    %2378 = arith.mulf %2377, %2371 : vector<2x64xf32>
    %2379 = arith.addf %2376, %2378 : vector<2x64xf32>
    %2380 = vector.broadcast %2361 : f32 to vector<2x64xf32>
    %2381 = arith.addf %2379, %2380 : vector<2x64xf32>
    %c0_i32_615 = arith.constant 0 : i32
    %2382 = vector.broadcast %c0_i32_615 : i32 to vector<2x64xi32>
    %2383 = arith.cmpi eq, %2357, %2382 : vector<2x64xi32>
    %c1_i32_616 = arith.constant 1 : i32
    %2384 = tpu.dynamic_rotate %2381 by %c1_i32_616 dim 1 : vector<2x64xf32>, i32 -> vector<2x64xf32>
    %cst_617 = arith.constant 0xFF800000 : f32
    %2385 = vector.broadcast %cst_617 : f32 to vector<2x64xf32>
    %2386 = arith.select %2383, %2385, %2384 : vector<2x64xi1>, vector<2x64xf32>
    %c63_i32_618 = arith.constant 63 : i32
    %2387 = vector.broadcast %c63_i32_618 : i32 to vector<2x64xi32>
    %2388 = arith.cmpi eq, %2357, %2387 : vector<2x64xi32>
    %c63_i32_619 = arith.constant 63 : i32
    %2389 = tpu.dynamic_rotate %2381 by %c63_i32_619 dim 1 : vector<2x64xf32>, i32 -> vector<2x64xf32>
    %cst_620 = arith.constant 0xFF800000 : f32
    %2390 = vector.broadcast %cst_620 : f32 to vector<2x64xf32>
    %2391 = arith.select %2388, %2390, %2389 : vector<2x64xi1>, vector<2x64xf32>
    %2392 = arith.maximumf %2386, %2381 : vector<2x64xf32>
    %2393 = arith.maximumf %2392, %2391 : vector<2x64xf32>
    %c0_621 = arith.constant 0 : index
    %c0_622 = arith.constant 0 : index
    %2394 = vector.load %arg26[%c0_621, %c0_622] : memref<64x32xf32, #tpu.memory_space<vmem>>, vector<64x32xf32>
    %cst_623 = arith.constant dense<0.000000e+00> : vector<2x32xf32>
    %2395 = tpu.matmul %2393, %2394, %cst_623 {dimension_numbers = #tpu.dot_dimension_numbers<[1], [0], [0], [1], [0, 0, 1, 1], [], []>} : vector<2x64xf32>, vector<64x32xf32>, vector<2x32xf32> -> vector<2x32xf32>
    %c0_624 = arith.constant 0 : index
    %c0_625 = arith.constant 0 : index
    %2396 = vector.load %arg27[%c0_624, %c0_625] : memref<32x64xf32, #tpu.memory_space<vmem>>, vector<32x64xf32>
    %cst_626 = arith.constant dense<0.000000e+00> : vector<2x64xf32>
    %2397 = tpu.matmul %2395, %2396, %cst_626 {dimension_numbers = #tpu.dot_dimension_numbers<[1], [0], [0], [1], [0, 0, 1, 1], [], []>} : vector<2x32xf32>, vector<32x64xf32>, vector<2x64xf32> -> vector<2x64xf32>
    %c0_627 = arith.constant 0 : index
    %c0_628 = arith.constant 0 : index
    %2398 = vector.load %arg28[%c0_627, %c0_628] : memref<1x64xf32, #tpu.memory_space<vmem>>, vector<1x64xf32>
    %2399 = vector.broadcast %2398 : vector<1x64xf32> to vector<2x64xf32>
    %2400 = arith.addf %2397, %2399 : vector<2x64xf32>
    %c0_629 = arith.constant 0 : index
    %c0_630 = arith.constant 0 : index
    %2401 = vector.load %arg29[%c0_629, %c0_630] : memref<1x64xf32, #tpu.memory_space<vmem>>, vector<1x64xf32>
    %c0_631 = arith.constant 0 : index
    %c0_632 = arith.constant 0 : index
    %2402 = vector.load %arg30[%c0_631, %c0_632] : memref<1x64xf32, #tpu.memory_space<vmem>>, vector<1x64xf32>
    %cst_633 = arith.constant dense<0.000000e+00> : vector<2xf32>
    %2403 = vector.multi_reduction <add>, %2400, %cst_633 [1] : vector<2x64xf32> to vector<2xf32>
    %2404 = vector.shape_cast %2403 : vector<2xf32> to vector<2x1xf32>
    %cst_634 = arith.constant 6.400000e+01 : f32
    %2405 = vector.broadcast %cst_634 : f32 to vector<2x1xf32>
    %2406 = arith.divf %2404, %2405 : vector<2x1xf32>
    %2407 = vector.broadcast %2406 : vector<2x1xf32> to vector<2x64xf32>
    %2408 = arith.subf %2400, %2407 : vector<2x64xf32>
    %2409 = arith.mulf %2408, %2408 : vector<2x64xf32>
    %cst_635 = arith.constant dense<0.000000e+00> : vector<2xf32>
    %2410 = vector.multi_reduction <add>, %2409, %cst_635 [1] : vector<2x64xf32> to vector<2xf32>
    %2411 = vector.shape_cast %2410 : vector<2xf32> to vector<2x1xf32>
    %cst_636 = arith.constant 6.400000e+01 : f32
    %2412 = vector.broadcast %cst_636 : f32 to vector<2x1xf32>
    %2413 = arith.divf %2411, %2412 : vector<2x1xf32>
    %2414 = vector.broadcast %2406 : vector<2x1xf32> to vector<2x64xf32>
    %2415 = arith.subf %2400, %2414 : vector<2x64xf32>
    %cst_637 = arith.constant 9.99999974E-6 : f32
    %2416 = vector.broadcast %cst_637 : f32 to vector<2x1xf32>
    %2417 = arith.addf %2413, %2416 : vector<2x1xf32>
    %2418 = math.rsqrt %2417 : vector<2x1xf32>
    %2419 = vector.broadcast %2418 : vector<2x1xf32> to vector<2x64xf32>
    %2420 = arith.mulf %2415, %2419 : vector<2x64xf32>
    %2421 = vector.broadcast %2401 : vector<1x64xf32> to vector<2x64xf32>
    %2422 = arith.mulf %2420, %2421 : vector<2x64xf32>
    %2423 = vector.broadcast %2402 : vector<1x64xf32> to vector<2x64xf32>
    %2424 = arith.addf %2422, %2423 : vector<2x64xf32>
    %cst_638 = arith.constant 0.000000e+00 : f32
    %2425 = vector.broadcast %cst_638 : f32 to vector<2x64xf32>
    %2426 = arith.maximumf %2424, %2425 : vector<2x64xf32>
    %c0_639 = arith.constant 0 : index
    %c0_640 = arith.constant 0 : index
    %2427 = vector.load %arg31[%c0_639, %c0_640] : memref<64x32xf32, #tpu.memory_space<vmem>>, vector<64x32xf32>
    %cst_641 = arith.constant dense<0.000000e+00> : vector<2x32xf32>
    %2428 = tpu.matmul %2426, %2427, %cst_641 {dimension_numbers = #tpu.dot_dimension_numbers<[1], [0], [0], [1], [0, 0, 1, 1], [], []>} : vector<2x64xf32>, vector<64x32xf32>, vector<2x32xf32> -> vector<2x32xf32>
    %c0_642 = arith.constant 0 : index
    %c0_643 = arith.constant 0 : index
    %2429 = vector.load %arg32[%c0_642, %c0_643] : memref<1x32xf32, #tpu.memory_space<vmem>>, vector<1x32xf32>
    %2430 = vector.broadcast %2429 : vector<1x32xf32> to vector<2x32xf32>
    %2431 = arith.addf %2428, %2430 : vector<2x32xf32>
    %c0_644 = arith.constant 0 : index
    %c0_645 = arith.constant 0 : index
    %2432 = vector.load %arg33[%c0_644, %c0_645] : memref<1x32xf32, #tpu.memory_space<vmem>>, vector<1x32xf32>
    %c0_646 = arith.constant 0 : index
    %c0_647 = arith.constant 0 : index
    %2433 = vector.load %arg34[%c0_646, %c0_647] : memref<1x32xf32, #tpu.memory_space<vmem>>, vector<1x32xf32>
    %cst_648 = arith.constant dense<0.000000e+00> : vector<2xf32>
    %2434 = vector.multi_reduction <add>, %2431, %cst_648 [1] : vector<2x32xf32> to vector<2xf32>
    %2435 = vector.shape_cast %2434 : vector<2xf32> to vector<2x1xf32>
    %cst_649 = arith.constant 3.200000e+01 : f32
    %2436 = vector.broadcast %cst_649 : f32 to vector<2x1xf32>
    %2437 = arith.divf %2435, %2436 : vector<2x1xf32>
    %2438 = vector.broadcast %2437 : vector<2x1xf32> to vector<2x32xf32>
    %2439 = arith.subf %2431, %2438 : vector<2x32xf32>
    %2440 = arith.mulf %2439, %2439 : vector<2x32xf32>
    %cst_650 = arith.constant dense<0.000000e+00> : vector<2xf32>
    %2441 = vector.multi_reduction <add>, %2440, %cst_650 [1] : vector<2x32xf32> to vector<2xf32>
    %2442 = vector.shape_cast %2441 : vector<2xf32> to vector<2x1xf32>
    %cst_651 = arith.constant 3.200000e+01 : f32
    %2443 = vector.broadcast %cst_651 : f32 to vector<2x1xf32>
    %2444 = arith.divf %2442, %2443 : vector<2x1xf32>
    %2445 = vector.broadcast %2437 : vector<2x1xf32> to vector<2x32xf32>
    %2446 = arith.subf %2431, %2445 : vector<2x32xf32>
    %cst_652 = arith.constant 9.99999974E-6 : f32
    %2447 = vector.broadcast %cst_652 : f32 to vector<2x1xf32>
    %2448 = arith.addf %2444, %2447 : vector<2x1xf32>
    %2449 = math.rsqrt %2448 : vector<2x1xf32>
    %2450 = vector.broadcast %2449 : vector<2x1xf32> to vector<2x32xf32>
    %2451 = arith.mulf %2446, %2450 : vector<2x32xf32>
    %2452 = vector.broadcast %2432 : vector<1x32xf32> to vector<2x32xf32>
    %2453 = arith.mulf %2451, %2452 : vector<2x32xf32>
    %2454 = vector.broadcast %2433 : vector<1x32xf32> to vector<2x32xf32>
    %2455 = arith.addf %2453, %2454 : vector<2x32xf32>
    %cst_653 = arith.constant 0.000000e+00 : f32
    %2456 = vector.broadcast %cst_653 : f32 to vector<2x32xf32>
    %2457 = arith.maximumf %2455, %2456 : vector<2x32xf32>
    %c0_654 = arith.constant 0 : index
    %c0_655 = arith.constant 0 : index
    %2458 = vector.load %arg35[%c0_654, %c0_655] : memref<32x1xf32, #tpu.memory_space<vmem>>, vector<32x1xf32>
    %cst_656 = arith.constant dense<0.000000e+00> : vector<2x1xf32>
    %2459 = tpu.matmul %2457, %2458, %cst_656 {dimension_numbers = #tpu.dot_dimension_numbers<[1], [0], [0], [1], [0, 0, 1, 1], [], []>} : vector<2x32xf32>, vector<32x1xf32>, vector<2x1xf32> -> vector<2x1xf32>
    %c0_657 = arith.constant 0 : index
    %c0_658 = arith.constant 0 : index
    %2460 = vector.load %arg36[%c0_657, %c0_658] : memref<1x1xf32, #tpu.memory_space<vmem>>, vector<1x1xf32>
    %2461 = vector.broadcast %2460 : vector<1x1xf32> to vector<2x1xf32>
    %2462 = arith.addf %2459, %2461 : vector<2x1xf32>
    %2463 = arith.negf %2462 : vector<2x1xf32>
    %2464 = math.exp %2463 : vector<2x1xf32>
    %cst_659 = arith.constant 1.000000e+00 : f32
    %2465 = vector.broadcast %cst_659 : f32 to vector<2x1xf32>
    %2466 = arith.addf %2465, %2464 : vector<2x1xf32>
    %2467 = arith.divf %2465, %2466 : vector<2x1xf32>
    %c0_660 = arith.constant 0 : index
    %c0_661 = arith.constant 0 : index
    %2468 = vector.load %arg37[%c0_660, %c0_661] : memref<2x1xf32, #tpu.memory_space<vmem>>, vector<2x1xf32>
    tpu.vector_store %arg37[%c0_660, %c0_661], %2467 {strides = array<i32>} : memref<2x1xf32, #tpu.memory_space<vmem>>, vector<2x1xf32>,
    return
  }
}

</mosaic_0001>

<llo_original>
// kernel: model1_forward.1
$region0: #{model1_forward.1}
  #allocation0 [shape = 'u32[]', space=smem, size = 0x4, offset = 0x4, fixed_abs, tag = 'smem constant byte address 0x4 - core index']
  #allocation1 [shape = 'u32[144,128]{1,0:T(1,128)}', space=vmem, size = 0x12000, scoped, tag = 'internal scratch']
  #allocation2 [shape = 'bf16[16,64]{1,0:T(16,128)(2,1)}', space=vmem, size = 0x1000, scoped, tag = 'scratch operand']
  #allocation3 [shape = 'bf16[16,64]{1,0:T(16,128)(2,1)}', space=vmem, size = 0x1000, scoped, tag = 'scratch operand']
  #allocation4 [shape = 'f32[16,192]{1,0:T(8,128)}', space=vmem, size = 0x4000, scoped, tag = 'scratch operand']
  #allocation5 [shape = 'f32[1,1]{1,0:T(1,128)S(1)}', space=vmem, size = 0x200, scoped, tag = 'scoped memory for model1_forward.1']
  %s0 = inlined_call_operand.smem [shape: u32[38], index: -1, kind: input, shape index: {}]
  %s1 = sld [smem:[%s0]]
  %s2 = scalar_lea.smem %s0, 1
  %s3 = sld [smem:[%s2]]
  %s4 = scalar_lea.smem %s0, 2
  %s5 = sld [smem:[%s4]]
  %s6 = scalar_lea.smem %s0, 3
  %s7 = sld [smem:[%s6]]
  %s8 = scalar_lea.smem %s0, 4
  %s9 = sld [smem:[%s8]]
  %s10 = scalar_lea.smem %s0, 5
  %s11 = sld [smem:[%s10]]
  %s12 = scalar_lea.smem %s0, 6
  %s13 = sld [smem:[%s12]]
  %s14 = scalar_lea.smem %s0, 7
  %s15 = sld [smem:[%s14]]
  %s16 = scalar_lea.smem %s0, 8
  %s17 = sld [smem:[%s16]]
  %s18 = scalar_lea.smem %s0, 9
  %s19 = sld [smem:[%s18]]
  %s20 = scalar_lea.smem %s0, 10
  %s21 = sld [smem:[%s20]]
  %s22 = scalar_lea.smem %s0, 11
  %s23 = sld [smem:[%s22]]
  %s24 = scalar_lea.smem %s0, 12
  %s25 = sld [smem:[%s24]]
  %s26 = scalar_lea.smem %s0, 13
  %s27 = sld [smem:[%s26]]
  %s28 = scalar_lea.smem %s0, 14
  %s29 = sld [smem:[%s28]]
  %s30 = scalar_lea.smem %s0, 15
  %s31 = sld [smem:[%s30]]
  %s32 = scalar_lea.smem %s0, 16
  %s33 = sld [smem:[%s32]]
  %s34 = scalar_lea.smem %s0, 17
  %s35 = sld [smem:[%s34]]
  %s36 = scalar_lea.smem %s0, 18
  %s37 = sld [smem:[%s36]]
  %s38 = scalar_lea.smem %s0, 19
  %s39 = sld [smem:[%s38]]
  %s40 = scalar_lea.smem %s0, 20
  %s41 = sld [smem:[%s40]]
  %s42 = scalar_lea.smem %s0, 21
  %s43 = sld [smem:[%s42]]
  %s44 = scalar_lea.smem %s0, 22
  %s45 = sld [smem:[%s44]]
  %s46 = scalar_lea.smem %s0, 23
  %s47 = sld [smem:[%s46]]
  %s48 = scalar_lea.smem %s0, 24
  %s49 = sld [smem:[%s48]]
  %s50 = scalar_lea.smem %s0, 25
  %s51 = sld [smem:[%s50]]
  %s52 = scalar_lea.smem %s0, 26
  %s53 = sld [smem:[%s52]]
  %s54 = scalar_lea.smem %s0, 27
  %s55 = sld [smem:[%s54]]
  %s56 = scalar_lea.smem %s0, 28
  %s57 = sld [smem:[%s56]]
  %s58 = scalar_lea.smem %s0, 29
  %s59 = sld [smem:[%s58]]
  %s60 = scalar_lea.smem %s0, 30
  %s61 = sld [smem:[%s60]]
  %s62 = scalar_lea.smem %s0, 31
  %s63 = sld [smem:[%s62]]
  %s64 = scalar_lea.smem %s0, 32
  %s65 = sld [smem:[%s64]]
  %s66 = scalar_lea.smem %s0, 33
  %s67 = sld [smem:[%s66]]
  %s68 = scalar_lea.smem %s0, 34
  %s69 = sld [smem:[%s68]]
  %s70 = scalar_lea.smem %s0, 35
  %s71 = sld [smem:[%s70]]
  %s72 = scalar_lea.smem %s0, 36
  %s73 = sld [smem:[%s72]]
  %s74 = scalar_lea.smem %s0, 37
  %s75 = sld [smem:[%s74]]
  %s76 = sld [smem:[#allocation0]]
  $region190: #{model1_forward.1} parent=0
    _
  %s78 = ssub.s32 1, %s76
  %s79 = scalar_select 0, %s78, %s76
  %v80 = vstv %s73
  %81 = vst [vmem:[#allocation5] sm:$0x1] %v80
  $region1: #{model1_forward.1} parent=0
    #allocation6 [shape = 'u8[512]{0}', space=vmem, size = 0x400, scoped, tag = 'input window, operand 6, single buffered']
    #allocation7 [shape = 's32[1]{0}', space=sflag, size = 0x4, scoped, tag = 'scoped memory for model1_forward.1']
    #allocation8 [shape = 's32[1]{0}', space=sflag, size = 0x4, scoped, tag = 'scoped memory for model1_forward.1']
    #allocation9 [shape = 'u8[512]{0}', space=smem, size = 0x200, scoped, tag = 'input window, operand 25, single buffered']
    #allocation10 [shape = 'u8[512]{0}', space=vmem, size = 0x400, scoped, tag = 'input window, operand 28, single buffered']
    #allocation11 [shape = 's32[1]{0}', space=sflag, size = 0x4, scoped, tag = 'scoped memory for model1_forward.1']
    #allocation12 [shape = 'u8[512]{0}', space=vmem, size = 0x400, scoped, tag = 'input window, operand 29, single buffered']
    #allocation13 [shape = 'u8[512]{0}', space=vmem, size = 0x400, scoped, tag = 'input window, operand 30, single buffered']
    #allocation14 [shape = 's32[1]{0}', space=sflag, size = 0x4, scoped, tag = 'scoped memory for model1_forward.1']
    #allocation15 [shape = 'u8[512]{0}', space=vmem, size = 0x400, scoped, tag = 'input window, operand 32, single buffered']
    #allocation16 [shape = 'u8[512]{0}', space=vmem, size = 0x400, scoped, tag = 'input window, operand 33, single buffered']
    #allocation17 [shape = 's32[1]{0}', space=sflag, size = 0x4, scoped, tag = 'scoped memory for model1_forward.1']
    #allocation18 [shape = 'u8[512]{0}', space=vmem, size = 0x400, scoped, tag = 'input window, operand 34, single buffered']
    %82 = vsyncpa [#allocation7], 0
    %83 = vsyncpa [#allocation8], 0
    %84 = vsyncpa [#allocation11], 0
    %85 = vsyncpa [#allocation14], 0
    %86 = vsyncpa [#allocation17], 0
    // Predicated region
    $region2: #{model1_forward.1} parent=1 // pred_check
      _
    $region3: #{model1_forward.1} parent=1 // pred_check_branch
      %88 = sbr.rel (0) target = $region5
    $region4: #{model1_forward.1} parent=1 // pred_region
      _
    $region5: #{model1_forward.1} parent=1 // pred_fallthru
      _
    // Predicated region
    $region6: #{model1_forward.1} parent=1 // pred_check
      _
    $region7: #{model1_forward.1} parent=1 // pred_check_branch
      %90 = sbr.rel (0) target = $region9
    $region8: #{model1_forward.1} parent=1 // pred_region
      _
    $region9: #{model1_forward.1} parent=1 // pred_fallthru
      _
    // Predicated region
    $region10: #{model1_forward.1} parent=1 // pred_check
      _
    $region11: #{model1_forward.1} parent=1 // pred_check_branch
      %92 = sbr.rel (0) target = $region13
    $region12: #{model1_forward.1} parent=1 // pred_region
      _
    $region13: #{model1_forward.1} parent=1 // pred_fallthru
      _
    // Predicated region
    $region14: #{model1_forward.1} parent=1 // pred_check
      _
    $region15: #{model1_forward.1} parent=1 // pred_check_branch
      %94 = sbr.rel (0) target = $region17
    $region16: #{model1_forward.1} parent=1 // pred_region
      _
    $region17: #{model1_forward.1} parent=1 // pred_fallthru
      _
    // Predicated region
    $region18: #{model1_forward.1} parent=1 // pred_check
      _
    $region19: #{model1_forward.1} parent=1 // pred_check_branch
      %96 = sbr.rel (0) target = $region21
    $region20: #{model1_forward.1} parent=1 // pred_region
      _
    $region21: #{model1_forward.1} parent=1 // pred_fallthru
      _
    // Predicated region
    $region22: #{model1_forward.1} parent=1 // pred_check
      _
    $region23: #{model1_forward.1} parent=1 // pred_check_branch
      %98 = sbr.rel (0) target = $region25
    $region24: #{model1_forward.1} parent=1 // pred_region
      _
    $region25: #{model1_forward.1} parent=1 // pred_fallthru
      _
    // Predicated region
    $region26: #{model1_forward.1} parent=1 // pred_check
      _
    $region27: #{model1_forward.1} parent=1 // pred_check_branch
      %100 = sbr.rel (0) target = $region29
    $region28: #{model1_forward.1} parent=1 // pred_region
      %s102 = ssub.s32 16, 16
      %103 = vsyncadd [#allocation7], %s102
      %s105 = sshll.u32 [#allocation6], 4
      %s106 = int_to_ptr.vmem [resolvable:$true] %s105
      %108 = dma.hbm_to_vmem [thread:$0]  %s13, 16, %s106, [#allocation7]
    $region29: #{model1_forward.1} parent=1 // pred_fallthru
      _
    // Predicated region
    $region30: #{model1_forward.1} parent=1 // pred_check
      _
    $region31: #{model1_forward.1} parent=1 // pred_check_branch
      %110 = sbr.rel (0) target = $region33
    $region32: #{model1_forward.1} parent=1 // pred_region
      _
    $region33: #{model1_forward.1} parent=1 // pred_fallthru
      _
    // Predicated region
    $region34: #{model1_forward.1} parent=1 // pred_check
      _
    $region35: #{model1_forward.1} parent=1 // pred_check_branch
      %112 = sbr.rel (0) target = $region37
    $region36: #{model1_forward.1} parent=1 // pred_region
      _
    $region37: #{model1_forward.1} parent=1 // pred_fallthru
      _
    // Predicated region
    $region38: #{model1_forward.1} parent=1 // pred_check
      _
    $region39: #{model1_forward.1} parent=1 // pred_check_branch
      %114 = sbr.rel (0) target = $region41
    $region40: #{model1_forward.1} parent=1 // pred_region
      _
    $region41: #{model1_forward.1} parent=1 // pred_fallthru
      _
    // Predicated region
    $region42: #{model1_forward.1} parent=1 // pred_check
      _
    $region43: #{model1_forward.1} parent=1 // pred_check_branch
      %116 = sbr.rel (0) target = $region45
    $region44: #{model1_forward.1} parent=1 // pred_region
      _
    $region45: #{model1_forward.1} parent=1 // pred_fallthru
      _
    // Predicated region
    $region46: #{model1_forward.1} parent=1 // pred_check
      _
    $region47: #{model1_forward.1} parent=1 // pred_check_branch
      %118 = sbr.rel (0) target = $region49
    $region48: #{model1_forward.1} parent=1 // pred_region
      _
    $region49: #{model1_forward.1} parent=1 // pred_fallthru
      _
    // Predicated region
    $region50: #{model1_forward.1} parent=1 // pred_check
      _
    $region51: #{model1_forward.1} parent=1 // pred_check_branch
      %120 = sbr.rel (0) target = $region53
    $region52: #{model1_forward.1} parent=1 // pred_region
      _
    $region53: #{model1_forward.1} parent=1 // pred_fallthru
      _
    // Predicated region
    $region54: #{model1_forward.1} parent=1 // pred_check
      _
    $region55: #{model1_forward.1} parent=1 // pred_check_branch
      %122 = sbr.rel (0) target = $region57
    $region56: #{model1_forward.1} parent=1 // pred_region
      _
    $region57: #{model1_forward.1} parent=1 // pred_fallthru
      _
    // Predicated region
    $region58: #{model1_forward.1} parent=1 // pred_check
      _
    $region59: #{model1_forward.1} parent=1 // pred_check_branch
      %124 = sbr.rel (0) target = $region61
    $region60: #{model1_forward.1} parent=1 // pred_region
      _
    $region61: #{model1_forward.1} parent=1 // pred_fallthru
      _
    // Predicated region
    $region62: #{model1_forward.1} parent=1 // pred_check
      _
    $region63: #{model1_forward.1} parent=1 // pred_check_branch
      %126 = sbr.rel (0) target = $region65
    $region64: #{model1_forward.1} parent=1 // pred_region
      _
    $region65: #{model1_forward.1} parent=1 // pred_fallthru
      _
    // Predicated region
    $region66: #{model1_forward.1} parent=1 // pred_check
      _
    $region67: #{model1_forward.1} parent=1 // pred_check_branch
      %128 = sbr.rel (0) target = $region69
    $region68: #{model1_forward.1} parent=1 // pred_region
      _
    $region69: #{model1_forward.1} parent=1 // pred_fallthru
      _
    // Predicated region
    $region70: #{model1_forward.1} parent=1 // pred_check
      _
    $region71: #{model1_forward.1} parent=1 // pred_check_branch
      %130 = sbr.rel (0) target = $region73
    $region72: #{model1_forward.1} parent=1 // pred_region
      _
    $region73: #{model1_forward.1} parent=1 // pred_fallthru
      _
    // Predicated region
    $region74: #{model1_forward.1} parent=1 // pred_check
      _
    $region75: #{model1_forward.1} parent=1 // pred_check_branch
      %132 = sbr.rel (0) target = $region77
    $region76: #{model1_forward.1} parent=1 // pred_region
      _
    $region77: #{model1_forward.1} parent=1 // pred_fallthru
      _
    // Predicated region
    $region78: #{model1_forward.1} parent=1 // pred_check
      _
    $region79: #{model1_forward.1} parent=1 // pred_check_branch
      %134 = sbr.rel (0) target = $region81
    $region80: #{model1_forward.1} parent=1 // pred_region
      _
    $region81: #{model1_forward.1} parent=1 // pred_fallthru
      _
    // Predicated region
    $region82: #{model1_forward.1} parent=1 // pred_check
      _
    $region83: #{model1_forward.1} parent=1 // pred_check_branch
      %136 = sbr.rel (0) target = $region85
    $region84: #{model1_forward.1} parent=1 // pred_region
      _
    $region85: #{model1_forward.1} parent=1 // pred_fallthru
      _
    // Predicated region
    $region86: #{model1_forward.1} parent=1 // pred_check
      _
    $region87: #{model1_forward.1} parent=1 // pred_check_branch
      %138 = sbr.rel (0) target = $region89
    $region88: #{model1_forward.1} parent=1 // pred_region
      _
    $region89: #{model1_forward.1} parent=1 // pred_fallthru
      _
    // Predicated region
    $region90: #{model1_forward.1} parent=1 // pred_check
      _
    $region91: #{model1_forward.1} parent=1 // pred_check_branch
      %140 = sbr.rel (0) target = $region93
    $region92: #{model1_forward.1} parent=1 // pred_region
      _
    $region93: #{model1_forward.1} parent=1 // pred_fallthru
      _
    // Predicated region
    $region94: #{model1_forward.1} parent=1 // pred_check
      _
    $region95: #{model1_forward.1} parent=1 // pred_check_branch
      %142 = sbr.rel (0) target = $region97
    $region96: #{model1_forward.1} parent=1 // pred_region
      _
    $region97: #{model1_forward.1} parent=1 // pred_fallthru
      _
    // Predicated region
    $region98: #{model1_forward.1} parent=1 // pred_check
      _
    $region99: #{model1_forward.1} parent=1 // pred_check_branch
      %144 = sbr.rel (0) target = $region101
    $region100: #{model1_forward.1} parent=1 // pred_region
      _
    $region101: #{model1_forward.1} parent=1 // pred_fallthru
      _
    // Predicated region
    $region102: #{model1_forward.1} parent=1 // pred_check
      _
    $region103: #{model1_forward.1} parent=1 // pred_check_branch
      %146 = sbr.rel (0) target = $region105
    $region104: #{model1_forward.1} parent=1 // pred_region
      %s148 = ssub.s32 16, 16
      %149 = vsyncadd [#allocation8], %s148
      %152 = dma.hbm_to_smem %s51, 16, [#allocation9], [#allocation8]
    $region105: #{model1_forward.1} parent=1 // pred_fallthru
      _
    // Predicated region
    $region106: #{model1_forward.1} parent=1 // pred_check
      _
    $region107: #{model1_forward.1} parent=1 // pred_check_branch
      %154 = sbr.rel (0) target = $region109
    $region108: #{model1_forward.1} parent=1 // pred_region
      _
    $region109: #{model1_forward.1} parent=1 // pred_fallthru
      _
    // Predicated region
    $region110: #{model1_forward.1} parent=1 // pred_check
      _
    $region111: #{model1_forward.1} parent=1 // pred_check_branch
      %156 = sbr.rel (0) target = $region113
    $region112: #{model1_forward.1} parent=1 // pred_region
      _
    $region113: #{model1_forward.1} parent=1 // pred_fallthru
      _
    // Predicated region
    $region114: #{model1_forward.1} parent=1 // pred_check
      _
    $region115: #{model1_forward.1} parent=1 // pred_check_branch
      %158 = sbr.rel (0) target = $region117
    $region116: #{model1_forward.1} parent=1 // pred_region
      %s160 = ssub.s32 16, 16
      %161 = vsyncadd [#allocation11], %s160
      %s163 = sshll.u32 [#allocation10], 4
      %s164 = int_to_ptr.vmem [resolvable:$true] %s163
      %166 = dma.hbm_to_vmem [thread:$0]  %s57, 16, %s164, [#allocation11]
    $region117: #{model1_forward.1} parent=1 // pred_fallthru
      _
    // Predicated region
    $region118: #{model1_forward.1} parent=1 // pred_check
      _
    $region119: #{model1_forward.1} parent=1 // pred_check_branch
      %168 = sbr.rel (0) target = $region121
    $region120: #{model1_forward.1} parent=1 // pred_region
      %s170 = ssub.s32 16, 16
      %171 = vsyncadd [#allocation11], %s170
      %s173 = sshll.u32 [#allocation12], 4
      %s174 = int_to_ptr.vmem [resolvable:$true] %s173
      %176 = dma.hbm_to_vmem [thread:$0]  %s59, 16, %s174, [#allocation11]
    $region121: #{model1_forward.1} parent=1 // pred_fallthru
      _
    // Predicated region
    $region122: #{model1_forward.1} parent=1 // pred_check
      _
    $region123: #{model1_forward.1} parent=1 // pred_check_branch
      %178 = sbr.rel (0) target = $region125
    $region124: #{model1_forward.1} parent=1 // pred_region
      %s180 = ssub.s32 16, 16
      %181 = vsyncadd [#allocation14], %s180
      %s183 = sshll.u32 [#allocation13], 4
      %s184 = int_to_ptr.vmem [resolvable:$true] %s183
      %186 = dma.hbm_to_vmem [thread:$0]  %s61, 16, %s184, [#allocation14]
    $region125: #{model1_forward.1} parent=1 // pred_fallthru
      _
    // Predicated region
    $region126: #{model1_forward.1} parent=1 // pred_check
      _
    $region127: #{model1_forward.1} parent=1 // pred_check_branch
      %188 = sbr.rel (0) target = $region129
    $region128: #{model1_forward.1} parent=1 // pred_region
      _
    $region129: #{model1_forward.1} parent=1 // pred_fallthru
      _
    // Predicated region
    $region130: #{model1_forward.1} parent=1 // pred_check
      _
    $region131: #{model1_forward.1} parent=1 // pred_check_branch
      %190 = sbr.rel (0) target = $region133
    $region132: #{model1_forward.1} parent=1 // pred_region
      %s192 = ssub.s32 16, 16
      %193 = vsyncadd [#allocation14], %s192
      %s195 = sshll.u32 [#allocation15], 4
      %s196 = int_to_ptr.vmem [resolvable:$true] %s195
      %198 = dma.hbm_to_vmem [thread:$0]  %s65, 16, %s196, [#allocation14]
    $region133: #{model1_forward.1} parent=1 // pred_fallthru
      _
    // Predicated region
    $region134: #{model1_forward.1} parent=1 // pred_check
      _
    $region135: #{model1_forward.1} parent=1 // pred_check_branch
      %200 = sbr.rel (0) target = $region137
    $region136: #{model1_forward.1} parent=1 // pred_region
      %s202 = ssub.s32 16, 16
      %203 = vsyncadd [#allocation17], %s202
      %s205 = sshll.u32 [#allocation16], 4
      %s206 = int_to_ptr.vmem [resolvable:$true] %s205
      %208 = dma.hbm_to_vmem [thread:$0]  %s67, 16, %s206, [#allocation17]
    $region137: #{model1_forward.1} parent=1 // pred_fallthru
      _
    // Predicated region
    $region138: #{model1_forward.1} parent=1 // pred_check
      _
    $region139: #{model1_forward.1} parent=1 // pred_check_branch
      %210 = sbr.rel (0) target = $region141
    $region140: #{model1_forward.1} parent=1 // pred_region
      %s212 = ssub.s32 16, 16
      %213 = vsyncadd [#allocation17], %s212
      %s215 = sshll.u32 [#allocation18], 4
      %s216 = int_to_ptr.vmem [resolvable:$true] %s215
      %218 = dma.hbm_to_vmem [thread:$0]  %s69, 16, %s216, [#allocation17]
    $region141: #{model1_forward.1} parent=1 // pred_fallthru
      _
    // Predicated region
    $region142: #{model1_forward.1} parent=1 // pred_check
      _
    $region143: #{model1_forward.1} parent=1 // pred_check_branch
      %220 = sbr.rel (0) target = $region145
    $region144: #{model1_forward.1} parent=1 // pred_region
      _
    $region145: #{model1_forward.1} parent=1 // pred_fallthru
      _
    // Predicated region
    $region146: #{model1_forward.1} parent=1 // pred_check
      _
    $region147: #{model1_forward.1} parent=1 // pred_check_branch
      %222 = sbr.rel (0) target = $region149
    $region148: #{model1_forward.1} parent=1 // pred_region
      _
    $region149: #{model1_forward.1} parent=1 // pred_fallthru
      _
    // Predicated region
    $region150: #{model1_forward.1} parent=1 // pred_check
      _
    $region151: #{model1_forward.1} parent=1 // pred_check_branch
      %224 = sbr.rel (0) target = $region153
    $region152: #{model1_forward.1} parent=1 // pred_region
      %225 = dma.done [#allocation7], 16
    $region153: #{model1_forward.1} parent=1 // pred_fallthru
      _
    // Predicated region
    $region154: #{model1_forward.1} parent=1 // pred_check
      _
    $region155: #{model1_forward.1} parent=1 // pred_check_branch
      %227 = sbr.rel (0) target = $region157
    $region156: #{model1_forward.1} parent=1 // pred_region
      %228 = dma.done [#allocation8], 16
    $region157: #{model1_forward.1} parent=1 // pred_fallthru
      _
    // Predicated region
    $region158: #{model1_forward.1} parent=1 // pred_check
      _
    $region159: #{model1_forward.1} parent=1 // pred_check_branch
      %230 = sbr.rel (0) target = $region161
    $region160: #{model1_forward.1} parent=1 // pred_region
      %231 = dma.done [#allocation11], 16
    $region161: #{model1_forward.1} parent=1 // pred_fallthru
      _
    // Predicated region
    $region162: #{model1_forward.1} parent=1 // pred_check
      _
    $region163: #{model1_forward.1} parent=1 // pred_check_branch
      %233 = sbr.rel (0) target = $region165
    $region164: #{model1_forward.1} parent=1 // pred_region
      %234 = dma.done [#allocation11], 16
    $region165: #{model1_forward.1} parent=1 // pred_fallthru
      _
    // Predicated region
    $region166: #{model1_forward.1} parent=1 // pred_check
      _
    $region167: #{model1_forward.1} parent=1 // pred_check_branch
      %236 = sbr.rel (0) target = $region169
    $region168: #{model1_forward.1} parent=1 // pred_region
      %237 = dma.done [#allocation14], 16
    $region169: #{model1_forward.1} parent=1 // pred_fallthru
      _
    // Predicated region
    $region170: #{model1_forward.1} parent=1 // pred_check
      _
    $region171: #{model1_forward.1} parent=1 // pred_check_branch
      %239 = sbr.rel (0) target = $region173
    $region172: #{model1_forward.1} parent=1 // pred_region
      %240 = dma.done [#allocation14], 16
    $region173: #{model1_forward.1} parent=1 // pred_fallthru
      _
    // Predicated region
    $region174: #{model1_forward.1} parent=1 // pred_check
      _
    $region175: #{model1_forward.1} parent=1 // pred_check_branch
      %242 = sbr.rel (0) target = $region177
    $region176: #{model1_forward.1} parent=1 // pred_region
      %243 = dma.done [#allocation17], 16
    $region177: #{model1_forward.1} parent=1 // pred_fallthru
      _
    // Predicated region
    $region178: #{model1_forward.1} parent=1 // pred_check
      _
    $region179: #{model1_forward.1} parent=1 // pred_check_branch
      %245 = sbr.rel (0) target = $region181
    $region180: #{model1_forward.1} parent=1 // pred_region
      %246 = dma.done [#allocation17], 16
    $region181: #{model1_forward.1} parent=1 // pred_fallthru
      _
    %247 = sfence
    %v249 = vld [vmem:[%s1] sm:$0xf]
    %v250 = vld [vmem:[%s1 + $0x4] sm:$0xf]
    %v251 = vld [vmem:[%s3] sm:$0xff]
    %v252 = vld [vmem:[%s3 + $0x8] sm:$0xff]
    %v253 = vld [vmem:[%s3 + $0x10] sm:$0xff]
    %v254 = vld [vmem:[%s3 + $0x18] sm:$0xff]
    %v255 = vld [vmem:[%s5] sm:$0x3]
    %v257 = vlaneseq
    %v258 = vshrl.u32 %v257, 7
    %v259 = vsub.s32 0, %v258
    %v260 = vrot.slane %v255, %v259
    %v261 = vlaneseq
    %v262 = vshrl.u32 %v261, 7
    %v263 = vsub.s32 1, %v262
    %v264 = vrot.slane %v255, %v263
    %v269 = vunpack.c.l.b16 %v249
    %v270 = vunpack.c.l.b16 %v250
    %v271 = vpack.c.b16 %v270, %v269
    %v276 = vunpack.c.l.b16 %v251
    %v277 = vunpack.c.h.b16 %v251
    %v278 = vunpack.c.l.b16 %v252
    %v279 = vunpack.c.h.b16 %v252
    %v280 = vunpack.c.l.b16 %v253
    %v281 = vunpack.c.h.b16 %v253
    %v282 = vunpack.c.l.b16 %v254
    %v283 = vunpack.c.h.b16 %v254
    %v284 = vpack.c.b16 %v278, %v276
    %v285 = vpack.c.b16 %v279, %v277
    %v286 = vpack.c.b16 %v282, %v280
    %v287 = vpack.c.b16 %v283, %v281
    %vm292 = vcmask 261120
    %v294 = vsel %vm292, %v271, 0
    %296 = vmatprep.subr.bf16.mxu0 %v285
    %297 = vmatpush1.bf16.msra.mxu0 %v284
    %298 = vmatprep.subr.bf16.mxu0 %v287
    %299 = vmatpush1.bf16.msra.mxu0 %v286
    %300 = vmatprep.subr.bf16.mxu0 0
    %301 = vmatpush1.bf16.msra.mxu0 0
    %302 = vmatprep.subr.bf16.mxu0 0
    %303 = vmatpush1.bf16.msra.mxu0 0
    %304 = vmatprep.subr.bf16.mxu0 0
    %305 = vmatpush1.bf16.msra.mxu0 0
    %306 = vmatprep.subr.bf16.mxu0 0
    %307 = vmatpush1.bf16.msra.mxu0 0
    %308 = vmatprep.subr.bf16.mxu0 0
    %309 = vmatpush1.bf16.msra.mxu0 0
    %310 = vmatprep.subr.bf16.mxu0 0
    %311 = vmatpush1.bf16.msra.mxu0 0
    %312 = vmatprep.subr.bf16.mxu0 0
    %313 = vmatpush1.bf16.msra.mxu0 0
    %314 = vmatprep.subr.bf16.mxu0 0
    %315 = vmatpush1.bf16.msra.mxu0 0
    %316 = vmatprep.subr.bf16.mxu0 0
    %317 = vmatpush1.bf16.msra.mxu0 0
    %318 = vmatprep.subr.bf16.mxu0 0
    %319 = vmatpush1.bf16.msra.mxu0 0
    %320 = vmatprep.subr.bf16.mxu0 0
    %321 = vmatpush1.bf16.msra.mxu0 0
    %322 = vmatprep.subr.bf16.mxu0 0
    %323 = vmatpush1.bf16.msra.mxu0 0
    %324 = vmatprep.subr.bf16.mxu0 0
    %325 = vmatpush1.bf16.msra.mxu0 0
    %326 = vmatprep.subr.bf16.mxu0 0
    %327 = vmatpush1.bf16.msra.mxu0 0
    %328 = vmatprep.mubr.bf16.mxu0 0
    %329 = vmatmul.mubr.bf16.gmra.mrb[0].mxu0 %v294
    %v330 = vpop.f32.mrb[0].mxu0
    %v331 = vadd.f32 %v260, %v330
    %v332 = vpop.f32.mrb[0].mxu0
    %v333 = vadd.f32 %v264, %v332
    %v334 = vpop.f32.mrb[0].mxu0
    %v335 = vadd.f32 %v260, %v334
    %v336 = vpop.f32.mrb[0].mxu0
    %v337 = vadd.f32 %v264, %v336
    %338 = vdwg.mxu0
    %339 = vst [vmem:[#allocation4] sm:$0xff] %v331
    %vm340 = vcmask 523264
    %341 = vst.msk [vmem:[#allocation4 + $0x8] sm:$0xff] %vm340, %v333
    %342 = vst [vmem:[#allocation4 + $0x10] sm:$0xff] %v335
    %343 = vst.msk [vmem:[#allocation4 + $0x18] sm:$0xff] %vm340, %v337
    %v344 = vld [vmem:[%s7] sm:$0xf]
    %v345 = vld [vmem:[%s7 + $0x4] sm:$0xf]
    %v346 = vld [vmem:[%s7 + $0x8] sm:$0xf]
    %v347 = vld [vmem:[%s7 + $0xc] sm:$0xf]
    %v348 = vld [vmem:[%s9] sm:$0xf]
    %v349 = vld [vmem:[%s9 + $0x4] sm:$0xf]
    %v350 = vld [vmem:[%s9 + $0x8] sm:$0xf]
    %v351 = vld [vmem:[%s9 + $0xc] sm:$0xf]
    %v352 = vld [vmem:[%s11] sm:$0x1]
    %v354 = vlaneseq
    %v355 = vshrl.u32 %v354, 7
    %v356 = vsub.s32 0, %v355
    %v357 = vrot.slane %v352, %v356
    %v358 = vld [vmem:[#allocation6] sm:$0x1]
    %v360 = vlaneseq
    %v361 = vshrl.u32 %v360, 7
    %v362 = vsub.s32 0, %v361
    %v363 = vrot.slane %v358, %v362
    %v368 = vunpack.c.l.b16 %v344
    %v369 = vunpack.c.l.b16 %v345
    %v370 = vunpack.c.l.b16 %v346
    %v371 = vunpack.c.l.b16 %v347
    %v372 = vpack.c.b16 %v369, %v368
    %v373 = vpack.c.b16 %v371, %v370
    %v377 = vsel %vm292, 0, 0
    %379 = vmatprep.subr.bf16.mxu0 0
    %380 = vmatpush1.bf16.msra.mxu0 %v372
    %381 = vmatprep.subr.bf16.mxu0 0
    %382 = vmatpush1.bf16.msra.mxu0 %v373
    %383 = vmatprep.subr.bf16.mxu0 0
    %384 = vmatpush1.bf16.msra.mxu0 0
    %385 = vmatprep.subr.bf16.mxu0 0
    %386 = vmatpush1.bf16.msra.mxu0 0
    %387 = vmatprep.subr.bf16.mxu0 0
    %388 = vmatpush1.bf16.msra.mxu0 0
    %389 = vmatprep.subr.bf16.mxu0 0
    %390 = vmatpush1.bf16.msra.mxu0 0
    %391 = vmatprep.subr.bf16.mxu0 0
    %392 = vmatpush1.bf16.msra.mxu0 0
    %393 = vmatprep.subr.bf16.mxu0 0
    %394 = vmatpush1.bf16.msra.mxu0 0
    %395 = vmatprep.subr.bf16.mxu0 0
    %396 = vmatpush1.bf16.msra.mxu0 0
    %397 = vmatprep.subr.bf16.mxu0 0
    %398 = vmatpush1.bf16.msra.mxu0 0
    %399 = vmatprep.subr.bf16.mxu0 0
    %400 = vmatpush1.bf16.msra.mxu0 0
    %401 = vmatprep.subr.bf16.mxu0 0
    %402 = vmatpush1.bf16.msra.mxu0 0
    %403 = vmatprep.subr.bf16.mxu0 0
    %404 = vmatpush1.bf16.msra.mxu0 0
    %405 = vmatprep.subr.bf16.mxu0 0
    %406 = vmatpush1.bf16.msra.mxu0 0
    %407 = vmatprep.subr.bf16.mxu0 0
    %408 = vmatpush1.bf16.msra.mxu0 0
    %409 = vmatprep.subr.bf16.mxu0 0
    %410 = vmatpush1.bf16.msra.mxu0 0
    %411 = vmatprep.mubr.bf16.mxu0 0
    %412 = vmatmul.mubr.bf16.gmra.mrb[0].mxu0 %v377
    %v413 = vpop.f32.mrb[0].mxu0
    %v414 = vadd.f32 0.0, %v413
    %v415 = vpop.f32.mrb[0].mxu0
    %v416 = vpop.f32.mrb[0].mxu0
    %v417 = vpop.f32.mrb[0].mxu0
    %418 = vdwg.mxu0
    %v423 = vunpack.c.l.b16 %v348
    %v424 = vunpack.c.l.b16 %v349
    %v425 = vunpack.c.l.b16 %v350
    %v426 = vunpack.c.l.b16 %v351
    %v427 = vpack.c.b16 %v424, %v423
    %v428 = vpack.c.b16 %v426, %v425
    %431 = vmatprep.subr.bf16.mxu0 0
    %432 = vmatpush1.bf16.msra.mxu0 %v427
    %433 = vmatprep.subr.bf16.mxu0 0
    %434 = vmatpush1.bf16.msra.mxu0 %v428
    %435 = vmatprep.subr.bf16.mxu0 0
    %436 = vmatpush1.bf16.msra.mxu0 0
    %437 = vmatprep.subr.bf16.mxu0 0
    %438 = vmatpush1.bf16.msra.mxu0 0
    %439 = vmatprep.subr.bf16.mxu0 0
    %440 = vmatpush1.bf16.msra.mxu0 0
    %441 = vmatprep.subr.bf16.mxu0 0
    %442 = vmatpush1.bf16.msra.mxu0 0
    %443 = vmatprep.subr.bf16.mxu0 0
    %444 = vmatpush1.bf16.msra.mxu0 0
    %445 = vmatprep.subr.bf16.mxu0 0
    %446 = vmatpush1.bf16.msra.mxu0 0
    %447 = vmatprep.subr.bf16.mxu0 0
    %448 = vmatpush1.bf16.msra.mxu0 0
    %449 = vmatprep.subr.bf16.mxu0 0
    %450 = vmatpush1.bf16.msra.mxu0 0
    %451 = vmatprep.subr.bf16.mxu0 0
    %452 = vmatpush1.bf16.msra.mxu0 0
    %453 = vmatprep.subr.bf16.mxu0 0
    %454 = vmatpush1.bf16.msra.mxu0 0
    %455 = vmatprep.subr.bf16.mxu0 0
    %456 = vmatpush1.bf16.msra.mxu0 0
    %457 = vmatprep.subr.bf16.mxu0 0
    %458 = vmatpush1.bf16.msra.mxu0 0
    %459 = vmatprep.subr.bf16.mxu0 0
    %460 = vmatpush1.bf16.msra.mxu0 0
    %461 = vmatprep.subr.bf16.mxu0 0
    %462 = vmatpush1.bf16.msra.mxu0 0
    %463 = vmatprep.mubr.bf16.mxu0 0
    %464 = vmatmul.mubr.bf16.gmra.mrb[0].mxu0 %v377
    %v465 = vpop.f32.mrb[0].mxu0
    %v466 = vadd.f32 0.0, %v465
    %v467 = vpop.f32.mrb[0].mxu0
    %v468 = vpop.f32.mrb[0].mxu0
    %v469 = vpop.f32.mrb[0].mxu0
    %470 = vdwg.mxu0
    %v471 = vld [vmem:[#allocation4] sm:$0x3]
    %v472 = vld [vmem:[#allocation4 + $0x10] sm:$0xc0]
    %v473 = vld [vmem:[#allocation4 + $0x18] sm:$0xc0]
    %v474 = vadd.f32 %v471, %v414
    %v475 = vxor.u32 %v474, 2147483648
    %v476 = vmul.f32 %v475, 1.442695
    %v477 = vpow.pop %v476
    %v478 = vadd.f32 %v477, 1.0
    %v479 = vrcp.pop %v478
    %v480 = vmul.f32 1.0, %v479
    %481 = vrot.lane.b32.xlu0 %v357, 64
    %v482 = vpop.permute.xlu0 %481
    %v484 = vadd.f32 %v414, %v482
    %486 = vrot.lane.b32.xlu0 %v484, 64
    %v487 = vpop.permute.xlu0 %486
    %v489 = vmul.f32 %v480, %v487
    %491 = vrot.lane.b32.xlu0 %v489, 64
    %v492 = vpop.permute.xlu0 %491
    %v494 = vadd.f32 %v471, %v492
    %v495 = vtanh.pop %v494
    %v497 = vrot.slane %v466, 2
    %498 = vrot.lane.b32.xlu0 %v497, 96
    %v499 = vpop.permute.xlu0 %498
    %v501 = vadd.f32 %v472, %v499
    %v502 = vxor.u32 %v501, 2147483648
    %v503 = vmul.f32 %v502, 1.442695
    %v504 = vpow.pop %v503
    %v505 = vadd.f32 %v504, 1.0
    %v506 = vrcp.pop %v505
    %v507 = vmul.f32 1.0, %v506
    %v508 = vadd.f32 %v473, %v499
    %v509 = vxor.u32 %v508, 2147483648
    %v510 = vmul.f32 %v509, 1.442695
    %v511 = vpow.pop %v510
    %v512 = vadd.f32 %v511, 1.0
    %v513 = vrcp.pop %v512
    %v514 = vmul.f32 1.0, %v513
    %515 = vrot.lane.b32.xlu0 %v363, 64
    %v516 = vpop.permute.xlu0 %515
    %v518 = vadd.f32 %v466, %v516
    %v520 = vrot.slane %v518, 2
    %521 = vrot.lane.b32.xlu0 %v520, 32
    %v522 = vpop.permute.xlu0 %521
    %v524 = vmul.f32 %v507, %v522
    %526 = vrot.lane.b32.xlu0 %v524, 64
    %v527 = vpop.permute.xlu0 %526
    %v529 = vadd.f32 %v473, %v527
    %v530 = vtanh.pop %v529
    %v531 = vsub.f32 1.0, %v480
    %533 = vrot.lane.b32.xlu0 %v495, 96
    %v534 = vpop.permute.xlu0 %533
    %v536 = vmul.f32 %v531, %v534
    %v537 = vmul.f32 %v480, 0.0
    %v538 = vadd.f32 %v536, %v537
    %v539 = vsub.f32 1.0, %v514
    %541 = vrot.lane.b32.xlu0 %v530, 96
    %v542 = vpop.permute.xlu0 %541
    %v544 = vmul.f32 %v539, %v542
    %v545 = vmul.f32 %v514, 0.0
    %v546 = vadd.f32 %v544, %v545
    %v547 = vpack.c.bf16 %v538, %v538
    %549 = vrot.lane.b32.xlu0 %v547, 96
    %v550 = vpop.permute.xlu0 %549
    %vm552 = vcmask 253952
    %553 = vst.msk [vmem:[#allocation2] sm:$0x1] %vm552, %v550
    %v554 = vpack.c.bf16 %v546, %v546
    %v556 = vrot.slane %v554, 4
    %557 = vrot.lane.b32.xlu0 %v556, 32
    %v558 = vpop.permute.xlu0 %557
    %vm560 = vcmask 523527
    %561 = vst.msk [vmem:[#allocation2] sm:$0x80] %vm560, %v558
    %v563 = vsel %vm292, %v550, 0
    %565 = vmatprep.subr.bf16.mxu0 0
    %566 = vmatpush1.bf16.msra.mxu0 %v372
    %567 = vmatprep.subr.bf16.mxu0 0
    %568 = vmatpush1.bf16.msra.mxu0 %v373
    %569 = vmatprep.subr.bf16.mxu0 0
    %570 = vmatpush1.bf16.msra.mxu0 0
    %571 = vmatprep.subr.bf16.mxu0 0
    %572 = vmatpush1.bf16.msra.mxu0 0
    %573 = vmatprep.subr.bf16.mxu0 0
    %574 = vmatpush1.bf16.msra.mxu0 0
    %575 = vmatprep.subr.bf16.mxu0 0
    %576 = vmatpush1.bf16.msra.mxu0 0
    %577 = vmatprep.subr.bf16.mxu0 0
    %578 = vmatpush1.bf16.msra.mxu0 0
    %579 = vmatprep.subr.bf16.mxu0 0
    %580 = vmatpush1.bf16.msra.mxu0 0
    %581 = vmatprep.subr.bf16.mxu0 0
    %582 = vmatpush1.bf16.msra.mxu0 0
    %583 = vmatprep.subr.bf16.mxu0 0
    %584 = vmatpush1.bf16.msra.mxu0 0
    %585 = vmatprep.subr.bf16.mxu0 0
    %586 = vmatpush1.bf16.msra.mxu0 0
    %587 = vmatprep.subr.bf16.mxu0 0
    %588 = vmatpush1.bf16.msra.mxu0 0
    %589 = vmatprep.subr.bf16.mxu0 0
    %590 = vmatpush1.bf16.msra.mxu0 0
    %591 = vmatprep.subr.bf16.mxu0 0
    %592 = vmatpush1.bf16.msra.mxu0 0
    %593 = vmatprep.subr.bf16.mxu0 0
    %594 = vmatpush1.bf16.msra.mxu0 0
    %595 = vmatprep.subr.bf16.mxu0 0
    %596 = vmatpush1.bf16.msra.mxu0 0
    %597 = vmatprep.mubr.bf16.mxu0 0
    %598 = vmatmul.mubr.bf16.gmra.mrb[0].mxu0 %v563
    %v599 = vpop.f32.mrb[0].mxu0
    %v600 = vadd.f32 0.0, %v599
    %v601 = vpop.f32.mrb[0].mxu0
    %v602 = vpop.f32.mrb[0].mxu0
    %v603 = vpop.f32.mrb[0].mxu0
    %604 = vdwg.mxu0
    %v605 = vrot.slane %v554, 3
    %v607 = vsel %vm292, %v605, 0
    %609 = vmatprep.subr.bf16.mxu0 0
    %610 = vmatpush1.bf16.msra.mxu0 %v427
    %611 = vmatprep.subr.bf16.mxu0 0
    %612 = vmatpush1.bf16.msra.mxu0 %v428
    %613 = vmatprep.subr.bf16.mxu0 0
    %614 = vmatpush1.bf16.msra.mxu0 0
    %615 = vmatprep.subr.bf16.mxu0 0
    %616 = vmatpush1.bf16.msra.mxu0 0
    %617 = vmatprep.subr.bf16.mxu0 0
    %618 = vmatpush1.bf16.msra.mxu0 0
    %619 = vmatprep.subr.bf16.mxu0 0
    %620 = vmatpush1.bf16.msra.mxu0 0
    %621 = vmatprep.subr.bf16.mxu0 0
    %622 = vmatpush1.bf16.msra.mxu0 0
    %623 = vmatprep.subr.bf16.mxu0 0
    %624 = vmatpush1.bf16.msra.mxu0 0
    %625 = vmatprep.subr.bf16.mxu0 0
    %626 = vmatpush1.bf16.msra.mxu0 0
    %627 = vmatprep.subr.bf16.mxu0 0
    %628 = vmatpush1.bf16.msra.mxu0 0
    %629 = vmatprep.subr.bf16.mxu0 0
    %630 = vmatpush1.bf16.msra.mxu0 0
    %631 = vmatprep.subr.bf16.mxu0 0
    %632 = vmatpush1.bf16.msra.mxu0 0
    %633 = vmatprep.subr.bf16.mxu0 0
    %634 = vmatpush1.bf16.msra.mxu0 0
    %635 = vmatprep.subr.bf16.mxu0 0
    %636 = vmatpush1.bf16.msra.mxu0 0
    %637 = vmatprep.subr.bf16.mxu0 0
    %638 = vmatpush1.bf16.msra.mxu0 0
    %639 = vmatprep.subr.bf16.mxu0 0
    %640 = vmatpush1.bf16.msra.mxu0 0
    %641 = vmatprep.mubr.bf16.mxu0 0
    %642 = vmatmul.mubr.bf16.gmra.mrb[0].mxu0 %v607
    %v643 = vpop.f32.mrb[0].mxu0
    %v644 = vadd.f32 0.0, %v643
    %v645 = vpop.f32.mrb[0].mxu0
    %v646 = vpop.f32.mrb[0].mxu0
    %v647 = vpop.f32.mrb[0].mxu0
    %648 = vdwg.mxu0
    %v649 = vld [vmem:[#allocation4] sm:$0xc]
    %v650 = vld [vmem:[#allocation4 + $0x10] sm:$0x30]
    %v651 = vld [vmem:[#allocation4 + $0x18] sm:$0x30]
    %v653 = vrot.slane %v600, 6
    %v655 = vadd.f32 %v649, %v653
    %v656 = vxor.u32 %v655, 2147483648
    %v657 = vmul.f32 %v656, 1.442695
    %v658 = vpow.pop %v657
    %v659 = vadd.f32 %v658, 1.0
    %v660 = vrcp.pop %v659
    %v661 = vmul.f32 1.0, %v660
    %v662 = vadd.f32 %v600, %v482
    %v664 = vrot.slane %v662, 6
    %665 = vrot.lane.b32.xlu0 %v664, 64
    %v666 = vpop.permute.xlu0 %665
    %v668 = vmul.f32 %v661, %v666
    %670 = vrot.lane.b32.xlu0 %v668, 64
    %v671 = vpop.permute.xlu0 %670
    %v673 = vadd.f32 %v649, %v671
    %v674 = vtanh.pop %v673
    %v676 = vrot.slane %v644, 4
    %677 = vrot.lane.b32.xlu0 %v676, 96
    %v678 = vpop.permute.xlu0 %677
    %v680 = vadd.f32 %v650, %v678
    %v681 = vxor.u32 %v680, 2147483648
    %v682 = vmul.f32 %v681, 1.442695
    %v683 = vpow.pop %v682
    %v684 = vadd.f32 %v683, 1.0
    %v685 = vrcp.pop %v684
    %v686 = vmul.f32 1.0, %v685
    %v687 = vadd.f32 %v651, %v678
    %v688 = vxor.u32 %v687, 2147483648
    %v689 = vmul.f32 %v688, 1.442695
    %v690 = vpow.pop %v689
    %v691 = vadd.f32 %v690, 1.0
    %v692 = vrcp.pop %v691
    %v693 = vmul.f32 1.0, %v692
    %v694 = vadd.f32 %v644, %v516
    %v696 = vrot.slane %v694, 4
    %697 = vrot.lane.b32.xlu0 %v696, 32
    %v698 = vpop.permute.xlu0 %697
    %v700 = vmul.f32 %v686, %v698
    %702 = vrot.lane.b32.xlu0 %v700, 64
    %v703 = vpop.permute.xlu0 %702
    %v705 = vadd.f32 %v651, %v703
    %v706 = vtanh.pop %v705
    %v707 = vsub.f32 1.0, %v661
    %709 = vrot.lane.b32.xlu0 %v674, 96
    %v710 = vpop.permute.xlu0 %709
    %v712 = vmul.f32 %v707, %v710
    %v714 = vrot.slane %v538, 6
    %v716 = vmul.f32 %v661, %v714
    %v717 = vadd.f32 %v712, %v716
    %v718 = vsub.f32 1.0, %v693
    %720 = vrot.lane.b32.xlu0 %v706, 96
    %v721 = vpop.permute.xlu0 %720
    %v723 = vmul.f32 %v718, %v721
    %v725 = vrot.slane %v546, 2
    %v727 = vmul.f32 %v693, %v725
    %v728 = vadd.f32 %v723, %v727
    %v729 = vpack.c.bf16 %v717, %v717
    %731 = vrot.lane.b32.xlu0 %v729, 96
    %v732 = vpop.permute.xlu0 %731
    %vm734 = vcmask 254977
    %735 = vst.msk [vmem:[#allocation2] sm:$0x2] %vm734, %v732
    %v736 = vpack.c.bf16 %v728, %v728
    %v738 = vrot.slane %v736, 4
    %739 = vrot.lane.b32.xlu0 %v738, 32
    %v740 = vpop.permute.xlu0 %739
    %vm742 = vcmask 522502
    %743 = vst.msk [vmem:[#allocation2] sm:$0x40] %vm742, %v740
    %v744 = vrot.slane %v729, 1
    %745 = vrot.lane.b32.xlu0 %v744, 96
    %v746 = vpop.permute.xlu0 %745
    %v748 = vsel %vm292, %v746, 0
    %750 = vmatprep.subr.bf16.mxu0 0
    %751 = vmatpush1.bf16.msra.mxu0 %v372
    %752 = vmatprep.subr.bf16.mxu0 0
    %753 = vmatpush1.bf16.msra.mxu0 %v373
    %754 = vmatprep.subr.bf16.mxu0 0
    %755 = vmatpush1.bf16.msra.mxu0 0
    %756 = vmatprep.subr.bf16.mxu0 0
    %757 = vmatpush1.bf16.msra.mxu0 0
    %758 = vmatprep.subr.bf16.mxu0 0
    %759 = vmatpush1.bf16.msra.mxu0 0
    %760 = vmatprep.subr.bf16.mxu0 0
    %761 = vmatpush1.bf16.msra.mxu0 0
    %762 = vmatprep.subr.bf16.mxu0 0
    %763 = vmatpush1.bf16.msra.mxu0 0
    %764 = vmatprep.subr.bf16.mxu0 0
    %765 = vmatpush1.bf16.msra.mxu0 0
    %766 = vmatprep.subr.bf16.mxu0 0
    %767 = vmatpush1.bf16.msra.mxu0 0
    %768 = vmatprep.subr.bf16.mxu0 0
    %769 = vmatpush1.bf16.msra.mxu0 0
    %770 = vmatprep.subr.bf16.mxu0 0
    %771 = vmatpush1.bf16.msra.mxu0 0
    %772 = vmatprep.subr.bf16.mxu0 0
    %773 = vmatpush1.bf16.msra.mxu0 0
    %774 = vmatprep.subr.bf16.mxu0 0
    %775 = vmatpush1.bf16.msra.mxu0 0
    %776 = vmatprep.subr.bf16.mxu0 0
    %777 = vmatpush1.bf16.msra.mxu0 0
    %778 = vmatprep.subr.bf16.mxu0 0
    %779 = vmatpush1.bf16.msra.mxu0 0
    %780 = vmatprep.subr.bf16.mxu0 0
    %781 = vmatpush1.bf16.msra.mxu0 0
    %782 = vmatprep.mubr.bf16.mxu0 0
    %783 = vmatmul.mubr.bf16.gmra.mrb[0].mxu0 %v748
    %v784 = vpop.f32.mrb[0].mxu0
    %v785 = vadd.f32 0.0, %v784
    %v786 = vpop.f32.mrb[0].mxu0
    %v787 = vpop.f32.mrb[0].mxu0
    %v788 = vpop.f32.mrb[0].mxu0
    %789 = vdwg.mxu0
    %v790 = vrot.slane %v736, 2
    %v792 = vsel %vm292, %v790, 0
    %794 = vmatprep.subr.bf16.mxu0 0
    %795 = vmatpush1.bf16.msra.mxu0 %v427
    %796 = vmatprep.subr.bf16.mxu0 0
    %797 = vmatpush1.bf16.msra.mxu0 %v428
    %798 = vmatprep.subr.bf16.mxu0 0
    %799 = vmatpush1.bf16.msra.mxu0 0
    %800 = vmatprep.subr.bf16.mxu0 0
    %801 = vmatpush1.bf16.msra.mxu0 0
    %802 = vmatprep.subr.bf16.mxu0 0
    %803 = vmatpush1.bf16.msra.mxu0 0
    %804 = vmatprep.subr.bf16.mxu0 0
    %805 = vmatpush1.bf16.msra.mxu0 0
    %806 = vmatprep.subr.bf16.mxu0 0
    %807 = vmatpush1.bf16.msra.mxu0 0
    %808 = vmatprep.subr.bf16.mxu0 0
    %809 = vmatpush1.bf16.msra.mxu0 0
    %810 = vmatprep.subr.bf16.mxu0 0
    %811 = vmatpush1.bf16.msra.mxu0 0
    %812 = vmatprep.subr.bf16.mxu0 0
    %813 = vmatpush1.bf16.msra.mxu0 0
    %814 = vmatprep.subr.bf16.mxu0 0
    %815 = vmatpush1.bf16.msra.mxu0 0
    %816 = vmatprep.subr.bf16.mxu0 0
    %817 = vmatpush1.bf16.msra.mxu0 0
    %818 = vmatprep.subr.bf16.mxu0 0
    %819 = vmatpush1.bf16.msra.mxu0 0
    %820 = vmatprep.subr.bf16.mxu0 0
    %821 = vmatpush1.bf16.msra.mxu0 0
    %822 = vmatprep.subr.bf16.mxu0 0
    %823 = vmatpush1.bf16.msra.mxu0 0
    %824 = vmatprep.subr.bf16.mxu0 0
    %825 = vmatpush1.bf16.msra.mxu0 0
    %826 = vmatprep.mubr.bf16.mxu0 0
    %827 = vmatmul.mubr.bf16.gmra.mrb[0].mxu0 %v792
    %v828 = vpop.f32.mrb[0].mxu0
    %v829 = vadd.f32 0.0, %v828
    %v830 = vpop.f32.mrb[0].mxu0
    %v831 = vpop.f32.mrb[0].mxu0
    %v832 = vpop.f32.mrb[0].mxu0
    %833 = vdwg.mxu0
    %v834 = vld [vmem:[#allocation4] sm:$0x30]
    %v835 = vld [vmem:[#allocation4 + $0x10] sm:$0xc]
    %v836 = vld [vmem:[#allocation4 + $0x18] sm:$0xc]
    %v838 = vrot.slane %v785, 4
    %v840 = vadd.f32 %v834, %v838
    %v841 = vxor.u32 %v840, 2147483648
    %v842 = vmul.f32 %v841, 1.442695
    %v843 = vpow.pop %v842
    %v844 = vadd.f32 %v843, 1.0
    %v845 = vrcp.pop %v844
    %v846 = vmul.f32 1.0, %v845
    %v847 = vadd.f32 %v785, %v482
    %v849 = vrot.slane %v847, 4
    %850 = vrot.lane.b32.xlu0 %v849, 64
    %v851 = vpop.permute.xlu0 %850
    %v853 = vmul.f32 %v846, %v851
    %855 = vrot.lane.b32.xlu0 %v853, 64
    %v856 = vpop.permute.xlu0 %855
    %v858 = vadd.f32 %v834, %v856
    %v859 = vtanh.pop %v858
    %v861 = vrot.slane %v829, 6
    %862 = vrot.lane.b32.xlu0 %v861, 96
    %v863 = vpop.permute.xlu0 %862
    %v865 = vadd.f32 %v835, %v863
    %v866 = vxor.u32 %v865, 2147483648
    %v867 = vmul.f32 %v866, 1.442695
    %v868 = vpow.pop %v867
    %v869 = vadd.f32 %v868, 1.0
    %v870 = vrcp.pop %v869
    %v871 = vmul.f32 1.0, %v870
    %v872 = vadd.f32 %v836, %v863
    %v873 = vxor.u32 %v872, 2147483648
    %v874 = vmul.f32 %v873, 1.442695
    %v875 = vpow.pop %v874
    %v876 = vadd.f32 %v875, 1.0
    %v877 = vrcp.pop %v876
    %v878 = vmul.f32 1.0, %v877
    %v879 = vadd.f32 %v829, %v516
    %v881 = vrot.slane %v879, 6
    %882 = vrot.lane.b32.xlu0 %v881, 32
    %v883 = vpop.permute.xlu0 %882
    %v885 = vmul.f32 %v871, %v883
    %887 = vrot.lane.b32.xlu0 %v885, 64
    %v888 = vpop.permute.xlu0 %887
    %v890 = vadd.f32 %v836, %v888
    %v891 = vtanh.pop %v890
    %v892 = vsub.f32 1.0, %v846
    %894 = vrot.lane.b32.xlu0 %v859, 96
    %v895 = vpop.permute.xlu0 %894
    %v897 = vmul.f32 %v892, %v895
    %v899 = vrot.slane %v717, 6
    %v901 = vmul.f32 %v846, %v899
    %v902 = vadd.f32 %v897, %v901
    %v903 = vsub.f32 1.0, %v878
    %905 = vrot.lane.b32.xlu0 %v891, 96
    %v906 = vpop.permute.xlu0 %905
    %v908 = vmul.f32 %v903, %v906
    %v910 = vrot.slane %v728, 2
    %v912 = vmul.f32 %v878, %v910
    %v913 = vadd.f32 %v908, %v912
    %v914 = vpack.c.bf16 %v902, %v902
    %916 = vrot.lane.b32.xlu0 %v914, 96
    %v917 = vpop.permute.xlu0 %916
    %vm919 = vcmask 256002
    %920 = vst.msk [vmem:[#allocation2] sm:$0x4] %vm919, %v917
    %v921 = vpack.c.bf16 %v913, %v913
    %v923 = vrot.slane %v921, 4
    %924 = vrot.lane.b32.xlu0 %v923, 32
    %v925 = vpop.permute.xlu0 %924
    %vm927 = vcmask 521477
    %928 = vst.msk [vmem:[#allocation2] sm:$0x20] %vm927, %v925
    %v929 = vrot.slane %v914, 2
    %930 = vrot.lane.b32.xlu0 %v929, 96
    %v931 = vpop.permute.xlu0 %930
    %v933 = vsel %vm292, %v931, 0
    %935 = vmatprep.subr.bf16.mxu0 0
    %936 = vmatpush1.bf16.msra.mxu0 %v372
    %937 = vmatprep.subr.bf16.mxu0 0
    %938 = vmatpush1.bf16.msra.mxu0 %v373
    %939 = vmatprep.subr.bf16.mxu0 0
    %940 = vmatpush1.bf16.msra.mxu0 0
    %941 = vmatprep.subr.bf16.mxu0 0
    %942 = vmatpush1.bf16.msra.mxu0 0
    %943 = vmatprep.subr.bf16.mxu0 0
    %944 = vmatpush1.bf16.msra.mxu0 0
    %945 = vmatprep.subr.bf16.mxu0 0
    %946 = vmatpush1.bf16.msra.mxu0 0
    %947 = vmatprep.subr.bf16.mxu0 0
    %948 = vmatpush1.bf16.msra.mxu0 0
    %949 = vmatprep.subr.bf16.mxu0 0
    %950 = vmatpush1.bf16.msra.mxu0 0
    %951 = vmatprep.subr.bf16.mxu0 0
    %952 = vmatpush1.bf16.msra.mxu0 0
    %953 = vmatprep.subr.bf16.mxu0 0
    %954 = vmatpush1.bf16.msra.mxu0 0
    %955 = vmatprep.subr.bf16.mxu0 0
    %956 = vmatpush1.bf16.msra.mxu0 0
    %957 = vmatprep.subr.bf16.mxu0 0
    %958 = vmatpush1.bf16.msra.mxu0 0
    %959 = vmatprep.subr.bf16.mxu0 0
    %960 = vmatpush1.bf16.msra.mxu0 0
    %961 = vmatprep.subr.bf16.mxu0 0
    %962 = vmatpush1.bf16.msra.mxu0 0
    %963 = vmatprep.subr.bf16.mxu0 0
    %964 = vmatpush1.bf16.msra.mxu0 0
    %965 = vmatprep.subr.bf16.mxu0 0
    %966 = vmatpush1.bf16.msra.mxu0 0
    %967 = vmatprep.mubr.bf16.mxu0 0
    %968 = vmatmul.mubr.bf16.gmra.mrb[0].mxu0 %v933
    %v969 = vpop.f32.mrb[0].mxu0
    %v970 = vadd.f32 0.0, %v969
    %v971 = vpop.f32.mrb[0].mxu0
    %v972 = vpop.f32.mrb[0].mxu0
    %v973 = vpop.f32.mrb[0].mxu0
    %974 = vdwg.mxu0
    %v975 = vrot.slane %v921, 1
    %v977 = vsel %vm292, %v975, 0
    %979 = vmatprep.subr.bf16.mxu0 0
    %980 = vmatpush1.bf16.msra.mxu0 %v427
    %981 = vmatprep.subr.bf16.mxu0 0
    %982 = vmatpush1.bf16.msra.mxu0 %v428
    %983 = vmatprep.subr.bf16.mxu0 0
    %984 = vmatpush1.bf16.msra.mxu0 0
    %985 = vmatprep.subr.bf16.mxu0 0
    %986 = vmatpush1.bf16.msra.mxu0 0
    %987 = vmatprep.subr.bf16.mxu0 0
    %988 = vmatpush1.bf16.msra.mxu0 0
    %989 = vmatprep.subr.bf16.mxu0 0
    %990 = vmatpush1.bf16.msra.mxu0 0
    %991 = vmatprep.subr.bf16.mxu0 0
    %992 = vmatpush1.bf16.msra.mxu0 0
    %993 = vmatprep.subr.bf16.mxu0 0
    %994 = vmatpush1.bf16.msra.mxu0 0
    %995 = vmatprep.subr.bf16.mxu0 0
    %996 = vmatpush1.bf16.msra.mxu0 0
    %997 = vmatprep.subr.bf16.mxu0 0
    %998 = vmatpush1.bf16.msra.mxu0 0
    %999 = vmatprep.subr.bf16.mxu0 0
    %1000 = vmatpush1.bf16.msra.mxu0 0
    %1001 = vmatprep.subr.bf16.mxu0 0
    %1002 = vmatpush1.bf16.msra.mxu0 0
    %1003 = vmatprep.subr.bf16.mxu0 0
    %1004 = vmatpush1.bf16.msra.mxu0 0
    %1005 = vmatprep.subr.bf16.mxu0 0
    %1006 = vmatpush1.bf16.msra.mxu0 0
    %1007 = vmatprep.subr.bf16.mxu0 0
    %1008 = vmatpush1.bf16.msra.mxu0 0
    %1009 = vmatprep.subr.bf16.mxu0 0
    %1010 = vmatpush1.bf16.msra.mxu0 0
    %1011 = vmatprep.mubr.bf16.mxu0 0
    %1012 = vmatmul.mubr.bf16.gmra.mrb[0].mxu0 %v977
    %v1013 = vpop.f32.mrb[0].mxu0
    %v1014 = vadd.f32 0.0, %v1013
    %v1015 = vpop.f32.mrb[0].mxu0
    %v1016 = vpop.f32.mrb[0].mxu0
    %v1017 = vpop.f32.mrb[0].mxu0
    %1018 = vdwg.mxu0
    %v1019 = vld [vmem:[#allocation4] sm:$0xc0]
    %v1020 = vld [vmem:[#allocation4 + $0x10] sm:$0x3]
    %v1021 = vld [vmem:[#allocation4 + $0x18] sm:$0x3]
    %v1023 = vrot.slane %v970, 2
    %v1025 = vadd.f32 %v1019, %v1023
    %v1026 = vxor.u32 %v1025, 2147483648
    %v1027 = vmul.f32 %v1026, 1.442695
    %v1028 = vpow.pop %v1027
    %v1029 = vadd.f32 %v1028, 1.0
    %v1030 = vrcp.pop %v1029
    %v1031 = vmul.f32 1.0, %v1030
    %v1032 = vadd.f32 %v970, %v482
    %v1034 = vrot.slane %v1032, 2
    %1035 = vrot.lane.b32.xlu0 %v1034, 64
    %v1036 = vpop.permute.xlu0 %1035
    %v1038 = vmul.f32 %v1031, %v1036
    %1040 = vrot.lane.b32.xlu0 %v1038, 64
    %v1041 = vpop.permute.xlu0 %1040
    %v1043 = vadd.f32 %v1019, %v1041
    %v1044 = vtanh.pop %v1043
    %1046 = vrot.lane.b32.xlu0 %v1014, 96
    %v1047 = vpop.permute.xlu0 %1046
    %v1049 = vadd.f32 %v1020, %v1047
    %v1050 = vxor.u32 %v1049, 2147483648
    %v1051 = vmul.f32 %v1050, 1.442695
    %v1052 = vpow.pop %v1051
    %v1053 = vadd.f32 %v1052, 1.0
    %v1054 = vrcp.pop %v1053
    %v1055 = vmul.f32 1.0, %v1054
    %v1056 = vadd.f32 %v1021, %v1047
    %v1057 = vxor.u32 %v1056, 2147483648
    %v1058 = vmul.f32 %v1057, 1.442695
    %v1059 = vpow.pop %v1058
    %v1060 = vadd.f32 %v1059, 1.0
    %v1061 = vrcp.pop %v1060
    %v1062 = vmul.f32 1.0, %v1061
    %v1063 = vadd.f32 %v1014, %v516
    %1065 = vrot.lane.b32.xlu0 %v1063, 32
    %v1066 = vpop.permute.xlu0 %1065
    %v1068 = vmul.f32 %v1055, %v1066
    %1070 = vrot.lane.b32.xlu0 %v1068, 64
    %v1071 = vpop.permute.xlu0 %1070
    %v1073 = vadd.f32 %v1021, %v1071
    %v1074 = vtanh.pop %v1073
    %v1075 = vsub.f32 1.0, %v1031
    %1077 = vrot.lane.b32.xlu0 %v1044, 96
    %v1078 = vpop.permute.xlu0 %1077
    %v1080 = vmul.f32 %v1075, %v1078
    %v1082 = vrot.slane %v902, 6
    %v1084 = vmul.f32 %v1031, %v1082
    %v1085 = vadd.f32 %v1080, %v1084
    %v1086 = vsub.f32 1.0, %v1062
    %1088 = vrot.lane.b32.xlu0 %v1074, 96
    %v1089 = vpop.permute.xlu0 %1088
    %v1091 = vmul.f32 %v1086, %v1089
    %v1093 = vrot.slane %v913, 2
    %v1095 = vmul.f32 %v1062, %v1093
    %v1096 = vadd.f32 %v1091, %v1095
    %v1097 = vpack.c.bf16 %v1085, %v1085
    %1099 = vrot.lane.b32.xlu0 %v1097, 96
    %v1100 = vpop.permute.xlu0 %1099
    %vm1102 = vcmask 257027
    %1103 = vst.msk [vmem:[#allocation2] sm:$0x8] %vm1102, %v1100
    %v1104 = vpack.c.bf16 %v1096, %v1096
    %v1106 = vrot.slane %v1104, 4
    %1107 = vrot.lane.b32.xlu0 %v1106, 32
    %v1108 = vpop.permute.xlu0 %1107
    %vm1110 = vcmask 520452
    %1111 = vst.msk [vmem:[#allocation2] sm:$0x10] %vm1110, %v1108
    %v1112 = vrot.slane %v1097, 3
    %1113 = vrot.lane.b32.xlu0 %v1112, 96
    %v1114 = vpop.permute.xlu0 %1113
    %v1116 = vsel %vm292, %v1114, 0
    %1118 = vmatprep.subr.bf16.mxu0 0
    %1119 = vmatpush1.bf16.msra.mxu0 %v372
    %1120 = vmatprep.subr.bf16.mxu0 0
    %1121 = vmatpush1.bf16.msra.mxu0 %v373
    %1122 = vmatprep.subr.bf16.mxu0 0
    %1123 = vmatpush1.bf16.msra.mxu0 0
    %1124 = vmatprep.subr.bf16.mxu0 0
    %1125 = vmatpush1.bf16.msra.mxu0 0
    %1126 = vmatprep.subr.bf16.mxu0 0
    %1127 = vmatpush1.bf16.msra.mxu0 0
    %1128 = vmatprep.subr.bf16.mxu0 0
    %1129 = vmatpush1.bf16.msra.mxu0 0
    %1130 = vmatprep.subr.bf16.mxu0 0
    %1131 = vmatpush1.bf16.msra.mxu0 0
    %1132 = vmatprep.subr.bf16.mxu0 0
    %1133 = vmatpush1.bf16.msra.mxu0 0
    %1134 = vmatprep.subr.bf16.mxu0 0
    %1135 = vmatpush1.bf16.msra.mxu0 0
    %1136 = vmatprep.subr.bf16.mxu0 0
    %1137 = vmatpush1.bf16.msra.mxu0 0
    %1138 = vmatprep.subr.bf16.mxu0 0
    %1139 = vmatpush1.bf16.msra.mxu0 0
    %1140 = vmatprep.subr.bf16.mxu0 0
    %1141 = vmatpush1.bf16.msra.mxu0 0
    %1142 = vmatprep.subr.bf16.mxu0 0
    %1143 = vmatpush1.bf16.msra.mxu0 0
    %1144 = vmatprep.subr.bf16.mxu0 0
    %1145 = vmatpush1.bf16.msra.mxu0 0
    %1146 = vmatprep.subr.bf16.mxu0 0
    %1147 = vmatpush1.bf16.msra.mxu0 0
    %1148 = vmatprep.subr.bf16.mxu0 0
    %1149 = vmatpush1.bf16.msra.mxu0 0
    %1150 = vmatprep.mubr.bf16.mxu0 0
    %1151 = vmatmul.mubr.bf16.gmra.mrb[0].mxu0 %v1116
    %v1152 = vpop.f32.mrb[0].mxu0
    %v1153 = vadd.f32 0.0, %v1152
    %v1154 = vpop.f32.mrb[0].mxu0
    %v1155 = vpop.f32.mrb[0].mxu0
    %v1156 = vpop.f32.mrb[0].mxu0
    %1157 = vdwg.mxu0
    %v1159 = vsel %vm292, %v1104, 0
    %1161 = vmatprep.subr.bf16.mxu0 0
    %1162 = vmatpush1.bf16.msra.mxu0 %v427
    %1163 = vmatprep.subr.bf16.mxu0 0
    %1164 = vmatpush1.bf16.msra.mxu0 %v428
    %1165 = vmatprep.subr.bf16.mxu0 0
    %1166 = vmatpush1.bf16.msra.mxu0 0
    %1167 = vmatprep.subr.bf16.mxu0 0
    %1168 = vmatpush1.bf16.msra.mxu0 0
    %1169 = vmatprep.subr.bf16.mxu0 0
    %1170 = vmatpush1.bf16.msra.mxu0 0
    %1171 = vmatprep.subr.bf16.mxu0 0
    %1172 = vmatpush1.bf16.msra.mxu0 0
    %1173 = vmatprep.subr.bf16.mxu0 0
    %1174 = vmatpush1.bf16.msra.mxu0 0
    %1175 = vmatprep.subr.bf16.mxu0 0
    %1176 = vmatpush1.bf16.msra.mxu0 0
    %1177 = vmatprep.subr.bf16.mxu0 0
    %1178 = vmatpush1.bf16.msra.mxu0 0
    %1179 = vmatprep.subr.bf16.mxu0 0
    %1180 = vmatpush1.bf16.msra.mxu0 0
    %1181 = vmatprep.subr.bf16.mxu0 0
    %1182 = vmatpush1.bf16.msra.mxu0 0
    %1183 = vmatprep.subr.bf16.mxu0 0
    %1184 = vmatpush1.bf16.msra.mxu0 0
    %1185 = vmatprep.subr.bf16.mxu0 0
    %1186 = vmatpush1.bf16.msra.mxu0 0
    %1187 = vmatprep.subr.bf16.mxu0 0
    %1188 = vmatpush1.bf16.msra.mxu0 0
    %1189 = vmatprep.subr.bf16.mxu0 0
    %1190 = vmatpush1.bf16.msra.mxu0 0
    %1191 = vmatprep.subr.bf16.mxu0 0
    %1192 = vmatpush1.bf16.msra.mxu0 0
    %1193 = vmatprep.mubr.bf16.mxu0 0
    %1194 = vmatmul.mubr.bf16.gmra.mrb[0].mxu0 %v1159
    %v1195 = vpop.f32.mrb[0].mxu0
    %v1196 = vadd.f32 0.0, %v1195
    %v1197 = vpop.f32.mrb[0].mxu0
    %v1198 = vpop.f32.mrb[0].mxu0
    %v1199 = vpop.f32.mrb[0].mxu0
    %1200 = vdwg.mxu0
    %v1201 = vld [vmem:[#allocation4 + $0x10] sm:$0x3]
    %v1202 = vld [vmem:[#allocation4] sm:$0xc0]
    %v1203 = vld [vmem:[#allocation4 + $0x8] sm:$0xc0]
    %v1204 = vadd.f32 %v1201, %v1153
    %v1205 = vxor.u32 %v1204, 2147483648
    %v1206 = vmul.f32 %v1205, 1.442695
    %v1207 = vpow.pop %v1206
    %v1208 = vadd.f32 %v1207, 1.0
    %v1209 = vrcp.pop %v1208
    %v1210 = vmul.f32 1.0, %v1209
    %v1211 = vadd.f32 %v1153, %v482
    %1213 = vrot.lane.b32.xlu0 %v1211, 64
    %v1214 = vpop.permute.xlu0 %1213
    %v1216 = vmul.f32 %v1210, %v1214
    %1218 = vrot.lane.b32.xlu0 %v1216, 64
    %v1219 = vpop.permute.xlu0 %1218
    %v1221 = vadd.f32 %v1201, %v1219
    %v1222 = vtanh.pop %v1221
    %v1224 = vrot.slane %v1196, 2
    %1225 = vrot.lane.b32.xlu0 %v1224, 96
    %v1226 = vpop.permute.xlu0 %1225
    %v1228 = vadd.f32 %v1202, %v1226
    %v1229 = vxor.u32 %v1228, 2147483648
    %v1230 = vmul.f32 %v1229, 1.442695
    %v1231 = vpow.pop %v1230
    %v1232 = vadd.f32 %v1231, 1.0
    %v1233 = vrcp.pop %v1232
    %v1234 = vmul.f32 1.0, %v1233
    %v1235 = vadd.f32 %v1203, %v1226
    %v1236 = vxor.u32 %v1235, 2147483648
    %v1237 = vmul.f32 %v1236, 1.442695
    %v1238 = vpow.pop %v1237
    %v1239 = vadd.f32 %v1238, 1.0
    %v1240 = vrcp.pop %v1239
    %v1241 = vmul.f32 1.0, %v1240
    %v1242 = vadd.f32 %v1196, %v516
    %v1244 = vrot.slane %v1242, 2
    %1245 = vrot.lane.b32.xlu0 %v1244, 32
    %v1246 = vpop.permute.xlu0 %1245
    %v1248 = vmul.f32 %v1234, %v1246
    %1250 = vrot.lane.b32.xlu0 %v1248, 64
    %v1251 = vpop.permute.xlu0 %1250
    %v1253 = vadd.f32 %v1203, %v1251
    %v1254 = vtanh.pop %v1253
    %v1255 = vsub.f32 1.0, %v1210
    %1257 = vrot.lane.b32.xlu0 %v1222, 96
    %v1258 = vpop.permute.xlu0 %1257
    %v1260 = vmul.f32 %v1255, %v1258
    %v1262 = vrot.slane %v1085, 6
    %v1264 = vmul.f32 %v1210, %v1262
    %v1265 = vadd.f32 %v1260, %v1264
    %v1266 = vsub.f32 1.0, %v1241
    %1268 = vrot.lane.b32.xlu0 %v1254, 96
    %v1269 = vpop.permute.xlu0 %1268
    %v1271 = vmul.f32 %v1266, %v1269
    %v1273 = vrot.slane %v1096, 2
    %v1275 = vmul.f32 %v1241, %v1273
    %v1276 = vadd.f32 %v1271, %v1275
    %v1277 = vpack.c.bf16 %v1265, %v1265
    %v1279 = vrot.slane %v1277, 4
    %1280 = vrot.lane.b32.xlu0 %v1279, 96
    %v1281 = vpop.permute.xlu0 %1280
    %vm1283 = vcmask 258052
    %1284 = vst.msk [vmem:[#allocation2] sm:$0x10] %vm1283, %v1281
    %v1285 = vpack.c.bf16 %v1276, %v1276
    %1287 = vrot.lane.b32.xlu0 %v1285, 32
    %v1288 = vpop.permute.xlu0 %1287
    %vm1290 = vcmask 519427
    %1291 = vst.msk [vmem:[#allocation2] sm:$0x8] %vm1290, %v1288
    %1292 = vrot.lane.b32.xlu0 %v1277, 96
    %v1293 = vpop.permute.xlu0 %1292
    %v1295 = vsel %vm292, %v1293, 0
    %1297 = vmatprep.subr.bf16.mxu0 0
    %1298 = vmatpush1.bf16.msra.mxu0 %v372
    %1299 = vmatprep.subr.bf16.mxu0 0
    %1300 = vmatpush1.bf16.msra.mxu0 %v373
    %1301 = vmatprep.subr.bf16.mxu0 0
    %1302 = vmatpush1.bf16.msra.mxu0 0
    %1303 = vmatprep.subr.bf16.mxu0 0
    %1304 = vmatpush1.bf16.msra.mxu0 0
    %1305 = vmatprep.subr.bf16.mxu0 0
    %1306 = vmatpush1.bf16.msra.mxu0 0
    %1307 = vmatprep.subr.bf16.mxu0 0
    %1308 = vmatpush1.bf16.msra.mxu0 0
    %1309 = vmatprep.subr.bf16.mxu0 0
    %1310 = vmatpush1.bf16.msra.mxu0 0
    %1311 = vmatprep.subr.bf16.mxu0 0
    %1312 = vmatpush1.bf16.msra.mxu0 0
    %1313 = vmatprep.subr.bf16.mxu0 0
    %1314 = vmatpush1.bf16.msra.mxu0 0
    %1315 = vmatprep.subr.bf16.mxu0 0
    %1316 = vmatpush1.bf16.msra.mxu0 0
    %1317 = vmatprep.subr.bf16.mxu0 0
    %1318 = vmatpush1.bf16.msra.mxu0 0
    %1319 = vmatprep.subr.bf16.mxu0 0
    %1320 = vmatpush1.bf16.msra.mxu0 0
    %1321 = vmatprep.subr.bf16.mxu0 0
    %1322 = vmatpush1.bf16.msra.mxu0 0
    %1323 = vmatprep.subr.bf16.mxu0 0
    %1324 = vmatpush1.bf16.msra.mxu0 0
    %1325 = vmatprep.subr.bf16.mxu0 0
    %1326 = vmatpush1.bf16.msra.mxu0 0
    %1327 = vmatprep.subr.bf16.mxu0 0
    %1328 = vmatpush1.bf16.msra.mxu0 0
    %1329 = vmatprep.mubr.bf16.mxu0 0
    %1330 = vmatmul.mubr.bf16.gmra.mrb[0].mxu0 %v1295
    %v1331 = vpop.f32.mrb[0].mxu0
    %v1332 = vadd.f32 0.0, %v1331
    %v1333 = vpop.f32.mrb[0].mxu0
    %v1334 = vpop.f32.mrb[0].mxu0
    %v1335 = vpop.f32.mrb[0].mxu0
    %1336 = vdwg.mxu0
    %v1337 = vrot.slane %v1285, 3
    %v1339 = vsel %vm292, %v1337, 0
    %1341 = vmatprep.subr.bf16.mxu0 0
    %1342 = vmatpush1.bf16.msra.mxu0 %v427
    %1343 = vmatprep.subr.bf16.mxu0 0
    %1344 = vmatpush1.bf16.msra.mxu0 %v428
    %1345 = vmatprep.subr.bf16.mxu0 0
    %1346 = vmatpush1.bf16.msra.mxu0 0
    %1347 = vmatprep.subr.bf16.mxu0 0
    %1348 = vmatpush1.bf16.msra.mxu0 0
    %1349 = vmatprep.subr.bf16.mxu0 0
    %1350 = vmatpush1.bf16.msra.mxu0 0
    %1351 = vmatprep.subr.bf16.mxu0 0
    %1352 = vmatpush1.bf16.msra.mxu0 0
    %1353 = vmatprep.subr.bf16.mxu0 0
    %1354 = vmatpush1.bf16.msra.mxu0 0
    %1355 = vmatprep.subr.bf16.mxu0 0
    %1356 = vmatpush1.bf16.msra.mxu0 0
    %1357 = vmatprep.subr.bf16.mxu0 0
    %1358 = vmatpush1.bf16.msra.mxu0 0
    %1359 = vmatprep.subr.bf16.mxu0 0
    %1360 = vmatpush1.bf16.msra.mxu0 0
    %1361 = vmatprep.subr.bf16.mxu0 0
    %1362 = vmatpush1.bf16.msra.mxu0 0
    %1363 = vmatprep.subr.bf16.mxu0 0
    %1364 = vmatpush1.bf16.msra.mxu0 0
    %1365 = vmatprep.subr.bf16.mxu0 0
    %1366 = vmatpush1.bf16.msra.mxu0 0
    %1367 = vmatprep.subr.bf16.mxu0 0
    %1368 = vmatpush1.bf16.msra.mxu0 0
    %1369 = vmatprep.subr.bf16.mxu0 0
    %1370 = vmatpush1.bf16.msra.mxu0 0
    %1371 = vmatprep.subr.bf16.mxu0 0
    %1372 = vmatpush1.bf16.msra.mxu0 0
    %1373 = vmatprep.mubr.bf16.mxu0 0
    %1374 = vmatmul.mubr.bf16.gmra.mrb[0].mxu0 %v1339
    %v1375 = vpop.f32.mrb[0].mxu0
    %v1376 = vadd.f32 0.0, %v1375
    %v1377 = vpop.f32.mrb[0].mxu0
    %v1378 = vpop.f32.mrb[0].mxu0
    %v1379 = vpop.f32.mrb[0].mxu0
    %1380 = vdwg.mxu0
    %v1381 = vld [vmem:[#allocation4 + $0x10] sm:$0xc]
    %v1382 = vld [vmem:[#allocation4] sm:$0x30]
    %v1383 = vld [vmem:[#allocation4 + $0x8] sm:$0x30]
    %v1385 = vrot.slane %v1332, 6
    %v1387 = vadd.f32 %v1381, %v1385
    %v1388 = vxor.u32 %v1387, 2147483648
    %v1389 = vmul.f32 %v1388, 1.442695
    %v1390 = vpow.pop %v1389
    %v1391 = vadd.f32 %v1390, 1.0
    %v1392 = vrcp.pop %v1391
    %v1393 = vmul.f32 1.0, %v1392
    %v1394 = vadd.f32 %v1332, %v482
    %v1396 = vrot.slane %v1394, 6
    %1397 = vrot.lane.b32.xlu0 %v1396, 64
    %v1398 = vpop.permute.xlu0 %1397
    %v1400 = vmul.f32 %v1393, %v1398
    %1402 = vrot.lane.b32.xlu0 %v1400, 64
    %v1403 = vpop.permute.xlu0 %1402
    %v1405 = vadd.f32 %v1381, %v1403
    %v1406 = vtanh.pop %v1405
    %v1408 = vrot.slane %v1376, 4
    %1409 = vrot.lane.b32.xlu0 %v1408, 96
    %v1410 = vpop.permute.xlu0 %1409
    %v1412 = vadd.f32 %v1382, %v1410
    %v1413 = vxor.u32 %v1412, 2147483648
    %v1414 = vmul.f32 %v1413, 1.442695
    %v1415 = vpow.pop %v1414
    %v1416 = vadd.f32 %v1415, 1.0
    %v1417 = vrcp.pop %v1416
    %v1418 = vmul.f32 1.0, %v1417
    %v1419 = vadd.f32 %v1383, %v1410
    %v1420 = vxor.u32 %v1419, 2147483648
    %v1421 = vmul.f32 %v1420, 1.442695
    %v1422 = vpow.pop %v1421
    %v1423 = vadd.f32 %v1422, 1.0
    %v1424 = vrcp.pop %v1423
    %v1425 = vmul.f32 1.0, %v1424
    %v1426 = vadd.f32 %v1376, %v516
    %v1428 = vrot.slane %v1426, 4
    %1429 = vrot.lane.b32.xlu0 %v1428, 32
    %v1430 = vpop.permute.xlu0 %1429
    %v1432 = vmul.f32 %v1418, %v1430
    %1434 = vrot.lane.b32.xlu0 %v1432, 64
    %v1435 = vpop.permute.xlu0 %1434
    %v1437 = vadd.f32 %v1383, %v1435
    %v1438 = vtanh.pop %v1437
    %v1439 = vsub.f32 1.0, %v1393
    %1441 = vrot.lane.b32.xlu0 %v1406, 96
    %v1442 = vpop.permute.xlu0 %1441
    %v1444 = vmul.f32 %v1439, %v1442
    %v1446 = vrot.slane %v1265, 6
    %v1448 = vmul.f32 %v1393, %v1446
    %v1449 = vadd.f32 %v1444, %v1448
    %v1450 = vsub.f32 1.0, %v1425
    %1452 = vrot.lane.b32.xlu0 %v1438, 96
    %v1453 = vpop.permute.xlu0 %1452
    %v1455 = vmul.f32 %v1450, %v1453
    %v1457 = vrot.slane %v1276, 2
    %v1459 = vmul.f32 %v1425, %v1457
    %v1460 = vadd.f32 %v1455, %v1459
    %v1461 = vpack.c.bf16 %v1449, %v1449
    %v1463 = vrot.slane %v1461, 4
    %1464 = vrot.lane.b32.xlu0 %v1463, 96
    %v1465 = vpop.permute.xlu0 %1464
    %vm1467 = vcmask 259077
    %1468 = vst.msk [vmem:[#allocation2] sm:$0x20] %vm1467, %v1465
    %v1469 = vpack.c.bf16 %v1460, %v1460
    %1471 = vrot.lane.b32.xlu0 %v1469, 32
    %v1472 = vpop.permute.xlu0 %1471
    %vm1474 = vcmask 518402
    %1475 = vst.msk [vmem:[#allocation2] sm:$0x4] %vm1474, %v1472
    %v1476 = vrot.slane %v1461, 1
    %1477 = vrot.lane.b32.xlu0 %v1476, 96
    %v1478 = vpop.permute.xlu0 %1477
    %v1480 = vsel %vm292, %v1478, 0
    %1482 = vmatprep.subr.bf16.mxu0 0
    %1483 = vmatpush1.bf16.msra.mxu0 %v372
    %1484 = vmatprep.subr.bf16.mxu0 0
    %1485 = vmatpush1.bf16.msra.mxu0 %v373
    %1486 = vmatprep.subr.bf16.mxu0 0
    %1487 = vmatpush1.bf16.msra.mxu0 0
    %1488 = vmatprep.subr.bf16.mxu0 0
    %1489 = vmatpush1.bf16.msra.mxu0 0
    %1490 = vmatprep.subr.bf16.mxu0 0
    %1491 = vmatpush1.bf16.msra.mxu0 0
    %1492 = vmatprep.subr.bf16.mxu0 0
    %1493 = vmatpush1.bf16.msra.mxu0 0
    %1494 = vmatprep.subr.bf16.mxu0 0
    %1495 = vmatpush1.bf16.msra.mxu0 0
    %1496 = vmatprep.subr.bf16.mxu0 0
    %1497 = vmatpush1.bf16.msra.mxu0 0
    %1498 = vmatprep.subr.bf16.mxu0 0
    %1499 = vmatpush1.bf16.msra.mxu0 0
    %1500 = vmatprep.subr.bf16.mxu0 0
    %1501 = vmatpush1.bf16.msra.mxu0 0
    %1502 = vmatprep.subr.bf16.mxu0 0
    %1503 = vmatpush1.bf16.msra.mxu0 0
    %1504 = vmatprep.subr.bf16.mxu0 0
    %1505 = vmatpush1.bf16.msra.mxu0 0
    %1506 = vmatprep.subr.bf16.mxu0 0
    %1507 = vmatpush1.bf16.msra.mxu0 0
    %1508 = vmatprep.subr.bf16.mxu0 0
    %1509 = vmatpush1.bf16.msra.mxu0 0
    %1510 = vmatprep.subr.bf16.mxu0 0
    %1511 = vmatpush1.bf16.msra.mxu0 0
    %1512 = vmatprep.subr.bf16.mxu0 0
    %1513 = vmatpush1.bf16.msra.mxu0 0
    %1514 = vmatprep.mubr.bf16.mxu0 0
    %1515 = vmatmul.mubr.bf16.gmra.mrb[0].mxu0 %v1480
    %v1516 = vpop.f32.mrb[0].mxu0
    %v1517 = vadd.f32 0.0, %v1516
    %v1518 = vpop.f32.mrb[0].mxu0
    %v1519 = vpop.f32.mrb[0].mxu0
    %v1520 = vpop.f32.mrb[0].mxu0
    %1521 = vdwg.mxu0
    %v1522 = vrot.slane %v1469, 2
    %v1524 = vsel %vm292, %v1522, 0
    %1526 = vmatprep.subr.bf16.mxu0 0
    %1527 = vmatpush1.bf16.msra.mxu0 %v427
    %1528 = vmatprep.subr.bf16.mxu0 0
    %1529 = vmatpush1.bf16.msra.mxu0 %v428
    %1530 = vmatprep.subr.bf16.mxu0 0
    %1531 = vmatpush1.bf16.msra.mxu0 0
    %1532 = vmatprep.subr.bf16.mxu0 0
    %1533 = vmatpush1.bf16.msra.mxu0 0
    %1534 = vmatprep.subr.bf16.mxu0 0
    %1535 = vmatpush1.bf16.msra.mxu0 0
    %1536 = vmatprep.subr.bf16.mxu0 0
    %1537 = vmatpush1.bf16.msra.mxu0 0
    %1538 = vmatprep.subr.bf16.mxu0 0
    %1539 = vmatpush1.bf16.msra.mxu0 0
    %1540 = vmatprep.subr.bf16.mxu0 0
    %1541 = vmatpush1.bf16.msra.mxu0 0
    %1542 = vmatprep.subr.bf16.mxu0 0
    %1543 = vmatpush1.bf16.msra.mxu0 0
    %1544 = vmatprep.subr.bf16.mxu0 0
    %1545 = vmatpush1.bf16.msra.mxu0 0
    %1546 = vmatprep.subr.bf16.mxu0 0
    %1547 = vmatpush1.bf16.msra.mxu0 0
    %1548 = vmatprep.subr.bf16.mxu0 0
    %1549 = vmatpush1.bf16.msra.mxu0 0
    %1550 = vmatprep.subr.bf16.mxu0 0
    %1551 = vmatpush1.bf16.msra.mxu0 0
    %1552 = vmatprep.subr.bf16.mxu0 0
    %1553 = vmatpush1.bf16.msra.mxu0 0
    %1554 = vmatprep.subr.bf16.mxu0 0
    %1555 = vmatpush1.bf16.msra.mxu0 0
    %1556 = vmatprep.subr.bf16.mxu0 0
    %1557 = vmatpush1.bf16.msra.mxu0 0
    %1558 = vmatprep.mubr.bf16.mxu0 0
    %1559 = vmatmul.mubr.bf16.gmra.mrb[0].mxu0 %v1524
    %v1560 = vpop.f32.mrb[0].mxu0
    %v1561 = vadd.f32 0.0, %v1560
    %v1562 = vpop.f32.mrb[0].mxu0
    %v1563 = vpop.f32.mrb[0].mxu0
    %v1564 = vpop.f32.mrb[0].mxu0
    %1565 = vdwg.mxu0
    %v1566 = vld [vmem:[#allocation4 + $0x10] sm:$0x30]
    %v1567 = vld [vmem:[#allocation4] sm:$0xc]
    %v1568 = vld [vmem:[#allocation4 + $0x8] sm:$0xc]
    %v1570 = vrot.slane %v1517, 4
    %v1572 = vadd.f32 %v1566, %v1570
    %v1573 = vxor.u32 %v1572, 2147483648
    %v1574 = vmul.f32 %v1573, 1.442695
    %v1575 = vpow.pop %v1574
    %v1576 = vadd.f32 %v1575, 1.0
    %v1577 = vrcp.pop %v1576
    %v1578 = vmul.f32 1.0, %v1577
    %v1579 = vadd.f32 %v1517, %v482
    %v1581 = vrot.slane %v1579, 4
    %1582 = vrot.lane.b32.xlu0 %v1581, 64
    %v1583 = vpop.permute.xlu0 %1582
    %v1585 = vmul.f32 %v1578, %v1583
    %1587 = vrot.lane.b32.xlu0 %v1585, 64
    %v1588 = vpop.permute.xlu0 %1587
    %v1590 = vadd.f32 %v1566, %v1588
    %v1591 = vtanh.pop %v1590
    %v1593 = vrot.slane %v1561, 6
    %1594 = vrot.lane.b32.xlu0 %v1593, 96
    %v1595 = vpop.permute.xlu0 %1594
    %v1597 = vadd.f32 %v1567, %v1595
    %v1598 = vxor.u32 %v1597, 2147483648
    %v1599 = vmul.f32 %v1598, 1.442695
    %v1600 = vpow.pop %v1599
    %v1601 = vadd.f32 %v1600, 1.0
    %v1602 = vrcp.pop %v1601
    %v1603 = vmul.f32 1.0, %v1602
    %v1604 = vadd.f32 %v1568, %v1595
    %v1605 = vxor.u32 %v1604, 2147483648
    %v1606 = vmul.f32 %v1605, 1.442695
    %v1607 = vpow.pop %v1606
    %v1608 = vadd.f32 %v1607, 1.0
    %v1609 = vrcp.pop %v1608
    %v1610 = vmul.f32 1.0, %v1609
    %v1611 = vadd.f32 %v1561, %v516
    %v1613 = vrot.slane %v1611, 6
    %1614 = vrot.lane.b32.xlu0 %v1613, 32
    %v1615 = vpop.permute.xlu0 %1614
    %v1617 = vmul.f32 %v1603, %v1615
    %1619 = vrot.lane.b32.xlu0 %v1617, 64
    %v1620 = vpop.permute.xlu0 %1619
    %v1622 = vadd.f32 %v1568, %v1620
    %v1623 = vtanh.pop %v1622
    %v1624 = vsub.f32 1.0, %v1578
    %1626 = vrot.lane.b32.xlu0 %v1591, 96
    %v1627 = vpop.permute.xlu0 %1626
    %v1629 = vmul.f32 %v1624, %v1627
    %v1631 = vrot.slane %v1449, 6
    %v1633 = vmul.f32 %v1578, %v1631
    %v1634 = vadd.f32 %v1629, %v1633
    %v1635 = vsub.f32 1.0, %v1610
    %1637 = vrot.lane.b32.xlu0 %v1623, 96
    %v1638 = vpop.permute.xlu0 %1637
    %v1640 = vmul.f32 %v1635, %v1638
    %v1642 = vrot.slane %v1460, 2
    %v1644 = vmul.f32 %v1610, %v1642
    %v1645 = vadd.f32 %v1640, %v1644
    %v1646 = vpack.c.bf16 %v1634, %v1634
    %v1648 = vrot.slane %v1646, 4
    %1649 = vrot.lane.b32.xlu0 %v1648, 96
    %v1650 = vpop.permute.xlu0 %1649
    %vm1652 = vcmask 260102
    %1653 = vst.msk [vmem:[#allocation2] sm:$0x40] %vm1652, %v1650
    %v1654 = vpack.c.bf16 %v1645, %v1645
    %1656 = vrot.lane.b32.xlu0 %v1654, 32
    %v1657 = vpop.permute.xlu0 %1656
    %vm1659 = vcmask 517377
    %1660 = vst.msk [vmem:[#allocation2] sm:$0x2] %vm1659, %v1657
    %v1661 = vrot.slane %v1646, 2
    %1662 = vrot.lane.b32.xlu0 %v1661, 96
    %v1663 = vpop.permute.xlu0 %1662
    %v1665 = vsel %vm292, %v1663, 0
    %1667 = vmatprep.subr.bf16.mxu0 0
    %1668 = vmatpush1.bf16.msra.mxu0 %v372
    %1669 = vmatprep.subr.bf16.mxu0 0
    %1670 = vmatpush1.bf16.msra.mxu0 %v373
    %1671 = vmatprep.subr.bf16.mxu0 0
    %1672 = vmatpush1.bf16.msra.mxu0 0
    %1673 = vmatprep.subr.bf16.mxu0 0
    %1674 = vmatpush1.bf16.msra.mxu0 0
    %1675 = vmatprep.subr.bf16.mxu0 0
    %1676 = vmatpush1.bf16.msra.mxu0 0
    %1677 = vmatprep.subr.bf16.mxu0 0
    %1678 = vmatpush1.bf16.msra.mxu0 0
    %1679 = vmatprep.subr.bf16.mxu0 0
    %1680 = vmatpush1.bf16.msra.mxu0 0
    %1681 = vmatprep.subr.bf16.mxu0 0
    %1682 = vmatpush1.bf16.msra.mxu0 0
    %1683 = vmatprep.subr.bf16.mxu0 0
    %1684 = vmatpush1.bf16.msra.mxu0 0
    %1685 = vmatprep.subr.bf16.mxu0 0
    %1686 = vmatpush1.bf16.msra.mxu0 0
    %1687 = vmatprep.subr.bf16.mxu0 0
    %1688 = vmatpush1.bf16.msra.mxu0 0
    %1689 = vmatprep.subr.bf16.mxu0 0
    %1690 = vmatpush1.bf16.msra.mxu0 0
    %1691 = vmatprep.subr.bf16.mxu0 0
    %1692 = vmatpush1.bf16.msra.mxu0 0
    %1693 = vmatprep.subr.bf16.mxu0 0
    %1694 = vmatpush1.bf16.msra.mxu0 0
    %1695 = vmatprep.subr.bf16.mxu0 0
    %1696 = vmatpush1.bf16.msra.mxu0 0
    %1697 = vmatprep.subr.bf16.mxu0 0
    %1698 = vmatpush1.bf16.msra.mxu0 0
    %1699 = vmatprep.mubr.bf16.mxu0 0
    %1700 = vmatmul.mubr.bf16.gmra.mrb[0].mxu0 %v1665
    %v1701 = vpop.f32.mrb[0].mxu0
    %v1702 = vadd.f32 0.0, %v1701
    %v1703 = vpop.f32.mrb[0].mxu0
    %v1704 = vpop.f32.mrb[0].mxu0
    %v1705 = vpop.f32.mrb[0].mxu0
    %1706 = vdwg.mxu0
    %v1707 = vrot.slane %v1654, 1
    %v1709 = vsel %vm292, %v1707, 0
    %1711 = vmatprep.subr.bf16.mxu0 0
    %1712 = vmatpush1.bf16.msra.mxu0 %v427
    %1713 = vmatprep.subr.bf16.mxu0 0
    %1714 = vmatpush1.bf16.msra.mxu0 %v428
    %1715 = vmatprep.subr.bf16.mxu0 0
    %1716 = vmatpush1.bf16.msra.mxu0 0
    %1717 = vmatprep.subr.bf16.mxu0 0
    %1718 = vmatpush1.bf16.msra.mxu0 0
    %1719 = vmatprep.subr.bf16.mxu0 0
    %1720 = vmatpush1.bf16.msra.mxu0 0
    %1721 = vmatprep.subr.bf16.mxu0 0
    %1722 = vmatpush1.bf16.msra.mxu0 0
    %1723 = vmatprep.subr.bf16.mxu0 0
    %1724 = vmatpush1.bf16.msra.mxu0 0
    %1725 = vmatprep.subr.bf16.mxu0 0
    %1726 = vmatpush1.bf16.msra.mxu0 0
    %1727 = vmatprep.subr.bf16.mxu0 0
    %1728 = vmatpush1.bf16.msra.mxu0 0
    %1729 = vmatprep.subr.bf16.mxu0 0
    %1730 = vmatpush1.bf16.msra.mxu0 0
    %1731 = vmatprep.subr.bf16.mxu0 0
    %1732 = vmatpush1.bf16.msra.mxu0 0
    %1733 = vmatprep.subr.bf16.mxu0 0
    %1734 = vmatpush1.bf16.msra.mxu0 0
    %1735 = vmatprep.subr.bf16.mxu0 0
    %1736 = vmatpush1.bf16.msra.mxu0 0
    %1737 = vmatprep.subr.bf16.mxu0 0
    %1738 = vmatpush1.bf16.msra.mxu0 0
    %1739 = vmatprep.subr.bf16.mxu0 0
    %1740 = vmatpush1.bf16.msra.mxu0 0
    %1741 = vmatprep.subr.bf16.mxu0 0
    %1742 = vmatpush1.bf16.msra.mxu0 0
    %1743 = vmatprep.mubr.bf16.mxu0 0
    %1744 = vmatmul.mubr.bf16.gmra.mrb[0].mxu0 %v1709
    %v1745 = vpop.f32.mrb[0].mxu0
    %v1746 = vadd.f32 0.0, %v1745
    %v1747 = vpop.f32.mrb[0].mxu0
    %v1748 = vpop.f32.mrb[0].mxu0
    %v1749 = vpop.f32.mrb[0].mxu0
    %1750 = vdwg.mxu0
    %v1751 = vld [vmem:[#allocation4 + $0x10] sm:$0xc0]
    %v1752 = vld [vmem:[#allocation4] sm:$0x3]
    %v1753 = vld [vmem:[#allocation4 + $0x8] sm:$0x3]
    %v1755 = vrot.slane %v1702, 2
    %v1757 = vadd.f32 %v1751, %v1755
    %v1758 = vxor.u32 %v1757, 2147483648
    %v1759 = vmul.f32 %v1758, 1.442695
    %v1760 = vpow.pop %v1759
    %v1761 = vadd.f32 %v1760, 1.0
    %v1762 = vrcp.pop %v1761
    %v1763 = vmul.f32 1.0, %v1762
    %v1764 = vadd.f32 %v1702, %v482
    %v1766 = vrot.slane %v1764, 2
    %1767 = vrot.lane.b32.xlu0 %v1766, 64
    %v1768 = vpop.permute.xlu0 %1767
    %v1770 = vmul.f32 %v1763, %v1768
    %1772 = vrot.lane.b32.xlu0 %v1770, 64
    %v1773 = vpop.permute.xlu0 %1772
    %v1775 = vadd.f32 %v1751, %v1773
    %v1776 = vtanh.pop %v1775
    %1778 = vrot.lane.b32.xlu0 %v1746, 96
    %v1779 = vpop.permute.xlu0 %1778
    %v1781 = vadd.f32 %v1752, %v1779
    %v1782 = vxor.u32 %v1781, 2147483648
    %v1783 = vmul.f32 %v1782, 1.442695
    %v1784 = vpow.pop %v1783
    %v1785 = vadd.f32 %v1784, 1.0
    %v1786 = vrcp.pop %v1785
    %v1787 = vmul.f32 1.0, %v1786
    %v1788 = vadd.f32 %v1753, %v1779
    %v1789 = vxor.u32 %v1788, 2147483648
    %v1790 = vmul.f32 %v1789, 1.442695
    %v1791 = vpow.pop %v1790
    %v1792 = vadd.f32 %v1791, 1.0
    %v1793 = vrcp.pop %v1792
    %v1794 = vmul.f32 1.0, %v1793
    %v1795 = vadd.f32 %v1746, %v516
    %1797 = vrot.lane.b32.xlu0 %v1795, 32
    %v1798 = vpop.permute.xlu0 %1797
    %v1800 = vmul.f32 %v1787, %v1798
    %1802 = vrot.lane.b32.xlu0 %v1800, 64
    %v1803 = vpop.permute.xlu0 %1802
    %v1805 = vadd.f32 %v1753, %v1803
    %v1806 = vtanh.pop %v1805
    %v1807 = vsub.f32 1.0, %v1763
    %1809 = vrot.lane.b32.xlu0 %v1776, 96
    %v1810 = vpop.permute.xlu0 %1809
    %v1812 = vmul.f32 %v1807, %v1810
    %v1814 = vrot.slane %v1634, 6
    %v1816 = vmul.f32 %v1763, %v1814
    %v1817 = vadd.f32 %v1812, %v1816
    %v1818 = vsub.f32 1.0, %v1794
    %1820 = vrot.lane.b32.xlu0 %v1806, 96
    %v1821 = vpop.permute.xlu0 %1820
    %v1823 = vmul.f32 %v1818, %v1821
    %v1825 = vrot.slane %v1645, 2
    %v1827 = vmul.f32 %v1794, %v1825
    %v1828 = vadd.f32 %v1823, %v1827
    %v1829 = vpack.c.bf16 %v1817, %v1817
    %v1831 = vrot.slane %v1829, 4
    %1832 = vrot.lane.b32.xlu0 %v1831, 96
    %v1833 = vpop.permute.xlu0 %1832
    %vm1835 = vcmask 261127
    %1836 = vst.msk [vmem:[#allocation2] sm:$0x80] %vm1835, %v1833
    %v1837 = vpack.c.bf16 %v1828, %v1828
    %1839 = vrot.lane.b32.xlu0 %v1837, 32
    %v1840 = vpop.permute.xlu0 %1839
    %vm1842 = vcmask 516352
    %1843 = vst.msk [vmem:[#allocation2] sm:$0x1] %vm1842, %v1840
    %v1844 = vld [vmem:[#allocation2] sm:$0xff]
    %v1845 = vld [vmem:[%s15] sm:$0xff]
    %v1846 = vld [vmem:[%s15 + $0x8] sm:$0xff]
    %v1847 = vld [vmem:[%s15 + $0x10] sm:$0xff]
    %v1848 = vld [vmem:[%s15 + $0x18] sm:$0xff]
    %v1849 = vld [vmem:[%s15 + $0x20] sm:$0xff]
    %v1850 = vld [vmem:[%s15 + $0x28] sm:$0xff]
    %v1851 = vld [vmem:[%s15 + $0x30] sm:$0xff]
    %v1852 = vld [vmem:[%s15 + $0x38] sm:$0xff]
    %v1853 = vld [vmem:[%s17] sm:$0x3]
    %v1855 = vlaneseq
    %v1856 = vshrl.u32 %v1855, 7
    %v1857 = vsub.s32 0, %v1856
    %v1858 = vrot.slane %v1853, %v1857
    %v1859 = vlaneseq
    %v1860 = vshrl.u32 %v1859, 7
    %v1861 = vsub.s32 1, %v1860
    %v1862 = vrot.slane %v1853, %v1861
    %v1873 = vunpack.c.l.b16 %v1845
    %v1874 = vunpack.c.h.b16 %v1845
    %v1875 = vunpack.c.l.b16 %v1846
    %v1876 = vunpack.c.h.b16 %v1846
    %v1877 = vunpack.c.l.b16 %v1847
    %v1878 = vunpack.c.h.b16 %v1847
    %v1879 = vunpack.c.l.b16 %v1848
    %v1880 = vunpack.c.h.b16 %v1848
    %v1881 = vunpack.c.l.b16 %v1849
    %v1882 = vunpack.c.h.b16 %v1849
    %v1883 = vunpack.c.l.b16 %v1850
    %v1884 = vunpack.c.h.b16 %v1850
    %v1885 = vunpack.c.l.b16 %v1851
    %v1886 = vunpack.c.h.b16 %v1851
    %v1887 = vunpack.c.l.b16 %v1852
    %v1888 = vunpack.c.h.b16 %v1852
    %v1889 = vpack.c.b16 %v1875, %v1873
    %v1890 = vpack.c.b16 %v1876, %v1874
    %v1891 = vpack.c.b16 %v1879, %v1877
    %v1892 = vpack.c.b16 %v1880, %v1878
    %v1893 = vpack.c.b16 %v1883, %v1881
    %v1894 = vpack.c.b16 %v1884, %v1882
    %v1895 = vpack.c.b16 %v1887, %v1885
    %v1896 = vpack.c.b16 %v1888, %v1886
    %v1906 = vsel %vm340, %v1844, 0
    %1908 = vmatprep.subr.bf16.mxu0 %v1890
    %1909 = vmatpush1.bf16.msra.mxu0 %v1889
    %1910 = vmatprep.subr.bf16.mxu0 %v1892
    %1911 = vmatpush1.bf16.msra.mxu0 %v1891
    %1912 = vmatprep.subr.bf16.mxu0 %v1894
    %1913 = vmatpush1.bf16.msra.mxu0 %v1893
    %1914 = vmatprep.subr.bf16.mxu0 %v1896
    %1915 = vmatpush1.bf16.msra.mxu0 %v1895
    %1916 = vmatprep.subr.bf16.mxu0 0
    %1917 = vmatpush1.bf16.msra.mxu0 0
    %1918 = vmatprep.subr.bf16.mxu0 0
    %1919 = vmatpush1.bf16.msra.mxu0 0
    %1920 = vmatprep.subr.bf16.mxu0 0
    %1921 = vmatpush1.bf16.msra.mxu0 0
    %1922 = vmatprep.subr.bf16.mxu0 0
    %1923 = vmatpush1.bf16.msra.mxu0 0
    %1924 = vmatprep.subr.bf16.mxu0 0
    %1925 = vmatpush1.bf16.msra.mxu0 0
    %1926 = vmatprep.subr.bf16.mxu0 0
    %1927 = vmatpush1.bf16.msra.mxu0 0
    %1928 = vmatprep.subr.bf16.mxu0 0
    %1929 = vmatpush1.bf16.msra.mxu0 0
    %1930 = vmatprep.subr.bf16.mxu0 0
    %1931 = vmatpush1.bf16.msra.mxu0 0
    %1932 = vmatprep.subr.bf16.mxu0 0
    %1933 = vmatpush1.bf16.msra.mxu0 0
    %1934 = vmatprep.subr.bf16.mxu0 0
    %1935 = vmatpush1.bf16.msra.mxu0 0
    %1936 = vmatprep.subr.bf16.mxu0 0
    %1937 = vmatpush1.bf16.msra.mxu0 0
    %1938 = vmatprep.subr.bf16.mxu0 0
    %1939 = vmatpush1.bf16.msra.mxu0 0
    %1940 = vmatprep.mubr.bf16.mxu0 0
    %1941 = vmatmul.mubr.bf16.gmra.mrb[0].mxu0 %v1906
    %v1942 = vpop.f32.mrb[0].mxu0
    %v1943 = vadd.f32 %v1858, %v1942
    %v1944 = vpop.f32.mrb[0].mxu0
    %v1945 = vadd.f32 %v1862, %v1944
    %v1946 = vpop.f32.mrb[0].mxu0
    %v1947 = vadd.f32 %v1858, %v1946
    %v1948 = vpop.f32.mrb[0].mxu0
    %v1949 = vadd.f32 %v1862, %v1948
    %1950 = vdwg.mxu0
    %1951 = vst [vmem:[#allocation4] sm:$0xff] %v1943
    %1952 = vst.msk [vmem:[#allocation4 + $0x8] sm:$0xff] %vm340, %v1945
    %1953 = vst [vmem:[#allocation4 + $0x10] sm:$0xff] %v1947
    %1954 = vst.msk [vmem:[#allocation4 + $0x18] sm:$0xff] %vm340, %v1949
    %v1955 = vld [vmem:[%s19] sm:$0xf]
    %v1956 = vld [vmem:[%s19 + $0x4] sm:$0xf]
    %v1957 = vld [vmem:[%s19 + $0x8] sm:$0xf]
    %v1958 = vld [vmem:[%s19 + $0xc] sm:$0xf]
    %v1959 = vld [vmem:[%s21] sm:$0xf]
    %v1960 = vld [vmem:[%s21 + $0x4] sm:$0xf]
    %v1961 = vld [vmem:[%s21 + $0x8] sm:$0xf]
    %v1962 = vld [vmem:[%s21 + $0xc] sm:$0xf]
    %v1963 = vld [vmem:[%s23] sm:$0x1]
    %v1965 = vlaneseq
    %v1966 = vshrl.u32 %v1965, 7
    %v1967 = vsub.s32 0, %v1966
    %v1968 = vrot.slane %v1963, %v1967
    %v1969 = vld [vmem:[%s25] sm:$0x1]
    %v1971 = vlaneseq
    %v1972 = vshrl.u32 %v1971, 7
    %v1973 = vsub.s32 0, %v1972
    %v1974 = vrot.slane %v1969, %v1973
    %v1979 = vunpack.c.l.b16 %v1955
    %v1980 = vunpack.c.l.b16 %v1956
    %v1981 = vunpack.c.l.b16 %v1957
    %v1982 = vunpack.c.l.b16 %v1958
    %v1983 = vpack.c.b16 %v1980, %v1979
    %v1984 = vpack.c.b16 %v1982, %v1981
    %1987 = vmatprep.subr.bf16.mxu0 0
    %1988 = vmatpush1.bf16.msra.mxu0 %v1983
    %1989 = vmatprep.subr.bf16.mxu0 0
    %1990 = vmatpush1.bf16.msra.mxu0 %v1984
    %1991 = vmatprep.subr.bf16.mxu0 0
    %1992 = vmatpush1.bf16.msra.mxu0 0
    %1993 = vmatprep.subr.bf16.mxu0 0
    %1994 = vmatpush1.bf16.msra.mxu0 0
    %1995 = vmatprep.subr.bf16.mxu0 0
    %1996 = vmatpush1.bf16.msra.mxu0 0
    %1997 = vmatprep.subr.bf16.mxu0 0
    %1998 = vmatpush1.bf16.msra.mxu0 0
    %1999 = vmatprep.subr.bf16.mxu0 0
    %2000 = vmatpush1.bf16.msra.mxu0 0
    %2001 = vmatprep.subr.bf16.mxu0 0
    %2002 = vmatpush1.bf16.msra.mxu0 0
    %2003 = vmatprep.subr.bf16.mxu0 0
    %2004 = vmatpush1.bf16.msra.mxu0 0
    %2005 = vmatprep.subr.bf16.mxu0 0
    %2006 = vmatpush1.bf16.msra.mxu0 0
    %2007 = vmatprep.subr.bf16.mxu0 0
    %2008 = vmatpush1.bf16.msra.mxu0 0
    %2009 = vmatprep.subr.bf16.mxu0 0
    %2010 = vmatpush1.bf16.msra.mxu0 0
    %2011 = vmatprep.subr.bf16.mxu0 0
    %2012 = vmatpush1.bf16.msra.mxu0 0
    %2013 = vmatprep.subr.bf16.mxu0 0
    %2014 = vmatpush1.bf16.msra.mxu0 0
    %2015 = vmatprep.subr.bf16.mxu0 0
    %2016 = vmatpush1.bf16.msra.mxu0 0
    %2017 = vmatprep.subr.bf16.mxu0 0
    %2018 = vmatpush1.bf16.msra.mxu0 0
    %2019 = vmatprep.mubr.bf16.mxu0 0
    %2020 = vmatmul.mubr.bf16.gmra.mrb[0].mxu0 %v377
    %v2021 = vpop.f32.mrb[0].mxu0
    %v2022 = vadd.f32 0.0, %v2021
    %v2023 = vpop.f32.mrb[0].mxu0
    %v2024 = vpop.f32.mrb[0].mxu0
    %v2025 = vpop.f32.mrb[0].mxu0
    %2026 = vdwg.mxu0
    %v2031 = vunpack.c.l.b16 %v1959
    %v2032 = vunpack.c.l.b16 %v1960
    %v2033 = vunpack.c.l.b16 %v1961
    %v2034 = vunpack.c.l.b16 %v1962
    %v2035 = vpack.c.b16 %v2032, %v2031
    %v2036 = vpack.c.b16 %v2034, %v2033
    %2039 = vmatprep.subr.bf16.mxu0 0
    %2040 = vmatpush1.bf16.msra.mxu0 %v2035
    %2041 = vmatprep.subr.bf16.mxu0 0
    %2042 = vmatpush1.bf16.msra.mxu0 %v2036
    %2043 = vmatprep.subr.bf16.mxu0 0
    %2044 = vmatpush1.bf16.msra.mxu0 0
    %2045 = vmatprep.subr.bf16.mxu0 0
    %2046 = vmatpush1.bf16.msra.mxu0 0
    %2047 = vmatprep.subr.bf16.mxu0 0
    %2048 = vmatpush1.bf16.msra.mxu0 0
    %2049 = vmatprep.subr.bf16.mxu0 0
    %2050 = vmatpush1.bf16.msra.mxu0 0
    %2051 = vmatprep.subr.bf16.mxu0 0
    %2052 = vmatpush1.bf16.msra.mxu0 0
    %2053 = vmatprep.subr.bf16.mxu0 0
    %2054 = vmatpush1.bf16.msra.mxu0 0
    %2055 = vmatprep.subr.bf16.mxu0 0
    %2056 = vmatpush1.bf16.msra.mxu0 0
    %2057 = vmatprep.subr.bf16.mxu0 0
    %2058 = vmatpush1.bf16.msra.mxu0 0
    %2059 = vmatprep.subr.bf16.mxu0 0
    %2060 = vmatpush1.bf16.msra.mxu0 0
    %2061 = vmatprep.subr.bf16.mxu0 0
    %2062 = vmatpush1.bf16.msra.mxu0 0
    %2063 = vmatprep.subr.bf16.mxu0 0
    %2064 = vmatpush1.bf16.msra.mxu0 0
    %2065 = vmatprep.subr.bf16.mxu0 0
    %2066 = vmatpush1.bf16.msra.mxu0 0
    %2067 = vmatprep.subr.bf16.mxu0 0
    %2068 = vmatpush1.bf16.msra.mxu0 0
    %2069 = vmatprep.subr.bf16.mxu0 0
    %2070 = vmatpush1.bf16.msra.mxu0 0
    %2071 = vmatprep.mubr.bf16.mxu0 0
    %2072 = vmatmul.mubr.bf16.gmra.mrb[0].mxu0 %v377
    %v2073 = vpop.f32.mrb[0].mxu0
    %v2074 = vadd.f32 0.0, %v2073
    %v2075 = vpop.f32.mrb[0].mxu0
    %v2076 = vpop.f32.mrb[0].mxu0
    %v2077 = vpop.f32.mrb[0].mxu0
    %2078 = vdwg.mxu0
    %v2079 = vld [vmem:[#allocation4] sm:$0x3]
    %v2080 = vld [vmem:[#allocation4 + $0x10] sm:$0xc0]
    %v2081 = vld [vmem:[#allocation4 + $0x18] sm:$0xc0]
    %v2082 = vadd.f32 %v2079, %v2022
    %v2083 = vxor.u32 %v2082, 2147483648
    %v2084 = vmul.f32 %v2083, 1.442695
    %v2085 = vpow.pop %v2084
    %v2086 = vadd.f32 %v2085, 1.0
    %v2087 = vrcp.pop %v2086
    %v2088 = vmul.f32 1.0, %v2087
    %2089 = vrot.lane.b32.xlu0 %v1968, 64
    %v2090 = vpop.permute.xlu0 %2089
    %v2092 = vadd.f32 %v2022, %v2090
    %2094 = vrot.lane.b32.xlu0 %v2092, 64
    %v2095 = vpop.permute.xlu0 %2094
    %v2097 = vmul.f32 %v2088, %v2095
    %2099 = vrot.lane.b32.xlu0 %v2097, 64
    %v2100 = vpop.permute.xlu0 %2099
    %v2102 = vadd.f32 %v2079, %v2100
    %v2103 = vtanh.pop %v2102
    %v2105 = vrot.slane %v2074, 2
    %2106 = vrot.lane.b32.xlu0 %v2105, 96
    %v2107 = vpop.permute.xlu0 %2106
    %v2109 = vadd.f32 %v2080, %v2107
    %v2110 = vxor.u32 %v2109, 2147483648
    %v2111 = vmul.f32 %v2110, 1.442695
    %v2112 = vpow.pop %v2111
    %v2113 = vadd.f32 %v2112, 1.0
    %v2114 = vrcp.pop %v2113
    %v2115 = vmul.f32 1.0, %v2114
    %v2116 = vadd.f32 %v2081, %v2107
    %v2117 = vxor.u32 %v2116, 2147483648
    %v2118 = vmul.f32 %v2117, 1.442695
    %v2119 = vpow.pop %v2118
    %v2120 = vadd.f32 %v2119, 1.0
    %v2121 = vrcp.pop %v2120
    %v2122 = vmul.f32 1.0, %v2121
    %2123 = vrot.lane.b32.xlu0 %v1974, 64
    %v2124 = vpop.permute.xlu0 %2123
    %v2126 = vadd.f32 %v2074, %v2124
    %v2128 = vrot.slane %v2126, 2
    %2129 = vrot.lane.b32.xlu0 %v2128, 32
    %v2130 = vpop.permute.xlu0 %2129
    %v2132 = vmul.f32 %v2115, %v2130
    %2134 = vrot.lane.b32.xlu0 %v2132, 64
    %v2135 = vpop.permute.xlu0 %2134
    %v2137 = vadd.f32 %v2081, %v2135
    %v2138 = vtanh.pop %v2137
    %v2139 = vsub.f32 1.0, %v2088
    %2141 = vrot.lane.b32.xlu0 %v2103, 96
    %v2142 = vpop.permute.xlu0 %2141
    %v2144 = vmul.f32 %v2139, %v2142
    %v2145 = vmul.f32 %v2088, 0.0
    %v2146 = vadd.f32 %v2144, %v2145
    %v2147 = vsub.f32 1.0, %v2122
    %2149 = vrot.lane.b32.xlu0 %v2138, 96
    %v2150 = vpop.permute.xlu0 %2149
    %v2152 = vmul.f32 %v2147, %v2150
    %v2153 = vmul.f32 %v2122, 0.0
    %v2154 = vadd.f32 %v2152, %v2153
    %v2155 = vpack.c.bf16 %v2146, %v2146
    %2157 = vrot.lane.b32.xlu0 %v2155, 96
    %v2158 = vpop.permute.xlu0 %2157
    %2160 = vst.msk [vmem:[#allocation3] sm:$0x1] %vm552, %v2158
    %v2161 = vpack.c.bf16 %v2154, %v2154
    %v2163 = vrot.slane %v2161, 4
    %2164 = vrot.lane.b32.xlu0 %v2163, 32
    %v2165 = vpop.permute.xlu0 %2164
    %2167 = vst.msk [vmem:[#allocation3] sm:$0x80] %vm560, %v2165
    %v2169 = vsel %vm292, %v2158, 0
    %2171 = vmatprep.subr.bf16.mxu0 0
    %2172 = vmatpush1.bf16.msra.mxu0 %v1983
    %2173 = vmatprep.subr.bf16.mxu0 0
    %2174 = vmatpush1.bf16.msra.mxu0 %v1984
    %2175 = vmatprep.subr.bf16.mxu0 0
    %2176 = vmatpush1.bf16.msra.mxu0 0
    %2177 = vmatprep.subr.bf16.mxu0 0
    %2178 = vmatpush1.bf16.msra.mxu0 0
    %2179 = vmatprep.subr.bf16.mxu0 0
    %2180 = vmatpush1.bf16.msra.mxu0 0
    %2181 = vmatprep.subr.bf16.mxu0 0
    %2182 = vmatpush1.bf16.msra.mxu0 0
    %2183 = vmatprep.subr.bf16.mxu0 0
    %2184 = vmatpush1.bf16.msra.mxu0 0
    %2185 = vmatprep.subr.bf16.mxu0 0
    %2186 = vmatpush1.bf16.msra.mxu0 0
    %2187 = vmatprep.subr.bf16.mxu0 0
    %2188 = vmatpush1.bf16.msra.mxu0 0
    %2189 = vmatprep.subr.bf16.mxu0 0
    %2190 = vmatpush1.bf16.msra.mxu0 0
    %2191 = vmatprep.subr.bf16.mxu0 0
    %2192 = vmatpush1.bf16.msra.mxu0 0
    %2193 = vmatprep.subr.bf16.mxu0 0
    %2194 = vmatpush1.bf16.msra.mxu0 0
    %2195 = vmatprep.subr.bf16.mxu0 0
    %2196 = vmatpush1.bf16.msra.mxu0 0
    %2197 = vmatprep.subr.bf16.mxu0 0
    %2198 = vmatpush1.bf16.msra.mxu0 0
    %2199 = vmatprep.subr.bf16.mxu0 0
    %2200 = vmatpush1.bf16.msra.mxu0 0
    %2201 = vmatprep.subr.bf16.mxu0 0
    %2202 = vmatpush1.bf16.msra.mxu0 0
    %2203 = vmatprep.mubr.bf16.mxu0 0
    %2204 = vmatmul.mubr.bf16.gmra.mrb[0].mxu0 %v2169
    %v2205 = vpop.f32.mrb[0].mxu0
    %v2206 = vadd.f32 0.0, %v2205
    %v2207 = vpop.f32.mrb[0].mxu0
    %v2208 = vpop.f32.mrb[0].mxu0
    %v2209 = vpop.f32.mrb[0].mxu0
    %2210 = vdwg.mxu0
    %v2211 = vrot.slane %v2161, 3
    %v2213 = vsel %vm292, %v2211, 0
    %2215 = vmatprep.subr.bf16.mxu0 0
    %2216 = vmatpush1.bf16.msra.mxu0 %v2035
    %2217 = vmatprep.subr.bf16.mxu0 0
    %2218 = vmatpush1.bf16.msra.mxu0 %v2036
    %2219 = vmatprep.subr.bf16.mxu0 0
    %2220 = vmatpush1.bf16.msra.mxu0 0
    %2221 = vmatprep.subr.bf16.mxu0 0
    %2222 = vmatpush1.bf16.msra.mxu0 0
    %2223 = vmatprep.subr.bf16.mxu0 0
    %2224 = vmatpush1.bf16.msra.mxu0 0
    %2225 = vmatprep.subr.bf16.mxu0 0
    %2226 = vmatpush1.bf16.msra.mxu0 0
    %2227 = vmatprep.subr.bf16.mxu0 0
    %2228 = vmatpush1.bf16.msra.mxu0 0
    %2229 = vmatprep.subr.bf16.mxu0 0
    %2230 = vmatpush1.bf16.msra.mxu0 0
    %2231 = vmatprep.subr.bf16.mxu0 0
    %2232 = vmatpush1.bf16.msra.mxu0 0
    %2233 = vmatprep.subr.bf16.mxu0 0
    %2234 = vmatpush1.bf16.msra.mxu0 0
    %2235 = vmatprep.subr.bf16.mxu0 0
    %2236 = vmatpush1.bf16.msra.mxu0 0
    %2237 = vmatprep.subr.bf16.mxu0 0
    %2238 = vmatpush1.bf16.msra.mxu0 0
    %2239 = vmatprep.subr.bf16.mxu0 0
    %2240 = vmatpush1.bf16.msra.mxu0 0
    %2241 = vmatprep.subr.bf16.mxu0 0
    %2242 = vmatpush1.bf16.msra.mxu0 0
    %2243 = vmatprep.subr.bf16.mxu0 0
    %2244 = vmatpush1.bf16.msra.mxu0 0
    %2245 = vmatprep.subr.bf16.mxu0 0
    %2246 = vmatpush1.bf16.msra.mxu0 0
    %2247 = vmatprep.mubr.bf16.mxu0 0
    %2248 = vmatmul.mubr.bf16.gmra.mrb[0].mxu0 %v2213
    %v2249 = vpop.f32.mrb[0].mxu0
    %v2250 = vadd.f32 0.0, %v2249
    %v2251 = vpop.f32.mrb[0].mxu0
    %v2252 = vpop.f32.mrb[0].mxu0
    %v2253 = vpop.f32.mrb[0].mxu0
    %2254 = vdwg.mxu0
    %v2255 = vld [vmem:[#allocation4] sm:$0xc]
    %v2256 = vld [vmem:[#allocation4 + $0x10] sm:$0x30]
    %v2257 = vld [vmem:[#allocation4 + $0x18] sm:$0x30]
    %v2259 = vrot.slane %v2206, 6
    %v2261 = vadd.f32 %v2255, %v2259
    %v2262 = vxor.u32 %v2261, 2147483648
    %v2263 = vmul.f32 %v2262, 1.442695
    %v2264 = vpow.pop %v2263
    %v2265 = vadd.f32 %v2264, 1.0
    %v2266 = vrcp.pop %v2265
    %v2267 = vmul.f32 1.0, %v2266
    %v2268 = vadd.f32 %v2206, %v2090
    %v2270 = vrot.slane %v2268, 6
    %2271 = vrot.lane.b32.xlu0 %v2270, 64
    %v2272 = vpop.permute.xlu0 %2271
    %v2274 = vmul.f32 %v2267, %v2272
    %2276 = vrot.lane.b32.xlu0 %v2274, 64
    %v2277 = vpop.permute.xlu0 %2276
    %v2279 = vadd.f32 %v2255, %v2277
    %v2280 = vtanh.pop %v2279
    %v2282 = vrot.slane %v2250, 4
    %2283 = vrot.lane.b32.xlu0 %v2282, 96
    %v2284 = vpop.permute.xlu0 %2283
    %v2286 = vadd.f32 %v2256, %v2284
    %v2287 = vxor.u32 %v2286, 2147483648
    %v2288 = vmul.f32 %v2287, 1.442695
    %v2289 = vpow.pop %v2288
    %v2290 = vadd.f32 %v2289, 1.0
    %v2291 = vrcp.pop %v2290
    %v2292 = vmul.f32 1.0, %v2291
    %v2293 = vadd.f32 %v2257, %v2284
    %v2294 = vxor.u32 %v2293, 2147483648
    %v2295 = vmul.f32 %v2294, 1.442695
    %v2296 = vpow.pop %v2295
    %v2297 = vadd.f32 %v2296, 1.0
    %v2298 = vrcp.pop %v2297
    %v2299 = vmul.f32 1.0, %v2298
    %v2300 = vadd.f32 %v2250, %v2124
    %v2302 = vrot.slane %v2300, 4
    %2303 = vrot.lane.b32.xlu0 %v2302, 32
    %v2304 = vpop.permute.xlu0 %2303
    %v2306 = vmul.f32 %v2292, %v2304
    %2308 = vrot.lane.b32.xlu0 %v2306, 64
    %v2309 = vpop.permute.xlu0 %2308
    %v2311 = vadd.f32 %v2257, %v2309
    %v2312 = vtanh.pop %v2311
    %v2313 = vsub.f32 1.0, %v2267
    %2315 = vrot.lane.b32.xlu0 %v2280, 96
    %v2316 = vpop.permute.xlu0 %2315
    %v2318 = vmul.f32 %v2313, %v2316
    %v2320 = vrot.slane %v2146, 6
    %v2322 = vmul.f32 %v2267, %v2320
    %v2323 = vadd.f32 %v2318, %v2322
    %v2324 = vsub.f32 1.0, %v2299
    %2326 = vrot.lane.b32.xlu0 %v2312, 96
    %v2327 = vpop.permute.xlu0 %2326
    %v2329 = vmul.f32 %v2324, %v2327
    %v2331 = vrot.slane %v2154, 2
    %v2333 = vmul.f32 %v2299, %v2331
    %v2334 = vadd.f32 %v2329, %v2333
    %v2335 = vpack.c.bf16 %v2323, %v2323
    %2337 = vrot.lane.b32.xlu0 %v2335, 96
    %v2338 = vpop.permute.xlu0 %2337
    %2340 = vst.msk [vmem:[#allocation3] sm:$0x2] %vm734, %v2338
    %v2341 = vpack.c.bf16 %v2334, %v2334
    %v2343 = vrot.slane %v2341, 4
    %2344 = vrot.lane.b32.xlu0 %v2343, 32
    %v2345 = vpop.permute.xlu0 %2344
    %2347 = vst.msk [vmem:[#allocation3] sm:$0x40] %vm742, %v2345
    %v2348 = vrot.slane %v2335, 1
    %2349 = vrot.lane.b32.xlu0 %v2348, 96
    %v2350 = vpop.permute.xlu0 %2349
    %v2352 = vsel %vm292, %v2350, 0
    %2354 = vmatprep.subr.bf16.mxu0 0
    %2355 = vmatpush1.bf16.msra.mxu0 %v1983
    %2356 = vmatprep.subr.bf16.mxu0 0
    %2357 = vmatpush1.bf16.msra.mxu0 %v1984
    %2358 = vmatprep.subr.bf16.mxu0 0
    %2359 = vmatpush1.bf16.msra.mxu0 0
    %2360 = vmatprep.subr.bf16.mxu0 0
    %2361 = vmatpush1.bf16.msra.mxu0 0
    %2362 = vmatprep.subr.bf16.mxu0 0
    %2363 = vmatpush1.bf16.msra.mxu0 0
    %2364 = vmatprep.subr.bf16.mxu0 0
    %2365 = vmatpush1.bf16.msra.mxu0 0
    %2366 = vmatprep.subr.bf16.mxu0 0
    %2367 = vmatpush1.bf16.msra.mxu0 0
    %2368 = vmatprep.subr.bf16.mxu0 0
    %2369 = vmatpush1.bf16.msra.mxu0 0
    %2370 = vmatprep.subr.bf16.mxu0 0
    %2371 = vmatpush1.bf16.msra.mxu0 0
    %2372 = vmatprep.subr.bf16.mxu0 0
    %2373 = vmatpush1.bf16.msra.mxu0 0
    %2374 = vmatprep.subr.bf16.mxu0 0
    %2375 = vmatpush1.bf16.msra.mxu0 0
    %2376 = vmatprep.subr.bf16.mxu0 0
    %2377 = vmatpush1.bf16.msra.mxu0 0
    %2378 = vmatprep.subr.bf16.mxu0 0
    %2379 = vmatpush1.bf16.msra.mxu0 0
    %2380 = vmatprep.subr.bf16.mxu0 0
    %2381 = vmatpush1.bf16.msra.mxu0 0
    %2382 = vmatprep.subr.bf16.mxu0 0
    %2383 = vmatpush1.bf16.msra.mxu0 0
    %2384 = vmatprep.subr.bf16.mxu0 0
    %2385 = vmatpush1.bf16.msra.mxu0 0
    %2386 = vmatprep.mubr.bf16.mxu0 0
    %2387 = vmatmul.mubr.bf16.gmra.mrb[0].mxu0 %v2352
    %v2388 = vpop.f32.mrb[0].mxu0
    %v2389 = vadd.f32 0.0, %v2388
    %v2390 = vpop.f32.mrb[0].mxu0
    %v2391 = vpop.f32.mrb[0].mxu0
    %v2392 = vpop.f32.mrb[0].mxu0
    %2393 = vdwg.mxu0
    %v2394 = vrot.slane %v2341, 2
    %v2396 = vsel %vm292, %v2394, 0
    %2398 = vmatprep.subr.bf16.mxu0 0
    %2399 = vmatpush1.bf16.msra.mxu0 %v2035
    %2400 = vmatprep.subr.bf16.mxu0 0
    %2401 = vmatpush1.bf16.msra.mxu0 %v2036
    %2402 = vmatprep.subr.bf16.mxu0 0
    %2403 = vmatpush1.bf16.msra.mxu0 0
    %2404 = vmatprep.subr.bf16.mxu0 0
    %2405 = vmatpush1.bf16.msra.mxu0 0
    %2406 = vmatprep.subr.bf16.mxu0 0
    %2407 = vmatpush1.bf16.msra.mxu0 0
    %2408 = vmatprep.subr.bf16.mxu0 0
    %2409 = vmatpush1.bf16.msra.mxu0 0
    %2410 = vmatprep.subr.bf16.mxu0 0
    %2411 = vmatpush1.bf16.msra.mxu0 0
    %2412 = vmatprep.subr.bf16.mxu0 0
    %2413 = vmatpush1.bf16.msra.mxu0 0
    %2414 = vmatprep.subr.bf16.mxu0 0
    %2415 = vmatpush1.bf16.msra.mxu0 0
    %2416 = vmatprep.subr.bf16.mxu0 0
    %2417 = vmatpush1.bf16.msra.mxu0 0
    %2418 = vmatprep.subr.bf16.mxu0 0
    %2419 = vmatpush1.bf16.msra.mxu0 0
    %2420 = vmatprep.subr.bf16.mxu0 0
    %2421 = vmatpush1.bf16.msra.mxu0 0
    %2422 = vmatprep.subr.bf16.mxu0 0
    %2423 = vmatpush1.bf16.msra.mxu0 0
    %2424 = vmatprep.subr.bf16.mxu0 0
    %2425 = vmatpush1.bf16.msra.mxu0 0
    %2426 = vmatprep.subr.bf16.mxu0 0
    %2427 = vmatpush1.bf16.msra.mxu0 0
    %2428 = vmatprep.subr.bf16.mxu0 0
    %2429 = vmatpush1.bf16.msra.mxu0 0
    %2430 = vmatprep.mubr.bf16.mxu0 0
    %2431 = vmatmul.mubr.bf16.gmra.mrb[0].mxu0 %v2396
    %v2432 = vpop.f32.mrb[0].mxu0
    %v2433 = vadd.f32 0.0, %v2432
    %v2434 = vpop.f32.mrb[0].mxu0
    %v2435 = vpop.f32.mrb[0].mxu0
    %v2436 = vpop.f32.mrb[0].mxu0
    %2437 = vdwg.mxu0
    %v2438 = vld [vmem:[#allocation4] sm:$0x30]
    %v2439 = vld [vmem:[#allocation4 + $0x10] sm:$0xc]
    %v2440 = vld [vmem:[#allocation4 + $0x18] sm:$0xc]
    %v2442 = vrot.slane %v2389, 4
    %v2444 = vadd.f32 %v2438, %v2442
    %v2445 = vxor.u32 %v2444, 2147483648
    %v2446 = vmul.f32 %v2445, 1.442695
    %v2447 = vpow.pop %v2446
    %v2448 = vadd.f32 %v2447, 1.0
    %v2449 = vrcp.pop %v2448
    %v2450 = vmul.f32 1.0, %v2449
    %v2451 = vadd.f32 %v2389, %v2090
    %v2453 = vrot.slane %v2451, 4
    %2454 = vrot.lane.b32.xlu0 %v2453, 64
    %v2455 = vpop.permute.xlu0 %2454
    %v2457 = vmul.f32 %v2450, %v2455
    %2459 = vrot.lane.b32.xlu0 %v2457, 64
    %v2460 = vpop.permute.xlu0 %2459
    %v2462 = vadd.f32 %v2438, %v2460
    %v2463 = vtanh.pop %v2462
    %v2465 = vrot.slane %v2433, 6
    %2466 = vrot.lane.b32.xlu0 %v2465, 96
    %v2467 = vpop.permute.xlu0 %2466
    %v2469 = vadd.f32 %v2439, %v2467
    %v2470 = vxor.u32 %v2469, 2147483648
    %v2471 = vmul.f32 %v2470, 1.442695
    %v2472 = vpow.pop %v2471
    %v2473 = vadd.f32 %v2472, 1.0
    %v2474 = vrcp.pop %v2473
    %v2475 = vmul.f32 1.0, %v2474
    %v2476 = vadd.f32 %v2440, %v2467
    %v2477 = vxor.u32 %v2476, 2147483648
    %v2478 = vmul.f32 %v2477, 1.442695
    %v2479 = vpow.pop %v2478
    %v2480 = vadd.f32 %v2479, 1.0
    %v2481 = vrcp.pop %v2480
    %v2482 = vmul.f32 1.0, %v2481
    %v2483 = vadd.f32 %v2433, %v2124
    %v2485 = vrot.slane %v2483, 6
    %2486 = vrot.lane.b32.xlu0 %v2485, 32
    %v2487 = vpop.permute.xlu0 %2486
    %v2489 = vmul.f32 %v2475, %v2487
    %2491 = vrot.lane.b32.xlu0 %v2489, 64
    %v2492 = vpop.permute.xlu0 %2491
    %v2494 = vadd.f32 %v2440, %v2492
    %v2495 = vtanh.pop %v2494
    %v2496 = vsub.f32 1.0, %v2450
    %2498 = vrot.lane.b32.xlu0 %v2463, 96
    %v2499 = vpop.permute.xlu0 %2498
    %v2501 = vmul.f32 %v2496, %v2499
    %v2503 = vrot.slane %v2323, 6
    %v2505 = vmul.f32 %v2450, %v2503
    %v2506 = vadd.f32 %v2501, %v2505
    %v2507 = vsub.f32 1.0, %v2482
    %2509 = vrot.lane.b32.xlu0 %v2495, 96
    %v2510 = vpop.permute.xlu0 %2509
    %v2512 = vmul.f32 %v2507, %v2510
    %v2514 = vrot.slane %v2334, 2
    %v2516 = vmul.f32 %v2482, %v2514
    %v2517 = vadd.f32 %v2512, %v2516
    %v2518 = vpack.c.bf16 %v2506, %v2506
    %2520 = vrot.lane.b32.xlu0 %v2518, 96
    %v2521 = vpop.permute.xlu0 %2520
    %2523 = vst.msk [vmem:[#allocation3] sm:$0x4] %vm919, %v2521
    %v2524 = vpack.c.bf16 %v2517, %v2517
    %v2526 = vrot.slane %v2524, 4
    %2527 = vrot.lane.b32.xlu0 %v2526, 32
    %v2528 = vpop.permute.xlu0 %2527
    %2530 = vst.msk [vmem:[#allocation3] sm:$0x20] %vm927, %v2528
    %v2531 = vrot.slane %v2518, 2
    %2532 = vrot.lane.b32.xlu0 %v2531, 96
    %v2533 = vpop.permute.xlu0 %2532
    %v2535 = vsel %vm292, %v2533, 0
    %2537 = vmatprep.subr.bf16.mxu0 0
    %2538 = vmatpush1.bf16.msra.mxu0 %v1983
    %2539 = vmatprep.subr.bf16.mxu0 0
    %2540 = vmatpush1.bf16.msra.mxu0 %v1984
    %2541 = vmatprep.subr.bf16.mxu0 0
    %2542 = vmatpush1.bf16.msra.mxu0 0
    %2543 = vmatprep.subr.bf16.mxu0 0
    %2544 = vmatpush1.bf16.msra.mxu0 0
    %2545 = vmatprep.subr.bf16.mxu0 0
    %2546 = vmatpush1.bf16.msra.mxu0 0
    %2547 = vmatprep.subr.bf16.mxu0 0
    %2548 = vmatpush1.bf16.msra.mxu0 0
    %2549 = vmatprep.subr.bf16.mxu0 0
    %2550 = vmatpush1.bf16.msra.mxu0 0
    %2551 = vmatprep.subr.bf16.mxu0 0
    %2552 = vmatpush1.bf16.msra.mxu0 0
    %2553 = vmatprep.subr.bf16.mxu0 0
    %2554 = vmatpush1.bf16.msra.mxu0 0
    %2555 = vmatprep.subr.bf16.mxu0 0
    %2556 = vmatpush1.bf16.msra.mxu0 0
    %2557 = vmatprep.subr.bf16.mxu0 0
    %2558 = vmatpush1.bf16.msra.mxu0 0
    %2559 = vmatprep.subr.bf16.mxu0 0
    %2560 = vmatpush1.bf16.msra.mxu0 0
    %2561 = vmatprep.subr.bf16.mxu0 0
    %2562 = vmatpush1.bf16.msra.mxu0 0
    %2563 = vmatprep.subr.bf16.mxu0 0
    %2564 = vmatpush1.bf16.msra.mxu0 0
    %2565 = vmatprep.subr.bf16.mxu0 0
    %2566 = vmatpush1.bf16.msra.mxu0 0
    %2567 = vmatprep.subr.bf16.mxu0 0
    %2568 = vmatpush1.bf16.msra.mxu0 0
    %2569 = vmatprep.mubr.bf16.mxu0 0
    %2570 = vmatmul.mubr.bf16.gmra.mrb[0].mxu0 %v2535
    %v2571 = vpop.f32.mrb[0].mxu0
    %v2572 = vadd.f32 0.0, %v2571
    %v2573 = vpop.f32.mrb[0].mxu0
    %v2574 = vpop.f32.mrb[0].mxu0
    %v2575 = vpop.f32.mrb[0].mxu0
    %2576 = vdwg.mxu0
    %v2577 = vrot.slane %v2524, 1
    %v2579 = vsel %vm292, %v2577, 0
    %2581 = vmatprep.subr.bf16.mxu0 0
    %2582 = vmatpush1.bf16.msra.mxu0 %v2035
    %2583 = vmatprep.subr.bf16.mxu0 0
    %2584 = vmatpush1.bf16.msra.mxu0 %v2036
    %2585 = vmatprep.subr.bf16.mxu0 0
    %2586 = vmatpush1.bf16.msra.mxu0 0
    %2587 = vmatprep.subr.bf16.mxu0 0
    %2588 = vmatpush1.bf16.msra.mxu0 0
    %2589 = vmatprep.subr.bf16.mxu0 0
    %2590 = vmatpush1.bf16.msra.mxu0 0
    %2591 = vmatprep.subr.bf16.mxu0 0
    %2592 = vmatpush1.bf16.msra.mxu0 0
    %2593 = vmatprep.subr.bf16.mxu0 0
    %2594 = vmatpush1.bf16.msra.mxu0 0
    %2595 = vmatprep.subr.bf16.mxu0 0
    %2596 = vmatpush1.bf16.msra.mxu0 0
    %2597 = vmatprep.subr.bf16.mxu0 0
    %2598 = vmatpush1.bf16.msra.mxu0 0
    %2599 = vmatprep.subr.bf16.mxu0 0
    %2600 = vmatpush1.bf16.msra.mxu0 0
    %2601 = vmatprep.subr.bf16.mxu0 0
    %2602 = vmatpush1.bf16.msra.mxu0 0
    %2603 = vmatprep.subr.bf16.mxu0 0
    %2604 = vmatpush1.bf16.msra.mxu0 0
    %2605 = vmatprep.subr.bf16.mxu0 0
    %2606 = vmatpush1.bf16.msra.mxu0 0
    %2607 = vmatprep.subr.bf16.mxu0 0
    %2608 = vmatpush1.bf16.msra.mxu0 0
    %2609 = vmatprep.subr.bf16.mxu0 0
    %2610 = vmatpush1.bf16.msra.mxu0 0
    %2611 = vmatprep.subr.bf16.mxu0 0
    %2612 = vmatpush1.bf16.msra.mxu0 0
    %2613 = vmatprep.mubr.bf16.mxu0 0
    %2614 = vmatmul.mubr.bf16.gmra.mrb[0].mxu0 %v2579
    %v2615 = vpop.f32.mrb[0].mxu0
    %v2616 = vadd.f32 0.0, %v2615
    %v2617 = vpop.f32.mrb[0].mxu0
    %v2618 = vpop.f32.mrb[0].mxu0
    %v2619 = vpop.f32.mrb[0].mxu0
    %2620 = vdwg.mxu0
    %v2621 = vld [vmem:[#allocation4] sm:$0xc0]
    %v2622 = vld [vmem:[#allocation4 + $0x10] sm:$0x3]
    %v2623 = vld [vmem:[#allocation4 + $0x18] sm:$0x3]
    %v2625 = vrot.slane %v2572, 2
    %v2627 = vadd.f32 %v2621, %v2625
    %v2628 = vxor.u32 %v2627, 2147483648
    %v2629 = vmul.f32 %v2628, 1.442695
    %v2630 = vpow.pop %v2629
    %v2631 = vadd.f32 %v2630, 1.0
    %v2632 = vrcp.pop %v2631
    %v2633 = vmul.f32 1.0, %v2632
    %v2634 = vadd.f32 %v2572, %v2090
    %v2636 = vrot.slane %v2634, 2
    %2637 = vrot.lane.b32.xlu0 %v2636, 64
    %v2638 = vpop.permute.xlu0 %2637
    %v2640 = vmul.f32 %v2633, %v2638
    %2642 = vrot.lane.b32.xlu0 %v2640, 64
    %v2643 = vpop.permute.xlu0 %2642
    %v2645 = vadd.f32 %v2621, %v2643
    %v2646 = vtanh.pop %v2645
    %2648 = vrot.lane.b32.xlu0 %v2616, 96
    %v2649 = vpop.permute.xlu0 %2648
    %v2651 = vadd.f32 %v2622, %v2649
    %v2652 = vxor.u32 %v2651, 2147483648
    %v2653 = vmul.f32 %v2652, 1.442695
    %v2654 = vpow.pop %v2653
    %v2655 = vadd.f32 %v2654, 1.0
    %v2656 = vrcp.pop %v2655
    %v2657 = vmul.f32 1.0, %v2656
    %v2658 = vadd.f32 %v2623, %v2649
    %v2659 = vxor.u32 %v2658, 2147483648
    %v2660 = vmul.f32 %v2659, 1.442695
    %v2661 = vpow.pop %v2660
    %v2662 = vadd.f32 %v2661, 1.0
    %v2663 = vrcp.pop %v2662
    %v2664 = vmul.f32 1.0, %v2663
    %v2665 = vadd.f32 %v2616, %v2124
    %2667 = vrot.lane.b32.xlu0 %v2665, 32
    %v2668 = vpop.permute.xlu0 %2667
    %v2670 = vmul.f32 %v2657, %v2668
    %2672 = vrot.lane.b32.xlu0 %v2670, 64
    %v2673 = vpop.permute.xlu0 %2672
    %v2675 = vadd.f32 %v2623, %v2673
    %v2676 = vtanh.pop %v2675
    %v2677 = vsub.f32 1.0, %v2633
    %2679 = vrot.lane.b32.xlu0 %v2646, 96
    %v2680 = vpop.permute.xlu0 %2679
    %v2682 = vmul.f32 %v2677, %v2680
    %v2684 = vrot.slane %v2506, 6
    %v2686 = vmul.f32 %v2633, %v2684
    %v2687 = vadd.f32 %v2682, %v2686
    %v2688 = vsub.f32 1.0, %v2664
    %2690 = vrot.lane.b32.xlu0 %v2676, 96
    %v2691 = vpop.permute.xlu0 %2690
    %v2693 = vmul.f32 %v2688, %v2691
    %v2695 = vrot.slane %v2517, 2
    %v2697 = vmul.f32 %v2664, %v2695
    %v2698 = vadd.f32 %v2693, %v2697
    %v2699 = vpack.c.bf16 %v2687, %v2687
    %2701 = vrot.lane.b32.xlu0 %v2699, 96
    %v2702 = vpop.permute.xlu0 %2701
    %2704 = vst.msk [vmem:[#allocation3] sm:$0x8] %vm1102, %v2702
    %v2705 = vpack.c.bf16 %v2698, %v2698
    %v2707 = vrot.slane %v2705, 4
    %2708 = vrot.lane.b32.xlu0 %v2707, 32
    %v2709 = vpop.permute.xlu0 %2708
    %2711 = vst.msk [vmem:[#allocation3] sm:$0x10] %vm1110, %v2709
    %v2712 = vrot.slane %v2699, 3
    %2713 = vrot.lane.b32.xlu0 %v2712, 96
    %v2714 = vpop.permute.xlu0 %2713
    %v2716 = vsel %vm292, %v2714, 0
    %2718 = vmatprep.subr.bf16.mxu0 0
    %2719 = vmatpush1.bf16.msra.mxu0 %v1983
    %2720 = vmatprep.subr.bf16.mxu0 0
    %2721 = vmatpush1.bf16.msra.mxu0 %v1984
    %2722 = vmatprep.subr.bf16.mxu0 0
    %2723 = vmatpush1.bf16.msra.mxu0 0
    %2724 = vmatprep.subr.bf16.mxu0 0
    %2725 = vmatpush1.bf16.msra.mxu0 0
    %2726 = vmatprep.subr.bf16.mxu0 0
    %2727 = vmatpush1.bf16.msra.mxu0 0
    %2728 = vmatprep.subr.bf16.mxu0 0
    %2729 = vmatpush1.bf16.msra.mxu0 0
    %2730 = vmatprep.subr.bf16.mxu0 0
    %2731 = vmatpush1.bf16.msra.mxu0 0
    %2732 = vmatprep.subr.bf16.mxu0 0
    %2733 = vmatpush1.bf16.msra.mxu0 0
    %2734 = vmatprep.subr.bf16.mxu0 0
    %2735 = vmatpush1.bf16.msra.mxu0 0
    %2736 = vmatprep.subr.bf16.mxu0 0
    %2737 = vmatpush1.bf16.msra.mxu0 0
    %2738 = vmatprep.subr.bf16.mxu0 0
    %2739 = vmatpush1.bf16.msra.mxu0 0
    %2740 = vmatprep.subr.bf16.mxu0 0
    %2741 = vmatpush1.bf16.msra.mxu0 0
    %2742 = vmatprep.subr.bf16.mxu0 0
    %2743 = vmatpush1.bf16.msra.mxu0 0
    %2744 = vmatprep.subr.bf16.mxu0 0
    %2745 = vmatpush1.bf16.msra.mxu0 0
    %2746 = vmatprep.subr.bf16.mxu0 0
    %2747 = vmatpush1.bf16.msra.mxu0 0
    %2748 = vmatprep.subr.bf16.mxu0 0
    %2749 = vmatpush1.bf16.msra.mxu0 0
    %2750 = vmatprep.mubr.bf16.mxu0 0
    %2751 = vmatmul.mubr.bf16.gmra.mrb[0].mxu0 %v2716
    %v2752 = vpop.f32.mrb[0].mxu0
    %v2753 = vadd.f32 0.0, %v2752
    %v2754 = vpop.f32.mrb[0].mxu0
    %v2755 = vpop.f32.mrb[0].mxu0
    %v2756 = vpop.f32.mrb[0].mxu0
    %2757 = vdwg.mxu0
    %v2759 = vsel %vm292, %v2705, 0
    %2761 = vmatprep.subr.bf16.mxu0 0
    %2762 = vmatpush1.bf16.msra.mxu0 %v2035
    %2763 = vmatprep.subr.bf16.mxu0 0
    %2764 = vmatpush1.bf16.msra.mxu0 %v2036
    %2765 = vmatprep.subr.bf16.mxu0 0
    %2766 = vmatpush1.bf16.msra.mxu0 0
    %2767 = vmatprep.subr.bf16.mxu0 0
    %2768 = vmatpush1.bf16.msra.mxu0 0
    %2769 = vmatprep.subr.bf16.mxu0 0
    %2770 = vmatpush1.bf16.msra.mxu0 0
    %2771 = vmatprep.subr.bf16.mxu0 0
    %2772 = vmatpush1.bf16.msra.mxu0 0
    %2773 = vmatprep.subr.bf16.mxu0 0
    %2774 = vmatpush1.bf16.msra.mxu0 0
    %2775 = vmatprep.subr.bf16.mxu0 0
    %2776 = vmatpush1.bf16.msra.mxu0 0
    %2777 = vmatprep.subr.bf16.mxu0 0
    %2778 = vmatpush1.bf16.msra.mxu0 0
    %2779 = vmatprep.subr.bf16.mxu0 0
    %2780 = vmatpush1.bf16.msra.mxu0 0
    %2781 = vmatprep.subr.bf16.mxu0 0
    %2782 = vmatpush1.bf16.msra.mxu0 0
    %2783 = vmatprep.subr.bf16.mxu0 0
    %2784 = vmatpush1.bf16.msra.mxu0 0
    %2785 = vmatprep.subr.bf16.mxu0 0
    %2786 = vmatpush1.bf16.msra.mxu0 0
    %2787 = vmatprep.subr.bf16.mxu0 0
    %2788 = vmatpush1.bf16.msra.mxu0 0
    %2789 = vmatprep.subr.bf16.mxu0 0
    %2790 = vmatpush1.bf16.msra.mxu0 0
    %2791 = vmatprep.subr.bf16.mxu0 0
    %2792 = vmatpush1.bf16.msra.mxu0 0
    %2793 = vmatprep.mubr.bf16.mxu0 0
    %2794 = vmatmul.mubr.bf16.gmra.mrb[0].mxu0 %v2759
    %v2795 = vpop.f32.mrb[0].mxu0
    %v2796 = vadd.f32 0.0, %v2795
    %v2797 = vpop.f32.mrb[0].mxu0
    %v2798 = vpop.f32.mrb[0].mxu0
    %v2799 = vpop.f32.mrb[0].mxu0
    %2800 = vdwg.mxu0
    %v2801 = vld [vmem:[#allocation4 + $0x10] sm:$0x3]
    %v2802 = vld [vmem:[#allocation4] sm:$0xc0]
    %v2803 = vld [vmem:[#allocation4 + $0x8] sm:$0xc0]
    %v2804 = vadd.f32 %v2801, %v2753
    %v2805 = vxor.u32 %v2804, 2147483648
    %v2806 = vmul.f32 %v2805, 1.442695
    %v2807 = vpow.pop %v2806
    %v2808 = vadd.f32 %v2807, 1.0
    %v2809 = vrcp.pop %v2808
    %v2810 = vmul.f32 1.0, %v2809
    %v2811 = vadd.f32 %v2753, %v2090
    %2813 = vrot.lane.b32.xlu0 %v2811, 64
    %v2814 = vpop.permute.xlu0 %2813
    %v2816 = vmul.f32 %v2810, %v2814
    %2818 = vrot.lane.b32.xlu0 %v2816, 64
    %v2819 = vpop.permute.xlu0 %2818
    %v2821 = vadd.f32 %v2801, %v2819
    %v2822 = vtanh.pop %v2821
    %v2824 = vrot.slane %v2796, 2
    %2825 = vrot.lane.b32.xlu0 %v2824, 96
    %v2826 = vpop.permute.xlu0 %2825
    %v2828 = vadd.f32 %v2802, %v2826
    %v2829 = vxor.u32 %v2828, 2147483648
    %v2830 = vmul.f32 %v2829, 1.442695
    %v2831 = vpow.pop %v2830
    %v2832 = vadd.f32 %v2831, 1.0
    %v2833 = vrcp.pop %v2832
    %v2834 = vmul.f32 1.0, %v2833
    %v2835 = vadd.f32 %v2803, %v2826
    %v2836 = vxor.u32 %v2835, 2147483648
    %v2837 = vmul.f32 %v2836, 1.442695
    %v2838 = vpow.pop %v2837
    %v2839 = vadd.f32 %v2838, 1.0
    %v2840 = vrcp.pop %v2839
    %v2841 = vmul.f32 1.0, %v2840
    %v2842 = vadd.f32 %v2796, %v2124
    %v2844 = vrot.slane %v2842, 2
    %2845 = vrot.lane.b32.xlu0 %v2844, 32
    %v2846 = vpop.permute.xlu0 %2845
    %v2848 = vmul.f32 %v2834, %v2846
    %2850 = vrot.lane.b32.xlu0 %v2848, 64
    %v2851 = vpop.permute.xlu0 %2850
    %v2853 = vadd.f32 %v2803, %v2851
    %v2854 = vtanh.pop %v2853
    %v2855 = vsub.f32 1.0, %v2810
    %2857 = vrot.lane.b32.xlu0 %v2822, 96
    %v2858 = vpop.permute.xlu0 %2857
    %v2860 = vmul.f32 %v2855, %v2858
    %v2862 = vrot.slane %v2687, 6
    %v2864 = vmul.f32 %v2810, %v2862
    %v2865 = vadd.f32 %v2860, %v2864
    %v2866 = vsub.f32 1.0, %v2841
    %2868 = vrot.lane.b32.xlu0 %v2854, 96
    %v2869 = vpop.permute.xlu0 %2868
    %v2871 = vmul.f32 %v2866, %v2869
    %v2873 = vrot.slane %v2698, 2
    %v2875 = vmul.f32 %v2841, %v2873
    %v2876 = vadd.f32 %v2871, %v2875
    %v2877 = vpack.c.bf16 %v2865, %v2865
    %v2879 = vrot.slane %v2877, 4
    %2880 = vrot.lane.b32.xlu0 %v2879, 96
    %v2881 = vpop.permute.xlu0 %2880
    %2883 = vst.msk [vmem:[#allocation3] sm:$0x10] %vm1283, %v2881
    %v2884 = vpack.c.bf16 %v2876, %v2876
    %2886 = vrot.lane.b32.xlu0 %v2884, 32
    %v2887 = vpop.permute.xlu0 %2886
    %2889 = vst.msk [vmem:[#allocation3] sm:$0x8] %vm1290, %v2887
    %2890 = vrot.lane.b32.xlu0 %v2877, 96
    %v2891 = vpop.permute.xlu0 %2890
    %v2893 = vsel %vm292, %v2891, 0
    %2895 = vmatprep.subr.bf16.mxu0 0
    %2896 = vmatpush1.bf16.msra.mxu0 %v1983
    %2897 = vmatprep.subr.bf16.mxu0 0
    %2898 = vmatpush1.bf16.msra.mxu0 %v1984
    %2899 = vmatprep.subr.bf16.mxu0 0
    %2900 = vmatpush1.bf16.msra.mxu0 0
    %2901 = vmatprep.subr.bf16.mxu0 0
    %2902 = vmatpush1.bf16.msra.mxu0 0
    %2903 = vmatprep.subr.bf16.mxu0 0
    %2904 = vmatpush1.bf16.msra.mxu0 0
    %2905 = vmatprep.subr.bf16.mxu0 0
    %2906 = vmatpush1.bf16.msra.mxu0 0
    %2907 = vmatprep.subr.bf16.mxu0 0
    %2908 = vmatpush1.bf16.msra.mxu0 0
    %2909 = vmatprep.subr.bf16.mxu0 0
    %2910 = vmatpush1.bf16.msra.mxu0 0
    %2911 = vmatprep.subr.bf16.mxu0 0
    %2912 = vmatpush1.bf16.msra.mxu0 0
    %2913 = vmatprep.subr.bf16.mxu0 0
    %2914 = vmatpush1.bf16.msra.mxu0 0
    %2915 = vmatprep.subr.bf16.mxu0 0
    %2916 = vmatpush1.bf16.msra.mxu0 0
    %2917 = vmatprep.subr.bf16.mxu0 0
    %2918 = vmatpush1.bf16.msra.mxu0 0
    %2919 = vmatprep.subr.bf16.mxu0 0
    %2920 = vmatpush1.bf16.msra.mxu0 0
    %2921 = vmatprep.subr.bf16.mxu0 0
    %2922 = vmatpush1.bf16.msra.mxu0 0
    %2923 = vmatprep.subr.bf16.mxu0 0
    %2924 = vmatpush1.bf16.msra.mxu0 0
    %2925 = vmatprep.subr.bf16.mxu0 0
    %2926 = vmatpush1.bf16.msra.mxu0 0
    %2927 = vmatprep.mubr.bf16.mxu0 0
    %2928 = vmatmul.mubr.bf16.gmra.mrb[0].mxu0 %v2893
    %v2929 = vpop.f32.mrb[0].mxu0
    %v2930 = vadd.f32 0.0, %v2929
    %v2931 = vpop.f32.mrb[0].mxu0
    %v2932 = vpop.f32.mrb[0].mxu0
    %v2933 = vpop.f32.mrb[0].mxu0
    %2934 = vdwg.mxu0
    %v2935 = vrot.slane %v2884, 3
    %v2937 = vsel %vm292, %v2935, 0
    %2939 = vmatprep.subr.bf16.mxu0 0
    %2940 = vmatpush1.bf16.msra.mxu0 %v2035
    %2941 = vmatprep.subr.bf16.mxu0 0
    %2942 = vmatpush1.bf16.msra.mxu0 %v2036
    %2943 = vmatprep.subr.bf16.mxu0 0
    %2944 = vmatpush1.bf16.msra.mxu0 0
    %2945 = vmatprep.subr.bf16.mxu0 0
    %2946 = vmatpush1.bf16.msra.mxu0 0
    %2947 = vmatprep.subr.bf16.mxu0 0
    %2948 = vmatpush1.bf16.msra.mxu0 0
    %2949 = vmatprep.subr.bf16.mxu0 0
    %2950 = vmatpush1.bf16.msra.mxu0 0
    %2951 = vmatprep.subr.bf16.mxu0 0
    %2952 = vmatpush1.bf16.msra.mxu0 0
    %2953 = vmatprep.subr.bf16.mxu0 0
    %2954 = vmatpush1.bf16.msra.mxu0 0
    %2955 = vmatprep.subr.bf16.mxu0 0
    %2956 = vmatpush1.bf16.msra.mxu0 0
    %2957 = vmatprep.subr.bf16.mxu0 0
    %2958 = vmatpush1.bf16.msra.mxu0 0
    %2959 = vmatprep.subr.bf16.mxu0 0
    %2960 = vmatpush1.bf16.msra.mxu0 0
    %2961 = vmatprep.subr.bf16.mxu0 0
    %2962 = vmatpush1.bf16.msra.mxu0 0
    %2963 = vmatprep.subr.bf16.mxu0 0
    %2964 = vmatpush1.bf16.msra.mxu0 0
    %2965 = vmatprep.subr.bf16.mxu0 0
    %2966 = vmatpush1.bf16.msra.mxu0 0
    %2967 = vmatprep.subr.bf16.mxu0 0
    %2968 = vmatpush1.bf16.msra.mxu0 0
    %2969 = vmatprep.subr.bf16.mxu0 0
    %2970 = vmatpush1.bf16.msra.mxu0 0
    %2971 = vmatprep.mubr.bf16.mxu0 0
    %2972 = vmatmul.mubr.bf16.gmra.mrb[0].mxu0 %v2937
    %v2973 = vpop.f32.mrb[0].mxu0
    %v2974 = vadd.f32 0.0, %v2973
    %v2975 = vpop.f32.mrb[0].mxu0
    %v2976 = vpop.f32.mrb[0].mxu0
    %v2977 = vpop.f32.mrb[0].mxu0
    %2978 = vdwg.mxu0
    %v2979 = vld [vmem:[#allocation4 + $0x10] sm:$0xc]
    %v2980 = vld [vmem:[#allocation4] sm:$0x30]
    %v2981 = vld [vmem:[#allocation4 + $0x8] sm:$0x30]
    %v2983 = vrot.slane %v2930, 6
    %v2985 = vadd.f32 %v2979, %v2983
    %v2986 = vxor.u32 %v2985, 2147483648
    %v2987 = vmul.f32 %v2986, 1.442695
    %v2988 = vpow.pop %v2987
    %v2989 = vadd.f32 %v2988, 1.0
    %v2990 = vrcp.pop %v2989
    %v2991 = vmul.f32 1.0, %v2990
    %v2992 = vadd.f32 %v2930, %v2090
    %v2994 = vrot.slane %v2992, 6
    %2995 = vrot.lane.b32.xlu0 %v2994, 64
    %v2996 = vpop.permute.xlu0 %2995
    %v2998 = vmul.f32 %v2991, %v2996
    %3000 = vrot.lane.b32.xlu0 %v2998, 64
    %v3001 = vpop.permute.xlu0 %3000
    %v3003 = vadd.f32 %v2979, %v3001
    %v3004 = vtanh.pop %v3003
    %v3006 = vrot.slane %v2974, 4
    %3007 = vrot.lane.b32.xlu0 %v3006, 96
    %v3008 = vpop.permute.xlu0 %3007
    %v3010 = vadd.f32 %v2980, %v3008
    %v3011 = vxor.u32 %v3010, 2147483648
    %v3012 = vmul.f32 %v3011, 1.442695
    %v3013 = vpow.pop %v3012
    %v3014 = vadd.f32 %v3013, 1.0
    %v3015 = vrcp.pop %v3014
    %v3016 = vmul.f32 1.0, %v3015
    %v3017 = vadd.f32 %v2981, %v3008
    %v3018 = vxor.u32 %v3017, 2147483648
    %v3019 = vmul.f32 %v3018, 1.442695
    %v3020 = vpow.pop %v3019
    %v3021 = vadd.f32 %v3020, 1.0
    %v3022 = vrcp.pop %v3021
    %v3023 = vmul.f32 1.0, %v3022
    %v3024 = vadd.f32 %v2974, %v2124
    %v3026 = vrot.slane %v3024, 4
    %3027 = vrot.lane.b32.xlu0 %v3026, 32
    %v3028 = vpop.permute.xlu0 %3027
    %v3030 = vmul.f32 %v3016, %v3028
    %3032 = vrot.lane.b32.xlu0 %v3030, 64
    %v3033 = vpop.permute.xlu0 %3032
    %v3035 = vadd.f32 %v2981, %v3033
    %v3036 = vtanh.pop %v3035
    %v3037 = vsub.f32 1.0, %v2991
    %3039 = vrot.lane.b32.xlu0 %v3004, 96
    %v3040 = vpop.permute.xlu0 %3039
    %v3042 = vmul.f32 %v3037, %v3040
    %v3044 = vrot.slane %v2865, 6
    %v3046 = vmul.f32 %v2991, %v3044
    %v3047 = vadd.f32 %v3042, %v3046
    %v3048 = vsub.f32 1.0, %v3023
    %3050 = vrot.lane.b32.xlu0 %v3036, 96
    %v3051 = vpop.permute.xlu0 %3050
    %v3053 = vmul.f32 %v3048, %v3051
    %v3055 = vrot.slane %v2876, 2
    %v3057 = vmul.f32 %v3023, %v3055
    %v3058 = vadd.f32 %v3053, %v3057
    %v3059 = vpack.c.bf16 %v3047, %v3047
    %v3061 = vrot.slane %v3059, 4
    %3062 = vrot.lane.b32.xlu0 %v3061, 96
    %v3063 = vpop.permute.xlu0 %3062
    %3065 = vst.msk [vmem:[#allocation3] sm:$0x20] %vm1467, %v3063
    %v3066 = vpack.c.bf16 %v3058, %v3058
    %3068 = vrot.lane.b32.xlu0 %v3066, 32
    %v3069 = vpop.permute.xlu0 %3068
    %3071 = vst.msk [vmem:[#allocation3] sm:$0x4] %vm1474, %v3069
    %v3072 = vrot.slane %v3059, 1
    %3073 = vrot.lane.b32.xlu0 %v3072, 96
    %v3074 = vpop.permute.xlu0 %3073
    %v3076 = vsel %vm292, %v3074, 0
    %3078 = vmatprep.subr.bf16.mxu0 0
    %3079 = vmatpush1.bf16.msra.mxu0 %v1983
    %3080 = vmatprep.subr.bf16.mxu0 0
    %3081 = vmatpush1.bf16.msra.mxu0 %v1984
    %3082 = vmatprep.subr.bf16.mxu0 0
    %3083 = vmatpush1.bf16.msra.mxu0 0
    %3084 = vmatprep.subr.bf16.mxu0 0
    %3085 = vmatpush1.bf16.msra.mxu0 0
    %3086 = vmatprep.subr.bf16.mxu0 0
    %3087 = vmatpush1.bf16.msra.mxu0 0
    %3088 = vmatprep.subr.bf16.mxu0 0
    %3089 = vmatpush1.bf16.msra.mxu0 0
    %3090 = vmatprep.subr.bf16.mxu0 0
    %3091 = vmatpush1.bf16.msra.mxu0 0
    %3092 = vmatprep.subr.bf16.mxu0 0
    %3093 = vmatpush1.bf16.msra.mxu0 0
    %3094 = vmatprep.subr.bf16.mxu0 0
    %3095 = vmatpush1.bf16.msra.mxu0 0
    %3096 = vmatprep.subr.bf16.mxu0 0
    %3097 = vmatpush1.bf16.msra.mxu0 0
    %3098 = vmatprep.subr.bf16.mxu0 0
    %3099 = vmatpush1.bf16.msra.mxu0 0
    %3100 = vmatprep.subr.bf16.mxu0 0
    %3101 = vmatpush1.bf16.msra.mxu0 0
    %3102 = vmatprep.subr.bf16.mxu0 0
    %3103 = vmatpush1.bf16.msra.mxu0 0
    %3104 = vmatprep.subr.bf16.mxu0 0
    %3105 = vmatpush1.bf16.msra.mxu0 0
    %3106 = vmatprep.subr.bf16.mxu0 0
    %3107 = vmatpush1.bf16.msra.mxu0 0
    %3108 = vmatprep.subr.bf16.mxu0 0
    %3109 = vmatpush1.bf16.msra.mxu0 0
    %3110 = vmatprep.mubr.bf16.mxu0 0
    %3111 = vmatmul.mubr.bf16.gmra.mrb[0].mxu0 %v3076
    %v3112 = vpop.f32.mrb[0].mxu0
    %v3113 = vadd.f32 0.0, %v3112
    %v3114 = vpop.f32.mrb[0].mxu0
    %v3115 = vpop.f32.mrb[0].mxu0
    %v3116 = vpop.f32.mrb[0].mxu0
    %3117 = vdwg.mxu0
    %v3118 = vrot.slane %v3066, 2
    %v3120 = vsel %vm292, %v3118, 0
    %3122 = vmatprep.subr.bf16.mxu0 0
    %3123 = vmatpush1.bf16.msra.mxu0 %v2035
    %3124 = vmatprep.subr.bf16.mxu0 0
    %3125 = vmatpush1.bf16.msra.mxu0 %v2036
    %3126 = vmatprep.subr.bf16.mxu0 0
    %3127 = vmatpush1.bf16.msra.mxu0 0
    %3128 = vmatprep.subr.bf16.mxu0 0
    %3129 = vmatpush1.bf16.msra.mxu0 0
    %3130 = vmatprep.subr.bf16.mxu0 0
    %3131 = vmatpush1.bf16.msra.mxu0 0
    %3132 = vmatprep.subr.bf16.mxu0 0
    %3133 = vmatpush1.bf16.msra.mxu0 0
    %3134 = vmatprep.subr.bf16.mxu0 0
    %3135 = vmatpush1.bf16.msra.mxu0 0
    %3136 = vmatprep.subr.bf16.mxu0 0
    %3137 = vmatpush1.bf16.msra.mxu0 0
    %3138 = vmatprep.subr.bf16.mxu0 0
    %3139 = vmatpush1.bf16.msra.mxu0 0
    %3140 = vmatprep.subr.bf16.mxu0 0
    %3141 = vmatpush1.bf16.msra.mxu0 0
    %3142 = vmatprep.subr.bf16.mxu0 0
    %3143 = vmatpush1.bf16.msra.mxu0 0
    %3144 = vmatprep.subr.bf16.mxu0 0
    %3145 = vmatpush1.bf16.msra.mxu0 0
    %3146 = vmatprep.subr.bf16.mxu0 0
    %3147 = vmatpush1.bf16.msra.mxu0 0
    %3148 = vmatprep.subr.bf16.mxu0 0
    %3149 = vmatpush1.bf16.msra.mxu0 0
    %3150 = vmatprep.subr.bf16.mxu0 0
    %3151 = vmatpush1.bf16.msra.mxu0 0
    %3152 = vmatprep.subr.bf16.mxu0 0
    %3153 = vmatpush1.bf16.msra.mxu0 0
    %3154 = vmatprep.mubr.bf16.mxu0 0
    %3155 = vmatmul.mubr.bf16.gmra.mrb[0].mxu0 %v3120
    %v3156 = vpop.f32.mrb[0].mxu0
    %v3157 = vadd.f32 0.0, %v3156
    %v3158 = vpop.f32.mrb[0].mxu0
    %v3159 = vpop.f32.mrb[0].mxu0
    %v3160 = vpop.f32.mrb[0].mxu0
    %3161 = vdwg.mxu0
    %v3162 = vld [vmem:[#allocation4 + $0x10] sm:$0x30]
    %v3163 = vld [vmem:[#allocation4] sm:$0xc]
    %v3164 = vld [vmem:[#allocation4 + $0x8] sm:$0xc]
    %v3166 = vrot.slane %v3113, 4
    %v3168 = vadd.f32 %v3162, %v3166
    %v3169 = vxor.u32 %v3168, 2147483648
    %v3170 = vmul.f32 %v3169, 1.442695
    %v3171 = vpow.pop %v3170
    %v3172 = vadd.f32 %v3171, 1.0
    %v3173 = vrcp.pop %v3172
    %v3174 = vmul.f32 1.0, %v3173
    %v3175 = vadd.f32 %v3113, %v2090
    %v3177 = vrot.slane %v3175, 4
    %3178 = vrot.lane.b32.xlu0 %v3177, 64
    %v3179 = vpop.permute.xlu0 %3178
    %v3181 = vmul.f32 %v3174, %v3179
    %3183 = vrot.lane.b32.xlu0 %v3181, 64
    %v3184 = vpop.permute.xlu0 %3183
    %v3186 = vadd.f32 %v3162, %v3184
    %v3187 = vtanh.pop %v3186
    %v3189 = vrot.slane %v3157, 6
    %3190 = vrot.lane.b32.xlu0 %v3189, 96
    %v3191 = vpop.permute.xlu0 %3190
    %v3193 = vadd.f32 %v3163, %v3191
    %v3194 = vxor.u32 %v3193, 2147483648
    %v3195 = vmul.f32 %v3194, 1.442695
    %v3196 = vpow.pop %v3195
    %v3197 = vadd.f32 %v3196, 1.0
    %v3198 = vrcp.pop %v3197
    %v3199 = vmul.f32 1.0, %v3198
    %v3200 = vadd.f32 %v3164, %v3191
    %v3201 = vxor.u32 %v3200, 2147483648
    %v3202 = vmul.f32 %v3201, 1.442695
    %v3203 = vpow.pop %v3202
    %v3204 = vadd.f32 %v3203, 1.0
    %v3205 = vrcp.pop %v3204
    %v3206 = vmul.f32 1.0, %v3205
    %v3207 = vadd.f32 %v3157, %v2124
    %v3209 = vrot.slane %v3207, 6
    %3210 = vrot.lane.b32.xlu0 %v3209, 32
    %v3211 = vpop.permute.xlu0 %3210
    %v3213 = vmul.f32 %v3199, %v3211
    %3215 = vrot.lane.b32.xlu0 %v3213, 64
    %v3216 = vpop.permute.xlu0 %3215
    %v3218 = vadd.f32 %v3164, %v3216
    %v3219 = vtanh.pop %v3218
    %v3220 = vsub.f32 1.0, %v3174
    %3222 = vrot.lane.b32.xlu0 %v3187, 96
    %v3223 = vpop.permute.xlu0 %3222
    %v3225 = vmul.f32 %v3220, %v3223
    %v3227 = vrot.slane %v3047, 6
    %v3229 = vmul.f32 %v3174, %v3227
    %v3230 = vadd.f32 %v3225, %v3229
    %v3231 = vsub.f32 1.0, %v3206
    %3233 = vrot.lane.b32.xlu0 %v3219, 96
    %v3234 = vpop.permute.xlu0 %3233
    %v3236 = vmul.f32 %v3231, %v3234
    %v3238 = vrot.slane %v3058, 2
    %v3240 = vmul.f32 %v3206, %v3238
    %v3241 = vadd.f32 %v3236, %v3240
    %v3242 = vpack.c.bf16 %v3230, %v3230
    %v3244 = vrot.slane %v3242, 4
    %3245 = vrot.lane.b32.xlu0 %v3244, 96
    %v3246 = vpop.permute.xlu0 %3245
    %3248 = vst.msk [vmem:[#allocation3] sm:$0x40] %vm1652, %v3246
    %v3249 = vpack.c.bf16 %v3241, %v3241
    %3251 = vrot.lane.b32.xlu0 %v3249, 32
    %v3252 = vpop.permute.xlu0 %3251
    %3254 = vst.msk [vmem:[#allocation3] sm:$0x2] %vm1659, %v3252
    %v3255 = vrot.slane %v3242, 2
    %3256 = vrot.lane.b32.xlu0 %v3255, 96
    %v3257 = vpop.permute.xlu0 %3256
    %v3259 = vsel %vm292, %v3257, 0
    %3261 = vmatprep.subr.bf16.mxu0 0
    %3262 = vmatpush1.bf16.msra.mxu0 %v1983
    %3263 = vmatprep.subr.bf16.mxu0 0
    %3264 = vmatpush1.bf16.msra.mxu0 %v1984
    %3265 = vmatprep.subr.bf16.mxu0 0
    %3266 = vmatpush1.bf16.msra.mxu0 0
    %3267 = vmatprep.subr.bf16.mxu0 0
    %3268 = vmatpush1.bf16.msra.mxu0 0
    %3269 = vmatprep.subr.bf16.mxu0 0
    %3270 = vmatpush1.bf16.msra.mxu0 0
    %3271 = vmatprep.subr.bf16.mxu0 0
    %3272 = vmatpush1.bf16.msra.mxu0 0
    %3273 = vmatprep.subr.bf16.mxu0 0
    %3274 = vmatpush1.bf16.msra.mxu0 0
    %3275 = vmatprep.subr.bf16.mxu0 0
    %3276 = vmatpush1.bf16.msra.mxu0 0
    %3277 = vmatprep.subr.bf16.mxu0 0
    %3278 = vmatpush1.bf16.msra.mxu0 0
    %3279 = vmatprep.subr.bf16.mxu0 0
    %3280 = vmatpush1.bf16.msra.mxu0 0
    %3281 = vmatprep.subr.bf16.mxu0 0
    %3282 = vmatpush1.bf16.msra.mxu0 0
    %3283 = vmatprep.subr.bf16.mxu0 0
    %3284 = vmatpush1.bf16.msra.mxu0 0
    %3285 = vmatprep.subr.bf16.mxu0 0
    %3286 = vmatpush1.bf16.msra.mxu0 0
    %3287 = vmatprep.subr.bf16.mxu0 0
    %3288 = vmatpush1.bf16.msra.mxu0 0
    %3289 = vmatprep.subr.bf16.mxu0 0
    %3290 = vmatpush1.bf16.msra.mxu0 0
    %3291 = vmatprep.subr.bf16.mxu0 0
    %3292 = vmatpush1.bf16.msra.mxu0 0
    %3293 = vmatprep.mubr.bf16.mxu0 0
    %3294 = vmatmul.mubr.bf16.gmra.mrb[0].mxu0 %v3259
    %v3295 = vpop.f32.mrb[0].mxu0
    %v3296 = vadd.f32 0.0, %v3295
    %v3297 = vpop.f32.mrb[0].mxu0
    %v3298 = vpop.f32.mrb[0].mxu0
    %v3299 = vpop.f32.mrb[0].mxu0
    %3300 = vdwg.mxu0
    %v3301 = vrot.slane %v3249, 1
    %v3303 = vsel %vm292, %v3301, 0
    %3305 = vmatprep.subr.bf16.mxu0 0
    %3306 = vmatpush1.bf16.msra.mxu0 %v2035
    %3307 = vmatprep.subr.bf16.mxu0 0
    %3308 = vmatpush1.bf16.msra.mxu0 %v2036
    %3309 = vmatprep.subr.bf16.mxu0 0
    %3310 = vmatpush1.bf16.msra.mxu0 0
    %3311 = vmatprep.subr.bf16.mxu0 0
    %3312 = vmatpush1.bf16.msra.mxu0 0
    %3313 = vmatprep.subr.bf16.mxu0 0
    %3314 = vmatpush1.bf16.msra.mxu0 0
    %3315 = vmatprep.subr.bf16.mxu0 0
    %3316 = vmatpush1.bf16.msra.mxu0 0
    %3317 = vmatprep.subr.bf16.mxu0 0
    %3318 = vmatpush1.bf16.msra.mxu0 0
    %3319 = vmatprep.subr.bf16.mxu0 0
    %3320 = vmatpush1.bf16.msra.mxu0 0
    %3321 = vmatprep.subr.bf16.mxu0 0
    %3322 = vmatpush1.bf16.msra.mxu0 0
    %3323 = vmatprep.subr.bf16.mxu0 0
    %3324 = vmatpush1.bf16.msra.mxu0 0
    %3325 = vmatprep.subr.bf16.mxu0 0
    %3326 = vmatpush1.bf16.msra.mxu0 0
    %3327 = vmatprep.subr.bf16.mxu0 0
    %3328 = vmatpush1.bf16.msra.mxu0 0
    %3329 = vmatprep.subr.bf16.mxu0 0
    %3330 = vmatpush1.bf16.msra.mxu0 0
    %3331 = vmatprep.subr.bf16.mxu0 0
    %3332 = vmatpush1.bf16.msra.mxu0 0
    %3333 = vmatprep.subr.bf16.mxu0 0
    %3334 = vmatpush1.bf16.msra.mxu0 0
    %3335 = vmatprep.subr.bf16.mxu0 0
    %3336 = vmatpush1.bf16.msra.mxu0 0
    %3337 = vmatprep.mubr.bf16.mxu0 0
    %3338 = vmatmul.mubr.bf16.gmra.mrb[0].mxu0 %v3303
    %v3339 = vpop.f32.mrb[0].mxu0
    %v3340 = vadd.f32 0.0, %v3339
    %v3341 = vpop.f32.mrb[0].mxu0
    %v3342 = vpop.f32.mrb[0].mxu0
    %v3343 = vpop.f32.mrb[0].mxu0
    %3344 = vdwg.mxu0
    %v3345 = vld [vmem:[#allocation4 + $0x10] sm:$0xc0]
    %v3346 = vld [vmem:[#allocation4] sm:$0x3]
    %v3347 = vld [vmem:[#allocation4 + $0x8] sm:$0x3]
    %v3349 = vrot.slane %v3296, 2
    %v3351 = vadd.f32 %v3345, %v3349
    %v3352 = vxor.u32 %v3351, 2147483648
    %v3353 = vmul.f32 %v3352, 1.442695
    %v3354 = vpow.pop %v3353
    %v3355 = vadd.f32 %v3354, 1.0
    %v3356 = vrcp.pop %v3355
    %v3357 = vmul.f32 1.0, %v3356
    %v3358 = vadd.f32 %v3296, %v2090
    %v3360 = vrot.slane %v3358, 2
    %3361 = vrot.lane.b32.xlu0 %v3360, 64
    %v3362 = vpop.permute.xlu0 %3361
    %v3364 = vmul.f32 %v3357, %v3362
    %3366 = vrot.lane.b32.xlu0 %v3364, 64
    %v3367 = vpop.permute.xlu0 %3366
    %v3369 = vadd.f32 %v3345, %v3367
    %v3370 = vtanh.pop %v3369
    %3372 = vrot.lane.b32.xlu0 %v3340, 96
    %v3373 = vpop.permute.xlu0 %3372
    %v3375 = vadd.f32 %v3346, %v3373
    %v3376 = vxor.u32 %v3375, 2147483648
    %v3377 = vmul.f32 %v3376, 1.442695
    %v3378 = vpow.pop %v3377
    %v3379 = vadd.f32 %v3378, 1.0
    %v3380 = vrcp.pop %v3379
    %v3381 = vmul.f32 1.0, %v3380
    %v3382 = vadd.f32 %v3347, %v3373
    %v3383 = vxor.u32 %v3382, 2147483648
    %v3384 = vmul.f32 %v3383, 1.442695
    %v3385 = vpow.pop %v3384
    %v3386 = vadd.f32 %v3385, 1.0
    %v3387 = vrcp.pop %v3386
    %v3388 = vmul.f32 1.0, %v3387
    %v3389 = vadd.f32 %v3340, %v2124
    %3391 = vrot.lane.b32.xlu0 %v3389, 32
    %v3392 = vpop.permute.xlu0 %3391
    %v3394 = vmul.f32 %v3381, %v3392
    %3396 = vrot.lane.b32.xlu0 %v3394, 64
    %v3397 = vpop.permute.xlu0 %3396
    %v3399 = vadd.f32 %v3347, %v3397
    %v3400 = vtanh.pop %v3399
    %v3401 = vsub.f32 1.0, %v3357
    %3403 = vrot.lane.b32.xlu0 %v3370, 96
    %v3404 = vpop.permute.xlu0 %3403
    %v3406 = vmul.f32 %v3401, %v3404
    %v3408 = vrot.slane %v3230, 6
    %v3410 = vmul.f32 %v3357, %v3408
    %v3411 = vadd.f32 %v3406, %v3410
    %v3412 = vsub.f32 1.0, %v3388
    %3414 = vrot.lane.b32.xlu0 %v3400, 96
    %v3415 = vpop.permute.xlu0 %3414
    %v3417 = vmul.f32 %v3412, %v3415
    %v3419 = vrot.slane %v3241, 2
    %v3421 = vmul.f32 %v3388, %v3419
    %v3422 = vadd.f32 %v3417, %v3421
    %v3423 = vpack.c.bf16 %v3411, %v3411
    %v3425 = vrot.slane %v3423, 4
    %3426 = vrot.lane.b32.xlu0 %v3425, 96
    %v3427 = vpop.permute.xlu0 %3426
    %3429 = vst.msk [vmem:[#allocation3] sm:$0x80] %vm1835, %v3427
    %v3430 = vpack.c.bf16 %v3422, %v3422
    %3432 = vrot.lane.b32.xlu0 %v3430, 32
    %v3433 = vpop.permute.xlu0 %3432
    %3435 = vst.msk [vmem:[#allocation3] sm:$0x1] %vm1842, %v3433
    %v3436 = vld [vmem:[#allocation3] sm:$0xff]
    %v3437 = vld [vmem:[%s27] sm:$0xff]
    %v3438 = vld [vmem:[%s27 + $0x8] sm:$0xff]
    %v3439 = vld [vmem:[%s27 + $0x10] sm:$0xff]
    %v3440 = vld [vmem:[%s27 + $0x18] sm:$0xff]
    %v3441 = vld [vmem:[%s27 + $0x20] sm:$0xff]
    %v3442 = vld [vmem:[%s27 + $0x28] sm:$0xff]
    %v3443 = vld [vmem:[%s27 + $0x30] sm:$0xff]
    %v3444 = vld [vmem:[%s27 + $0x38] sm:$0xff]
    %v3445 = vld [vmem:[%s29] sm:$0x3]
    %v3447 = vlaneseq
    %v3448 = vshrl.u32 %v3447, 7
    %v3449 = vsub.s32 0, %v3448
    %v3450 = vrot.slane %v3445, %v3449
    %v3451 = vlaneseq
    %v3452 = vshrl.u32 %v3451, 7
    %v3453 = vsub.s32 1, %v3452
    %v3454 = vrot.slane %v3445, %v3453
    %v3465 = vunpack.c.l.b16 %v3437
    %v3466 = vunpack.c.h.b16 %v3437
    %v3467 = vunpack.c.l.b16 %v3438
    %v3468 = vunpack.c.h.b16 %v3438
    %v3469 = vunpack.c.l.b16 %v3439
    %v3470 = vunpack.c.h.b16 %v3439
    %v3471 = vunpack.c.l.b16 %v3440
    %v3472 = vunpack.c.h.b16 %v3440
    %v3473 = vunpack.c.l.b16 %v3441
    %v3474 = vunpack.c.h.b16 %v3441
    %v3475 = vunpack.c.l.b16 %v3442
    %v3476 = vunpack.c.h.b16 %v3442
    %v3477 = vunpack.c.l.b16 %v3443
    %v3478 = vunpack.c.h.b16 %v3443
    %v3479 = vunpack.c.l.b16 %v3444
    %v3480 = vunpack.c.h.b16 %v3444
    %v3481 = vpack.c.b16 %v3467, %v3465
    %v3482 = vpack.c.b16 %v3468, %v3466
    %v3483 = vpack.c.b16 %v3471, %v3469
    %v3484 = vpack.c.b16 %v3472, %v3470
    %v3485 = vpack.c.b16 %v3475, %v3473
    %v3486 = vpack.c.b16 %v3476, %v3474
    %v3487 = vpack.c.b16 %v3479, %v3477
    %v3488 = vpack.c.b16 %v3480, %v3478
    %v3498 = vsel %vm340, %v3436, 0
    %3500 = vmatprep.subr.bf16.mxu0 %v3482
    %3501 = vmatpush1.bf16.msra.mxu0 %v3481
    %3502 = vmatprep.subr.bf16.mxu0 %v3484
    %3503 = vmatpush1.bf16.msra.mxu0 %v3483
    %3504 = vmatprep.subr.bf16.mxu0 %v3486
    %3505 = vmatpush1.bf16.msra.mxu0 %v3485
    %3506 = vmatprep.subr.bf16.mxu0 %v3488
    %3507 = vmatpush1.bf16.msra.mxu0 %v3487
    %3508 = vmatprep.subr.bf16.mxu0 0
    %3509 = vmatpush1.bf16.msra.mxu0 0
    %3510 = vmatprep.subr.bf16.mxu0 0
    %3511 = vmatpush1.bf16.msra.mxu0 0
    %3512 = vmatprep.subr.bf16.mxu0 0
    %3513 = vmatpush1.bf16.msra.mxu0 0
    %3514 = vmatprep.subr.bf16.mxu0 0
    %3515 = vmatpush1.bf16.msra.mxu0 0
    %3516 = vmatprep.subr.bf16.mxu0 0
    %3517 = vmatpush1.bf16.msra.mxu0 0
    %3518 = vmatprep.subr.bf16.mxu0 0
    %3519 = vmatpush1.bf16.msra.mxu0 0
    %3520 = vmatprep.subr.bf16.mxu0 0
    %3521 = vmatpush1.bf16.msra.mxu0 0
    %3522 = vmatprep.subr.bf16.mxu0 0
    %3523 = vmatpush1.bf16.msra.mxu0 0
    %3524 = vmatprep.subr.bf16.mxu0 0
    %3525 = vmatpush1.bf16.msra.mxu0 0
    %3526 = vmatprep.subr.bf16.mxu0 0
    %3527 = vmatpush1.bf16.msra.mxu0 0
    %3528 = vmatprep.subr.bf16.mxu0 0
    %3529 = vmatpush1.bf16.msra.mxu0 0
    %3530 = vmatprep.subr.bf16.mxu0 0
    %3531 = vmatpush1.bf16.msra.mxu0 0
    %3532 = vmatprep.mubr.bf16.mxu0 0
    %3533 = vmatmul.mubr.bf16.gmra.mrb[0].mxu0 %v3498
    %v3534 = vpop.f32.mrb[0].mxu0
    %v3535 = vadd.f32 %v3450, %v3534
    %v3536 = vpop.f32.mrb[0].mxu0
    %v3537 = vadd.f32 %v3454, %v3536
    %v3538 = vpop.f32.mrb[0].mxu0
    %v3539 = vadd.f32 %v3450, %v3538
    %v3540 = vpop.f32.mrb[0].mxu0
    %v3541 = vadd.f32 %v3454, %v3540
    %3542 = vdwg.mxu0
    %3543 = vst [vmem:[#allocation4] sm:$0xff] %v3535
    %3544 = vst.msk [vmem:[#allocation4 + $0x8] sm:$0xff] %vm340, %v3537
    %3545 = vst [vmem:[#allocation4 + $0x10] sm:$0xff] %v3539
    %3546 = vst.msk [vmem:[#allocation4 + $0x18] sm:$0xff] %vm340, %v3541
    %v3547 = vld [vmem:[%s31] sm:$0xf]
    %v3548 = vld [vmem:[%s31 + $0x4] sm:$0xf]
    %v3549 = vld [vmem:[%s31 + $0x8] sm:$0xf]
    %v3550 = vld [vmem:[%s31 + $0xc] sm:$0xf]
    %v3551 = vld [vmem:[%s33] sm:$0xf]
    %v3552 = vld [vmem:[%s33 + $0x4] sm:$0xf]
    %v3553 = vld [vmem:[%s33 + $0x8] sm:$0xf]
    %v3554 = vld [vmem:[%s33 + $0xc] sm:$0xf]
    %v3555 = vld [vmem:[%s35] sm:$0x1]
    %v3557 = vlaneseq
    %v3558 = vshrl.u32 %v3557, 7
    %v3559 = vsub.s32 0, %v3558
    %v3560 = vrot.slane %v3555, %v3559
    %v3561 = vld [vmem:[%s37] sm:$0x1]
    %v3563 = vlaneseq
    %v3564 = vshrl.u32 %v3563, 7
    %v3565 = vsub.s32 0, %v3564
    %v3566 = vrot.slane %v3561, %v3565
    %v3571 = vunpack.c.l.b16 %v3547
    %v3572 = vunpack.c.l.b16 %v3548
    %v3573 = vunpack.c.l.b16 %v3549
    %v3574 = vunpack.c.l.b16 %v3550
    %v3575 = vpack.c.b16 %v3572, %v3571
    %v3576 = vpack.c.b16 %v3574, %v3573
    %3579 = vmatprep.subr.bf16.mxu0 0
    %3580 = vmatpush1.bf16.msra.mxu0 %v3575
    %3581 = vmatprep.subr.bf16.mxu0 0
    %3582 = vmatpush1.bf16.msra.mxu0 %v3576
    %3583 = vmatprep.subr.bf16.mxu0 0
    %3584 = vmatpush1.bf16.msra.mxu0 0
    %3585 = vmatprep.subr.bf16.mxu0 0
    %3586 = vmatpush1.bf16.msra.mxu0 0
    %3587 = vmatprep.subr.bf16.mxu0 0
    %3588 = vmatpush1.bf16.msra.mxu0 0
    %3589 = vmatprep.subr.bf16.mxu0 0
    %3590 = vmatpush1.bf16.msra.mxu0 0
    %3591 = vmatprep.subr.bf16.mxu0 0
    %3592 = vmatpush1.bf16.msra.mxu0 0
    %3593 = vmatprep.subr.bf16.mxu0 0
    %3594 = vmatpush1.bf16.msra.mxu0 0
    %3595 = vmatprep.subr.bf16.mxu0 0
    %3596 = vmatpush1.bf16.msra.mxu0 0
    %3597 = vmatprep.subr.bf16.mxu0 0
    %3598 = vmatpush1.bf16.msra.mxu0 0
    %3599 = vmatprep.subr.bf16.mxu0 0
    %3600 = vmatpush1.bf16.msra.mxu0 0
    %3601 = vmatprep.subr.bf16.mxu0 0
    %3602 = vmatpush1.bf16.msra.mxu0 0
    %3603 = vmatprep.subr.bf16.mxu0 0
    %3604 = vmatpush1.bf16.msra.mxu0 0
    %3605 = vmatprep.subr.bf16.mxu0 0
    %3606 = vmatpush1.bf16.msra.mxu0 0
    %3607 = vmatprep.subr.bf16.mxu0 0
    %3608 = vmatpush1.bf16.msra.mxu0 0
    %3609 = vmatprep.subr.bf16.mxu0 0
    %3610 = vmatpush1.bf16.msra.mxu0 0
    %3611 = vmatprep.mubr.bf16.mxu0 0
    %3612 = vmatmul.mubr.bf16.gmra.mrb[0].mxu0 %v377
    %v3613 = vpop.f32.mrb[0].mxu0
    %v3614 = vadd.f32 0.0, %v3613
    %v3615 = vpop.f32.mrb[0].mxu0
    %v3616 = vpop.f32.mrb[0].mxu0
    %v3617 = vpop.f32.mrb[0].mxu0
    %3618 = vdwg.mxu0
    %v3623 = vunpack.c.l.b16 %v3551
    %v3624 = vunpack.c.l.b16 %v3552
    %v3625 = vunpack.c.l.b16 %v3553
    %v3626 = vunpack.c.l.b16 %v3554
    %v3627 = vpack.c.b16 %v3624, %v3623
    %v3628 = vpack.c.b16 %v3626, %v3625
    %3631 = vmatprep.subr.bf16.mxu0 0
    %3632 = vmatpush1.bf16.msra.mxu0 %v3627
    %3633 = vmatprep.subr.bf16.mxu0 0
    %3634 = vmatpush1.bf16.msra.mxu0 %v3628
    %3635 = vmatprep.subr.bf16.mxu0 0
    %3636 = vmatpush1.bf16.msra.mxu0 0
    %3637 = vmatprep.subr.bf16.mxu0 0
    %3638 = vmatpush1.bf16.msra.mxu0 0
    %3639 = vmatprep.subr.bf16.mxu0 0
    %3640 = vmatpush1.bf16.msra.mxu0 0
    %3641 = vmatprep.subr.bf16.mxu0 0
    %3642 = vmatpush1.bf16.msra.mxu0 0
    %3643 = vmatprep.subr.bf16.mxu0 0
    %3644 = vmatpush1.bf16.msra.mxu0 0
    %3645 = vmatprep.subr.bf16.mxu0 0
    %3646 = vmatpush1.bf16.msra.mxu0 0
    %3647 = vmatprep.subr.bf16.mxu0 0
    %3648 = vmatpush1.bf16.msra.mxu0 0
    %3649 = vmatprep.subr.bf16.mxu0 0
    %3650 = vmatpush1.bf16.msra.mxu0 0
    %3651 = vmatprep.subr.bf16.mxu0 0
    %3652 = vmatpush1.bf16.msra.mxu0 0
    %3653 = vmatprep.subr.bf16.mxu0 0
    %3654 = vmatpush1.bf16.msra.mxu0 0
    %3655 = vmatprep.subr.bf16.mxu0 0
    %3656 = vmatpush1.bf16.msra.mxu0 0
    %3657 = vmatprep.subr.bf16.mxu0 0
    %3658 = vmatpush1.bf16.msra.mxu0 0
    %3659 = vmatprep.subr.bf16.mxu0 0
    %3660 = vmatpush1.bf16.msra.mxu0 0
    %3661 = vmatprep.subr.bf16.mxu0 0
    %3662 = vmatpush1.bf16.msra.mxu0 0
    %3663 = vmatprep.mubr.bf16.mxu0 0
    %3664 = vmatmul.mubr.bf16.gmra.mrb[0].mxu0 %v377
    %v3665 = vpop.f32.mrb[0].mxu0
    %v3666 = vadd.f32 0.0, %v3665
    %v3667 = vpop.f32.mrb[0].mxu0
    %v3668 = vpop.f32.mrb[0].mxu0
    %v3669 = vpop.f32.mrb[0].mxu0
    %3670 = vdwg.mxu0
    %v3671 = vld [vmem:[#allocation4] sm:$0x3]
    %v3672 = vld [vmem:[#allocation4 + $0x10] sm:$0xc0]
    %v3673 = vld [vmem:[#allocation4 + $0x18] sm:$0xc0]
    %v3674 = vadd.f32 %v3671, %v3614
    %v3675 = vxor.u32 %v3674, 2147483648
    %v3676 = vmul.f32 %v3675, 1.442695
    %v3677 = vpow.pop %v3676
    %v3678 = vadd.f32 %v3677, 1.0
    %v3679 = vrcp.pop %v3678
    %v3680 = vmul.f32 1.0, %v3679
    %3681 = vrot.lane.b32.xlu0 %v3560, 64
    %v3682 = vpop.permute.xlu0 %3681
    %v3684 = vadd.f32 %v3614, %v3682
    %3686 = vrot.lane.b32.xlu0 %v3684, 64
    %v3687 = vpop.permute.xlu0 %3686
    %v3689 = vmul.f32 %v3680, %v3687
    %3691 = vrot.lane.b32.xlu0 %v3689, 64
    %v3692 = vpop.permute.xlu0 %3691
    %v3694 = vadd.f32 %v3671, %v3692
    %v3695 = vtanh.pop %v3694
    %v3697 = vrot.slane %v3666, 2
    %3698 = vrot.lane.b32.xlu0 %v3697, 96
    %v3699 = vpop.permute.xlu0 %3698
    %v3701 = vadd.f32 %v3672, %v3699
    %v3702 = vxor.u32 %v3701, 2147483648
    %v3703 = vmul.f32 %v3702, 1.442695
    %v3704 = vpow.pop %v3703
    %v3705 = vadd.f32 %v3704, 1.0
    %v3706 = vrcp.pop %v3705
    %v3707 = vmul.f32 1.0, %v3706
    %v3708 = vadd.f32 %v3673, %v3699
    %v3709 = vxor.u32 %v3708, 2147483648
    %v3710 = vmul.f32 %v3709, 1.442695
    %v3711 = vpow.pop %v3710
    %v3712 = vadd.f32 %v3711, 1.0
    %v3713 = vrcp.pop %v3712
    %v3714 = vmul.f32 1.0, %v3713
    %3715 = vrot.lane.b32.xlu0 %v3566, 64
    %v3716 = vpop.permute.xlu0 %3715
    %v3718 = vadd.f32 %v3666, %v3716
    %v3720 = vrot.slane %v3718, 2
    %3721 = vrot.lane.b32.xlu0 %v3720, 32
    %v3722 = vpop.permute.xlu0 %3721
    %v3724 = vmul.f32 %v3707, %v3722
    %3726 = vrot.lane.b32.xlu0 %v3724, 64
    %v3727 = vpop.permute.xlu0 %3726
    %v3729 = vadd.f32 %v3673, %v3727
    %v3730 = vtanh.pop %v3729
    %v3731 = vsub.f32 1.0, %v3680
    %3733 = vrot.lane.b32.xlu0 %v3695, 96
    %v3734 = vpop.permute.xlu0 %3733
    %v3736 = vmul.f32 %v3731, %v3734
    %v3737 = vmul.f32 %v3680, 0.0
    %v3738 = vadd.f32 %v3736, %v3737
    %v3739 = vsub.f32 1.0, %v3714
    %3741 = vrot.lane.b32.xlu0 %v3730, 96
    %v3742 = vpop.permute.xlu0 %3741
    %v3744 = vmul.f32 %v3739, %v3742
    %v3745 = vmul.f32 %v3714, 0.0
    %v3746 = vadd.f32 %v3744, %v3745
    %v3747 = vpack.c.bf16 %v3738, %v3738
    %3749 = vrot.lane.b32.xlu0 %v3747, 96
    %v3750 = vpop.permute.xlu0 %3749
    %3752 = vst.msk [vmem:[#allocation2] sm:$0x1] %vm552, %v3750
    %v3753 = vpack.c.bf16 %v3746, %v3746
    %v3755 = vrot.slane %v3753, 4
    %3756 = vrot.lane.b32.xlu0 %v3755, 32
    %v3757 = vpop.permute.xlu0 %3756
    %3759 = vst.msk [vmem:[#allocation2] sm:$0x80] %vm560, %v3757
    %v3761 = vsel %vm292, %v3750, 0
    %3763 = vmatprep.subr.bf16.mxu0 0
    %3764 = vmatpush1.bf16.msra.mxu0 %v3575
    %3765 = vmatprep.subr.bf16.mxu0 0
    %3766 = vmatpush1.bf16.msra.mxu0 %v3576
    %3767 = vmatprep.subr.bf16.mxu0 0
    %3768 = vmatpush1.bf16.msra.mxu0 0
    %3769 = vmatprep.subr.bf16.mxu0 0
    %3770 = vmatpush1.bf16.msra.mxu0 0
    %3771 = vmatprep.subr.bf16.mxu0 0
    %3772 = vmatpush1.bf16.msra.mxu0 0
    %3773 = vmatprep.subr.bf16.mxu0 0
    %3774 = vmatpush1.bf16.msra.mxu0 0
    %3775 = vmatprep.subr.bf16.mxu0 0
    %3776 = vmatpush1.bf16.msra.mxu0 0
    %3777 = vmatprep.subr.bf16.mxu0 0
    %3778 = vmatpush1.bf16.msra.mxu0 0
    %3779 = vmatprep.subr.bf16.mxu0 0
    %3780 = vmatpush1.bf16.msra.mxu0 0
    %3781 = vmatprep.subr.bf16.mxu0 0
    %3782 = vmatpush1.bf16.msra.mxu0 0
    %3783 = vmatprep.subr.bf16.mxu0 0
    %3784 = vmatpush1.bf16.msra.mxu0 0
    %3785 = vmatprep.subr.bf16.mxu0 0
    %3786 = vmatpush1.bf16.msra.mxu0 0
    %3787 = vmatprep.subr.bf16.mxu0 0
    %3788 = vmatpush1.bf16.msra.mxu0 0
    %3789 = vmatprep.subr.bf16.mxu0 0
    %3790 = vmatpush1.bf16.msra.mxu0 0
    %3791 = vmatprep.subr.bf16.mxu0 0
    %3792 = vmatpush1.bf16.msra.mxu0 0
    %3793 = vmatprep.subr.bf16.mxu0 0
    %3794 = vmatpush1.bf16.msra.mxu0 0
    %3795 = vmatprep.mubr.bf16.mxu0 0
    %3796 = vmatmul.mubr.bf16.gmra.mrb[0].mxu0 %v3761
    %v3797 = vpop.f32.mrb[0].mxu0
    %v3798 = vadd.f32 0.0, %v3797
    %v3799 = vpop.f32.mrb[0].mxu0
    %v3800 = vpop.f32.mrb[0].mxu0
    %v3801 = vpop.f32.mrb[0].mxu0
    %3802 = vdwg.mxu0
    %v3803 = vrot.slane %v3753, 3
    %v3805 = vsel %vm292, %v3803, 0
    %3807 = vmatprep.subr.bf16.mxu0 0
    %3808 = vmatpush1.bf16.msra.mxu0 %v3627
    %3809 = vmatprep.subr.bf16.mxu0 0
    %3810 = vmatpush1.bf16.msra.mxu0 %v3628
    %3811 = vmatprep.subr.bf16.mxu0 0
    %3812 = vmatpush1.bf16.msra.mxu0 0
    %3813 = vmatprep.subr.bf16.mxu0 0
    %3814 = vmatpush1.bf16.msra.mxu0 0
    %3815 = vmatprep.subr.bf16.mxu0 0
    %3816 = vmatpush1.bf16.msra.mxu0 0
    %3817 = vmatprep.subr.bf16.mxu0 0
    %3818 = vmatpush1.bf16.msra.mxu0 0
    %3819 = vmatprep.subr.bf16.mxu0 0
    %3820 = vmatpush1.bf16.msra.mxu0 0
    %3821 = vmatprep.subr.bf16.mxu0 0
    %3822 = vmatpush1.bf16.msra.mxu0 0
    %3823 = vmatprep.subr.bf16.mxu0 0
    %3824 = vmatpush1.bf16.msra.mxu0 0
    %3825 = vmatprep.subr.bf16.mxu0 0
    %3826 = vmatpush1.bf16.msra.mxu0 0
    %3827 = vmatprep.subr.bf16.mxu0 0
    %3828 = vmatpush1.bf16.msra.mxu0 0
    %3829 = vmatprep.subr.bf16.mxu0 0
    %3830 = vmatpush1.bf16.msra.mxu0 0
    %3831 = vmatprep.subr.bf16.mxu0 0
    %3832 = vmatpush1.bf16.msra.mxu0 0
    %3833 = vmatprep.subr.bf16.mxu0 0
    %3834 = vmatpush1.bf16.msra.mxu0 0
    %3835 = vmatprep.subr.bf16.mxu0 0
    %3836 = vmatpush1.bf16.msra.mxu0 0
    %3837 = vmatprep.subr.bf16.mxu0 0
    %3838 = vmatpush1.bf16.msra.mxu0 0
    %3839 = vmatprep.mubr.bf16.mxu0 0
    %3840 = vmatmul.mubr.bf16.gmra.mrb[0].mxu0 %v3805
    %v3841 = vpop.f32.mrb[0].mxu0
    %v3842 = vadd.f32 0.0, %v3841
    %v3843 = vpop.f32.mrb[0].mxu0
    %v3844 = vpop.f32.mrb[0].mxu0
    %v3845 = vpop.f32.mrb[0].mxu0
    %3846 = vdwg.mxu0
    %v3847 = vld [vmem:[#allocation4] sm:$0xc]
    %v3848 = vld [vmem:[#allocation4 + $0x10] sm:$0x30]
    %v3849 = vld [vmem:[#allocation4 + $0x18] sm:$0x30]
    %v3851 = vrot.slane %v3798, 6
    %v3853 = vadd.f32 %v3847, %v3851
    %v3854 = vxor.u32 %v3853, 2147483648
    %v3855 = vmul.f32 %v3854, 1.442695
    %v3856 = vpow.pop %v3855
    %v3857 = vadd.f32 %v3856, 1.0
    %v3858 = vrcp.pop %v3857
    %v3859 = vmul.f32 1.0, %v3858
    %v3860 = vadd.f32 %v3798, %v3682
    %v3862 = vrot.slane %v3860, 6
    %3863 = vrot.lane.b32.xlu0 %v3862, 64
    %v3864 = vpop.permute.xlu0 %3863
    %v3866 = vmul.f32 %v3859, %v3864
    %3868 = vrot.lane.b32.xlu0 %v3866, 64
    %v3869 = vpop.permute.xlu0 %3868
    %v3871 = vadd.f32 %v3847, %v3869
    %v3872 = vtanh.pop %v3871
    %v3874 = vrot.slane %v3842, 4
    %3875 = vrot.lane.b32.xlu0 %v3874, 96
    %v3876 = vpop.permute.xlu0 %3875
    %v3878 = vadd.f32 %v3848, %v3876
    %v3879 = vxor.u32 %v3878, 2147483648
    %v3880 = vmul.f32 %v3879, 1.442695
    %v3881 = vpow.pop %v3880
    %v3882 = vadd.f32 %v3881, 1.0
    %v3883 = vrcp.pop %v3882
    %v3884 = vmul.f32 1.0, %v3883
    %v3885 = vadd.f32 %v3849, %v3876
    %v3886 = vxor.u32 %v3885, 2147483648
    %v3887 = vmul.f32 %v3886, 1.442695
    %v3888 = vpow.pop %v3887
    %v3889 = vadd.f32 %v3888, 1.0
    %v3890 = vrcp.pop %v3889
    %v3891 = vmul.f32 1.0, %v3890
    %v3892 = vadd.f32 %v3842, %v3716
    %v3894 = vrot.slane %v3892, 4
    %3895 = vrot.lane.b32.xlu0 %v3894, 32
    %v3896 = vpop.permute.xlu0 %3895
    %v3898 = vmul.f32 %v3884, %v3896
    %3900 = vrot.lane.b32.xlu0 %v3898, 64
    %v3901 = vpop.permute.xlu0 %3900
    %v3903 = vadd.f32 %v3849, %v3901
    %v3904 = vtanh.pop %v3903
    %v3905 = vsub.f32 1.0, %v3859
    %3907 = vrot.lane.b32.xlu0 %v3872, 96
    %v3908 = vpop.permute.xlu0 %3907
    %v3910 = vmul.f32 %v3905, %v3908
    %v3912 = vrot.slane %v3738, 6
    %v3914 = vmul.f32 %v3859, %v3912
    %v3915 = vadd.f32 %v3910, %v3914
    %v3916 = vsub.f32 1.0, %v3891
    %3918 = vrot.lane.b32.xlu0 %v3904, 96
    %v3919 = vpop.permute.xlu0 %3918
    %v3921 = vmul.f32 %v3916, %v3919
    %v3923 = vrot.slane %v3746, 2
    %v3925 = vmul.f32 %v3891, %v3923
    %v3926 = vadd.f32 %v3921, %v3925
    %v3927 = vpack.c.bf16 %v3915, %v3915
    %3929 = vrot.lane.b32.xlu0 %v3927, 96
    %v3930 = vpop.permute.xlu0 %3929
    %3932 = vst.msk [vmem:[#allocation2] sm:$0x2] %vm734, %v3930
    %v3933 = vpack.c.bf16 %v3926, %v3926
    %v3935 = vrot.slane %v3933, 4
    %3936 = vrot.lane.b32.xlu0 %v3935, 32
    %v3937 = vpop.permute.xlu0 %3936
    %3939 = vst.msk [vmem:[#allocation2] sm:$0x40] %vm742, %v3937
    %v3940 = vrot.slane %v3927, 1
    %3941 = vrot.lane.b32.xlu0 %v3940, 96
    %v3942 = vpop.permute.xlu0 %3941
    %v3944 = vsel %vm292, %v3942, 0
    %3946 = vmatprep.subr.bf16.mxu0 0
    %3947 = vmatpush1.bf16.msra.mxu0 %v3575
    %3948 = vmatprep.subr.bf16.mxu0 0
    %3949 = vmatpush1.bf16.msra.mxu0 %v3576
    %3950 = vmatprep.subr.bf16.mxu0 0
    %3951 = vmatpush1.bf16.msra.mxu0 0
    %3952 = vmatprep.subr.bf16.mxu0 0
    %3953 = vmatpush1.bf16.msra.mxu0 0
    %3954 = vmatprep.subr.bf16.mxu0 0
    %3955 = vmatpush1.bf16.msra.mxu0 0
    %3956 = vmatprep.subr.bf16.mxu0 0
    %3957 = vmatpush1.bf16.msra.mxu0 0
    %3958 = vmatprep.subr.bf16.mxu0 0
    %3959 = vmatpush1.bf16.msra.mxu0 0
    %3960 = vmatprep.subr.bf16.mxu0 0
    %3961 = vmatpush1.bf16.msra.mxu0 0
    %3962 = vmatprep.subr.bf16.mxu0 0
    %3963 = vmatpush1.bf16.msra.mxu0 0
    %3964 = vmatprep.subr.bf16.mxu0 0
    %3965 = vmatpush1.bf16.msra.mxu0 0
    %3966 = vmatprep.subr.bf16.mxu0 0
    %3967 = vmatpush1.bf16.msra.mxu0 0
    %3968 = vmatprep.subr.bf16.mxu0 0
    %3969 = vmatpush1.bf16.msra.mxu0 0
    %3970 = vmatprep.subr.bf16.mxu0 0
    %3971 = vmatpush1.bf16.msra.mxu0 0
    %3972 = vmatprep.subr.bf16.mxu0 0
    %3973 = vmatpush1.bf16.msra.mxu0 0
    %3974 = vmatprep.subr.bf16.mxu0 0
    %3975 = vmatpush1.bf16.msra.mxu0 0
    %3976 = vmatprep.subr.bf16.mxu0 0
    %3977 = vmatpush1.bf16.msra.mxu0 0
    %3978 = vmatprep.mubr.bf16.mxu0 0
    %3979 = vmatmul.mubr.bf16.gmra.mrb[0].mxu0 %v3944
    %v3980 = vpop.f32.mrb[0].mxu0
    %v3981 = vadd.f32 0.0, %v3980
    %v3982 = vpop.f32.mrb[0].mxu0
    %v3983 = vpop.f32.mrb[0].mxu0
    %v3984 = vpop.f32.mrb[0].mxu0
    %3985 = vdwg.mxu0
    %v3986 = vrot.slane %v3933, 2
    %v3988 = vsel %vm292, %v3986, 0
    %3990 = vmatprep.subr.bf16.mxu0 0
    %3991 = vmatpush1.bf16.msra.mxu0 %v3627
    %3992 = vmatprep.subr.bf16.mxu0 0
    %3993 = vmatpush1.bf16.msra.mxu0 %v3628
    %3994 = vmatprep.subr.bf16.mxu0 0
    %3995 = vmatpush1.bf16.msra.mxu0 0
    %3996 = vmatprep.subr.bf16.mxu0 0
    %3997 = vmatpush1.bf16.msra.mxu0 0
    %3998 = vmatprep.subr.bf16.mxu0 0
    %3999 = vmatpush1.bf16.msra.mxu0 0
    %4000 = vmatprep.subr.bf16.mxu0 0
    %4001 = vmatpush1.bf16.msra.mxu0 0
    %4002 = vmatprep.subr.bf16.mxu0 0
    %4003 = vmatpush1.bf16.msra.mxu0 0
    %4004 = vmatprep.subr.bf16.mxu0 0
    %4005 = vmatpush1.bf16.msra.mxu0 0
    %4006 = vmatprep.subr.bf16.mxu0 0
    %4007 = vmatpush1.bf16.msra.mxu0 0
    %4008 = vmatprep.subr.bf16.mxu0 0
    %4009 = vmatpush1.bf16.msra.mxu0 0
    %4010 = vmatprep.subr.bf16.mxu0 0
    %4011 = vmatpush1.bf16.msra.mxu0 0
    %4012 = vmatprep.subr.bf16.mxu0 0
    %4013 = vmatpush1.bf16.msra.mxu0 0
    %4014 = vmatprep.subr.bf16.mxu0 0
    %4015 = vmatpush1.bf16.msra.mxu0 0
    %4016 = vmatprep.subr.bf16.mxu0 0
    %4017 = vmatpush1.bf16.msra.mxu0 0
    %4018 = vmatprep.subr.bf16.mxu0 0
    %4019 = vmatpush1.bf16.msra.mxu0 0
    %4020 = vmatprep.subr.bf16.mxu0 0
    %4021 = vmatpush1.bf16.msra.mxu0 0
    %4022 = vmatprep.mubr.bf16.mxu0 0
    %4023 = vmatmul.mubr.bf16.gmra.mrb[0].mxu0 %v3988
    %v4024 = vpop.f32.mrb[0].mxu0
    %v4025 = vadd.f32 0.0, %v4024
    %v4026 = vpop.f32.mrb[0].mxu0
    %v4027 = vpop.f32.mrb[0].mxu0
    %v4028 = vpop.f32.mrb[0].mxu0
    %4029 = vdwg.mxu0
    %v4030 = vld [vmem:[#allocation4] sm:$0x30]
    %v4031 = vld [vmem:[#allocation4 + $0x10] sm:$0xc]
    %v4032 = vld [vmem:[#allocation4 + $0x18] sm:$0xc]
    %v4034 = vrot.slane %v3981, 4
    %v4036 = vadd.f32 %v4030, %v4034
    %v4037 = vxor.u32 %v4036, 2147483648
    %v4038 = vmul.f32 %v4037, 1.442695
    %v4039 = vpow.pop %v4038
    %v4040 = vadd.f32 %v4039, 1.0
    %v4041 = vrcp.pop %v4040
    %v4042 = vmul.f32 1.0, %v4041
    %v4043 = vadd.f32 %v3981, %v3682
    %v4045 = vrot.slane %v4043, 4
    %4046 = vrot.lane.b32.xlu0 %v4045, 64
    %v4047 = vpop.permute.xlu0 %4046
    %v4049 = vmul.f32 %v4042, %v4047
    %4051 = vrot.lane.b32.xlu0 %v4049, 64
    %v4052 = vpop.permute.xlu0 %4051
    %v4054 = vadd.f32 %v4030, %v4052
    %v4055 = vtanh.pop %v4054
    %v4057 = vrot.slane %v4025, 6
    %4058 = vrot.lane.b32.xlu0 %v4057, 96
    %v4059 = vpop.permute.xlu0 %4058
    %v4061 = vadd.f32 %v4031, %v4059
    %v4062 = vxor.u32 %v4061, 2147483648
    %v4063 = vmul.f32 %v4062, 1.442695
    %v4064 = vpow.pop %v4063
    %v4065 = vadd.f32 %v4064, 1.0
    %v4066 = vrcp.pop %v4065
    %v4067 = vmul.f32 1.0, %v4066
    %v4068 = vadd.f32 %v4032, %v4059
    %v4069 = vxor.u32 %v4068, 2147483648
    %v4070 = vmul.f32 %v4069, 1.442695
    %v4071 = vpow.pop %v4070
    %v4072 = vadd.f32 %v4071, 1.0
    %v4073 = vrcp.pop %v4072
    %v4074 = vmul.f32 1.0, %v4073
    %v4075 = vadd.f32 %v4025, %v3716
    %v4077 = vrot.slane %v4075, 6
    %4078 = vrot.lane.b32.xlu0 %v4077, 32
    %v4079 = vpop.permute.xlu0 %4078
    %v4081 = vmul.f32 %v4067, %v4079
    %4083 = vrot.lane.b32.xlu0 %v4081, 64
    %v4084 = vpop.permute.xlu0 %4083
    %v4086 = vadd.f32 %v4032, %v4084
    %v4087 = vtanh.pop %v4086
    %v4088 = vsub.f32 1.0, %v4042
    %4090 = vrot.lane.b32.xlu0 %v4055, 96
    %v4091 = vpop.permute.xlu0 %4090
    %v4093 = vmul.f32 %v4088, %v4091
    %v4095 = vrot.slane %v3915, 6
    %v4097 = vmul.f32 %v4042, %v4095
    %v4098 = vadd.f32 %v4093, %v4097
    %v4099 = vsub.f32 1.0, %v4074
    %4101 = vrot.lane.b32.xlu0 %v4087, 96
    %v4102 = vpop.permute.xlu0 %4101
    %v4104 = vmul.f32 %v4099, %v4102
    %v4106 = vrot.slane %v3926, 2
    %v4108 = vmul.f32 %v4074, %v4106
    %v4109 = vadd.f32 %v4104, %v4108
    %v4110 = vpack.c.bf16 %v4098, %v4098
    %4112 = vrot.lane.b32.xlu0 %v4110, 96
    %v4113 = vpop.permute.xlu0 %4112
    %4115 = vst.msk [vmem:[#allocation2] sm:$0x4] %vm919, %v4113
    %v4116 = vpack.c.bf16 %v4109, %v4109
    %v4118 = vrot.slane %v4116, 4
    %4119 = vrot.lane.b32.xlu0 %v4118, 32
    %v4120 = vpop.permute.xlu0 %4119
    %4122 = vst.msk [vmem:[#allocation2] sm:$0x20] %vm927, %v4120
    %v4123 = vrot.slane %v4110, 2
    %4124 = vrot.lane.b32.xlu0 %v4123, 96
    %v4125 = vpop.permute.xlu0 %4124
    %v4127 = vsel %vm292, %v4125, 0
    %4129 = vmatprep.subr.bf16.mxu0 0
    %4130 = vmatpush1.bf16.msra.mxu0 %v3575
    %4131 = vmatprep.subr.bf16.mxu0 0
    %4132 = vmatpush1.bf16.msra.mxu0 %v3576
    %4133 = vmatprep.subr.bf16.mxu0 0
    %4134 = vmatpush1.bf16.msra.mxu0 0
    %4135 = vmatprep.subr.bf16.mxu0 0
    %4136 = vmatpush1.bf16.msra.mxu0 0
    %4137 = vmatprep.subr.bf16.mxu0 0
    %4138 = vmatpush1.bf16.msra.mxu0 0
    %4139 = vmatprep.subr.bf16.mxu0 0
    %4140 = vmatpush1.bf16.msra.mxu0 0
    %4141 = vmatprep.subr.bf16.mxu0 0
    %4142 = vmatpush1.bf16.msra.mxu0 0
    %4143 = vmatprep.subr.bf16.mxu0 0
    %4144 = vmatpush1.bf16.msra.mxu0 0
    %4145 = vmatprep.subr.bf16.mxu0 0
    %4146 = vmatpush1.bf16.msra.mxu0 0
    %4147 = vmatprep.subr.bf16.mxu0 0
    %4148 = vmatpush1.bf16.msra.mxu0 0
    %4149 = vmatprep.subr.bf16.mxu0 0
    %4150 = vmatpush1.bf16.msra.mxu0 0
    %4151 = vmatprep.subr.bf16.mxu0 0
    %4152 = vmatpush1.bf16.msra.mxu0 0
    %4153 = vmatprep.subr.bf16.mxu0 0
    %4154 = vmatpush1.bf16.msra.mxu0 0
    %4155 = vmatprep.subr.bf16.mxu0 0
    %4156 = vmatpush1.bf16.msra.mxu0 0
    %4157 = vmatprep.subr.bf16.mxu0 0
    %4158 = vmatpush1.bf16.msra.mxu0 0
    %4159 = vmatprep.subr.bf16.mxu0 0
    %4160 = vmatpush1.bf16.msra.mxu0 0
    %4161 = vmatprep.mubr.bf16.mxu0 0
    %4162 = vmatmul.mubr.bf16.gmra.mrb[0].mxu0 %v4127
    %v4163 = vpop.f32.mrb[0].mxu0
    %v4164 = vadd.f32 0.0, %v4163
    %v4165 = vpop.f32.mrb[0].mxu0
    %v4166 = vpop.f32.mrb[0].mxu0
    %v4167 = vpop.f32.mrb[0].mxu0
    %4168 = vdwg.mxu0
    %v4169 = vrot.slane %v4116, 1
    %v4171 = vsel %vm292, %v4169, 0
    %4173 = vmatprep.subr.bf16.mxu0 0
    %4174 = vmatpush1.bf16.msra.mxu0 %v3627
    %4175 = vmatprep.subr.bf16.mxu0 0
    %4176 = vmatpush1.bf16.msra.mxu0 %v3628
    %4177 = vmatprep.subr.bf16.mxu0 0
    %4178 = vmatpush1.bf16.msra.mxu0 0
    %4179 = vmatprep.subr.bf16.mxu0 0
    %4180 = vmatpush1.bf16.msra.mxu0 0
    %4181 = vmatprep.subr.bf16.mxu0 0
    %4182 = vmatpush1.bf16.msra.mxu0 0
    %4183 = vmatprep.subr.bf16.mxu0 0
    %4184 = vmatpush1.bf16.msra.mxu0 0
    %4185 = vmatprep.subr.bf16.mxu0 0
    %4186 = vmatpush1.bf16.msra.mxu0 0
    %4187 = vmatprep.subr.bf16.mxu0 0
    %4188 = vmatpush1.bf16.msra.mxu0 0
    %4189 = vmatprep.subr.bf16.mxu0 0
    %4190 = vmatpush1.bf16.msra.mxu0 0
    %4191 = vmatprep.subr.bf16.mxu0 0
    %4192 = vmatpush1.bf16.msra.mxu0 0
    %4193 = vmatprep.subr.bf16.mxu0 0
    %4194 = vmatpush1.bf16.msra.mxu0 0
    %4195 = vmatprep.subr.bf16.mxu0 0
    %4196 = vmatpush1.bf16.msra.mxu0 0
    %4197 = vmatprep.subr.bf16.mxu0 0
    %4198 = vmatpush1.bf16.msra.mxu0 0
    %4199 = vmatprep.subr.bf16.mxu0 0
    %4200 = vmatpush1.bf16.msra.mxu0 0
    %4201 = vmatprep.subr.bf16.mxu0 0
    %4202 = vmatpush1.bf16.msra.mxu0 0
    %4203 = vmatprep.subr.bf16.mxu0 0
    %4204 = vmatpush1.bf16.msra.mxu0 0
    %4205 = vmatprep.mubr.bf16.mxu0 0
    %4206 = vmatmul.mubr.bf16.gmra.mrb[0].mxu0 %v4171
    %v4207 = vpop.f32.mrb[0].mxu0
    %v4208 = vadd.f32 0.0, %v4207
    %v4209 = vpop.f32.mrb[0].mxu0
    %v4210 = vpop.f32.mrb[0].mxu0
    %v4211 = vpop.f32.mrb[0].mxu0
    %4212 = vdwg.mxu0
    %v4213 = vld [vmem:[#allocation4] sm:$0xc0]
    %v4214 = vld [vmem:[#allocation4 + $0x10] sm:$0x3]
    %v4215 = vld [vmem:[#allocation4 + $0x18] sm:$0x3]
    %v4217 = vrot.slane %v4164, 2
    %v4219 = vadd.f32 %v4213, %v4217
    %v4220 = vxor.u32 %v4219, 2147483648
    %v4221 = vmul.f32 %v4220, 1.442695
    %v4222 = vpow.pop %v4221
    %v4223 = vadd.f32 %v4222, 1.0
    %v4224 = vrcp.pop %v4223
    %v4225 = vmul.f32 1.0, %v4224
    %v4226 = vadd.f32 %v4164, %v3682
    %v4228 = vrot.slane %v4226, 2
    %4229 = vrot.lane.b32.xlu0 %v4228, 64
    %v4230 = vpop.permute.xlu0 %4229
    %v4232 = vmul.f32 %v4225, %v4230
    %4234 = vrot.lane.b32.xlu0 %v4232, 64
    %v4235 = vpop.permute.xlu0 %4234
    %v4237 = vadd.f32 %v4213, %v4235
    %v4238 = vtanh.pop %v4237
    %4240 = vrot.lane.b32.xlu0 %v4208, 96
    %v4241 = vpop.permute.xlu0 %4240
    %v4243 = vadd.f32 %v4214, %v4241
    %v4244 = vxor.u32 %v4243, 2147483648
    %v4245 = vmul.f32 %v4244, 1.442695
    %v4246 = vpow.pop %v4245
    %v4247 = vadd.f32 %v4246, 1.0
    %v4248 = vrcp.pop %v4247
    %v4249 = vmul.f32 1.0, %v4248
    %v4250 = vadd.f32 %v4215, %v4241
    %v4251 = vxor.u32 %v4250, 2147483648
    %v4252 = vmul.f32 %v4251, 1.442695
    %v4253 = vpow.pop %v4252
    %v4254 = vadd.f32 %v4253, 1.0
    %v4255 = vrcp.pop %v4254
    %v4256 = vmul.f32 1.0, %v4255
    %v4257 = vadd.f32 %v4208, %v3716
    %4259 = vrot.lane.b32.xlu0 %v4257, 32
    %v4260 = vpop.permute.xlu0 %4259
    %v4262 = vmul.f32 %v4249, %v4260
    %4264 = vrot.lane.b32.xlu0 %v4262, 64
    %v4265 = vpop.permute.xlu0 %4264
    %v4267 = vadd.f32 %v4215, %v4265
    %v4268 = vtanh.pop %v4267
    %v4269 = vsub.f32 1.0, %v4225
    %4271 = vrot.lane.b32.xlu0 %v4238, 96
    %v4272 = vpop.permute.xlu0 %4271
    %v4274 = vmul.f32 %v4269, %v4272
    %v4276 = vrot.slane %v4098, 6
    %v4278 = vmul.f32 %v4225, %v4276
    %v4279 = vadd.f32 %v4274, %v4278
    %v4280 = vsub.f32 1.0, %v4256
    %4282 = vrot.lane.b32.xlu0 %v4268, 96
    %v4283 = vpop.permute.xlu0 %4282
    %v4285 = vmul.f32 %v4280, %v4283
    %v4287 = vrot.slane %v4109, 2
    %v4289 = vmul.f32 %v4256, %v4287
    %v4290 = vadd.f32 %v4285, %v4289
    %v4291 = vpack.c.bf16 %v4279, %v4279
    %4293 = vrot.lane.b32.xlu0 %v4291, 96
    %v4294 = vpop.permute.xlu0 %4293
    %4296 = vst.msk [vmem:[#allocation2] sm:$0x8] %vm1102, %v4294
    %v4297 = vpack.c.bf16 %v4290, %v4290
    %v4299 = vrot.slane %v4297, 4
    %4300 = vrot.lane.b32.xlu0 %v4299, 32
    %v4301 = vpop.permute.xlu0 %4300
    %4303 = vst.msk [vmem:[#allocation2] sm:$0x10] %vm1110, %v4301
    %v4304 = vrot.slane %v4291, 3
    %4305 = vrot.lane.b32.xlu0 %v4304, 96
    %v4306 = vpop.permute.xlu0 %4305
    %v4308 = vsel %vm292, %v4306, 0
    %4310 = vmatprep.subr.bf16.mxu0 0
    %4311 = vmatpush1.bf16.msra.mxu0 %v3575
    %4312 = vmatprep.subr.bf16.mxu0 0
    %4313 = vmatpush1.bf16.msra.mxu0 %v3576
    %4314 = vmatprep.subr.bf16.mxu0 0
    %4315 = vmatpush1.bf16.msra.mxu0 0
    %4316 = vmatprep.subr.bf16.mxu0 0
    %4317 = vmatpush1.bf16.msra.mxu0 0
    %4318 = vmatprep.subr.bf16.mxu0 0
    %4319 = vmatpush1.bf16.msra.mxu0 0
    %4320 = vmatprep.subr.bf16.mxu0 0
    %4321 = vmatpush1.bf16.msra.mxu0 0
    %4322 = vmatprep.subr.bf16.mxu0 0
    %4323 = vmatpush1.bf16.msra.mxu0 0
    %4324 = vmatprep.subr.bf16.mxu0 0
    %4325 = vmatpush1.bf16.msra.mxu0 0
    %4326 = vmatprep.subr.bf16.mxu0 0
    %4327 = vmatpush1.bf16.msra.mxu0 0
    %4328 = vmatprep.subr.bf16.mxu0 0
    %4329 = vmatpush1.bf16.msra.mxu0 0
    %4330 = vmatprep.subr.bf16.mxu0 0
    %4331 = vmatpush1.bf16.msra.mxu0 0
    %4332 = vmatprep.subr.bf16.mxu0 0
    %4333 = vmatpush1.bf16.msra.mxu0 0
    %4334 = vmatprep.subr.bf16.mxu0 0
    %4335 = vmatpush1.bf16.msra.mxu0 0
    %4336 = vmatprep.subr.bf16.mxu0 0
    %4337 = vmatpush1.bf16.msra.mxu0 0
    %4338 = vmatprep.subr.bf16.mxu0 0
    %4339 = vmatpush1.bf16.msra.mxu0 0
    %4340 = vmatprep.subr.bf16.mxu0 0
    %4341 = vmatpush1.bf16.msra.mxu0 0
    %4342 = vmatprep.mubr.bf16.mxu0 0
    %4343 = vmatmul.mubr.bf16.gmra.mrb[0].mxu0 %v4308
    %v4344 = vpop.f32.mrb[0].mxu0
    %v4345 = vadd.f32 0.0, %v4344
    %v4346 = vpop.f32.mrb[0].mxu0
    %v4347 = vpop.f32.mrb[0].mxu0
    %v4348 = vpop.f32.mrb[0].mxu0
    %4349 = vdwg.mxu0
    %v4351 = vsel %vm292, %v4297, 0
    %4353 = vmatprep.subr.bf16.mxu0 0
    %4354 = vmatpush1.bf16.msra.mxu0 %v3627
    %4355 = vmatprep.subr.bf16.mxu0 0
    %4356 = vmatpush1.bf16.msra.mxu0 %v3628
    %4357 = vmatprep.subr.bf16.mxu0 0
    %4358 = vmatpush1.bf16.msra.mxu0 0
    %4359 = vmatprep.subr.bf16.mxu0 0
    %4360 = vmatpush1.bf16.msra.mxu0 0
    %4361 = vmatprep.subr.bf16.mxu0 0
    %4362 = vmatpush1.bf16.msra.mxu0 0
    %4363 = vmatprep.subr.bf16.mxu0 0
    %4364 = vmatpush1.bf16.msra.mxu0 0
    %4365 = vmatprep.subr.bf16.mxu0 0
    %4366 = vmatpush1.bf16.msra.mxu0 0
    %4367 = vmatprep.subr.bf16.mxu0 0
    %4368 = vmatpush1.bf16.msra.mxu0 0
    %4369 = vmatprep.subr.bf16.mxu0 0
    %4370 = vmatpush1.bf16.msra.mxu0 0
    %4371 = vmatprep.subr.bf16.mxu0 0
    %4372 = vmatpush1.bf16.msra.mxu0 0
    %4373 = vmatprep.subr.bf16.mxu0 0
    %4374 = vmatpush1.bf16.msra.mxu0 0
    %4375 = vmatprep.subr.bf16.mxu0 0
    %4376 = vmatpush1.bf16.msra.mxu0 0
    %4377 = vmatprep.subr.bf16.mxu0 0
    %4378 = vmatpush1.bf16.msra.mxu0 0
    %4379 = vmatprep.subr.bf16.mxu0 0
    %4380 = vmatpush1.bf16.msra.mxu0 0
    %4381 = vmatprep.subr.bf16.mxu0 0
    %4382 = vmatpush1.bf16.msra.mxu0 0
    %4383 = vmatprep.subr.bf16.mxu0 0
    %4384 = vmatpush1.bf16.msra.mxu0 0
    %4385 = vmatprep.mubr.bf16.mxu0 0
    %4386 = vmatmul.mubr.bf16.gmra.mrb[0].mxu0 %v4351
    %v4387 = vpop.f32.mrb[0].mxu0
    %v4388 = vadd.f32 0.0, %v4387
    %v4389 = vpop.f32.mrb[0].mxu0
    %v4390 = vpop.f32.mrb[0].mxu0
    %v4391 = vpop.f32.mrb[0].mxu0
    %4392 = vdwg.mxu0
    %v4393 = vld [vmem:[#allocation4 + $0x10] sm:$0x3]
    %v4394 = vld [vmem:[#allocation4] sm:$0xc0]
    %v4395 = vld [vmem:[#allocation4 + $0x8] sm:$0xc0]
    %v4396 = vadd.f32 %v4393, %v4345
    %v4397 = vxor.u32 %v4396, 2147483648
    %v4398 = vmul.f32 %v4397, 1.442695
    %v4399 = vpow.pop %v4398
    %v4400 = vadd.f32 %v4399, 1.0
    %v4401 = vrcp.pop %v4400
    %v4402 = vmul.f32 1.0, %v4401
    %v4403 = vadd.f32 %v4345, %v3682
    %4405 = vrot.lane.b32.xlu0 %v4403, 64
    %v4406 = vpop.permute.xlu0 %4405
    %v4408 = vmul.f32 %v4402, %v4406
    %4410 = vrot.lane.b32.xlu0 %v4408, 64
    %v4411 = vpop.permute.xlu0 %4410
    %v4413 = vadd.f32 %v4393, %v4411
    %v4414 = vtanh.pop %v4413
    %v4416 = vrot.slane %v4388, 2
    %4417 = vrot.lane.b32.xlu0 %v4416, 96
    %v4418 = vpop.permute.xlu0 %4417
    %v4420 = vadd.f32 %v4394, %v4418
    %v4421 = vxor.u32 %v4420, 2147483648
    %v4422 = vmul.f32 %v4421, 1.442695
    %v4423 = vpow.pop %v4422
    %v4424 = vadd.f32 %v4423, 1.0
    %v4425 = vrcp.pop %v4424
    %v4426 = vmul.f32 1.0, %v4425
    %v4427 = vadd.f32 %v4395, %v4418
    %v4428 = vxor.u32 %v4427, 2147483648
    %v4429 = vmul.f32 %v4428, 1.442695
    %v4430 = vpow.pop %v4429
    %v4431 = vadd.f32 %v4430, 1.0
    %v4432 = vrcp.pop %v4431
    %v4433 = vmul.f32 1.0, %v4432
    %v4434 = vadd.f32 %v4388, %v3716
    %v4436 = vrot.slane %v4434, 2
    %4437 = vrot.lane.b32.xlu0 %v4436, 32
    %v4438 = vpop.permute.xlu0 %4437
    %v4440 = vmul.f32 %v4426, %v4438
    %4442 = vrot.lane.b32.xlu0 %v4440, 64
    %v4443 = vpop.permute.xlu0 %4442
    %v4445 = vadd.f32 %v4395, %v4443
    %v4446 = vtanh.pop %v4445
    %v4447 = vsub.f32 1.0, %v4402
    %4449 = vrot.lane.b32.xlu0 %v4414, 96
    %v4450 = vpop.permute.xlu0 %4449
    %v4452 = vmul.f32 %v4447, %v4450
    %v4454 = vrot.slane %v4279, 6
    %v4456 = vmul.f32 %v4402, %v4454
    %v4457 = vadd.f32 %v4452, %v4456
    %v4458 = vsub.f32 1.0, %v4433
    %4460 = vrot.lane.b32.xlu0 %v4446, 96
    %v4461 = vpop.permute.xlu0 %4460
    %v4463 = vmul.f32 %v4458, %v4461
    %v4465 = vrot.slane %v4290, 2
    %v4467 = vmul.f32 %v4433, %v4465
    %v4468 = vadd.f32 %v4463, %v4467
    %v4469 = vpack.c.bf16 %v4457, %v4457
    %v4471 = vrot.slane %v4469, 4
    %4472 = vrot.lane.b32.xlu0 %v4471, 96
    %v4473 = vpop.permute.xlu0 %4472
    %4475 = vst.msk [vmem:[#allocation2] sm:$0x10] %vm1283, %v4473
    %v4476 = vpack.c.bf16 %v4468, %v4468
    %4478 = vrot.lane.b32.xlu0 %v4476, 32
    %v4479 = vpop.permute.xlu0 %4478
    %4481 = vst.msk [vmem:[#allocation2] sm:$0x8] %vm1290, %v4479
    %4482 = vrot.lane.b32.xlu0 %v4469, 96
    %v4483 = vpop.permute.xlu0 %4482
    %v4485 = vsel %vm292, %v4483, 0
    %4487 = vmatprep.subr.bf16.mxu0 0
    %4488 = vmatpush1.bf16.msra.mxu0 %v3575
    %4489 = vmatprep.subr.bf16.mxu0 0
    %4490 = vmatpush1.bf16.msra.mxu0 %v3576
    %4491 = vmatprep.subr.bf16.mxu0 0
    %4492 = vmatpush1.bf16.msra.mxu0 0
    %4493 = vmatprep.subr.bf16.mxu0 0
    %4494 = vmatpush1.bf16.msra.mxu0 0
    %4495 = vmatprep.subr.bf16.mxu0 0
    %4496 = vmatpush1.bf16.msra.mxu0 0
    %4497 = vmatprep.subr.bf16.mxu0 0
    %4498 = vmatpush1.bf16.msra.mxu0 0
    %4499 = vmatprep.subr.bf16.mxu0 0
    %4500 = vmatpush1.bf16.msra.mxu0 0
    %4501 = vmatprep.subr.bf16.mxu0 0
    %4502 = vmatpush1.bf16.msra.mxu0 0
    %4503 = vmatprep.subr.bf16.mxu0 0
    %4504 = vmatpush1.bf16.msra.mxu0 0
    %4505 = vmatprep.subr.bf16.mxu0 0
    %4506 = vmatpush1.bf16.msra.mxu0 0
    %4507 = vmatprep.subr.bf16.mxu0 0
    %4508 = vmatpush1.bf16.msra.mxu0 0
    %4509 = vmatprep.subr.bf16.mxu0 0
    %4510 = vmatpush1.bf16.msra.mxu0 0
    %4511 = vmatprep.subr.bf16.mxu0 0
    %4512 = vmatpush1.bf16.msra.mxu0 0
    %4513 = vmatprep.subr.bf16.mxu0 0
    %4514 = vmatpush1.bf16.msra.mxu0 0
    %4515 = vmatprep.subr.bf16.mxu0 0
    %4516 = vmatpush1.bf16.msra.mxu0 0
    %4517 = vmatprep.subr.bf16.mxu0 0
    %4518 = vmatpush1.bf16.msra.mxu0 0
    %4519 = vmatprep.mubr.bf16.mxu0 0
    %4520 = vmatmul.mubr.bf16.gmra.mrb[0].mxu0 %v4485
    %v4521 = vpop.f32.mrb[0].mxu0
    %v4522 = vadd.f32 0.0, %v4521
    %v4523 = vpop.f32.mrb[0].mxu0
    %v4524 = vpop.f32.mrb[0].mxu0
    %v4525 = vpop.f32.mrb[0].mxu0
    %4526 = vdwg.mxu0
    %v4527 = vrot.slane %v4476, 3
    %v4529 = vsel %vm292, %v4527, 0
    %4531 = vmatprep.subr.bf16.mxu0 0
    %4532 = vmatpush1.bf16.msra.mxu0 %v3627
    %4533 = vmatprep.subr.bf16.mxu0 0
    %4534 = vmatpush1.bf16.msra.mxu0 %v3628
    %4535 = vmatprep.subr.bf16.mxu0 0
    %4536 = vmatpush1.bf16.msra.mxu0 0
    %4537 = vmatprep.subr.bf16.mxu0 0
    %4538 = vmatpush1.bf16.msra.mxu0 0
    %4539 = vmatprep.subr.bf16.mxu0 0
    %4540 = vmatpush1.bf16.msra.mxu0 0
    %4541 = vmatprep.subr.bf16.mxu0 0
    %4542 = vmatpush1.bf16.msra.mxu0 0
    %4543 = vmatprep.subr.bf16.mxu0 0
    %4544 = vmatpush1.bf16.msra.mxu0 0
    %4545 = vmatprep.subr.bf16.mxu0 0
    %4546 = vmatpush1.bf16.msra.mxu0 0
    %4547 = vmatprep.subr.bf16.mxu0 0
    %4548 = vmatpush1.bf16.msra.mxu0 0
    %4549 = vmatprep.subr.bf16.mxu0 0
    %4550 = vmatpush1.bf16.msra.mxu0 0
    %4551 = vmatprep.subr.bf16.mxu0 0
    %4552 = vmatpush1.bf16.msra.mxu0 0
    %4553 = vmatprep.subr.bf16.mxu0 0
    %4554 = vmatpush1.bf16.msra.mxu0 0
    %4555 = vmatprep.subr.bf16.mxu0 0
    %4556 = vmatpush1.bf16.msra.mxu0 0
    %4557 = vmatprep.subr.bf16.mxu0 0
    %4558 = vmatpush1.bf16.msra.mxu0 0
    %4559 = vmatprep.subr.bf16.mxu0 0
    %4560 = vmatpush1.bf16.msra.mxu0 0
    %4561 = vmatprep.subr.bf16.mxu0 0
    %4562 = vmatpush1.bf16.msra.mxu0 0
    %4563 = vmatprep.mubr.bf16.mxu0 0
    %4564 = vmatmul.mubr.bf16.gmra.mrb[0].mxu0 %v4529
    %v4565 = vpop.f32.mrb[0].mxu0
    %v4566 = vadd.f32 0.0, %v4565
    %v4567 = vpop.f32.mrb[0].mxu0
    %v4568 = vpop.f32.mrb[0].mxu0
    %v4569 = vpop.f32.mrb[0].mxu0
    %4570 = vdwg.mxu0
    %v4571 = vld [vmem:[#allocation4 + $0x10] sm:$0xc]
    %v4572 = vld [vmem:[#allocation4] sm:$0x30]
    %v4573 = vld [vmem:[#allocation4 + $0x8] sm:$0x30]
    %v4575 = vrot.slane %v4522, 6
    %v4577 = vadd.f32 %v4571, %v4575
    %v4578 = vxor.u32 %v4577, 2147483648
    %v4579 = vmul.f32 %v4578, 1.442695
    %v4580 = vpow.pop %v4579
    %v4581 = vadd.f32 %v4580, 1.0
    %v4582 = vrcp.pop %v4581
    %v4583 = vmul.f32 1.0, %v4582
    %v4584 = vadd.f32 %v4522, %v3682
    %v4586 = vrot.slane %v4584, 6
    %4587 = vrot.lane.b32.xlu0 %v4586, 64
    %v4588 = vpop.permute.xlu0 %4587
    %v4590 = vmul.f32 %v4583, %v4588
    %4592 = vrot.lane.b32.xlu0 %v4590, 64
    %v4593 = vpop.permute.xlu0 %4592
    %v4595 = vadd.f32 %v4571, %v4593
    %v4596 = vtanh.pop %v4595
    %v4598 = vrot.slane %v4566, 4
    %4599 = vrot.lane.b32.xlu0 %v4598, 96
    %v4600 = vpop.permute.xlu0 %4599
    %v4602 = vadd.f32 %v4572, %v4600
    %v4603 = vxor.u32 %v4602, 2147483648
    %v4604 = vmul.f32 %v4603, 1.442695
    %v4605 = vpow.pop %v4604
    %v4606 = vadd.f32 %v4605, 1.0
    %v4607 = vrcp.pop %v4606
    %v4608 = vmul.f32 1.0, %v4607
    %v4609 = vadd.f32 %v4573, %v4600
    %v4610 = vxor.u32 %v4609, 2147483648
    %v4611 = vmul.f32 %v4610, 1.442695
    %v4612 = vpow.pop %v4611
    %v4613 = vadd.f32 %v4612, 1.0
    %v4614 = vrcp.pop %v4613
    %v4615 = vmul.f32 1.0, %v4614
    %v4616 = vadd.f32 %v4566, %v3716
    %v4618 = vrot.slane %v4616, 4
    %4619 = vrot.lane.b32.xlu0 %v4618, 32
    %v4620 = vpop.permute.xlu0 %4619
    %v4622 = vmul.f32 %v4608, %v4620
    %4624 = vrot.lane.b32.xlu0 %v4622, 64
    %v4625 = vpop.permute.xlu0 %4624
    %v4627 = vadd.f32 %v4573, %v4625
    %v4628 = vtanh.pop %v4627
    %v4629 = vsub.f32 1.0, %v4583
    %4631 = vrot.lane.b32.xlu0 %v4596, 96
    %v4632 = vpop.permute.xlu0 %4631
    %v4634 = vmul.f32 %v4629, %v4632
    %v4636 = vrot.slane %v4457, 6
    %v4638 = vmul.f32 %v4583, %v4636
    %v4639 = vadd.f32 %v4634, %v4638
    %v4640 = vsub.f32 1.0, %v4615
    %4642 = vrot.lane.b32.xlu0 %v4628, 96
    %v4643 = vpop.permute.xlu0 %4642
    %v4645 = vmul.f32 %v4640, %v4643
    %v4647 = vrot.slane %v4468, 2
    %v4649 = vmul.f32 %v4615, %v4647
    %v4650 = vadd.f32 %v4645, %v4649
    %v4651 = vpack.c.bf16 %v4639, %v4639
    %v4653 = vrot.slane %v4651, 4
    %4654 = vrot.lane.b32.xlu0 %v4653, 96
    %v4655 = vpop.permute.xlu0 %4654
    %4657 = vst.msk [vmem:[#allocation2] sm:$0x20] %vm1467, %v4655
    %v4658 = vpack.c.bf16 %v4650, %v4650
    %4660 = vrot.lane.b32.xlu0 %v4658, 32
    %v4661 = vpop.permute.xlu0 %4660
    %4663 = vst.msk [vmem:[#allocation2] sm:$0x4] %vm1474, %v4661
    %v4664 = vrot.slane %v4651, 1
    %4665 = vrot.lane.b32.xlu0 %v4664, 96
    %v4666 = vpop.permute.xlu0 %4665
    %v4668 = vsel %vm292, %v4666, 0
    %4670 = vmatprep.subr.bf16.mxu0 0
    %4671 = vmatpush1.bf16.msra.mxu0 %v3575
    %4672 = vmatprep.subr.bf16.mxu0 0
    %4673 = vmatpush1.bf16.msra.mxu0 %v3576
    %4674 = vmatprep.subr.bf16.mxu0 0
    %4675 = vmatpush1.bf16.msra.mxu0 0
    %4676 = vmatprep.subr.bf16.mxu0 0
    %4677 = vmatpush1.bf16.msra.mxu0 0
    %4678 = vmatprep.subr.bf16.mxu0 0
    %4679 = vmatpush1.bf16.msra.mxu0 0
    %4680 = vmatprep.subr.bf16.mxu0 0
    %4681 = vmatpush1.bf16.msra.mxu0 0
    %4682 = vmatprep.subr.bf16.mxu0 0
    %4683 = vmatpush1.bf16.msra.mxu0 0
    %4684 = vmatprep.subr.bf16.mxu0 0
    %4685 = vmatpush1.bf16.msra.mxu0 0
    %4686 = vmatprep.subr.bf16.mxu0 0
    %4687 = vmatpush1.bf16.msra.mxu0 0
    %4688 = vmatprep.subr.bf16.mxu0 0
    %4689 = vmatpush1.bf16.msra.mxu0 0
    %4690 = vmatprep.subr.bf16.mxu0 0
    %4691 = vmatpush1.bf16.msra.mxu0 0
    %4692 = vmatprep.subr.bf16.mxu0 0
    %4693 = vmatpush1.bf16.msra.mxu0 0
    %4694 = vmatprep.subr.bf16.mxu0 0
    %4695 = vmatpush1.bf16.msra.mxu0 0
    %4696 = vmatprep.subr.bf16.mxu0 0
    %4697 = vmatpush1.bf16.msra.mxu0 0
    %4698 = vmatprep.subr.bf16.mxu0 0
    %4699 = vmatpush1.bf16.msra.mxu0 0
    %4700 = vmatprep.subr.bf16.mxu0 0
    %4701 = vmatpush1.bf16.msra.mxu0 0
    %4702 = vmatprep.mubr.bf16.mxu0 0
    %4703 = vmatmul.mubr.bf16.gmra.mrb[0].mxu0 %v4668
    %v4704 = vpop.f32.mrb[0].mxu0
    %v4705 = vadd.f32 0.0, %v4704
    %v4706 = vpop.f32.mrb[0].mxu0
    %v4707 = vpop.f32.mrb[0].mxu0
    %v4708 = vpop.f32.mrb[0].mxu0
    %4709 = vdwg.mxu0
    %v4710 = vrot.slane %v4658, 2
    %v4712 = vsel %vm292, %v4710, 0
    %4714 = vmatprep.subr.bf16.mxu0 0
    %4715 = vmatpush1.bf16.msra.mxu0 %v3627
    %4716 = vmatprep.subr.bf16.mxu0 0
    %4717 = vmatpush1.bf16.msra.mxu0 %v3628
    %4718 = vmatprep.subr.bf16.mxu0 0
    %4719 = vmatpush1.bf16.msra.mxu0 0
    %4720 = vmatprep.subr.bf16.mxu0 0
    %4721 = vmatpush1.bf16.msra.mxu0 0
    %4722 = vmatprep.subr.bf16.mxu0 0
    %4723 = vmatpush1.bf16.msra.mxu0 0
    %4724 = vmatprep.subr.bf16.mxu0 0
    %4725 = vmatpush1.bf16.msra.mxu0 0
    %4726 = vmatprep.subr.bf16.mxu0 0
    %4727 = vmatpush1.bf16.msra.mxu0 0
    %4728 = vmatprep.subr.bf16.mxu0 0
    %4729 = vmatpush1.bf16.msra.mxu0 0
    %4730 = vmatprep.subr.bf16.mxu0 0
    %4731 = vmatpush1.bf16.msra.mxu0 0
    %4732 = vmatprep.subr.bf16.mxu0 0
    %4733 = vmatpush1.bf16.msra.mxu0 0
    %4734 = vmatprep.subr.bf16.mxu0 0
    %4735 = vmatpush1.bf16.msra.mxu0 0
    %4736 = vmatprep.subr.bf16.mxu0 0
    %4737 = vmatpush1.bf16.msra.mxu0 0
    %4738 = vmatprep.subr.bf16.mxu0 0
    %4739 = vmatpush1.bf16.msra.mxu0 0
    %4740 = vmatprep.subr.bf16.mxu0 0
    %4741 = vmatpush1.bf16.msra.mxu0 0
    %4742 = vmatprep.subr.bf16.mxu0 0
    %4743 = vmatpush1.bf16.msra.mxu0 0
    %4744 = vmatprep.subr.bf16.mxu0 0
    %4745 = vmatpush1.bf16.msra.mxu0 0
    %4746 = vmatprep.mubr.bf16.mxu0 0
    %4747 = vmatmul.mubr.bf16.gmra.mrb[0].mxu0 %v4712
    %v4748 = vpop.f32.mrb[0].mxu0
    %v4749 = vadd.f32 0.0, %v4748
    %v4750 = vpop.f32.mrb[0].mxu0
    %v4751 = vpop.f32.mrb[0].mxu0
    %v4752 = vpop.f32.mrb[0].mxu0
    %4753 = vdwg.mxu0
    %v4754 = vld [vmem:[#allocation4 + $0x10] sm:$0x30]
    %v4755 = vld [vmem:[#allocation4] sm:$0xc]
    %v4756 = vld [vmem:[#allocation4 + $0x8] sm:$0xc]
    %v4758 = vrot.slane %v4705, 4
    %v4760 = vadd.f32 %v4754, %v4758
    %v4761 = vxor.u32 %v4760, 2147483648
    %v4762 = vmul.f32 %v4761, 1.442695
    %v4763 = vpow.pop %v4762
    %v4764 = vadd.f32 %v4763, 1.0
    %v4765 = vrcp.pop %v4764
    %v4766 = vmul.f32 1.0, %v4765
    %v4767 = vadd.f32 %v4705, %v3682
    %v4769 = vrot.slane %v4767, 4
    %4770 = vrot.lane.b32.xlu0 %v4769, 64
    %v4771 = vpop.permute.xlu0 %4770
    %v4773 = vmul.f32 %v4766, %v4771
    %4775 = vrot.lane.b32.xlu0 %v4773, 64
    %v4776 = vpop.permute.xlu0 %4775
    %v4778 = vadd.f32 %v4754, %v4776
    %v4779 = vtanh.pop %v4778
    %v4781 = vrot.slane %v4749, 6
    %4782 = vrot.lane.b32.xlu0 %v4781, 96
    %v4783 = vpop.permute.xlu0 %4782
    %v4785 = vadd.f32 %v4755, %v4783
    %v4786 = vxor.u32 %v4785, 2147483648
    %v4787 = vmul.f32 %v4786, 1.442695
    %v4788 = vpow.pop %v4787
    %v4789 = vadd.f32 %v4788, 1.0
    %v4790 = vrcp.pop %v4789
    %v4791 = vmul.f32 1.0, %v4790
    %v4792 = vadd.f32 %v4756, %v4783
    %v4793 = vxor.u32 %v4792, 2147483648
    %v4794 = vmul.f32 %v4793, 1.442695
    %v4795 = vpow.pop %v4794
    %v4796 = vadd.f32 %v4795, 1.0
    %v4797 = vrcp.pop %v4796
    %v4798 = vmul.f32 1.0, %v4797
    %v4799 = vadd.f32 %v4749, %v3716
    %v4801 = vrot.slane %v4799, 6
    %4802 = vrot.lane.b32.xlu0 %v4801, 32
    %v4803 = vpop.permute.xlu0 %4802
    %v4805 = vmul.f32 %v4791, %v4803
    %4807 = vrot.lane.b32.xlu0 %v4805, 64
    %v4808 = vpop.permute.xlu0 %4807
    %v4810 = vadd.f32 %v4756, %v4808
    %v4811 = vtanh.pop %v4810
    %v4812 = vsub.f32 1.0, %v4766
    %4814 = vrot.lane.b32.xlu0 %v4779, 96
    %v4815 = vpop.permute.xlu0 %4814
    %v4817 = vmul.f32 %v4812, %v4815
    %v4819 = vrot.slane %v4639, 6
    %v4821 = vmul.f32 %v4766, %v4819
    %v4822 = vadd.f32 %v4817, %v4821
    %v4823 = vsub.f32 1.0, %v4798
    %4825 = vrot.lane.b32.xlu0 %v4811, 96
    %v4826 = vpop.permute.xlu0 %4825
    %v4828 = vmul.f32 %v4823, %v4826
    %v4830 = vrot.slane %v4650, 2
    %v4832 = vmul.f32 %v4798, %v4830
    %v4833 = vadd.f32 %v4828, %v4832
    %v4834 = vpack.c.bf16 %v4822, %v4822
    %v4836 = vrot.slane %v4834, 4
    %4837 = vrot.lane.b32.xlu0 %v4836, 96
    %v4838 = vpop.permute.xlu0 %4837
    %4840 = vst.msk [vmem:[#allocation2] sm:$0x40] %vm1652, %v4838
    %v4841 = vpack.c.bf16 %v4833, %v4833
    %4843 = vrot.lane.b32.xlu0 %v4841, 32
    %v4844 = vpop.permute.xlu0 %4843
    %4846 = vst.msk [vmem:[#allocation2] sm:$0x2] %vm1659, %v4844
    %v4847 = vrot.slane %v4834, 2
    %4848 = vrot.lane.b32.xlu0 %v4847, 96
    %v4849 = vpop.permute.xlu0 %4848
    %v4851 = vsel %vm292, %v4849, 0
    %4853 = vmatprep.subr.bf16.mxu0 0
    %4854 = vmatpush1.bf16.msra.mxu0 %v3575
    %4855 = vmatprep.subr.bf16.mxu0 0
    %4856 = vmatpush1.bf16.msra.mxu0 %v3576
    %4857 = vmatprep.subr.bf16.mxu0 0
    %4858 = vmatpush1.bf16.msra.mxu0 0
    %4859 = vmatprep.subr.bf16.mxu0 0
    %4860 = vmatpush1.bf16.msra.mxu0 0
    %4861 = vmatprep.subr.bf16.mxu0 0
    %4862 = vmatpush1.bf16.msra.mxu0 0
    %4863 = vmatprep.subr.bf16.mxu0 0
    %4864 = vmatpush1.bf16.msra.mxu0 0
    %4865 = vmatprep.subr.bf16.mxu0 0
    %4866 = vmatpush1.bf16.msra.mxu0 0
    %4867 = vmatprep.subr.bf16.mxu0 0
    %4868 = vmatpush1.bf16.msra.mxu0 0
    %4869 = vmatprep.subr.bf16.mxu0 0
    %4870 = vmatpush1.bf16.msra.mxu0 0
    %4871 = vmatprep.subr.bf16.mxu0 0
    %4872 = vmatpush1.bf16.msra.mxu0 0
    %4873 = vmatprep.subr.bf16.mxu0 0
    %4874 = vmatpush1.bf16.msra.mxu0 0
    %4875 = vmatprep.subr.bf16.mxu0 0
    %4876 = vmatpush1.bf16.msra.mxu0 0
    %4877 = vmatprep.subr.bf16.mxu0 0
    %4878 = vmatpush1.bf16.msra.mxu0 0
    %4879 = vmatprep.subr.bf16.mxu0 0
    %4880 = vmatpush1.bf16.msra.mxu0 0
    %4881 = vmatprep.subr.bf16.mxu0 0
    %4882 = vmatpush1.bf16.msra.mxu0 0
    %4883 = vmatprep.subr.bf16.mxu0 0
    %4884 = vmatpush1.bf16.msra.mxu0 0
    %4885 = vmatprep.mubr.bf16.mxu0 0
    %4886 = vmatmul.mubr.bf16.gmra.mrb[0].mxu0 %v4851
    %v4887 = vpop.f32.mrb[0].mxu0
    %v4888 = vadd.f32 0.0, %v4887
    %v4889 = vpop.f32.mrb[0].mxu0
    %v4890 = vpop.f32.mrb[0].mxu0
    %v4891 = vpop.f32.mrb[0].mxu0
    %4892 = vdwg.mxu0
    %v4893 = vrot.slane %v4841, 1
    %v4895 = vsel %vm292, %v4893, 0
    %4897 = vmatprep.subr.bf16.mxu0 0
    %4898 = vmatpush1.bf16.msra.mxu0 %v3627
    %4899 = vmatprep.subr.bf16.mxu0 0
    %4900 = vmatpush1.bf16.msra.mxu0 %v3628
    %4901 = vmatprep.subr.bf16.mxu0 0
    %4902 = vmatpush1.bf16.msra.mxu0 0
    %4903 = vmatprep.subr.bf16.mxu0 0
    %4904 = vmatpush1.bf16.msra.mxu0 0
    %4905 = vmatprep.subr.bf16.mxu0 0
    %4906 = vmatpush1.bf16.msra.mxu0 0
    %4907 = vmatprep.subr.bf16.mxu0 0
    %4908 = vmatpush1.bf16.msra.mxu0 0
    %4909 = vmatprep.subr.bf16.mxu0 0
    %4910 = vmatpush1.bf16.msra.mxu0 0
    %4911 = vmatprep.subr.bf16.mxu0 0
    %4912 = vmatpush1.bf16.msra.mxu0 0
    %4913 = vmatprep.subr.bf16.mxu0 0
    %4914 = vmatpush1.bf16.msra.mxu0 0
    %4915 = vmatprep.subr.bf16.mxu0 0
    %4916 = vmatpush1.bf16.msra.mxu0 0
    %4917 = vmatprep.subr.bf16.mxu0 0
    %4918 = vmatpush1.bf16.msra.mxu0 0
    %4919 = vmatprep.subr.bf16.mxu0 0
    %4920 = vmatpush1.bf16.msra.mxu0 0
    %4921 = vmatprep.subr.bf16.mxu0 0
    %4922 = vmatpush1.bf16.msra.mxu0 0
    %4923 = vmatprep.subr.bf16.mxu0 0
    %4924 = vmatpush1.bf16.msra.mxu0 0
    %4925 = vmatprep.subr.bf16.mxu0 0
    %4926 = vmatpush1.bf16.msra.mxu0 0
    %4927 = vmatprep.subr.bf16.mxu0 0
    %4928 = vmatpush1.bf16.msra.mxu0 0
    %4929 = vmatprep.mubr.bf16.mxu0 0
    %4930 = vmatmul.mubr.bf16.gmra.mrb[0].mxu0 %v4895
    %v4931 = vpop.f32.mrb[0].mxu0
    %v4932 = vadd.f32 0.0, %v4931
    %v4933 = vpop.f32.mrb[0].mxu0
    %v4934 = vpop.f32.mrb[0].mxu0
    %v4935 = vpop.f32.mrb[0].mxu0
    %4936 = vdwg.mxu0
    %v4937 = vld [vmem:[#allocation4 + $0x10] sm:$0xc0]
    %v4938 = vld [vmem:[#allocation4] sm:$0x3]
    %v4939 = vld [vmem:[#allocation4 + $0x8] sm:$0x3]
    %v4941 = vrot.slane %v4888, 2
    %v4943 = vadd.f32 %v4937, %v4941
    %v4944 = vxor.u32 %v4943, 2147483648
    %v4945 = vmul.f32 %v4944, 1.442695
    %v4946 = vpow.pop %v4945
    %v4947 = vadd.f32 %v4946, 1.0
    %v4948 = vrcp.pop %v4947
    %v4949 = vmul.f32 1.0, %v4948
    %v4950 = vadd.f32 %v4888, %v3682
    %v4952 = vrot.slane %v4950, 2
    %4953 = vrot.lane.b32.xlu0 %v4952, 64
    %v4954 = vpop.permute.xlu0 %4953
    %v4956 = vmul.f32 %v4949, %v4954
    %4958 = vrot.lane.b32.xlu0 %v4956, 64
    %v4959 = vpop.permute.xlu0 %4958
    %v4961 = vadd.f32 %v4937, %v4959
    %v4962 = vtanh.pop %v4961
    %4964 = vrot.lane.b32.xlu0 %v4932, 96
    %v4965 = vpop.permute.xlu0 %4964
    %v4967 = vadd.f32 %v4938, %v4965
    %v4968 = vxor.u32 %v4967, 2147483648
    %v4969 = vmul.f32 %v4968, 1.442695
    %v4970 = vpow.pop %v4969
    %v4971 = vadd.f32 %v4970, 1.0
    %v4972 = vrcp.pop %v4971
    %v4973 = vmul.f32 1.0, %v4972
    %v4974 = vadd.f32 %v4939, %v4965
    %v4975 = vxor.u32 %v4974, 2147483648
    %v4976 = vmul.f32 %v4975, 1.442695
    %v4977 = vpow.pop %v4976
    %v4978 = vadd.f32 %v4977, 1.0
    %v4979 = vrcp.pop %v4978
    %v4980 = vmul.f32 1.0, %v4979
    %v4981 = vadd.f32 %v4932, %v3716
    %4983 = vrot.lane.b32.xlu0 %v4981, 32
    %v4984 = vpop.permute.xlu0 %4983
    %v4986 = vmul.f32 %v4973, %v4984
    %4988 = vrot.lane.b32.xlu0 %v4986, 64
    %v4989 = vpop.permute.xlu0 %4988
    %v4991 = vadd.f32 %v4939, %v4989
    %v4992 = vtanh.pop %v4991
    %v4993 = vsub.f32 1.0, %v4949
    %4995 = vrot.lane.b32.xlu0 %v4962, 96
    %v4996 = vpop.permute.xlu0 %4995
    %v4998 = vmul.f32 %v4993, %v4996
    %v5000 = vrot.slane %v4822, 6
    %v5002 = vmul.f32 %v4949, %v5000
    %v5003 = vadd.f32 %v4998, %v5002
    %v5004 = vsub.f32 1.0, %v4980
    %5006 = vrot.lane.b32.xlu0 %v4992, 96
    %v5007 = vpop.permute.xlu0 %5006
    %v5009 = vmul.f32 %v5004, %v5007
    %v5011 = vrot.slane %v4833, 2
    %v5013 = vmul.f32 %v4980, %v5011
    %v5014 = vadd.f32 %v5009, %v5013
    %v5015 = vpack.c.bf16 %v5003, %v5003
    %v5017 = vrot.slane %v5015, 4
    %5018 = vrot.lane.b32.xlu0 %v5017, 96
    %v5019 = vpop.permute.xlu0 %5018
    %5021 = vst.msk [vmem:[#allocation2] sm:$0x80] %vm1835, %v5019
    %v5022 = vpack.c.bf16 %v5014, %v5014
    %5024 = vrot.lane.b32.xlu0 %v5022, 32
    %v5025 = vpop.permute.xlu0 %5024
    %5027 = vst.msk [vmem:[#allocation2] sm:$0x1] %vm1842, %v5025
    %v5028 = vld [vmem:[#allocation2] sm:$0xff]
    %v5029 = vld [vmem:[%s39] sm:$0xff]
    %v5030 = vld [vmem:[%s39 + $0x8] sm:$0xff]
    %v5031 = vld [vmem:[%s39 + $0x10] sm:$0xff]
    %v5032 = vld [vmem:[%s39 + $0x18] sm:$0xff]
    %v5033 = vld [vmem:[%s39 + $0x20] sm:$0xff]
    %v5034 = vld [vmem:[%s39 + $0x28] sm:$0xff]
    %v5035 = vld [vmem:[%s39 + $0x30] sm:$0xff]
    %v5036 = vld [vmem:[%s39 + $0x38] sm:$0xff]
    %v5037 = vld [vmem:[%s41] sm:$0x3]
    %v5039 = vlaneseq
    %v5040 = vshrl.u32 %v5039, 7
    %v5041 = vsub.s32 0, %v5040
    %v5042 = vrot.slane %v5037, %v5041
    %v5043 = vlaneseq
    %v5044 = vshrl.u32 %v5043, 7
    %v5045 = vsub.s32 1, %v5044
    %v5046 = vrot.slane %v5037, %v5045
    %v5057 = vunpack.c.l.b16 %v5029
    %v5058 = vunpack.c.h.b16 %v5029
    %v5059 = vunpack.c.l.b16 %v5030
    %v5060 = vunpack.c.h.b16 %v5030
    %v5061 = vunpack.c.l.b16 %v5031
    %v5062 = vunpack.c.h.b16 %v5031
    %v5063 = vunpack.c.l.b16 %v5032
    %v5064 = vunpack.c.h.b16 %v5032
    %v5065 = vunpack.c.l.b16 %v5033
    %v5066 = vunpack.c.h.b16 %v5033
    %v5067 = vunpack.c.l.b16 %v5034
    %v5068 = vunpack.c.h.b16 %v5034
    %v5069 = vunpack.c.l.b16 %v5035
    %v5070 = vunpack.c.h.b16 %v5035
    %v5071 = vunpack.c.l.b16 %v5036
    %v5072 = vunpack.c.h.b16 %v5036
    %v5073 = vpack.c.b16 %v5059, %v5057
    %v5074 = vpack.c.b16 %v5060, %v5058
    %v5075 = vpack.c.b16 %v5063, %v5061
    %v5076 = vpack.c.b16 %v5064, %v5062
    %v5077 = vpack.c.b16 %v5067, %v5065
    %v5078 = vpack.c.b16 %v5068, %v5066
    %v5079 = vpack.c.b16 %v5071, %v5069
    %v5080 = vpack.c.b16 %v5072, %v5070
    %v5090 = vsel %vm340, %v5028, 0
    %5092 = vmatprep.subr.bf16.mxu0 %v5074
    %5093 = vmatpush1.bf16.msra.mxu0 %v5073
    %5094 = vmatprep.subr.bf16.mxu0 %v5076
    %5095 = vmatpush1.bf16.msra.mxu0 %v5075
    %5096 = vmatprep.subr.bf16.mxu0 %v5078
    %5097 = vmatpush1.bf16.msra.mxu0 %v5077
    %5098 = vmatprep.subr.bf16.mxu0 %v5080
    %5099 = vmatpush1.bf16.msra.mxu0 %v5079
    %5100 = vmatprep.subr.bf16.mxu0 0
    %5101 = vmatpush1.bf16.msra.mxu0 0
    %5102 = vmatprep.subr.bf16.mxu0 0
    %5103 = vmatpush1.bf16.msra.mxu0 0
    %5104 = vmatprep.subr.bf16.mxu0 0
    %5105 = vmatpush1.bf16.msra.mxu0 0
    %5106 = vmatprep.subr.bf16.mxu0 0
    %5107 = vmatpush1.bf16.msra.mxu0 0
    %5108 = vmatprep.subr.bf16.mxu0 0
    %5109 = vmatpush1.bf16.msra.mxu0 0
    %5110 = vmatprep.subr.bf16.mxu0 0
    %5111 = vmatpush1.bf16.msra.mxu0 0
    %5112 = vmatprep.subr.bf16.mxu0 0
    %5113 = vmatpush1.bf16.msra.mxu0 0
    %5114 = vmatprep.subr.bf16.mxu0 0
    %5115 = vmatpush1.bf16.msra.mxu0 0
    %5116 = vmatprep.subr.bf16.mxu0 0
    %5117 = vmatpush1.bf16.msra.mxu0 0
    %5118 = vmatprep.subr.bf16.mxu0 0
    %5119 = vmatpush1.bf16.msra.mxu0 0
    %5120 = vmatprep.subr.bf16.mxu0 0
    %5121 = vmatpush1.bf16.msra.mxu0 0
    %5122 = vmatprep.subr.bf16.mxu0 0
    %5123 = vmatpush1.bf16.msra.mxu0 0
    %5124 = vmatprep.mubr.bf16.mxu0 0
    %5125 = vmatmul.mubr.bf16.gmra.mrb[0].mxu0 %v5090
    %v5126 = vpop.f32.mrb[0].mxu0
    %v5127 = vadd.f32 %v5042, %v5126
    %v5128 = vpop.f32.mrb[0].mxu0
    %v5129 = vadd.f32 %v5046, %v5128
    %v5130 = vpop.f32.mrb[0].mxu0
    %v5131 = vadd.f32 %v5042, %v5130
    %v5132 = vpop.f32.mrb[0].mxu0
    %v5133 = vadd.f32 %v5046, %v5132
    %5134 = vdwg.mxu0
    %5135 = vst [vmem:[#allocation4] sm:$0xff] %v5127
    %5136 = vst.msk [vmem:[#allocation4 + $0x8] sm:$0xff] %vm340, %v5129
    %5137 = vst [vmem:[#allocation4 + $0x10] sm:$0xff] %v5131
    %5138 = vst.msk [vmem:[#allocation4 + $0x18] sm:$0xff] %vm340, %v5133
    %v5139 = vld [vmem:[%s43] sm:$0xf]
    %v5140 = vld [vmem:[%s43 + $0x4] sm:$0xf]
    %v5141 = vld [vmem:[%s43 + $0x8] sm:$0xf]
    %v5142 = vld [vmem:[%s43 + $0xc] sm:$0xf]
    %v5143 = vld [vmem:[%s45] sm:$0xf]
    %v5144 = vld [vmem:[%s45 + $0x4] sm:$0xf]
    %v5145 = vld [vmem:[%s45 + $0x8] sm:$0xf]
    %v5146 = vld [vmem:[%s45 + $0xc] sm:$0xf]
    %v5147 = vld [vmem:[%s47] sm:$0x1]
    %v5149 = vlaneseq
    %v5150 = vshrl.u32 %v5149, 7
    %v5151 = vsub.s32 0, %v5150
    %v5152 = vrot.slane %v5147, %v5151
    %v5153 = vld [vmem:[%s49] sm:$0x1]
    %v5155 = vlaneseq
    %v5156 = vshrl.u32 %v5155, 7
    %v5157 = vsub.s32 0, %v5156
    %v5158 = vrot.slane %v5153, %v5157
    %v5163 = vunpack.c.l.b16 %v5139
    %v5164 = vunpack.c.l.b16 %v5140
    %v5165 = vunpack.c.l.b16 %v5141
    %v5166 = vunpack.c.l.b16 %v5142
    %v5167 = vpack.c.b16 %v5164, %v5163
    %v5168 = vpack.c.b16 %v5166, %v5165
    %5171 = vmatprep.subr.bf16.mxu0 0
    %5172 = vmatpush1.bf16.msra.mxu0 %v5167
    %5173 = vmatprep.subr.bf16.mxu0 0
    %5174 = vmatpush1.bf16.msra.mxu0 %v5168
    %5175 = vmatprep.subr.bf16.mxu0 0
    %5176 = vmatpush1.bf16.msra.mxu0 0
    %5177 = vmatprep.subr.bf16.mxu0 0
    %5178 = vmatpush1.bf16.msra.mxu0 0
    %5179 = vmatprep.subr.bf16.mxu0 0
    %5180 = vmatpush1.bf16.msra.mxu0 0
    %5181 = vmatprep.subr.bf16.mxu0 0
    %5182 = vmatpush1.bf16.msra.mxu0 0
    %5183 = vmatprep.subr.bf16.mxu0 0
    %5184 = vmatpush1.bf16.msra.mxu0 0
    %5185 = vmatprep.subr.bf16.mxu0 0
    %5186 = vmatpush1.bf16.msra.mxu0 0
    %5187 = vmatprep.subr.bf16.mxu0 0
    %5188 = vmatpush1.bf16.msra.mxu0 0
    %5189 = vmatprep.subr.bf16.mxu0 0
    %5190 = vmatpush1.bf16.msra.mxu0 0
    %5191 = vmatprep.subr.bf16.mxu0 0
    %5192 = vmatpush1.bf16.msra.mxu0 0
    %5193 = vmatprep.subr.bf16.mxu0 0
    %5194 = vmatpush1.bf16.msra.mxu0 0
    %5195 = vmatprep.subr.bf16.mxu0 0
    %5196 = vmatpush1.bf16.msra.mxu0 0
    %5197 = vmatprep.subr.bf16.mxu0 0
    %5198 = vmatpush1.bf16.msra.mxu0 0
    %5199 = vmatprep.subr.bf16.mxu0 0
    %5200 = vmatpush1.bf16.msra.mxu0 0
    %5201 = vmatprep.subr.bf16.mxu0 0
    %5202 = vmatpush1.bf16.msra.mxu0 0
    %5203 = vmatprep.mubr.bf16.mxu0 0
    %5204 = vmatmul.mubr.bf16.gmra.mrb[0].mxu0 %v377
    %v5205 = vpop.f32.mrb[0].mxu0
    %v5206 = vadd.f32 0.0, %v5205
    %v5207 = vpop.f32.mrb[0].mxu0
    %v5208 = vpop.f32.mrb[0].mxu0
    %v5209 = vpop.f32.mrb[0].mxu0
    %5210 = vdwg.mxu0
    %v5215 = vunpack.c.l.b16 %v5143
    %v5216 = vunpack.c.l.b16 %v5144
    %v5217 = vunpack.c.l.b16 %v5145
    %v5218 = vunpack.c.l.b16 %v5146
    %v5219 = vpack.c.b16 %v5216, %v5215
    %v5220 = vpack.c.b16 %v5218, %v5217
    %5223 = vmatprep.subr.bf16.mxu0 0
    %5224 = vmatpush1.bf16.msra.mxu0 %v5219
    %5225 = vmatprep.subr.bf16.mxu0 0
    %5226 = vmatpush1.bf16.msra.mxu0 %v5220
    %5227 = vmatprep.subr.bf16.mxu0 0
    %5228 = vmatpush1.bf16.msra.mxu0 0
    %5229 = vmatprep.subr.bf16.mxu0 0
    %5230 = vmatpush1.bf16.msra.mxu0 0
    %5231 = vmatprep.subr.bf16.mxu0 0
    %5232 = vmatpush1.bf16.msra.mxu0 0
    %5233 = vmatprep.subr.bf16.mxu0 0
    %5234 = vmatpush1.bf16.msra.mxu0 0
    %5235 = vmatprep.subr.bf16.mxu0 0
    %5236 = vmatpush1.bf16.msra.mxu0 0
    %5237 = vmatprep.subr.bf16.mxu0 0
    %5238 = vmatpush1.bf16.msra.mxu0 0
    %5239 = vmatprep.subr.bf16.mxu0 0
    %5240 = vmatpush1.bf16.msra.mxu0 0
    %5241 = vmatprep.subr.bf16.mxu0 0
    %5242 = vmatpush1.bf16.msra.mxu0 0
    %5243 = vmatprep.subr.bf16.mxu0 0
    %5244 = vmatpush1.bf16.msra.mxu0 0
    %5245 = vmatprep.subr.bf16.mxu0 0
    %5246 = vmatpush1.bf16.msra.mxu0 0
    %5247 = vmatprep.subr.bf16.mxu0 0
    %5248 = vmatpush1.bf16.msra.mxu0 0
    %5249 = vmatprep.subr.bf16.mxu0 0
    %5250 = vmatpush1.bf16.msra.mxu0 0
    %5251 = vmatprep.subr.bf16.mxu0 0
    %5252 = vmatpush1.bf16.msra.mxu0 0
    %5253 = vmatprep.subr.bf16.mxu0 0
    %5254 = vmatpush1.bf16.msra.mxu0 0
    %5255 = vmatprep.mubr.bf16.mxu0 0
    %5256 = vmatmul.mubr.bf16.gmra.mrb[0].mxu0 %v377
    %v5257 = vpop.f32.mrb[0].mxu0
    %v5258 = vadd.f32 0.0, %v5257
    %v5259 = vpop.f32.mrb[0].mxu0
    %v5260 = vpop.f32.mrb[0].mxu0
    %v5261 = vpop.f32.mrb[0].mxu0
    %5262 = vdwg.mxu0
    %v5263 = vld [vmem:[#allocation4] sm:$0x3]
    %v5264 = vld [vmem:[#allocation4 + $0x10] sm:$0xc0]
    %v5265 = vld [vmem:[#allocation4 + $0x18] sm:$0xc0]
    %v5266 = vadd.f32 %v5263, %v5206
    %v5267 = vxor.u32 %v5266, 2147483648
    %v5268 = vmul.f32 %v5267, 1.442695
    %v5269 = vpow.pop %v5268
    %v5270 = vadd.f32 %v5269, 1.0
    %v5271 = vrcp.pop %v5270
    %v5272 = vmul.f32 1.0, %v5271
    %5273 = vrot.lane.b32.xlu0 %v5152, 64
    %v5274 = vpop.permute.xlu0 %5273
    %v5276 = vadd.f32 %v5206, %v5274
    %5278 = vrot.lane.b32.xlu0 %v5276, 64
    %v5279 = vpop.permute.xlu0 %5278
    %v5281 = vmul.f32 %v5272, %v5279
    %5283 = vrot.lane.b32.xlu0 %v5281, 64
    %v5284 = vpop.permute.xlu0 %5283
    %v5286 = vadd.f32 %v5263, %v5284
    %v5287 = vtanh.pop %v5286
    %v5289 = vrot.slane %v5258, 2
    %5290 = vrot.lane.b32.xlu0 %v5289, 96
    %v5291 = vpop.permute.xlu0 %5290
    %v5293 = vadd.f32 %v5264, %v5291
    %v5294 = vxor.u32 %v5293, 2147483648
    %v5295 = vmul.f32 %v5294, 1.442695
    %v5296 = vpow.pop %v5295
    %v5297 = vadd.f32 %v5296, 1.0
    %v5298 = vrcp.pop %v5297
    %v5299 = vmul.f32 1.0, %v5298
    %v5300 = vadd.f32 %v5265, %v5291
    %v5301 = vxor.u32 %v5300, 2147483648
    %v5302 = vmul.f32 %v5301, 1.442695
    %v5303 = vpow.pop %v5302
    %v5304 = vadd.f32 %v5303, 1.0
    %v5305 = vrcp.pop %v5304
    %v5306 = vmul.f32 1.0, %v5305
    %5307 = vrot.lane.b32.xlu0 %v5158, 64
    %v5308 = vpop.permute.xlu0 %5307
    %v5310 = vadd.f32 %v5258, %v5308
    %v5312 = vrot.slane %v5310, 2
    %5313 = vrot.lane.b32.xlu0 %v5312, 32
    %v5314 = vpop.permute.xlu0 %5313
    %v5316 = vmul.f32 %v5299, %v5314
    %5318 = vrot.lane.b32.xlu0 %v5316, 64
    %v5319 = vpop.permute.xlu0 %5318
    %v5321 = vadd.f32 %v5265, %v5319
    %v5322 = vtanh.pop %v5321
    %v5323 = vsub.f32 1.0, %v5272
    %5325 = vrot.lane.b32.xlu0 %v5287, 96
    %v5326 = vpop.permute.xlu0 %5325
    %v5328 = vmul.f32 %v5323, %v5326
    %v5329 = vmul.f32 %v5272, 0.0
    %v5330 = vadd.f32 %v5328, %v5329
    %v5331 = vsub.f32 1.0, %v5306
    %5333 = vrot.lane.b32.xlu0 %v5322, 96
    %v5334 = vpop.permute.xlu0 %5333
    %v5336 = vmul.f32 %v5331, %v5334
    %v5337 = vmul.f32 %v5306, 0.0
    %v5338 = vadd.f32 %v5336, %v5337
    %v5339 = vadd.f32 %v5330, 0.0
    %v5340 = vadd.f32 %v5338, 0.0
    %v5341 = vpack.c.bf16 %v5330, %v5330
    %5343 = vrot.lane.b32.xlu0 %v5341, 96
    %v5344 = vpop.permute.xlu0 %5343
    %v5346 = vsel %vm292, %v5344, 0
    %5348 = vmatprep.subr.bf16.mxu0 0
    %5349 = vmatpush1.bf16.msra.mxu0 %v5167
    %5350 = vmatprep.subr.bf16.mxu0 0
    %5351 = vmatpush1.bf16.msra.mxu0 %v5168
    %5352 = vmatprep.subr.bf16.mxu0 0
    %5353 = vmatpush1.bf16.msra.mxu0 0
    %5354 = vmatprep.subr.bf16.mxu0 0
    %5355 = vmatpush1.bf16.msra.mxu0 0
    %5356 = vmatprep.subr.bf16.mxu0 0
    %5357 = vmatpush1.bf16.msra.mxu0 0
    %5358 = vmatprep.subr.bf16.mxu0 0
    %5359 = vmatpush1.bf16.msra.mxu0 0
    %5360 = vmatprep.subr.bf16.mxu0 0
    %5361 = vmatpush1.bf16.msra.mxu0 0
    %5362 = vmatprep.subr.bf16.mxu0 0
    %5363 = vmatpush1.bf16.msra.mxu0 0
    %5364 = vmatprep.subr.bf16.mxu0 0
    %5365 = vmatpush1.bf16.msra.mxu0 0
    %5366 = vmatprep.subr.bf16.mxu0 0
    %5367 = vmatpush1.bf16.msra.mxu0 0
    %5368 = vmatprep.subr.bf16.mxu0 0
    %5369 = vmatpush1.bf16.msra.mxu0 0
    %5370 = vmatprep.subr.bf16.mxu0 0
    %5371 = vmatpush1.bf16.msra.mxu0 0
    %5372 = vmatprep.subr.bf16.mxu0 0
    %5373 = vmatpush1.bf16.msra.mxu0 0
    %5374 = vmatprep.subr.bf16.mxu0 0
    %5375 = vmatpush1.bf16.msra.mxu0 0
    %5376 = vmatprep.subr.bf16.mxu0 0
    %5377 = vmatpush1.bf16.msra.mxu0 0
    %5378 = vmatprep.subr.bf16.mxu0 0
    %5379 = vmatpush1.bf16.msra.mxu0 0
    %5380 = vmatprep.mubr.bf16.mxu0 0
    %5381 = vmatmul.mubr.bf16.gmra.mrb[0].mxu0 %v5346
    %v5382 = vpop.f32.mrb[0].mxu0
    %v5383 = vadd.f32 0.0, %v5382
    %v5384 = vpop.f32.mrb[0].mxu0
    %v5385 = vpop.f32.mrb[0].mxu0
    %v5386 = vpop.f32.mrb[0].mxu0
    %5387 = vdwg.mxu0
    %v5388 = vpack.c.bf16 %v5338, %v5338
    %v5390 = vrot.slane %v5388, 3
    %v5392 = vsel %vm292, %v5390, 0
    %5394 = vmatprep.subr.bf16.mxu0 0
    %5395 = vmatpush1.bf16.msra.mxu0 %v5219
    %5396 = vmatprep.subr.bf16.mxu0 0
    %5397 = vmatpush1.bf16.msra.mxu0 %v5220
    %5398 = vmatprep.subr.bf16.mxu0 0
    %5399 = vmatpush1.bf16.msra.mxu0 0
    %5400 = vmatprep.subr.bf16.mxu0 0
    %5401 = vmatpush1.bf16.msra.mxu0 0
    %5402 = vmatprep.subr.bf16.mxu0 0
    %5403 = vmatpush1.bf16.msra.mxu0 0
    %5404 = vmatprep.subr.bf16.mxu0 0
    %5405 = vmatpush1.bf16.msra.mxu0 0
    %5406 = vmatprep.subr.bf16.mxu0 0
    %5407 = vmatpush1.bf16.msra.mxu0 0
    %5408 = vmatprep.subr.bf16.mxu0 0
    %5409 = vmatpush1.bf16.msra.mxu0 0
    %5410 = vmatprep.subr.bf16.mxu0 0
    %5411 = vmatpush1.bf16.msra.mxu0 0
    %5412 = vmatprep.subr.bf16.mxu0 0
    %5413 = vmatpush1.bf16.msra.mxu0 0
    %5414 = vmatprep.subr.bf16.mxu0 0
    %5415 = vmatpush1.bf16.msra.mxu0 0
    %5416 = vmatprep.subr.bf16.mxu0 0
    %5417 = vmatpush1.bf16.msra.mxu0 0
    %5418 = vmatprep.subr.bf16.mxu0 0
    %5419 = vmatpush1.bf16.msra.mxu0 0
    %5420 = vmatprep.subr.bf16.mxu0 0
    %5421 = vmatpush1.bf16.msra.mxu0 0
    %5422 = vmatprep.subr.bf16.mxu0 0
    %5423 = vmatpush1.bf16.msra.mxu0 0
    %5424 = vmatprep.subr.bf16.mxu0 0
    %5425 = vmatpush1.bf16.msra.mxu0 0
    %5426 = vmatprep.mubr.bf16.mxu0 0
    %5427 = vmatmul.mubr.bf16.gmra.mrb[0].mxu0 %v5392
    %v5428 = vpop.f32.mrb[0].mxu0
    %v5429 = vadd.f32 0.0, %v5428
    %v5430 = vpop.f32.mrb[0].mxu0
    %v5431 = vpop.f32.mrb[0].mxu0
    %v5432 = vpop.f32.mrb[0].mxu0
    %5433 = vdwg.mxu0
    %v5434 = vld [vmem:[#allocation4] sm:$0xc]
    %v5435 = vld [vmem:[#allocation4 + $0x10] sm:$0x30]
    %v5436 = vld [vmem:[#allocation4 + $0x18] sm:$0x30]
    %v5438 = vrot.slane %v5383, 6
    %v5440 = vadd.f32 %v5434, %v5438
    %v5441 = vxor.u32 %v5440, 2147483648
    %v5442 = vmul.f32 %v5441, 1.442695
    %v5443 = vpow.pop %v5442
    %v5444 = vadd.f32 %v5443, 1.0
    %v5445 = vrcp.pop %v5444
    %v5446 = vmul.f32 1.0, %v5445
    %v5447 = vadd.f32 %v5383, %v5274
    %v5449 = vrot.slane %v5447, 6
    %5450 = vrot.lane.b32.xlu0 %v5449, 64
    %v5451 = vpop.permute.xlu0 %5450
    %v5453 = vmul.f32 %v5446, %v5451
    %5455 = vrot.lane.b32.xlu0 %v5453, 64
    %v5456 = vpop.permute.xlu0 %5455
    %v5458 = vadd.f32 %v5434, %v5456
    %v5459 = vtanh.pop %v5458
    %v5461 = vrot.slane %v5429, 4
    %5462 = vrot.lane.b32.xlu0 %v5461, 96
    %v5463 = vpop.permute.xlu0 %5462
    %v5465 = vadd.f32 %v5435, %v5463
    %v5466 = vxor.u32 %v5465, 2147483648
    %v5467 = vmul.f32 %v5466, 1.442695
    %v5468 = vpow.pop %v5467
    %v5469 = vadd.f32 %v5468, 1.0
    %v5470 = vrcp.pop %v5469
    %v5471 = vmul.f32 1.0, %v5470
    %v5472 = vadd.f32 %v5436, %v5463
    %v5473 = vxor.u32 %v5472, 2147483648
    %v5474 = vmul.f32 %v5473, 1.442695
    %v5475 = vpow.pop %v5474
    %v5476 = vadd.f32 %v5475, 1.0
    %v5477 = vrcp.pop %v5476
    %v5478 = vmul.f32 1.0, %v5477
    %v5479 = vadd.f32 %v5429, %v5308
    %v5481 = vrot.slane %v5479, 4
    %5482 = vrot.lane.b32.xlu0 %v5481, 32
    %v5483 = vpop.permute.xlu0 %5482
    %v5485 = vmul.f32 %v5471, %v5483
    %5487 = vrot.lane.b32.xlu0 %v5485, 64
    %v5488 = vpop.permute.xlu0 %5487
    %v5490 = vadd.f32 %v5436, %v5488
    %v5491 = vtanh.pop %v5490
    %v5492 = vsub.f32 1.0, %v5446
    %5494 = vrot.lane.b32.xlu0 %v5459, 96
    %v5495 = vpop.permute.xlu0 %5494
    %v5497 = vmul.f32 %v5492, %v5495
    %v5499 = vrot.slane %v5330, 6
    %v5501 = vmul.f32 %v5446, %v5499
    %v5502 = vadd.f32 %v5497, %v5501
    %v5503 = vsub.f32 1.0, %v5478
    %5505 = vrot.lane.b32.xlu0 %v5491, 96
    %v5506 = vpop.permute.xlu0 %5505
    %v5508 = vmul.f32 %v5503, %v5506
    %v5510 = vrot.slane %v5338, 2
    %v5512 = vmul.f32 %v5478, %v5510
    %v5513 = vadd.f32 %v5508, %v5512
    %v5515 = vrot.slane %v5502, 2
    %v5517 = vadd.f32 %v5339, %v5515
    %v5519 = vrot.slane %v5513, 6
    %v5521 = vadd.f32 %v5340, %v5519
    %v5522 = vpack.c.bf16 %v5502, %v5502
    %v5524 = vrot.slane %v5522, 1
    %5525 = vrot.lane.b32.xlu0 %v5524, 96
    %v5526 = vpop.permute.xlu0 %5525
    %v5528 = vsel %vm292, %v5526, 0
    %5530 = vmatprep.subr.bf16.mxu0 0
    %5531 = vmatpush1.bf16.msra.mxu0 %v5167
    %5532 = vmatprep.subr.bf16.mxu0 0
    %5533 = vmatpush1.bf16.msra.mxu0 %v5168
    %5534 = vmatprep.subr.bf16.mxu0 0
    %5535 = vmatpush1.bf16.msra.mxu0 0
    %5536 = vmatprep.subr.bf16.mxu0 0
    %5537 = vmatpush1.bf16.msra.mxu0 0
    %5538 = vmatprep.subr.bf16.mxu0 0
    %5539 = vmatpush1.bf16.msra.mxu0 0
    %5540 = vmatprep.subr.bf16.mxu0 0
    %5541 = vmatpush1.bf16.msra.mxu0 0
    %5542 = vmatprep.subr.bf16.mxu0 0
    %5543 = vmatpush1.bf16.msra.mxu0 0
    %5544 = vmatprep.subr.bf16.mxu0 0
    %5545 = vmatpush1.bf16.msra.mxu0 0
    %5546 = vmatprep.subr.bf16.mxu0 0
    %5547 = vmatpush1.bf16.msra.mxu0 0
    %5548 = vmatprep.subr.bf16.mxu0 0
    %5549 = vmatpush1.bf16.msra.mxu0 0
    %5550 = vmatprep.subr.bf16.mxu0 0
    %5551 = vmatpush1.bf16.msra.mxu0 0
    %5552 = vmatprep.subr.bf16.mxu0 0
    %5553 = vmatpush1.bf16.msra.mxu0 0
    %5554 = vmatprep.subr.bf16.mxu0 0
    %5555 = vmatpush1.bf16.msra.mxu0 0
    %5556 = vmatprep.subr.bf16.mxu0 0
    %5557 = vmatpush1.bf16.msra.mxu0 0
    %5558 = vmatprep.subr.bf16.mxu0 0
    %5559 = vmatpush1.bf16.msra.mxu0 0
    %5560 = vmatprep.subr.bf16.mxu0 0
    %5561 = vmatpush1.bf16.msra.mxu0 0
    %5562 = vmatprep.mubr.bf16.mxu0 0
    %5563 = vmatmul.mubr.bf16.gmra.mrb[0].mxu0 %v5528
    %v5564 = vpop.f32.mrb[0].mxu0
    %v5565 = vadd.f32 0.0, %v5564
    %v5566 = vpop.f32.mrb[0].mxu0
    %v5567 = vpop.f32.mrb[0].mxu0
    %v5568 = vpop.f32.mrb[0].mxu0
    %5569 = vdwg.mxu0
    %v5570 = vpack.c.bf16 %v5513, %v5513
    %v5572 = vrot.slane %v5570, 2
    %v5574 = vsel %vm292, %v5572, 0
    %5576 = vmatprep.subr.bf16.mxu0 0
    %5577 = vmatpush1.bf16.msra.mxu0 %v5219
    %5578 = vmatprep.subr.bf16.mxu0 0
    %5579 = vmatpush1.bf16.msra.mxu0 %v5220
    %5580 = vmatprep.subr.bf16.mxu0 0
    %5581 = vmatpush1.bf16.msra.mxu0 0
    %5582 = vmatprep.subr.bf16.mxu0 0
    %5583 = vmatpush1.bf16.msra.mxu0 0
    %5584 = vmatprep.subr.bf16.mxu0 0
    %5585 = vmatpush1.bf16.msra.mxu0 0
    %5586 = vmatprep.subr.bf16.mxu0 0
    %5587 = vmatpush1.bf16.msra.mxu0 0
    %5588 = vmatprep.subr.bf16.mxu0 0
    %5589 = vmatpush1.bf16.msra.mxu0 0
    %5590 = vmatprep.subr.bf16.mxu0 0
    %5591 = vmatpush1.bf16.msra.mxu0 0
    %5592 = vmatprep.subr.bf16.mxu0 0
    %5593 = vmatpush1.bf16.msra.mxu0 0
    %5594 = vmatprep.subr.bf16.mxu0 0
    %5595 = vmatpush1.bf16.msra.mxu0 0
    %5596 = vmatprep.subr.bf16.mxu0 0
    %5597 = vmatpush1.bf16.msra.mxu0 0
    %5598 = vmatprep.subr.bf16.mxu0 0
    %5599 = vmatpush1.bf16.msra.mxu0 0
    %5600 = vmatprep.subr.bf16.mxu0 0
    %5601 = vmatpush1.bf16.msra.mxu0 0
    %5602 = vmatprep.subr.bf16.mxu0 0
    %5603 = vmatpush1.bf16.msra.mxu0 0
    %5604 = vmatprep.subr.bf16.mxu0 0
    %5605 = vmatpush1.bf16.msra.mxu0 0
    %5606 = vmatprep.subr.bf16.mxu0 0
    %5607 = vmatpush1.bf16.msra.mxu0 0
    %5608 = vmatprep.mubr.bf16.mxu0 0
    %5609 = vmatmul.mubr.bf16.gmra.mrb[0].mxu0 %v5574
    %v5610 = vpop.f32.mrb[0].mxu0
    %v5611 = vadd.f32 0.0, %v5610
    %v5612 = vpop.f32.mrb[0].mxu0
    %v5613 = vpop.f32.mrb[0].mxu0
    %v5614 = vpop.f32.mrb[0].mxu0
    %5615 = vdwg.mxu0
    %v5616 = vld [vmem:[#allocation4] sm:$0x30]
    %v5617 = vld [vmem:[#allocation4 + $0x10] sm:$0xc]
    %v5618 = vld [vmem:[#allocation4 + $0x18] sm:$0xc]
    %v5620 = vrot.slane %v5565, 4
    %v5622 = vadd.f32 %v5616, %v5620
    %v5623 = vxor.u32 %v5622, 2147483648
    %v5624 = vmul.f32 %v5623, 1.442695
    %v5625 = vpow.pop %v5624
    %v5626 = vadd.f32 %v5625, 1.0
    %v5627 = vrcp.pop %v5626
    %v5628 = vmul.f32 1.0, %v5627
    %v5629 = vadd.f32 %v5565, %v5274
    %v5631 = vrot.slane %v5629, 4
    %5632 = vrot.lane.b32.xlu0 %v5631, 64
    %v5633 = vpop.permute.xlu0 %5632
    %v5635 = vmul.f32 %v5628, %v5633
    %5637 = vrot.lane.b32.xlu0 %v5635, 64
    %v5638 = vpop.permute.xlu0 %5637
    %v5640 = vadd.f32 %v5616, %v5638
    %v5641 = vtanh.pop %v5640
    %v5643 = vrot.slane %v5611, 6
    %5644 = vrot.lane.b32.xlu0 %v5643, 96
    %v5645 = vpop.permute.xlu0 %5644
    %v5647 = vadd.f32 %v5617, %v5645
    %v5648 = vxor.u32 %v5647, 2147483648
    %v5649 = vmul.f32 %v5648, 1.442695
    %v5650 = vpow.pop %v5649
    %v5651 = vadd.f32 %v5650, 1.0
    %v5652 = vrcp.pop %v5651
    %v5653 = vmul.f32 1.0, %v5652
    %v5654 = vadd.f32 %v5618, %v5645
    %v5655 = vxor.u32 %v5654, 2147483648
    %v5656 = vmul.f32 %v5655, 1.442695
    %v5657 = vpow.pop %v5656
    %v5658 = vadd.f32 %v5657, 1.0
    %v5659 = vrcp.pop %v5658
    %v5660 = vmul.f32 1.0, %v5659
    %v5661 = vadd.f32 %v5611, %v5308
    %v5663 = vrot.slane %v5661, 6
    %5664 = vrot.lane.b32.xlu0 %v5663, 32
    %v5665 = vpop.permute.xlu0 %5664
    %v5667 = vmul.f32 %v5653, %v5665
    %5669 = vrot.lane.b32.xlu0 %v5667, 64
    %v5670 = vpop.permute.xlu0 %5669
    %v5672 = vadd.f32 %v5618, %v5670
    %v5673 = vtanh.pop %v5672
    %v5674 = vsub.f32 1.0, %v5628
    %5676 = vrot.lane.b32.xlu0 %v5641, 96
    %v5677 = vpop.permute.xlu0 %5676
    %v5679 = vmul.f32 %v5674, %v5677
    %v5680 = vrot.slane %v5502, 6
    %v5682 = vmul.f32 %v5628, %v5680
    %v5683 = vadd.f32 %v5679, %v5682
    %v5684 = vsub.f32 1.0, %v5660
    %5686 = vrot.lane.b32.xlu0 %v5673, 96
    %v5687 = vpop.permute.xlu0 %5686
    %v5689 = vmul.f32 %v5684, %v5687
    %v5690 = vrot.slane %v5513, 2
    %v5692 = vmul.f32 %v5660, %v5690
    %v5693 = vadd.f32 %v5689, %v5692
    %v5695 = vrot.slane %v5683, 4
    %v5697 = vadd.f32 %v5517, %v5695
    %v5699 = vrot.slane %v5693, 4
    %v5701 = vadd.f32 %v5521, %v5699
    %v5702 = vpack.c.bf16 %v5683, %v5683
    %v5704 = vrot.slane %v5702, 2
    %5705 = vrot.lane.b32.xlu0 %v5704, 96
    %v5706 = vpop.permute.xlu0 %5705
    %v5708 = vsel %vm292, %v5706, 0
    %5710 = vmatprep.subr.bf16.mxu0 0
    %5711 = vmatpush1.bf16.msra.mxu0 %v5167
    %5712 = vmatprep.subr.bf16.mxu0 0
    %5713 = vmatpush1.bf16.msra.mxu0 %v5168
    %5714 = vmatprep.subr.bf16.mxu0 0
    %5715 = vmatpush1.bf16.msra.mxu0 0
    %5716 = vmatprep.subr.bf16.mxu0 0
    %5717 = vmatpush1.bf16.msra.mxu0 0
    %5718 = vmatprep.subr.bf16.mxu0 0
    %5719 = vmatpush1.bf16.msra.mxu0 0
    %5720 = vmatprep.subr.bf16.mxu0 0
    %5721 = vmatpush1.bf16.msra.mxu0 0
    %5722 = vmatprep.subr.bf16.mxu0 0
    %5723 = vmatpush1.bf16.msra.mxu0 0
    %5724 = vmatprep.subr.bf16.mxu0 0
    %5725 = vmatpush1.bf16.msra.mxu0 0
    %5726 = vmatprep.subr.bf16.mxu0 0
    %5727 = vmatpush1.bf16.msra.mxu0 0
    %5728 = vmatprep.subr.bf16.mxu0 0
    %5729 = vmatpush1.bf16.msra.mxu0 0
    %5730 = vmatprep.subr.bf16.mxu0 0
    %5731 = vmatpush1.bf16.msra.mxu0 0
    %5732 = vmatprep.subr.bf16.mxu0 0
    %5733 = vmatpush1.bf16.msra.mxu0 0
    %5734 = vmatprep.subr.bf16.mxu0 0
    %5735 = vmatpush1.bf16.msra.mxu0 0
    %5736 = vmatprep.subr.bf16.mxu0 0
    %5737 = vmatpush1.bf16.msra.mxu0 0
    %5738 = vmatprep.subr.bf16.mxu0 0
    %5739 = vmatpush1.bf16.msra.mxu0 0
    %5740 = vmatprep.subr.bf16.mxu0 0
    %5741 = vmatpush1.bf16.msra.mxu0 0
    %5742 = vmatprep.mubr.bf16.mxu0 0
    %5743 = vmatmul.mubr.bf16.gmra.mrb[0].mxu0 %v5708
    %v5744 = vpop.f32.mrb[0].mxu0
    %v5745 = vadd.f32 0.0, %v5744
    %v5746 = vpop.f32.mrb[0].mxu0
    %v5747 = vpop.f32.mrb[0].mxu0
    %v5748 = vpop.f32.mrb[0].mxu0
    %5749 = vdwg.mxu0
    %v5750 = vpack.c.bf16 %v5693, %v5693
    %v5752 = vrot.slane %v5750, 1
    %v5754 = vsel %vm292, %v5752, 0
    %5756 = vmatprep.subr.bf16.mxu0 0
    %5757 = vmatpush1.bf16.msra.mxu0 %v5219
    %5758 = vmatprep.subr.bf16.mxu0 0
    %5759 = vmatpush1.bf16.msra.mxu0 %v5220
    %5760 = vmatprep.subr.bf16.mxu0 0
    %5761 = vmatpush1.bf16.msra.mxu0 0
    %5762 = vmatprep.subr.bf16.mxu0 0
    %5763 = vmatpush1.bf16.msra.mxu0 0
    %5764 = vmatprep.subr.bf16.mxu0 0
    %5765 = vmatpush1.bf16.msra.mxu0 0
    %5766 = vmatprep.subr.bf16.mxu0 0
    %5767 = vmatpush1.bf16.msra.mxu0 0
    %5768 = vmatprep.subr.bf16.mxu0 0
    %5769 = vmatpush1.bf16.msra.mxu0 0
    %5770 = vmatprep.subr.bf16.mxu0 0
    %5771 = vmatpush1.bf16.msra.mxu0 0
    %5772 = vmatprep.subr.bf16.mxu0 0
    %5773 = vmatpush1.bf16.msra.mxu0 0
    %5774 = vmatprep.subr.bf16.mxu0 0
    %5775 = vmatpush1.bf16.msra.mxu0 0
    %5776 = vmatprep.subr.bf16.mxu0 0
    %5777 = vmatpush1.bf16.msra.mxu0 0
    %5778 = vmatprep.subr.bf16.mxu0 0
    %5779 = vmatpush1.bf16.msra.mxu0 0
    %5780 = vmatprep.subr.bf16.mxu0 0
    %5781 = vmatpush1.bf16.msra.mxu0 0
    %5782 = vmatprep.subr.bf16.mxu0 0
    %5783 = vmatpush1.bf16.msra.mxu0 0
    %5784 = vmatprep.subr.bf16.mxu0 0
    %5785 = vmatpush1.bf16.msra.mxu0 0
    %5786 = vmatprep.subr.bf16.mxu0 0
    %5787 = vmatpush1.bf16.msra.mxu0 0
    %5788 = vmatprep.mubr.bf16.mxu0 0
    %5789 = vmatmul.mubr.bf16.gmra.mrb[0].mxu0 %v5754
    %v5790 = vpop.f32.mrb[0].mxu0
    %v5791 = vadd.f32 0.0, %v5790
    %v5792 = vpop.f32.mrb[0].mxu0
    %v5793 = vpop.f32.mrb[0].mxu0
    %v5794 = vpop.f32.mrb[0].mxu0
    %5795 = vdwg.mxu0
    %v5796 = vld [vmem:[#allocation4] sm:$0xc0]
    %v5797 = vld [vmem:[#allocation4 + $0x10] sm:$0x3]
    %v5798 = vld [vmem:[#allocation4 + $0x18] sm:$0x3]
    %v5800 = vrot.slane %v5745, 2
    %v5802 = vadd.f32 %v5796, %v5800
    %v5803 = vxor.u32 %v5802, 2147483648
    %v5804 = vmul.f32 %v5803, 1.442695
    %v5805 = vpow.pop %v5804
    %v5806 = vadd.f32 %v5805, 1.0
    %v5807 = vrcp.pop %v5806
    %v5808 = vmul.f32 1.0, %v5807
    %v5809 = vadd.f32 %v5745, %v5274
    %v5811 = vrot.slane %v5809, 2
    %5812 = vrot.lane.b32.xlu0 %v5811, 64
    %v5813 = vpop.permute.xlu0 %5812
    %v5815 = vmul.f32 %v5808, %v5813
    %5817 = vrot.lane.b32.xlu0 %v5815, 64
    %v5818 = vpop.permute.xlu0 %5817
    %v5820 = vadd.f32 %v5796, %v5818
    %v5821 = vtanh.pop %v5820
    %5823 = vrot.lane.b32.xlu0 %v5791, 96
    %v5824 = vpop.permute.xlu0 %5823
    %v5826 = vadd.f32 %v5797, %v5824
    %v5827 = vxor.u32 %v5826, 2147483648
    %v5828 = vmul.f32 %v5827, 1.442695
    %v5829 = vpow.pop %v5828
    %v5830 = vadd.f32 %v5829, 1.0
    %v5831 = vrcp.pop %v5830
    %v5832 = vmul.f32 1.0, %v5831
    %v5833 = vadd.f32 %v5798, %v5824
    %v5834 = vxor.u32 %v5833, 2147483648
    %v5835 = vmul.f32 %v5834, 1.442695
    %v5836 = vpow.pop %v5835
    %v5837 = vadd.f32 %v5836, 1.0
    %v5838 = vrcp.pop %v5837
    %v5839 = vmul.f32 1.0, %v5838
    %v5840 = vadd.f32 %v5791, %v5308
    %5842 = vrot.lane.b32.xlu0 %v5840, 32
    %v5843 = vpop.permute.xlu0 %5842
    %v5845 = vmul.f32 %v5832, %v5843
    %5847 = vrot.lane.b32.xlu0 %v5845, 64
    %v5848 = vpop.permute.xlu0 %5847
    %v5850 = vadd.f32 %v5798, %v5848
    %v5851 = vtanh.pop %v5850
    %v5852 = vsub.f32 1.0, %v5808
    %5854 = vrot.lane.b32.xlu0 %v5821, 96
    %v5855 = vpop.permute.xlu0 %5854
    %v5857 = vmul.f32 %v5852, %v5855
    %v5858 = vrot.slane %v5683, 6
    %v5860 = vmul.f32 %v5808, %v5858
    %v5861 = vadd.f32 %v5857, %v5860
    %v5862 = vsub.f32 1.0, %v5839
    %5864 = vrot.lane.b32.xlu0 %v5851, 96
    %v5865 = vpop.permute.xlu0 %5864
    %v5867 = vmul.f32 %v5862, %v5865
    %v5868 = vrot.slane %v5693, 2
    %v5870 = vmul.f32 %v5839, %v5868
    %v5871 = vadd.f32 %v5867, %v5870
    %v5873 = vrot.slane %v5861, 6
    %v5875 = vadd.f32 %v5697, %v5873
    %v5877 = vrot.slane %v5871, 2
    %v5879 = vadd.f32 %v5701, %v5877
    %v5880 = vpack.c.bf16 %v5861, %v5861
    %v5882 = vrot.slane %v5880, 3
    %5883 = vrot.lane.b32.xlu0 %v5882, 96
    %v5884 = vpop.permute.xlu0 %5883
    %v5886 = vsel %vm292, %v5884, 0
    %5888 = vmatprep.subr.bf16.mxu0 0
    %5889 = vmatpush1.bf16.msra.mxu0 %v5167
    %5890 = vmatprep.subr.bf16.mxu0 0
    %5891 = vmatpush1.bf16.msra.mxu0 %v5168
    %5892 = vmatprep.subr.bf16.mxu0 0
    %5893 = vmatpush1.bf16.msra.mxu0 0
    %5894 = vmatprep.subr.bf16.mxu0 0
    %5895 = vmatpush1.bf16.msra.mxu0 0
    %5896 = vmatprep.subr.bf16.mxu0 0
    %5897 = vmatpush1.bf16.msra.mxu0 0
    %5898 = vmatprep.subr.bf16.mxu0 0
    %5899 = vmatpush1.bf16.msra.mxu0 0
    %5900 = vmatprep.subr.bf16.mxu0 0
    %5901 = vmatpush1.bf16.msra.mxu0 0
    %5902 = vmatprep.subr.bf16.mxu0 0
    %5903 = vmatpush1.bf16.msra.mxu0 0
    %5904 = vmatprep.subr.bf16.mxu0 0
    %5905 = vmatpush1.bf16.msra.mxu0 0
    %5906 = vmatprep.subr.bf16.mxu0 0
    %5907 = vmatpush1.bf16.msra.mxu0 0
    %5908 = vmatprep.subr.bf16.mxu0 0
    %5909 = vmatpush1.bf16.msra.mxu0 0
    %5910 = vmatprep.subr.bf16.mxu0 0
    %5911 = vmatpush1.bf16.msra.mxu0 0
    %5912 = vmatprep.subr.bf16.mxu0 0
    %5913 = vmatpush1.bf16.msra.mxu0 0
    %5914 = vmatprep.subr.bf16.mxu0 0
    %5915 = vmatpush1.bf16.msra.mxu0 0
    %5916 = vmatprep.subr.bf16.mxu0 0
    %5917 = vmatpush1.bf16.msra.mxu0 0
    %5918 = vmatprep.subr.bf16.mxu0 0
    %5919 = vmatpush1.bf16.msra.mxu0 0
    %5920 = vmatprep.mubr.bf16.mxu0 0
    %5921 = vmatmul.mubr.bf16.gmra.mrb[0].mxu0 %v5886
    %v5922 = vpop.f32.mrb[0].mxu0
    %v5923 = vadd.f32 0.0, %v5922
    %v5924 = vpop.f32.mrb[0].mxu0
    %v5925 = vpop.f32.mrb[0].mxu0
    %v5926 = vpop.f32.mrb[0].mxu0
    %5927 = vdwg.mxu0
    %v5928 = vpack.c.bf16 %v5871, %v5871
    %v5930 = vsel %vm292, %v5928, 0
    %5932 = vmatprep.subr.bf16.mxu0 0
    %5933 = vmatpush1.bf16.msra.mxu0 %v5219
    %5934 = vmatprep.subr.bf16.mxu0 0
    %5935 = vmatpush1.bf16.msra.mxu0 %v5220
    %5936 = vmatprep.subr.bf16.mxu0 0
    %5937 = vmatpush1.bf16.msra.mxu0 0
    %5938 = vmatprep.subr.bf16.mxu0 0
    %5939 = vmatpush1.bf16.msra.mxu0 0
    %5940 = vmatprep.subr.bf16.mxu0 0
    %5941 = vmatpush1.bf16.msra.mxu0 0
    %5942 = vmatprep.subr.bf16.mxu0 0
    %5943 = vmatpush1.bf16.msra.mxu0 0
    %5944 = vmatprep.subr.bf16.mxu0 0
    %5945 = vmatpush1.bf16.msra.mxu0 0
    %5946 = vmatprep.subr.bf16.mxu0 0
    %5947 = vmatpush1.bf16.msra.mxu0 0
    %5948 = vmatprep.subr.bf16.mxu0 0
    %5949 = vmatpush1.bf16.msra.mxu0 0
    %5950 = vmatprep.subr.bf16.mxu0 0
    %5951 = vmatpush1.bf16.msra.mxu0 0
    %5952 = vmatprep.subr.bf16.mxu0 0
    %5953 = vmatpush1.bf16.msra.mxu0 0
    %5954 = vmatprep.subr.bf16.mxu0 0
    %5955 = vmatpush1.bf16.msra.mxu0 0
    %5956 = vmatprep.subr.bf16.mxu0 0
    %5957 = vmatpush1.bf16.msra.mxu0 0
    %5958 = vmatprep.subr.bf16.mxu0 0
    %5959 = vmatpush1.bf16.msra.mxu0 0
    %5960 = vmatprep.subr.bf16.mxu0 0
    %5961 = vmatpush1.bf16.msra.mxu0 0
    %5962 = vmatprep.subr.bf16.mxu0 0
    %5963 = vmatpush1.bf16.msra.mxu0 0
    %5964 = vmatprep.mubr.bf16.mxu0 0
    %5965 = vmatmul.mubr.bf16.gmra.mrb[0].mxu0 %v5930
    %v5966 = vpop.f32.mrb[0].mxu0
    %v5967 = vadd.f32 0.0, %v5966
    %v5968 = vpop.f32.mrb[0].mxu0
    %v5969 = vpop.f32.mrb[0].mxu0
    %v5970 = vpop.f32.mrb[0].mxu0
    %5971 = vdwg.mxu0
    %v5972 = vld [vmem:[#allocation4 + $0x10] sm:$0x3]
    %v5973 = vld [vmem:[#allocation4] sm:$0xc0]
    %v5974 = vld [vmem:[#allocation4 + $0x8] sm:$0xc0]
    %v5975 = vadd.f32 %v5972, %v5923
    %v5976 = vxor.u32 %v5975, 2147483648
    %v5977 = vmul.f32 %v5976, 1.442695
    %v5978 = vpow.pop %v5977
    %v5979 = vadd.f32 %v5978, 1.0
    %v5980 = vrcp.pop %v5979
    %v5981 = vmul.f32 1.0, %v5980
    %v5982 = vadd.f32 %v5923, %v5274
    %5984 = vrot.lane.b32.xlu0 %v5982, 64
    %v5985 = vpop.permute.xlu0 %5984
    %v5987 = vmul.f32 %v5981, %v5985
    %5989 = vrot.lane.b32.xlu0 %v5987, 64
    %v5990 = vpop.permute.xlu0 %5989
    %v5992 = vadd.f32 %v5972, %v5990
    %v5993 = vtanh.pop %v5992
    %v5995 = vrot.slane %v5967, 2
    %5996 = vrot.lane.b32.xlu0 %v5995, 96
    %v5997 = vpop.permute.xlu0 %5996
    %v5999 = vadd.f32 %v5973, %v5997
    %v6000 = vxor.u32 %v5999, 2147483648
    %v6001 = vmul.f32 %v6000, 1.442695
    %v6002 = vpow.pop %v6001
    %v6003 = vadd.f32 %v6002, 1.0
    %v6004 = vrcp.pop %v6003
    %v6005 = vmul.f32 1.0, %v6004
    %v6006 = vadd.f32 %v5974, %v5997
    %v6007 = vxor.u32 %v6006, 2147483648
    %v6008 = vmul.f32 %v6007, 1.442695
    %v6009 = vpow.pop %v6008
    %v6010 = vadd.f32 %v6009, 1.0
    %v6011 = vrcp.pop %v6010
    %v6012 = vmul.f32 1.0, %v6011
    %v6013 = vadd.f32 %v5967, %v5308
    %v6015 = vrot.slane %v6013, 2
    %6016 = vrot.lane.b32.xlu0 %v6015, 32
    %v6017 = vpop.permute.xlu0 %6016
    %v6019 = vmul.f32 %v6005, %v6017
    %6021 = vrot.lane.b32.xlu0 %v6019, 64
    %v6022 = vpop.permute.xlu0 %6021
    %v6024 = vadd.f32 %v5974, %v6022
    %v6025 = vtanh.pop %v6024
    %v6026 = vsub.f32 1.0, %v5981
    %6028 = vrot.lane.b32.xlu0 %v5993, 96
    %v6029 = vpop.permute.xlu0 %6028
    %v6031 = vmul.f32 %v6026, %v6029
    %v6032 = vmul.f32 %v5981, %v5873
    %v6033 = vadd.f32 %v6031, %v6032
    %v6034 = vsub.f32 1.0, %v6012
    %6036 = vrot.lane.b32.xlu0 %v6025, 96
    %v6037 = vpop.permute.xlu0 %6036
    %v6039 = vmul.f32 %v6034, %v6037
    %v6040 = vmul.f32 %v6012, %v5877
    %v6041 = vadd.f32 %v6039, %v6040
    %v6042 = vadd.f32 %v5875, %v6033
    %v6043 = vadd.f32 %v5879, %v6041
    %v6044 = vpack.c.bf16 %v6033, %v6033
    %6046 = vrot.lane.b32.xlu0 %v6044, 96
    %v6047 = vpop.permute.xlu0 %6046
    %v6049 = vsel %vm292, %v6047, 0
    %6051 = vmatprep.subr.bf16.mxu0 0
    %6052 = vmatpush1.bf16.msra.mxu0 %v5167
    %6053 = vmatprep.subr.bf16.mxu0 0
    %6054 = vmatpush1.bf16.msra.mxu0 %v5168
    %6055 = vmatprep.subr.bf16.mxu0 0
    %6056 = vmatpush1.bf16.msra.mxu0 0
    %6057 = vmatprep.subr.bf16.mxu0 0
    %6058 = vmatpush1.bf16.msra.mxu0 0
    %6059 = vmatprep.subr.bf16.mxu0 0
    %6060 = vmatpush1.bf16.msra.mxu0 0
    %6061 = vmatprep.subr.bf16.mxu0 0
    %6062 = vmatpush1.bf16.msra.mxu0 0
    %6063 = vmatprep.subr.bf16.mxu0 0
    %6064 = vmatpush1.bf16.msra.mxu0 0
    %6065 = vmatprep.subr.bf16.mxu0 0
    %6066 = vmatpush1.bf16.msra.mxu0 0
    %6067 = vmatprep.subr.bf16.mxu0 0
    %6068 = vmatpush1.bf16.msra.mxu0 0
    %6069 = vmatprep.subr.bf16.mxu0 0
    %6070 = vmatpush1.bf16.msra.mxu0 0
    %6071 = vmatprep.subr.bf16.mxu0 0
    %6072 = vmatpush1.bf16.msra.mxu0 0
    %6073 = vmatprep.subr.bf16.mxu0 0
    %6074 = vmatpush1.bf16.msra.mxu0 0
    %6075 = vmatprep.subr.bf16.mxu0 0
    %6076 = vmatpush1.bf16.msra.mxu0 0
    %6077 = vmatprep.subr.bf16.mxu0 0
    %6078 = vmatpush1.bf16.msra.mxu0 0
    %6079 = vmatprep.subr.bf16.mxu0 0
    %6080 = vmatpush1.bf16.msra.mxu0 0
    %6081 = vmatprep.subr.bf16.mxu0 0
    %6082 = vmatpush1.bf16.msra.mxu0 0
    %6083 = vmatprep.mubr.bf16.mxu0 0
    %6084 = vmatmul.mubr.bf16.gmra.mrb[0].mxu0 %v6049
    %v6085 = vpop.f32.mrb[0].mxu0
    %v6086 = vadd.f32 0.0, %v6085
    %v6087 = vpop.f32.mrb[0].mxu0
    %v6088 = vpop.f32.mrb[0].mxu0
    %v6089 = vpop.f32.mrb[0].mxu0
    %6090 = vdwg.mxu0
    %v6091 = vpack.c.bf16 %v6041, %v6041
    %v6093 = vrot.slane %v6091, 3
    %v6095 = vsel %vm292, %v6093, 0
    %6097 = vmatprep.subr.bf16.mxu0 0
    %6098 = vmatpush1.bf16.msra.mxu0 %v5219
    %6099 = vmatprep.subr.bf16.mxu0 0
    %6100 = vmatpush1.bf16.msra.mxu0 %v5220
    %6101 = vmatprep.subr.bf16.mxu0 0
    %6102 = vmatpush1.bf16.msra.mxu0 0
    %6103 = vmatprep.subr.bf16.mxu0 0
    %6104 = vmatpush1.bf16.msra.mxu0 0
    %6105 = vmatprep.subr.bf16.mxu0 0
    %6106 = vmatpush1.bf16.msra.mxu0 0
    %6107 = vmatprep.subr.bf16.mxu0 0
    %6108 = vmatpush1.bf16.msra.mxu0 0
    %6109 = vmatprep.subr.bf16.mxu0 0
    %6110 = vmatpush1.bf16.msra.mxu0 0
    %6111 = vmatprep.subr.bf16.mxu0 0
    %6112 = vmatpush1.bf16.msra.mxu0 0
    %6113 = vmatprep.subr.bf16.mxu0 0
    %6114 = vmatpush1.bf16.msra.mxu0 0
    %6115 = vmatprep.subr.bf16.mxu0 0
    %6116 = vmatpush1.bf16.msra.mxu0 0
    %6117 = vmatprep.subr.bf16.mxu0 0
    %6118 = vmatpush1.bf16.msra.mxu0 0
    %6119 = vmatprep.subr.bf16.mxu0 0
    %6120 = vmatpush1.bf16.msra.mxu0 0
    %6121 = vmatprep.subr.bf16.mxu0 0
    %6122 = vmatpush1.bf16.msra.mxu0 0
    %6123 = vmatprep.subr.bf16.mxu0 0
    %6124 = vmatpush1.bf16.msra.mxu0 0
    %6125 = vmatprep.subr.bf16.mxu0 0
    %6126 = vmatpush1.bf16.msra.mxu0 0
    %6127 = vmatprep.subr.bf16.mxu0 0
    %6128 = vmatpush1.bf16.msra.mxu0 0
    %6129 = vmatprep.mubr.bf16.mxu0 0
    %6130 = vmatmul.mubr.bf16.gmra.mrb[0].mxu0 %v6095
    %v6131 = vpop.f32.mrb[0].mxu0
    %v6132 = vadd.f32 0.0, %v6131
    %v6133 = vpop.f32.mrb[0].mxu0
    %v6134 = vpop.f32.mrb[0].mxu0
    %v6135 = vpop.f32.mrb[0].mxu0
    %6136 = vdwg.mxu0
    %v6137 = vld [vmem:[#allocation4 + $0x10] sm:$0xc]
    %v6138 = vld [vmem:[#allocation4] sm:$0x30]
    %v6139 = vld [vmem:[#allocation4 + $0x8] sm:$0x30]
    %v6141 = vrot.slane %v6086, 6
    %v6143 = vadd.f32 %v6137, %v6141
    %v6144 = vxor.u32 %v6143, 2147483648
    %v6145 = vmul.f32 %v6144, 1.442695
    %v6146 = vpow.pop %v6145
    %v6147 = vadd.f32 %v6146, 1.0
    %v6148 = vrcp.pop %v6147
    %v6149 = vmul.f32 1.0, %v6148
    %v6150 = vadd.f32 %v6086, %v5274
    %v6152 = vrot.slane %v6150, 6
    %6153 = vrot.lane.b32.xlu0 %v6152, 64
    %v6154 = vpop.permute.xlu0 %6153
    %v6156 = vmul.f32 %v6149, %v6154
    %6158 = vrot.lane.b32.xlu0 %v6156, 64
    %v6159 = vpop.permute.xlu0 %6158
    %v6161 = vadd.f32 %v6137, %v6159
    %v6162 = vtanh.pop %v6161
    %v6164 = vrot.slane %v6132, 4
    %6165 = vrot.lane.b32.xlu0 %v6164, 96
    %v6166 = vpop.permute.xlu0 %6165
    %v6168 = vadd.f32 %v6138, %v6166
    %v6169 = vxor.u32 %v6168, 2147483648
    %v6170 = vmul.f32 %v6169, 1.442695
    %v6171 = vpow.pop %v6170
    %v6172 = vadd.f32 %v6171, 1.0
    %v6173 = vrcp.pop %v6172
    %v6174 = vmul.f32 1.0, %v6173
    %v6175 = vadd.f32 %v6139, %v6166
    %v6176 = vxor.u32 %v6175, 2147483648
    %v6177 = vmul.f32 %v6176, 1.442695
    %v6178 = vpow.pop %v6177
    %v6179 = vadd.f32 %v6178, 1.0
    %v6180 = vrcp.pop %v6179
    %v6181 = vmul.f32 1.0, %v6180
    %v6182 = vadd.f32 %v6132, %v5308
    %v6184 = vrot.slane %v6182, 4
    %6185 = vrot.lane.b32.xlu0 %v6184, 32
    %v6186 = vpop.permute.xlu0 %6185
    %v6188 = vmul.f32 %v6174, %v6186
    %6190 = vrot.lane.b32.xlu0 %v6188, 64
    %v6191 = vpop.permute.xlu0 %6190
    %v6193 = vadd.f32 %v6139, %v6191
    %v6194 = vtanh.pop %v6193
    %v6195 = vsub.f32 1.0, %v6149
    %6197 = vrot.lane.b32.xlu0 %v6162, 96
    %v6198 = vpop.permute.xlu0 %6197
    %v6200 = vmul.f32 %v6195, %v6198
    %v6202 = vrot.slane %v6033, 6
    %v6204 = vmul.f32 %v6149, %v6202
    %v6205 = vadd.f32 %v6200, %v6204
    %v6206 = vsub.f32 1.0, %v6181
    %6208 = vrot.lane.b32.xlu0 %v6194, 96
    %v6209 = vpop.permute.xlu0 %6208
    %v6211 = vmul.f32 %v6206, %v6209
    %v6213 = vrot.slane %v6041, 2
    %v6215 = vmul.f32 %v6181, %v6213
    %v6216 = vadd.f32 %v6211, %v6215
    %v6218 = vrot.slane %v6205, 2
    %v6220 = vadd.f32 %v6042, %v6218
    %v6222 = vrot.slane %v6216, 6
    %v6224 = vadd.f32 %v6043, %v6222
    %v6225 = vpack.c.bf16 %v6205, %v6205
    %v6227 = vrot.slane %v6225, 1
    %6228 = vrot.lane.b32.xlu0 %v6227, 96
    %v6229 = vpop.permute.xlu0 %6228
    %v6231 = vsel %vm292, %v6229, 0
    %6233 = vmatprep.subr.bf16.mxu0 0
    %6234 = vmatpush1.bf16.msra.mxu0 %v5167
    %6235 = vmatprep.subr.bf16.mxu0 0
    %6236 = vmatpush1.bf16.msra.mxu0 %v5168
    %6237 = vmatprep.subr.bf16.mxu0 0
    %6238 = vmatpush1.bf16.msra.mxu0 0
    %6239 = vmatprep.subr.bf16.mxu0 0
    %6240 = vmatpush1.bf16.msra.mxu0 0
    %6241 = vmatprep.subr.bf16.mxu0 0
    %6242 = vmatpush1.bf16.msra.mxu0 0
    %6243 = vmatprep.subr.bf16.mxu0 0
    %6244 = vmatpush1.bf16.msra.mxu0 0
    %6245 = vmatprep.subr.bf16.mxu0 0
    %6246 = vmatpush1.bf16.msra.mxu0 0
    %6247 = vmatprep.subr.bf16.mxu0 0
    %6248 = vmatpush1.bf16.msra.mxu0 0
    %6249 = vmatprep.subr.bf16.mxu0 0
    %6250 = vmatpush1.bf16.msra.mxu0 0
    %6251 = vmatprep.subr.bf16.mxu0 0
    %6252 = vmatpush1.bf16.msra.mxu0 0
    %6253 = vmatprep.subr.bf16.mxu0 0
    %6254 = vmatpush1.bf16.msra.mxu0 0
    %6255 = vmatprep.subr.bf16.mxu0 0
    %6256 = vmatpush1.bf16.msra.mxu0 0
    %6257 = vmatprep.subr.bf16.mxu0 0
    %6258 = vmatpush1.bf16.msra.mxu0 0
    %6259 = vmatprep.subr.bf16.mxu0 0
    %6260 = vmatpush1.bf16.msra.mxu0 0
    %6261 = vmatprep.subr.bf16.mxu0 0
    %6262 = vmatpush1.bf16.msra.mxu0 0
    %6263 = vmatprep.subr.bf16.mxu0 0
    %6264 = vmatpush1.bf16.msra.mxu0 0
    %6265 = vmatprep.mubr.bf16.mxu0 0
    %6266 = vmatmul.mubr.bf16.gmra.mrb[0].mxu0 %v6231
    %v6267 = vpop.f32.mrb[0].mxu0
    %v6268 = vadd.f32 0.0, %v6267
    %v6269 = vpop.f32.mrb[0].mxu0
    %v6270 = vpop.f32.mrb[0].mxu0
    %v6271 = vpop.f32.mrb[0].mxu0
    %6272 = vdwg.mxu0
    %v6273 = vpack.c.bf16 %v6216, %v6216
    %v6275 = vrot.slane %v6273, 2
    %v6277 = vsel %vm292, %v6275, 0
    %6279 = vmatprep.subr.bf16.mxu0 0
    %6280 = vmatpush1.bf16.msra.mxu0 %v5219
    %6281 = vmatprep.subr.bf16.mxu0 0
    %6282 = vmatpush1.bf16.msra.mxu0 %v5220
    %6283 = vmatprep.subr.bf16.mxu0 0
    %6284 = vmatpush1.bf16.msra.mxu0 0
    %6285 = vmatprep.subr.bf16.mxu0 0
    %6286 = vmatpush1.bf16.msra.mxu0 0
    %6287 = vmatprep.subr.bf16.mxu0 0
    %6288 = vmatpush1.bf16.msra.mxu0 0
    %6289 = vmatprep.subr.bf16.mxu0 0
    %6290 = vmatpush1.bf16.msra.mxu0 0
    %6291 = vmatprep.subr.bf16.mxu0 0
    %6292 = vmatpush1.bf16.msra.mxu0 0
    %6293 = vmatprep.subr.bf16.mxu0 0
    %6294 = vmatpush1.bf16.msra.mxu0 0
    %6295 = vmatprep.subr.bf16.mxu0 0
    %6296 = vmatpush1.bf16.msra.mxu0 0
    %6297 = vmatprep.subr.bf16.mxu0 0
    %6298 = vmatpush1.bf16.msra.mxu0 0
    %6299 = vmatprep.subr.bf16.mxu0 0
    %6300 = vmatpush1.bf16.msra.mxu0 0
    %6301 = vmatprep.subr.bf16.mxu0 0
    %6302 = vmatpush1.bf16.msra.mxu0 0
    %6303 = vmatprep.subr.bf16.mxu0 0
    %6304 = vmatpush1.bf16.msra.mxu0 0
    %6305 = vmatprep.subr.bf16.mxu0 0
    %6306 = vmatpush1.bf16.msra.mxu0 0
    %6307 = vmatprep.subr.bf16.mxu0 0
    %6308 = vmatpush1.bf16.msra.mxu0 0
    %6309 = vmatprep.subr.bf16.mxu0 0
    %6310 = vmatpush1.bf16.msra.mxu0 0
    %6311 = vmatprep.mubr.bf16.mxu0 0
    %6312 = vmatmul.mubr.bf16.gmra.mrb[0].mxu0 %v6277
    %v6313 = vpop.f32.mrb[0].mxu0
    %v6314 = vadd.f32 0.0, %v6313
    %v6315 = vpop.f32.mrb[0].mxu0
    %v6316 = vpop.f32.mrb[0].mxu0
    %v6317 = vpop.f32.mrb[0].mxu0
    %6318 = vdwg.mxu0
    %v6319 = vld [vmem:[#allocation4 + $0x10] sm:$0x30]
    %v6320 = vld [vmem:[#allocation4] sm:$0xc]
    %v6321 = vld [vmem:[#allocation4 + $0x8] sm:$0xc]
    %v6323 = vrot.slane %v6268, 4
    %v6325 = vadd.f32 %v6319, %v6323
    %v6326 = vxor.u32 %v6325, 2147483648
    %v6327 = vmul.f32 %v6326, 1.442695
    %v6328 = vpow.pop %v6327
    %v6329 = vadd.f32 %v6328, 1.0
    %v6330 = vrcp.pop %v6329
    %v6331 = vmul.f32 1.0, %v6330
    %v6332 = vadd.f32 %v6268, %v5274
    %v6334 = vrot.slane %v6332, 4
    %6335 = vrot.lane.b32.xlu0 %v6334, 64
    %v6336 = vpop.permute.xlu0 %6335
    %v6338 = vmul.f32 %v6331, %v6336
    %6340 = vrot.lane.b32.xlu0 %v6338, 64
    %v6341 = vpop.permute.xlu0 %6340
    %v6343 = vadd.f32 %v6319, %v6341
    %v6344 = vtanh.pop %v6343
    %v6346 = vrot.slane %v6314, 6
    %6347 = vrot.lane.b32.xlu0 %v6346, 96
    %v6348 = vpop.permute.xlu0 %6347
    %v6350 = vadd.f32 %v6320, %v6348
    %v6351 = vxor.u32 %v6350, 2147483648
    %v6352 = vmul.f32 %v6351, 1.442695
    %v6353 = vpow.pop %v6352
    %v6354 = vadd.f32 %v6353, 1.0
    %v6355 = vrcp.pop %v6354
    %v6356 = vmul.f32 1.0, %v6355
    %v6357 = vadd.f32 %v6321, %v6348
    %v6358 = vxor.u32 %v6357, 2147483648
    %v6359 = vmul.f32 %v6358, 1.442695
    %v6360 = vpow.pop %v6359
    %v6361 = vadd.f32 %v6360, 1.0
    %v6362 = vrcp.pop %v6361
    %v6363 = vmul.f32 1.0, %v6362
    %v6364 = vadd.f32 %v6314, %v5308
    %v6366 = vrot.slane %v6364, 6
    %6367 = vrot.lane.b32.xlu0 %v6366, 32
    %v6368 = vpop.permute.xlu0 %6367
    %v6370 = vmul.f32 %v6356, %v6368
    %6372 = vrot.lane.b32.xlu0 %v6370, 64
    %v6373 = vpop.permute.xlu0 %6372
    %v6375 = vadd.f32 %v6321, %v6373
    %v6376 = vtanh.pop %v6375
    %v6377 = vsub.f32 1.0, %v6331
    %6379 = vrot.lane.b32.xlu0 %v6344, 96
    %v6380 = vpop.permute.xlu0 %6379
    %v6382 = vmul.f32 %v6377, %v6380
    %v6383 = vrot.slane %v6205, 6
    %v6385 = vmul.f32 %v6331, %v6383
    %v6386 = vadd.f32 %v6382, %v6385
    %v6387 = vsub.f32 1.0, %v6363
    %6389 = vrot.lane.b32.xlu0 %v6376, 96
    %v6390 = vpop.permute.xlu0 %6389
    %v6392 = vmul.f32 %v6387, %v6390
    %v6393 = vrot.slane %v6216, 2
    %v6395 = vmul.f32 %v6363, %v6393
    %v6396 = vadd.f32 %v6392, %v6395
    %v6398 = vrot.slane %v6386, 4
    %v6400 = vadd.f32 %v6220, %v6398
    %v6402 = vrot.slane %v6396, 4
    %v6404 = vadd.f32 %v6224, %v6402
    %v6405 = vpack.c.bf16 %v6386, %v6386
    %v6407 = vrot.slane %v6405, 2
    %6408 = vrot.lane.b32.xlu0 %v6407, 96
    %v6409 = vpop.permute.xlu0 %6408
    %v6411 = vsel %vm292, %v6409, 0
    %6413 = vmatprep.subr.bf16.mxu0 0
    %6414 = vmatpush1.bf16.msra.mxu0 %v5167
    %6415 = vmatprep.subr.bf16.mxu0 0
    %6416 = vmatpush1.bf16.msra.mxu0 %v5168
    %6417 = vmatprep.subr.bf16.mxu0 0
    %6418 = vmatpush1.bf16.msra.mxu0 0
    %6419 = vmatprep.subr.bf16.mxu0 0
    %6420 = vmatpush1.bf16.msra.mxu0 0
    %6421 = vmatprep.subr.bf16.mxu0 0
    %6422 = vmatpush1.bf16.msra.mxu0 0
    %6423 = vmatprep.subr.bf16.mxu0 0
    %6424 = vmatpush1.bf16.msra.mxu0 0
    %6425 = vmatprep.subr.bf16.mxu0 0
    %6426 = vmatpush1.bf16.msra.mxu0 0
    %6427 = vmatprep.subr.bf16.mxu0 0
    %6428 = vmatpush1.bf16.msra.mxu0 0
    %6429 = vmatprep.subr.bf16.mxu0 0
    %6430 = vmatpush1.bf16.msra.mxu0 0
    %6431 = vmatprep.subr.bf16.mxu0 0
    %6432 = vmatpush1.bf16.msra.mxu0 0
    %6433 = vmatprep.subr.bf16.mxu0 0
    %6434 = vmatpush1.bf16.msra.mxu0 0
    %6435 = vmatprep.subr.bf16.mxu0 0
    %6436 = vmatpush1.bf16.msra.mxu0 0
    %6437 = vmatprep.subr.bf16.mxu0 0
    %6438 = vmatpush1.bf16.msra.mxu0 0
    %6439 = vmatprep.subr.bf16.mxu0 0
    %6440 = vmatpush1.bf16.msra.mxu0 0
    %6441 = vmatprep.subr.bf16.mxu0 0
    %6442 = vmatpush1.bf16.msra.mxu0 0
    %6443 = vmatprep.subr.bf16.mxu0 0
    %6444 = vmatpush1.bf16.msra.mxu0 0
    %6445 = vmatprep.mubr.bf16.mxu0 0
    %6446 = vmatmul.mubr.bf16.gmra.mrb[0].mxu0 %v6411
    %v6447 = vpop.f32.mrb[0].mxu0
    %v6448 = vadd.f32 0.0, %v6447
    %v6449 = vpop.f32.mrb[0].mxu0
    %v6450 = vpop.f32.mrb[0].mxu0
    %v6451 = vpop.f32.mrb[0].mxu0
    %6452 = vdwg.mxu0
    %v6453 = vpack.c.bf16 %v6396, %v6396
    %v6455 = vrot.slane %v6453, 1
    %v6457 = vsel %vm292, %v6455, 0
    %6459 = vmatprep.subr.bf16.mxu0 0
    %6460 = vmatpush1.bf16.msra.mxu0 %v5219
    %6461 = vmatprep.subr.bf16.mxu0 0
    %6462 = vmatpush1.bf16.msra.mxu0 %v5220
    %6463 = vmatprep.subr.bf16.mxu0 0
    %6464 = vmatpush1.bf16.msra.mxu0 0
    %6465 = vmatprep.subr.bf16.mxu0 0
    %6466 = vmatpush1.bf16.msra.mxu0 0
    %6467 = vmatprep.subr.bf16.mxu0 0
    %6468 = vmatpush1.bf16.msra.mxu0 0
    %6469 = vmatprep.subr.bf16.mxu0 0
    %6470 = vmatpush1.bf16.msra.mxu0 0
    %6471 = vmatprep.subr.bf16.mxu0 0
    %6472 = vmatpush1.bf16.msra.mxu0 0
    %6473 = vmatprep.subr.bf16.mxu0 0
    %6474 = vmatpush1.bf16.msra.mxu0 0
    %6475 = vmatprep.subr.bf16.mxu0 0
    %6476 = vmatpush1.bf16.msra.mxu0 0
    %6477 = vmatprep.subr.bf16.mxu0 0
    %6478 = vmatpush1.bf16.msra.mxu0 0
    %6479 = vmatprep.subr.bf16.mxu0 0
    %6480 = vmatpush1.bf16.msra.mxu0 0
    %6481 = vmatprep.subr.bf16.mxu0 0
    %6482 = vmatpush1.bf16.msra.mxu0 0
    %6483 = vmatprep.subr.bf16.mxu0 0
    %6484 = vmatpush1.bf16.msra.mxu0 0
    %6485 = vmatprep.subr.bf16.mxu0 0
    %6486 = vmatpush1.bf16.msra.mxu0 0
    %6487 = vmatprep.subr.bf16.mxu0 0
    %6488 = vmatpush1.bf16.msra.mxu0 0
    %6489 = vmatprep.subr.bf16.mxu0 0
    %6490 = vmatpush1.bf16.msra.mxu0 0
    %6491 = vmatprep.mubr.bf16.mxu0 0
    %6492 = vmatmul.mubr.bf16.gmra.mrb[0].mxu0 %v6457
    %v6493 = vpop.f32.mrb[0].mxu0
    %v6494 = vadd.f32 0.0, %v6493
    %v6495 = vpop.f32.mrb[0].mxu0
    %v6496 = vpop.f32.mrb[0].mxu0
    %v6497 = vpop.f32.mrb[0].mxu0
    %6498 = vdwg.mxu0
    %v6499 = vld [vmem:[#allocation4 + $0x10] sm:$0xc0]
    %v6500 = vld [vmem:[#allocation4] sm:$0x3]
    %v6501 = vld [vmem:[#allocation4 + $0x8] sm:$0x3]
    %v6503 = vrot.slane %v6448, 2
    %v6505 = vadd.f32 %v6499, %v6503
    %v6506 = vxor.u32 %v6505, 2147483648
    %v6507 = vmul.f32 %v6506, 1.442695
    %v6508 = vpow.pop %v6507
    %v6509 = vadd.f32 %v6508, 1.0
    %v6510 = vrcp.pop %v6509
    %v6511 = vmul.f32 1.0, %v6510
    %v6512 = vadd.f32 %v6448, %v5274
    %v6514 = vrot.slane %v6512, 2
    %6515 = vrot.lane.b32.xlu0 %v6514, 64
    %v6516 = vpop.permute.xlu0 %6515
    %v6518 = vmul.f32 %v6511, %v6516
    %6520 = vrot.lane.b32.xlu0 %v6518, 64
    %v6521 = vpop.permute.xlu0 %6520
    %v6523 = vadd.f32 %v6499, %v6521
    %v6524 = vtanh.pop %v6523
    %6526 = vrot.lane.b32.xlu0 %v6494, 96
    %v6527 = vpop.permute.xlu0 %6526
    %v6529 = vadd.f32 %v6500, %v6527
    %v6530 = vxor.u32 %v6529, 2147483648
    %v6531 = vmul.f32 %v6530, 1.442695
    %v6532 = vpow.pop %v6531
    %v6533 = vadd.f32 %v6532, 1.0
    %v6534 = vrcp.pop %v6533
    %v6535 = vmul.f32 1.0, %v6534
    %v6536 = vadd.f32 %v6501, %v6527
    %v6537 = vxor.u32 %v6536, 2147483648
    %v6538 = vmul.f32 %v6537, 1.442695
    %v6539 = vpow.pop %v6538
    %v6540 = vadd.f32 %v6539, 1.0
    %v6541 = vrcp.pop %v6540
    %v6542 = vmul.f32 1.0, %v6541
    %v6543 = vadd.f32 %v6494, %v5308
    %6545 = vrot.lane.b32.xlu0 %v6543, 32
    %v6546 = vpop.permute.xlu0 %6545
    %v6548 = vmul.f32 %v6535, %v6546
    %6550 = vrot.lane.b32.xlu0 %v6548, 64
    %v6551 = vpop.permute.xlu0 %6550
    %v6553 = vadd.f32 %v6501, %v6551
    %v6554 = vtanh.pop %v6553
    %v6555 = vsub.f32 1.0, %v6511
    %6557 = vrot.lane.b32.xlu0 %v6524, 96
    %v6558 = vpop.permute.xlu0 %6557
    %v6560 = vmul.f32 %v6555, %v6558
    %v6561 = vrot.slane %v6386, 6
    %v6563 = vmul.f32 %v6511, %v6561
    %v6564 = vadd.f32 %v6560, %v6563
    %v6565 = vsub.f32 1.0, %v6542
    %6567 = vrot.lane.b32.xlu0 %v6554, 96
    %v6568 = vpop.permute.xlu0 %6567
    %v6570 = vmul.f32 %v6565, %v6568
    %v6571 = vrot.slane %v6396, 2
    %v6573 = vmul.f32 %v6542, %v6571
    %v6574 = vadd.f32 %v6570, %v6573
    %v6576 = vrot.slane %v6564, 6
    %v6578 = vadd.f32 %v6400, %v6576
    %v6580 = vrot.slane %v6574, 2
    %v6582 = vadd.f32 %v6404, %v6580
    %v6583 = vmul.f32 %v6578, 0.125
    %v6584 = vmul.f32 %v6582, 0.125
    %6586 = vrot.lane.b32.xlu0 %v6583, 96
    %v6587 = vpop.permute.xlu0 %6586
    %v6590 = vrot.slane %v6584, 6
    %6591 = vrot.lane.b32.xlu0 %v6590, 32
    %v6592 = vpop.permute.xlu0 %6591
    %v6594 = vsel %vm292, %v6587, %v6592
    %v6595 = vlaneseq
    %v6596 = vand.u32 %v6595, 127
    %s6597 = sld [smem:[#allocation9]]
    %s6598 = sld [smem:[#allocation9 + $0x1]]
    %s6599 = sld [smem:[#allocation9 + $0x2]]
    %s6600 = sld [smem:[#allocation9 + $0x3]]
    %vm6601 = vcmp.eq.s32.totalorder %v6596, 0
    %vm6602 = vcmask 1048064
    %6603 = vrot.lane.b32.xlu0 %v6594, 64
    %v6604 = vpop.permute.xlu0 %6603
    %v6605 = vsel %vm6602, %v6604, %v6594
    %6606 = vrot.lane.b32.xlu0 %v6605, 64
    %v6607 = vpop.permute.xlu0 %6606
    %v6608 = vsel %vm6602, %v6607, %v6594
    %6610 = vrot.lane.b32.xlu0 %v6608, 65
    %v6611 = vpop.permute.xlu0 %6610
    %v6613 = vsel %vm6601, 0.0, %v6611
    %vm6614 = vcmp.eq.s32.totalorder %v6596, 63
    %6615 = vrot.lane.b32.xlu0 %v6608, 127
    %v6616 = vpop.permute.xlu0 %6615
    %v6618 = vsel %vm6614, 0.0, %v6616
    %v6619 = vstv %s6597
    %v6620 = vmul.f32 %v6619, %v6613
    %v6621 = vstv %s6598
    %v6622 = vmul.f32 %v6621, %v6594
    %v6623 = vadd.f32 %v6620, %v6622
    %v6624 = vstv %s6599
    %v6625 = vmul.f32 %v6624, %v6618
    %v6626 = vadd.f32 %v6623, %v6625
    %v6627 = vstv %s6600
    %v6628 = vadd.f32 %v6626, %v6627
    %6629 = vrot.lane.b32.xlu0 %v6628, 64
    %v6630 = vpop.permute.xlu0 %6629
    %v6631 = vsel %vm6602, %v6630, %v6628
    %6632 = vrot.lane.b32.xlu0 %v6631, 64
    %v6633 = vpop.permute.xlu0 %6632
    %v6634 = vsel %vm6602, %v6633, %v6628
    %6636 = vrot.lane.b32.xlu0 %v6634, 65
    %v6637 = vpop.permute.xlu0 %6636
    %v6639 = vsel %vm6601, -inf, %v6637
    %6640 = vrot.lane.b32.xlu0 %v6634, 127
    %v6641 = vpop.permute.xlu0 %6640
    %v6643 = vsel %vm6614, -inf, %v6641
    %v6644 = vmax.f32 %v6639, %v6628
    %v6645 = vmax.f32 %v6644, %v6643
    %v6646 = vld [vmem:[%s53] sm:$0xff]
    %v6647 = vld [vmem:[%s53 + $0x8] sm:$0xff]
    %v6648 = vld [vmem:[%s53 + $0x10] sm:$0xff]
    %v6649 = vld [vmem:[%s53 + $0x18] sm:$0xff]
    %v6650 = vld [vmem:[%s53 + $0x20] sm:$0xff]
    %v6651 = vld [vmem:[%s53 + $0x28] sm:$0xff]
    %v6652 = vld [vmem:[%s53 + $0x30] sm:$0xff]
    %v6653 = vld [vmem:[%s53 + $0x38] sm:$0xff]
    %v6655 = vsel %vm340, %v6645, 0
    %6657 = vmatprep.subr.mxu0 0.0
    %6658 = vmatpush1.msra.mxu0 %v6646
    %6659 = vmatprep.subr.mxu0 0.0
    %6660 = vmatpush1.msra.mxu0 %v6647
    %6661 = vmatprep.subr.mxu0 0.0
    %6662 = vmatpush1.msra.mxu0 %v6648
    %6663 = vmatprep.subr.mxu0 0.0
    %6664 = vmatpush1.msra.mxu0 %v6649
    %6665 = vmatprep.subr.mxu0 0.0
    %6666 = vmatpush1.msra.mxu0 %v6650
    %6667 = vmatprep.subr.mxu0 0.0
    %6668 = vmatpush1.msra.mxu0 %v6651
    %6669 = vmatprep.subr.mxu0 0.0
    %6670 = vmatpush1.msra.mxu0 %v6652
    %6671 = vmatprep.subr.mxu0 0.0
    %6672 = vmatpush1.msra.mxu0 %v6653
    %6673 = vmatprep.subr.mxu0 0.0
    %6674 = vmatpush1.msra.mxu0 0.0
    %6675 = vmatprep.subr.mxu0 0.0
    %6676 = vmatpush1.msra.mxu0 0.0
    %6677 = vmatprep.subr.mxu0 0.0
    %6678 = vmatpush1.msra.mxu0 0.0
    %6679 = vmatprep.subr.mxu0 0.0
    %6680 = vmatpush1.msra.mxu0 0.0
    %6681 = vmatprep.subr.mxu0 0.0
    %6682 = vmatpush1.msra.mxu0 0.0
    %6683 = vmatprep.subr.mxu0 0.0
    %6684 = vmatpush1.msra.mxu0 0.0
    %6685 = vmatprep.subr.mxu0 0.0
    %6686 = vmatpush1.msra.mxu0 0.0
    %6687 = vmatprep.subr.mxu0 0.0
    %6688 = vmatpush1.msra.mxu0 0.0
    %6689 = vmatprep.subr.mxu0 0.0
    %6690 = vmatpush1.msra.mxu0 0.0
    %6691 = vmatprep.subr.mxu0 0.0
    %6692 = vmatpush1.msra.mxu0 0.0
    %6693 = vmatprep.subr.mxu0 0.0
    %6694 = vmatpush1.msra.mxu0 0.0
    %6695 = vmatprep.subr.mxu0 0.0
    %6696 = vmatpush1.msra.mxu0 0.0
    %6697 = vmatprep.subr.mxu0 0.0
    %6698 = vmatpush1.msra.mxu0 0.0
    %6699 = vmatprep.subr.mxu0 0.0
    %6700 = vmatpush1.msra.mxu0 0.0
    %6701 = vmatprep.subr.mxu0 0.0
    %6702 = vmatpush1.msra.mxu0 0.0
    %6703 = vmatprep.subr.mxu0 0.0
    %6704 = vmatpush1.msra.mxu0 0.0
    %6705 = vmatprep.subr.mxu0 0.0
    %6706 = vmatpush1.msra.mxu0 0.0
    %6707 = vmatprep.subr.mxu0 0.0
    %6708 = vmatpush1.msra.mxu0 0.0
    %6709 = vmatprep.subr.mxu0 0.0
    %6710 = vmatpush1.msra.mxu0 0.0
    %6711 = vmatprep.subr.mxu0 0.0
    %6712 = vmatpush1.msra.mxu0 0.0
    %6713 = vmatprep.subr.mxu0 0.0
    %6714 = vmatpush1.msra.mxu0 0.0
    %6715 = vmatprep.subr.mxu0 0.0
    %6716 = vmatpush1.msra.mxu0 0.0
    %6717 = vmatprep.subr.mxu0 0.0
    %6718 = vmatpush1.msra.mxu0 0.0
    %6719 = vmatprep.subr.mxu0 0.0
    %6720 = vmatpush1.msra.mxu0 0.0
    %6721 = vmatprep.mubr.f32.mxu0 0.0
    %6722 = vmatmul.mubr.f32.gmra.mrb[0].mxu0 %v6655
    %v6723 = vpop.f32.mrb[0].mxu0
    %v6724 = vadd.f32 0.0, %v6723
    %v6725 = vpop.f32.mrb[0].mxu0
    %6726 = vdwg.mxu0
    %v6727 = vld [vmem:[%s55] sm:$0xff]
    %v6728 = vld [vmem:[%s55 + $0x8] sm:$0xff]
    %v6729 = vld [vmem:[%s55 + $0x10] sm:$0xff]
    %v6730 = vld [vmem:[%s55 + $0x18] sm:$0xff]
    %v6731 = vld [vmem:[#allocation10] sm:$0x1]
    %v6733 = vlaneseq
    %v6734 = vshrl.u32 %v6733, 7
    %v6735 = vsub.s32 0, %v6734
    %v6736 = vrot.slane %v6731, %v6735
    %v6739 = vsel %vm292, %v6724, 0
    %6741 = vmatprep.subr.mxu0 0.0
    %6742 = vmatpush1.msra.mxu0 %v6727
    %6743 = vmatprep.subr.mxu0 0.0
    %6744 = vmatpush1.msra.mxu0 %v6728
    %6745 = vmatprep.subr.mxu0 0.0
    %6746 = vmatpush1.msra.mxu0 %v6729
    %6747 = vmatprep.subr.mxu0 0.0
    %6748 = vmatpush1.msra.mxu0 %v6730
    %6749 = vmatprep.subr.mxu0 0.0
    %6750 = vmatpush1.msra.mxu0 0.0
    %6751 = vmatprep.subr.mxu0 0.0
    %6752 = vmatpush1.msra.mxu0 0.0
    %6753 = vmatprep.subr.mxu0 0.0
    %6754 = vmatpush1.msra.mxu0 0.0
    %6755 = vmatprep.subr.mxu0 0.0
    %6756 = vmatpush1.msra.mxu0 0.0
    %6757 = vmatprep.subr.mxu0 0.0
    %6758 = vmatpush1.msra.mxu0 0.0
    %6759 = vmatprep.subr.mxu0 0.0
    %6760 = vmatpush1.msra.mxu0 0.0
    %6761 = vmatprep.subr.mxu0 0.0
    %6762 = vmatpush1.msra.mxu0 0.0
    %6763 = vmatprep.subr.mxu0 0.0
    %6764 = vmatpush1.msra.mxu0 0.0
    %6765 = vmatprep.subr.mxu0 0.0
    %6766 = vmatpush1.msra.mxu0 0.0
    %6767 = vmatprep.subr.mxu0 0.0
    %6768 = vmatpush1.msra.mxu0 0.0
    %6769 = vmatprep.subr.mxu0 0.0
    %6770 = vmatpush1.msra.mxu0 0.0
    %6771 = vmatprep.subr.mxu0 0.0
    %6772 = vmatpush1.msra.mxu0 0.0
    %6773 = vmatprep.subr.mxu0 0.0
    %6774 = vmatpush1.msra.mxu0 0.0
    %6775 = vmatprep.subr.mxu0 0.0
    %6776 = vmatpush1.msra.mxu0 0.0
    %6777 = vmatprep.subr.mxu0 0.0
    %6778 = vmatpush1.msra.mxu0 0.0
    %6779 = vmatprep.subr.mxu0 0.0
    %6780 = vmatpush1.msra.mxu0 0.0
    %6781 = vmatprep.subr.mxu0 0.0
    %6782 = vmatpush1.msra.mxu0 0.0
    %6783 = vmatprep.subr.mxu0 0.0
    %6784 = vmatpush1.msra.mxu0 0.0
    %6785 = vmatprep.subr.mxu0 0.0
    %6786 = vmatpush1.msra.mxu0 0.0
    %6787 = vmatprep.subr.mxu0 0.0
    %6788 = vmatpush1.msra.mxu0 0.0
    %6789 = vmatprep.subr.mxu0 0.0
    %6790 = vmatpush1.msra.mxu0 0.0
    %6791 = vmatprep.subr.mxu0 0.0
    %6792 = vmatpush1.msra.mxu0 0.0
    %6793 = vmatprep.subr.mxu0 0.0
    %6794 = vmatpush1.msra.mxu0 0.0
    %6795 = vmatprep.subr.mxu0 0.0
    %6796 = vmatpush1.msra.mxu0 0.0
    %6797 = vmatprep.subr.mxu0 0.0
    %6798 = vmatpush1.msra.mxu0 0.0
    %6799 = vmatprep.subr.mxu0 0.0
    %6800 = vmatpush1.msra.mxu0 0.0
    %6801 = vmatprep.subr.mxu0 0.0
    %6802 = vmatpush1.msra.mxu0 0.0
    %6803 = vmatprep.subr.mxu0 0.0
    %6804 = vmatpush1.msra.mxu0 0.0
    %6805 = vmatprep.mubr.f32.mxu0 0.0
    %6806 = vmatmul.mubr.f32.gmra.mrb[0].mxu0 %v6739
    %v6807 = vpop.f32.mrb[0].mxu0
    %v6808 = vadd.f32 %v6736, %v6807
    %v6809 = vpop.f32.mrb[0].mxu0
    %6810 = vdwg.mxu0
    %v6811 = vld [vmem:[#allocation12] sm:$0x1]
    %v6812 = vld [vmem:[#allocation13] sm:$0x1]
    %vm6813 = vcmask 517120
    %v6814 = vsel %vm6813, %v6808, 0.0
    %6815 = vadd.xlane.f32.xlu0 %v6814
    %v6816 = vpop.xlane.xlu0 %6815
    %v6817 = vrcp.pop 64.0
    %v6818 = vmul.f32 %v6816, %v6817
    %v6819 = vsub.f32 %v6808, %v6818
    %v6820 = vmul.f32 %v6819, %v6819
    %v6821 = vsel %vm6813, %v6820, 0.0
    %6822 = vadd.xlane.f32.xlu0 %v6821
    %v6823 = vpop.xlane.xlu0 %6822
    %v6824 = vmul.f32 %v6823, %v6817
    %v6825 = vadd.f32 %v6824, 1e-05
    %v6826 = vrsqrt.pop %v6825
    %v6827 = vmul.f32 %v6819, %v6826
    %v6829 = vlaneseq
    %v6830 = vshrl.u32 %v6829, 7
    %v6831 = vsub.s32 0, %v6830
    %v6832 = vrot.slane %v6811, %v6831
    %v6834 = vmul.f32 %v6827, %v6832
    %v6836 = vlaneseq
    %v6837 = vshrl.u32 %v6836, 7
    %v6838 = vsub.s32 0, %v6837
    %v6839 = vrot.slane %v6812, %v6838
    %v6841 = vadd.f32 %v6834, %v6839
    %v6842 = vmax.f32 %v6841, 0.0
    %v6843 = vld [vmem:[%s63] sm:$0xff]
    %v6844 = vld [vmem:[%s63 + $0x8] sm:$0xff]
    %v6845 = vld [vmem:[%s63 + $0x10] sm:$0xff]
    %v6846 = vld [vmem:[%s63 + $0x18] sm:$0xff]
    %v6847 = vld [vmem:[%s63 + $0x20] sm:$0xff]
    %v6848 = vld [vmem:[%s63 + $0x28] sm:$0xff]
    %v6849 = vld [vmem:[%s63 + $0x30] sm:$0xff]
    %v6850 = vld [vmem:[%s63 + $0x38] sm:$0xff]
    %v6851 = vld [vmem:[#allocation15] sm:$0x1]
    %v6853 = vlaneseq
    %v6854 = vshrl.u32 %v6853, 7
    %v6855 = vsub.s32 0, %v6854
    %v6856 = vrot.slane %v6851, %v6855
    %v6859 = vsel %vm340, %v6842, 0
    %6861 = vmatprep.subr.mxu0 0.0
    %6862 = vmatpush1.msra.mxu0 %v6843
    %6863 = vmatprep.subr.mxu0 0.0
    %6864 = vmatpush1.msra.mxu0 %v6844
    %6865 = vmatprep.subr.mxu0 0.0
    %6866 = vmatpush1.msra.mxu0 %v6845
    %6867 = vmatprep.subr.mxu0 0.0
    %6868 = vmatpush1.msra.mxu0 %v6846
    %6869 = vmatprep.subr.mxu0 0.0
    %6870 = vmatpush1.msra.mxu0 %v6847
    %6871 = vmatprep.subr.mxu0 0.0
    %6872 = vmatpush1.msra.mxu0 %v6848
    %6873 = vmatprep.subr.mxu0 0.0
    %6874 = vmatpush1.msra.mxu0 %v6849
    %6875 = vmatprep.subr.mxu0 0.0
    %6876 = vmatpush1.msra.mxu0 %v6850
    %6877 = vmatprep.subr.mxu0 0.0
    %6878 = vmatpush1.msra.mxu0 0.0
    %6879 = vmatprep.subr.mxu0 0.0
    %6880 = vmatpush1.msra.mxu0 0.0
    %6881 = vmatprep.subr.mxu0 0.0
    %6882 = vmatpush1.msra.mxu0 0.0
    %6883 = vmatprep.subr.mxu0 0.0
    %6884 = vmatpush1.msra.mxu0 0.0
    %6885 = vmatprep.subr.mxu0 0.0
    %6886 = vmatpush1.msra.mxu0 0.0
    %6887 = vmatprep.subr.mxu0 0.0
    %6888 = vmatpush1.msra.mxu0 0.0
    %6889 = vmatprep.subr.mxu0 0.0
    %6890 = vmatpush1.msra.mxu0 0.0
    %6891 = vmatprep.subr.mxu0 0.0
    %6892 = vmatpush1.msra.mxu0 0.0
    %6893 = vmatprep.subr.mxu0 0.0
    %6894 = vmatpush1.msra.mxu0 0.0
    %6895 = vmatprep.subr.mxu0 0.0
    %6896 = vmatpush1.msra.mxu0 0.0
    %6897 = vmatprep.subr.mxu0 0.0
    %6898 = vmatpush1.msra.mxu0 0.0
    %6899 = vmatprep.subr.mxu0 0.0
    %6900 = vmatpush1.msra.mxu0 0.0
    %6901 = vmatprep.subr.mxu0 0.0
    %6902 = vmatpush1.msra.mxu0 0.0
    %6903 = vmatprep.subr.mxu0 0.0
    %6904 = vmatpush1.msra.mxu0 0.0
    %6905 = vmatprep.subr.mxu0 0.0
    %6906 = vmatpush1.msra.mxu0 0.0
    %6907 = vmatprep.subr.mxu0 0.0
    %6908 = vmatpush1.msra.mxu0 0.0
    %6909 = vmatprep.subr.mxu0 0.0
    %6910 = vmatpush1.msra.mxu0 0.0
    %6911 = vmatprep.subr.mxu0 0.0
    %6912 = vmatpush1.msra.mxu0 0.0
    %6913 = vmatprep.subr.mxu0 0.0
    %6914 = vmatpush1.msra.mxu0 0.0
    %6915 = vmatprep.subr.mxu0 0.0
    %6916 = vmatpush1.msra.mxu0 0.0
    %6917 = vmatprep.subr.mxu0 0.0
    %6918 = vmatpush1.msra.mxu0 0.0
    %6919 = vmatprep.subr.mxu0 0.0
    %6920 = vmatpush1.msra.mxu0 0.0
    %6921 = vmatprep.subr.mxu0 0.0
    %6922 = vmatpush1.msra.mxu0 0.0
    %6923 = vmatprep.subr.mxu0 0.0
    %6924 = vmatpush1.msra.mxu0 0.0
    %6925 = vmatprep.mubr.f32.mxu0 0.0
    %6926 = vmatmul.mubr.f32.gmra.mrb[0].mxu0 %v6859
    %v6927 = vpop.f32.mrb[0].mxu0
    %v6928 = vadd.f32 %v6856, %v6927
    %v6929 = vpop.f32.mrb[0].mxu0
    %6930 = vdwg.mxu0
    %v6931 = vld [vmem:[#allocation16] sm:$0x1]
    %v6932 = vld [vmem:[#allocation18] sm:$0x1]
    %vm6933 = vcmask 254976
    %v6934 = vsel %vm6933, %v6928, 0.0
    %6935 = vadd.xlane.f32.xlu0 %v6934
    %v6936 = vpop.xlane.xlu0 %6935
    %v6937 = vrcp.pop 32.0
    %v6938 = vmul.f32 %v6936, %v6937
    %v6939 = vsub.f32 %v6928, %v6938
    %v6940 = vmul.f32 %v6939, %v6939
    %v6941 = vsel %vm6933, %v6940, 0.0
    %6942 = vadd.xlane.f32.xlu0 %v6941
    %v6943 = vpop.xlane.xlu0 %6942
    %v6944 = vmul.f32 %v6943, %v6937
    %v6945 = vadd.f32 %v6944, 1e-05
    %v6946 = vrsqrt.pop %v6945
    %v6947 = vmul.f32 %v6939, %v6946
    %v6949 = vlaneseq
    %v6950 = vshrl.u32 %v6949, 7
    %v6951 = vsub.s32 0, %v6950
    %v6952 = vrot.slane %v6931, %v6951
    %v6954 = vmul.f32 %v6947, %v6952
    %v6956 = vlaneseq
    %v6957 = vshrl.u32 %v6956, 7
    %v6958 = vsub.s32 0, %v6957
    %v6959 = vrot.slane %v6932, %v6958
    %v6961 = vadd.f32 %v6954, %v6959
    %v6962 = vmax.f32 %v6961, 0.0
    %v6963 = vld [vmem:[%s71] sm:$0xff]
    %v6964 = vld [vmem:[%s71 + $0x8] sm:$0xff]
    %v6965 = vld [vmem:[%s71 + $0x10] sm:$0xff]
    %v6966 = vld [vmem:[%s71 + $0x18] sm:$0xff]
    %v6967 = vld [vmem:[#allocation5] sm:$0x1]
    %v6969 = vlaneseq
    %v6970 = vshrl.u32 %v6969, 7
    %v6971 = vsub.s32 0, %v6970
    %v6972 = vrot.slane %v6967, %v6971
    %v6975 = vsel %vm292, %v6962, 0
    %6977 = vmatprep.subr.mxu0 0.0
    %6978 = vmatpush1.msra.mxu0 %v6963
    %6979 = vmatprep.subr.mxu0 0.0
    %6980 = vmatpush1.msra.mxu0 %v6964
    %6981 = vmatprep.subr.mxu0 0.0
    %6982 = vmatpush1.msra.mxu0 %v6965
    %6983 = vmatprep.subr.mxu0 0.0
    %6984 = vmatpush1.msra.mxu0 %v6966
    %6985 = vmatprep.subr.mxu0 0.0
    %6986 = vmatpush1.msra.mxu0 0.0
    %6987 = vmatprep.subr.mxu0 0.0
    %6988 = vmatpush1.msra.mxu0 0.0
    %6989 = vmatprep.subr.mxu0 0.0
    %6990 = vmatpush1.msra.mxu0 0.0
    %6991 = vmatprep.subr.mxu0 0.0
    %6992 = vmatpush1.msra.mxu0 0.0
    %6993 = vmatprep.subr.mxu0 0.0
    %6994 = vmatpush1.msra.mxu0 0.0
    %6995 = vmatprep.subr.mxu0 0.0
    %6996 = vmatpush1.msra.mxu0 0.0
    %6997 = vmatprep.subr.mxu0 0.0
    %6998 = vmatpush1.msra.mxu0 0.0
    %6999 = vmatprep.subr.mxu0 0.0
    %7000 = vmatpush1.msra.mxu0 0.0
    %7001 = vmatprep.subr.mxu0 0.0
    %7002 = vmatpush1.msra.mxu0 0.0
    %7003 = vmatprep.subr.mxu0 0.0
    %7004 = vmatpush1.msra.mxu0 0.0
    %7005 = vmatprep.subr.mxu0 0.0
    %7006 = vmatpush1.msra.mxu0 0.0
    %7007 = vmatprep.subr.mxu0 0.0
    %7008 = vmatpush1.msra.mxu0 0.0
    %7009 = vmatprep.subr.mxu0 0.0
    %7010 = vmatpush1.msra.mxu0 0.0
    %7011 = vmatprep.subr.mxu0 0.0
    %7012 = vmatpush1.msra.mxu0 0.0
    %7013 = vmatprep.subr.mxu0 0.0
    %7014 = vmatpush1.msra.mxu0 0.0
    %7015 = vmatprep.subr.mxu0 0.0
    %7016 = vmatpush1.msra.mxu0 0.0
    %7017 = vmatprep.subr.mxu0 0.0
    %7018 = vmatpush1.msra.mxu0 0.0
    %7019 = vmatprep.subr.mxu0 0.0
    %7020 = vmatpush1.msra.mxu0 0.0
    %7021 = vmatprep.subr.mxu0 0.0
    %7022 = vmatpush1.msra.mxu0 0.0
    %7023 = vmatprep.subr.mxu0 0.0
    %7024 = vmatpush1.msra.mxu0 0.0
    %7025 = vmatprep.subr.mxu0 0.0
    %7026 = vmatpush1.msra.mxu0 0.0
    %7027 = vmatprep.subr.mxu0 0.0
    %7028 = vmatpush1.msra.mxu0 0.0
    %7029 = vmatprep.subr.mxu0 0.0
    %7030 = vmatpush1.msra.mxu0 0.0
    %7031 = vmatprep.subr.mxu0 0.0
    %7032 = vmatpush1.msra.mxu0 0.0
    %7033 = vmatprep.subr.mxu0 0.0
    %7034 = vmatpush1.msra.mxu0 0.0
    %7035 = vmatprep.subr.mxu0 0.0
    %7036 = vmatpush1.msra.mxu0 0.0
    %7037 = vmatprep.subr.mxu0 0.0
    %7038 = vmatpush1.msra.mxu0 0.0
    %7039 = vmatprep.subr.mxu0 0.0
    %7040 = vmatpush1.msra.mxu0 0.0
    %7041 = vmatprep.mubr.f32.mxu0 0.0
    %7042 = vmatmul.mubr.f32.gmra.mrb[0].mxu0 %v6975
    %v7043 = vpop.f32.mrb[0].mxu0
    %v7044 = vadd.f32 %v6972, %v7043
    %v7045 = vpop.f32.mrb[0].mxu0
    %7046 = vdwg.mxu0
    %v7047 = vxor.u32 %v7044, 2147483648
    %v7048 = vmul.f32 %v7047, 1.442695
    %v7049 = vpow.pop %v7048
    %v7050 = vadd.f32 %v7049, 1.0
    %v7051 = vrcp.pop %v7050
    %v7052 = vmul.f32 1.0, %v7051
    %vm7053 = vcmask 1024
    %7054 = vst.msk [vmem:[%s75] sm:$0x3] %vm7053, %v7052
    // Predicated region
    $region182: #{model1_forward.1} parent=1 // pred_check
      _
    $region183: #{model1_forward.1} parent=1 // pred_check_branch
      %7056 = sbr.rel (0) target = $region185
    $region184: #{model1_forward.1} parent=1 // pred_region
      _
    $region185: #{model1_forward.1} parent=1 // pred_fallthru
      _
    // Predicated region
    $region186: #{model1_forward.1} parent=1 // pred_check
      _
    $region187: #{model1_forward.1} parent=1 // pred_check_branch
      %7058 = sbr.rel (0) target = $region189
    $region188: #{model1_forward.1} parent=1 // pred_region
      _
    $region189: #{model1_forward.1} parent=1 // pred_fallthru
      _
    %7059 = vsyncpa [#allocation7], 1
    %7060 = vsyncpa [#allocation11], 1
    %7061 = vsyncpa [#allocation14], 1
    %7062 = vsyncpa [#allocation17], 1
    %7063 = vsyncpa [#allocation8], 1

</llo_original>
